<compile_context>
chip_gen: v7x
topology: tpu7x:2x2x1
jax: 0.10.0
libtpu: 0.0.40
codegen_flags: <defaults>
</compile_context>

<pallas_src>
import sys
import numpy as np
import jax
import jax.numpy as jnp
from jax import lax
from jax.experimental import pallas as pl
from jax.experimental.pallas import tpu as pltpu

EPS = sys.float_info.epsilon   # matches the torch module (`+ epsilon`)
H = 128                        # GRU hidden size (fixed by the module)


def _softplus(x):
    # matches torch.nn.functional.softplus (beta=1, threshold=20)
    return jnp.where(x > 20.0, x, jnp.log1p(jnp.exp(jnp.minimum(x, 20.0))))


def make_kernel(T, TT, OUTW):
    """Kernel factory; T = real seq len, TT = timesteps per grid iteration,
    OUTW = padded (lane-dense) fused-head output width."""
    H3 = 3 * H
    need_mask = (T % TT) != 0

    def kernel(gi_ref, w3_ref, b3_ref, wout_ref, bout_ref,
               out_ref, hn_ref, h0_scr, h1_scr):
        c = pl.program_id(0)

        @pl.when(c == 0)
        def _():
            h0_scr[...] = jnp.zeros_like(h0_scr)
            h1_scr[...] = jnp.zeros_like(h1_scr)

        # hoisted bias loads (reused by every inner step; no per-iter reload)
        b_hh0 = b3_ref[:, 0:H3]
        b_ih1 = b3_ref[:, H3:2 * H3]
        b_hh1 = b3_ref[:, 2 * H3:3 * H3]
        b_mlp = bout_ref[:, 0:H]
        b_head = bout_ref[:, H:H + OUTW]

        h0 = h0_scr[...]
        h1 = h1_scr[...]

        # statically unrolled inner time loop: TT timesteps per grid step
        for i in range(TT):
            # both recurrent matmuls issued up front: gh1 depends only on the
            # previous h1, so its MXU push overlaps layer-0's EUP/VPU work.
            gh0 = jnp.dot(h0, w3_ref[:, 0:H3],
                          preferred_element_type=jnp.float32) + b_hh0
            gh1 = jnp.dot(h1, w3_ref[:, 2 * H3:3 * H3],
                          preferred_element_type=jnp.float32) + b_hh1

            gi0 = gi_ref[i]                       # precomputed input proj (B, 3H)
            r0 = jax.nn.sigmoid(gi0[:, 0:H] + gh0[:, 0:H])
            z0 = jax.nn.sigmoid(gi0[:, H:2 * H] + gh0[:, H:2 * H])
            n0 = jnp.tanh(gi0[:, 2 * H:H3] + r0 * gh0[:, 2 * H:H3])
            h0_new = (1.0 - z0) * n0 + z0 * h0

            gi1 = jnp.dot(h0_new, w3_ref[:, H3:2 * H3],
                          preferred_element_type=jnp.float32) + b_ih1
            r1 = jax.nn.sigmoid(gi1[:, 0:H] + gh1[:, 0:H])
            z1 = jax.nn.sigmoid(gi1[:, H:2 * H] + gh1[:, H:2 * H])
            n1 = jnp.tanh(gi1[:, 2 * H:H3] + r1 * gh1[:, 2 * H:H3])
            h1_new = (1.0 - z1) * n1 + z1 * h1

            if need_mask:
                # keep hidden state frozen on padded (t >= T) steps
                valid = (c * TT + i) < T
                h0_new = jnp.where(valid, h0_new, h0)
                h1_new = jnp.where(valid, h1_new, h1)
            h0, h1 = h0_new, h1_new

            # output MLP: shared relu hidden + fused (a|m|s) heads, lane-dense
            hid = jnp.maximum(
                jnp.dot(h1, wout_ref[:, 0:H],
                        preferred_element_type=jnp.float32) + b_mlp, 0.0)
            heads = jnp.dot(hid, wout_ref[:, H:H + OUTW],
                            preferred_element_type=jnp.float32) + b_head
            out_ref[i] = heads                    # single (B, 128) store / step

        h0_scr[...] = h0
        h1_scr[...] = h1

        # h_n written only once, at the last grid iteration
        @pl.when(c == pl.num_programs(0) - 1)
        def _():
            hn_ref[0] = h0
            hn_ref[1] = h1

    return kernel


def gru_predictor_mu_forward(envs, states, params, steps_per_block=8):
    """envs: (B, env_size) f32; states: (B, T, state_size) f32."""
    B, T, S = states.shape
    G = params["w_a"].shape[1]                   # num_gaussians
    H3 = 3 * H

    # ---------------- time-parallel precompute (one big MXU matmul) ---------
    # gi0[t] = h_env @ W_ih0_env + (states[t] @ W_se + b_se) @ W_ih0_state + b_ih0
    #        = states[t] @ (W_se @ W_ih0_state) + const
    h_env = jax.nn.relu(envs @ params["w_env"] + params["b_env"])       # (B, EE)
    w_in = params["w_se"] @ params["w_ih0s"]                            # (S, 3H)
    gi_const = (h_env @ params["w_ih0e"]
                + params["b_se"] @ params["w_ih0s"]
                + params["b_ih0"])                                      # (B, 3H)
    gi_all = jnp.einsum("bts,sh->tbh", states, w_in) + gi_const[None]   # (T,B,3H)

    TT = min(steps_per_block, T)                 # timesteps per grid iteration
    n_chunks = pl.cdiv(T, TT)
    T_pad = n_chunks * TT
    if T_pad != T:
        gi_all = jnp.pad(gi_all, ((0, T_pad - T), (0, 0), (0, 0)))

    # ---------------- fuse / pad weights so the kernel takes 5 refs ---------
    w3 = jnp.concatenate([params["w_hh0"], params["w_ih1"], params["w_hh1"]],
                         axis=1)                                        # (H, 9H)
    b3 = jnp.concatenate([params["b_hh0"], params["b_ih1"], params["b_hh1"]],
                         axis=1)                                        # (1, 9H)
    OUTW = ((6 * G + 127) // 128) * 128          # pad fused heads to lane-dense
    w_heads = jnp.concatenate([params["w_a"], params["w_m"], params["w_s"]],
                              axis=1)                                   # (H, 6G)
    b_heads = jnp.concatenate([params["b_a"], params["b_m"], params["b_s"]],
                              axis=1)                                   # (1, 6G)
    w_heads = jnp.pad(w_heads, ((0, 0), (0, OUTW - 6 * G)))
    b_heads = jnp.pad(b_heads, ((0, 0), (0, OUTW - 6 * G)))
    wout = jnp.concatenate([params["w_mlp"], w_heads], axis=1)          # (H, H+OUTW)
    bout = jnp.concatenate([params["b_mlp"], b_heads], axis=1)          # (1, H+OUTW)

    kernel = make_kernel(T=T, TT=TT, OUTW=OUTW)

    out_tm, h_n = pl.pallas_call(
        kernel,
        out_shape=(jax.ShapeDtypeStruct((T_pad, B, OUTW), jnp.float32),
                   jax.ShapeDtypeStruct((2, B, H), jnp.float32)),
        grid_spec=pltpu.PrefetchScalarGridSpec(
            num_scalar_prefetch=0,
            grid=(n_chunks,),
            in_specs=[
                pl.BlockSpec((TT, B, H3), lambda c: (c, 0, 0)),     # gi per chunk
                pl.BlockSpec((H, 3 * H3), lambda c: (0, 0)),        # w_hh0|w_ih1|w_hh1
                pl.BlockSpec((1, 3 * H3), lambda c: (0, 0)),        # fused GRU biases
                pl.BlockSpec((H, H + OUTW), lambda c: (0, 0)),      # w_mlp|heads(padded)
                pl.BlockSpec((1, H + OUTW), lambda c: (0, 0)),      # fused out biases
            ],
            out_specs=(
                pl.BlockSpec((TT, B, OUTW), lambda c: (c, 0, 0)),   # lane-dense slab
                pl.BlockSpec((2, B, H), lambda c: (0, 0, 0)),       # h_n (resident)
            ),
            scratch_shapes=[
                pltpu.VMEM((B, H), jnp.float32),    # GRU layer-0 hidden carry
                pltpu.VMEM((B, H), jnp.float32),    # GRU layer-1 hidden carry
            ]),
        compiler_params=pltpu.CompilerParams(
            dimension_semantics=("arbitrary",)),    # sequential recurrence
    )(gi_all, w3, b3, wout, bout)

    # ---------------- glue: slice heads, activations, mixture shapes --------
    heads = jnp.transpose(out_tm[:T], (1, 0, 2))            # (B, T, OUTW)
    a = jax.nn.softmax(heads[..., 0:G], axis=-1)            # (B, T, G)
    m = heads[..., G:3 * G].reshape(B, T, G, 2)             # (B, T, G, 2)
    s = (_softplus(heads[..., 3 * G:6 * G]) + EPS).reshape(B, T, G, 3)
    # TODO(synk): GaussianMixture / predict_using_sampled_states (predict_t>0)
    # has no clean Pallas equivalent; the mixture parameters are returned.
    return a, m, s, h_n


def reference_forward(envs, states, params):
    """Pure-JAX reference (lax.scan) of the same forward pass."""
    B, T, S = states.shape
    G = params["w_a"].shape[1]
    h_env = jax.nn.relu(envs @ params["w_env"] + params["b_env"])

    def step(carry, x_t):
        h0, h1 = carry
        se = x_t @ params["w_se"] + params["b_se"]
        gi0 = h_env @ params["w_ih0e"] + se @ params["w_ih0s"] + params["b_ih0"]
        gh0 = h0 @ params["w_hh0"] + params["b_hh0"]
        r = jax.nn.sigmoid(gi0[:, :H] + gh0[:, :H])
        z = jax.nn.sigmoid(gi0[:, H:2 * H] + gh0[:, H:2 * H])
        n = jnp.tanh(gi0[:, 2 * H:] + r * gh0[:, 2 * H:])
        h0 = (1 - z) * n + z * h0
        gi1 = h0 @ params["w_ih1"] + params["b_ih1"]
        gh1 = h1 @ params["w_hh1"] + params["b_hh1"]
        r = jax.nn.sigmoid(gi1[:, :H] + gh1[:, :H])
        z = jax.nn.sigmoid(gi1[:, H:2 * H] + gh1[:, H:2 * H])
        n = jnp.tanh(gi1[:, 2 * H:] + r * gh1[:, 2 * H:])
        h1 = (1 - z) * n + z * h1
        hid = jax.nn.relu(h1 @ params["w_mlp"] + params["b_mlp"])
        a = jax.nn.softmax(hid @ params["w_a"] + params["b_a"], axis=-1)
        m = hid @ params["w_m"] + params["b_m"]
        s = _softplus(hid @ params["w_s"] + params["b_s"]) + EPS
        return (h0, h1), (a, m, s)

    init = (jnp.zeros((B, H), jnp.float32), jnp.zeros((B, H), jnp.float32))
    (h0, h1), (a, m, s) = lax.scan(step, init, jnp.transpose(states, (1, 0, 2)))
    a = jnp.transpose(a, (1, 0, 2))
    m = jnp.transpose(m, (1, 0, 2)).reshape(B, T, G, 2)
    s = jnp.transpose(s, (1, 0, 2)).reshape(B, T, G, 3)
    return a, m, s, jnp.stack([h0, h1])


def init_params(key, env_size, state_size, env_embed=32, state_embed=16, G=8):
    ks = iter(jax.random.split(key, 32))

    def w(shape, scale=0.1):
        return (scale * jax.random.normal(next(ks), shape)).astype(jnp.float32)

    # GRU input weights for layer 0 are stored split: rows acting on h_env and
    # rows acting on the state embedding (matches torch's concat input order).
    return {
        "w_env": w((env_size, env_embed)),     "b_env": w((1, env_embed)),
        "w_se":  w((state_size, state_embed)), "b_se": w((1, state_embed)),
        "w_ih0e": w((env_embed, 3 * H)),       "w_ih0s": w((state_embed, 3 * H)),
        "b_ih0": w((1, 3 * H)),
        "w_hh0": w((H, 3 * H)),                "b_hh0": w((1, 3 * H)),
        "w_ih1": w((H, 3 * H)),                "b_ih1": w((1, 3 * H)),
        "w_hh1": w((H, 3 * H)),                "b_hh1": w((1, 3 * H)),
        "w_mlp": w((H, H)),                    "b_mlp": w((1, H)),
        "w_a": w((H, G)),                      "b_a": w((1, G)),
        "w_m": w((H, 2 * G)),                  "b_m": w((1, 2 * G)),
        "w_s": w((H, 3 * G)),                  "b_s": w((1, 3 * G)),
    }


if __name__ == "__main__":
    B, T = 2, 8
    ENV_SIZE, STATE_SIZE, G = 16, 4, 8

    key = jax.random.PRNGKey(0)
    k_env, k_states, k_params = jax.random.split(key, 3)
    envs = jax.random.normal(k_env, (B, ENV_SIZE), dtype=jnp.float32)
    states = jax.random.normal(k_states, (B, T, STATE_SIZE), dtype=jnp.float32)
    params = init_params(k_params, ENV_SIZE, STATE_SIZE, G=G)

    a, m, s, h_n = jax.block_until_ready(
        gru_predictor_mu_forward(envs, states, params))

    # correctness check against pure-JAX reference
    a_r, m_r, s_r, hn_r = jax.block_until_ready(
        reference_forward(envs, states, params))
    np.testing.assert_allclose(np.asarray(a), np.asarray(a_r), rtol=5e-3, atol=5e-3)
    np.testing.assert_allclose(np.asarray(m), np.asarray(m_r), rtol=5e-3, atol=5e-3)
    np.testing.assert_allclose(np.asarray(s), np.asarray(s_r), rtol=5e-3, atol=5e-3)
    np.testing.assert_allclose(np.asarray(h_n), np.asarray(hn_r), rtol=5e-3, atol=5e-3)

    assert a.shape == (B, T, G)
    assert m.shape == (B, T, G, 2)
    assert s.shape == (B, T, G, 3)
    assert h_n.shape == (2, B, 128)
    print("KERNEL_OK")
</pallas_src>

<mosaic_0001>
module attributes {stable_mosaic.version = 11 : i64} {
  func.func @kernel(%arg0: i32, %arg1: memref<8x2x384xf32, #tpu.memory_space<vmem>>, %arg2: memref<128x1152xf32, #tpu.memory_space<vmem>>, %arg3: memref<1x1152xf32, #tpu.memory_space<vmem>>, %arg4: memref<128x256xf32, #tpu.memory_space<vmem>>, %arg5: memref<1x256xf32, #tpu.memory_space<vmem>>, %arg6: memref<8x2x128xf32, #tpu.memory_space<vmem>>, %arg7: memref<2x2x128xf32, #tpu.memory_space<vmem>>, %arg8: memref<2x128xf32, #tpu.memory_space<vmem>>, %arg9: memref<2x128xf32, #tpu.memory_space<vmem>>) attributes {dimension_semantics = [#tpu.dimension_semantics<arbitrary>], iteration_bounds = array<i64: 1>, scalar_prefetch = 0 : i64, scratch_operands = 2 : i64, tpu.core_type = #tpu.core_type<tc>, window_params = [{transform_indices = @transform_0, window_bounds = array<i64: 8, 2, 384>}, {pipeline_mode = #tpu.pipeline_mode<synchronous>, transform_indices = @transform_1, window_bounds = array<i64: 128, 1152>}, {pipeline_mode = #tpu.pipeline_mode<synchronous>, transform_indices = @transform_2, window_bounds = array<i64: 1, 1152>}, {pipeline_mode = #tpu.pipeline_mode<synchronous>, transform_indices = @transform_3, window_bounds = array<i64: 128, 256>}, {pipeline_mode = #tpu.pipeline_mode<synchronous>, transform_indices = @transform_4, window_bounds = array<i64: 1, 256>}, {transform_indices = @transform_5, window_bounds = array<i64: 8, 2, 128>}, {pipeline_mode = #tpu.pipeline_mode<synchronous>, transform_indices = @transform_6, window_bounds = array<i64: 2, 2, 128>}]} {
    %c0_i32 = arith.constant 0 : i32
    %0 = arith.cmpi eq, %arg0, %c0_i32 : i32
    %1 = arith.extui %0 : i1 to i32
    %c0_i32_0 = arith.constant 0 : i32
    %2 = arith.cmpi ne, %1, %c0_i32_0 : i32
    scf.if %2 {
      %cst_233 = arith.constant 0.000000e+00 : f32
      %647 = vector.broadcast %cst_233 : f32 to vector<2x128xf32>
      %c0_234 = arith.constant 0 : index
      %c0_235 = arith.constant 0 : index
      %648 = vector.load %arg8[%c0_234, %c0_235] : memref<2x128xf32, #tpu.memory_space<vmem>>, vector<2x128xf32>
      tpu.vector_store %arg8[%c0_234, %c0_235], %647 {strides = array<i32>} : memref<2x128xf32, #tpu.memory_space<vmem>>, vector<2x128xf32>,
      %cst_236 = arith.constant 0.000000e+00 : f32
      %649 = vector.broadcast %cst_236 : f32 to vector<2x128xf32>
      %c0_237 = arith.constant 0 : index
      %c0_238 = arith.constant 0 : index
      %650 = vector.load %arg9[%c0_237, %c0_238] : memref<2x128xf32, #tpu.memory_space<vmem>>, vector<2x128xf32>
      tpu.vector_store %arg9[%c0_237, %c0_238], %649 {strides = array<i32>} : memref<2x128xf32, #tpu.memory_space<vmem>>, vector<2x128xf32>,
    } else {
    }
    %c0 = arith.constant 0 : index
    %c0_1 = arith.constant 0 : index
    %3 = vector.load %arg3[%c0, %c0_1] : memref<1x1152xf32, #tpu.memory_space<vmem>>, vector<1x384xf32>
    %c0_2 = arith.constant 0 : index
    %c384 = arith.constant 384 : index
    %4 = vector.load %arg3[%c0_2, %c384] : memref<1x1152xf32, #tpu.memory_space<vmem>>, vector<1x384xf32>
    %c0_3 = arith.constant 0 : index
    %c768 = arith.constant 768 : index
    %5 = vector.load %arg3[%c0_3, %c768] : memref<1x1152xf32, #tpu.memory_space<vmem>>, vector<1x384xf32>
    %c0_4 = arith.constant 0 : index
    %c0_5 = arith.constant 0 : index
    %6 = vector.load %arg5[%c0_4, %c0_5] : memref<1x256xf32, #tpu.memory_space<vmem>>, vector<1x128xf32>
    %c0_6 = arith.constant 0 : index
    %c128 = arith.constant 128 : index
    %7 = vector.load %arg5[%c0_6, %c128] : memref<1x256xf32, #tpu.memory_space<vmem>>, vector<1x128xf32>
    %c0_7 = arith.constant 0 : index
    %c0_8 = arith.constant 0 : index
    %8 = vector.load %arg8[%c0_7, %c0_8] : memref<2x128xf32, #tpu.memory_space<vmem>>, vector<2x128xf32>
    %c0_9 = arith.constant 0 : index
    %c0_10 = arith.constant 0 : index
    %9 = vector.load %arg9[%c0_9, %c0_10] : memref<2x128xf32, #tpu.memory_space<vmem>>, vector<2x128xf32>
    %c0_11 = arith.constant 0 : index
    %c0_12 = arith.constant 0 : index
    %10 = vector.load %arg2[%c0_11, %c0_12] : memref<128x1152xf32, #tpu.memory_space<vmem>>, vector<128x384xf32>
    %cst = arith.constant dense<0.000000e+00> : vector<2x384xf32>
    %11 = tpu.matmul %8, %10, %cst {dimension_numbers = #tpu.dot_dimension_numbers<[1], [0], [0], [1], [0, 0, 1, 1], [], []>} : vector<2x128xf32>, vector<128x384xf32>, vector<2x384xf32> -> vector<2x384xf32>
    %12 = vector.broadcast %3 : vector<1x384xf32> to vector<2x384xf32>
    %13 = arith.addf %11, %12 : vector<2x384xf32>
    %c0_13 = arith.constant 0 : index
    %c768_14 = arith.constant 768 : index
    %14 = vector.load %arg2[%c0_13, %c768_14] : memref<128x1152xf32, #tpu.memory_space<vmem>>, vector<128x384xf32>
    %cst_15 = arith.constant dense<0.000000e+00> : vector<2x384xf32>
    %15 = tpu.matmul %9, %14, %cst_15 {dimension_numbers = #tpu.dot_dimension_numbers<[1], [0], [0], [1], [0, 0, 1, 1], [], []>} : vector<2x128xf32>, vector<128x384xf32>, vector<2x384xf32> -> vector<2x384xf32>
    %16 = vector.broadcast %5 : vector<1x384xf32> to vector<2x384xf32>
    %17 = arith.addf %15, %16 : vector<2x384xf32>
    %c0_16 = arith.constant 0 : index
    %c0_17 = arith.constant 0 : index
    %c0_18 = arith.constant 0 : index
    %18 = vector.load %arg1[%c0_16, %c0_17, %c0_18] : memref<8x2x384xf32, #tpu.memory_space<vmem>>, vector<1x2x384xf32>
    %19 = vector.shape_cast %18 : vector<1x2x384xf32> to vector<2x384xf32>
    %20 = vector.extract_strided_slice %19 {offsets = [0, 0], sizes = [2, 128], strides = [1, 1]} : vector<2x384xf32> to vector<2x128xf32>
    %21 = vector.extract_strided_slice %13 {offsets = [0, 0], sizes = [2, 128], strides = [1, 1]} : vector<2x384xf32> to vector<2x128xf32>
    %22 = arith.addf %20, %21 : vector<2x128xf32>
    %23 = arith.negf %22 : vector<2x128xf32>
    %24 = math.exp %23 : vector<2x128xf32>
    %cst_19 = arith.constant 1.000000e+00 : f32
    %25 = vector.broadcast %cst_19 : f32 to vector<2x128xf32>
    %26 = arith.addf %25, %24 : vector<2x128xf32>
    %27 = arith.divf %25, %26 : vector<2x128xf32>
    %28 = vector.extract_strided_slice %19 {offsets = [0, 128], sizes = [2, 128], strides = [1, 1]} : vector<2x384xf32> to vector<2x128xf32>
    %29 = vector.extract_strided_slice %13 {offsets = [0, 128], sizes = [2, 128], strides = [1, 1]} : vector<2x384xf32> to vector<2x128xf32>
    %30 = arith.addf %28, %29 : vector<2x128xf32>
    %31 = arith.negf %30 : vector<2x128xf32>
    %32 = math.exp %31 : vector<2x128xf32>
    %cst_20 = arith.constant 1.000000e+00 : f32
    %33 = vector.broadcast %cst_20 : f32 to vector<2x128xf32>
    %34 = arith.addf %33, %32 : vector<2x128xf32>
    %35 = arith.divf %33, %34 : vector<2x128xf32>
    %36 = vector.extract_strided_slice %19 {offsets = [0, 256], sizes = [2, 128], strides = [1, 1]} : vector<2x384xf32> to vector<2x128xf32>
    %37 = vector.extract_strided_slice %13 {offsets = [0, 256], sizes = [2, 128], strides = [1, 1]} : vector<2x384xf32> to vector<2x128xf32>
    %38 = arith.mulf %27, %37 : vector<2x128xf32>
    %39 = arith.addf %36, %38 : vector<2x128xf32>
    %40 = math.tanh %39 : vector<2x128xf32>
    %cst_21 = arith.constant 1.000000e+00 : f32
    %41 = vector.broadcast %cst_21 : f32 to vector<2x128xf32>
    %42 = arith.subf %41, %35 : vector<2x128xf32>
    %43 = arith.mulf %42, %40 : vector<2x128xf32>
    %44 = arith.mulf %35, %8 : vector<2x128xf32>
    %45 = arith.addf %43, %44 : vector<2x128xf32>
    %c0_22 = arith.constant 0 : index
    %c384_23 = arith.constant 384 : index
    %46 = vector.load %arg2[%c0_22, %c384_23] : memref<128x1152xf32, #tpu.memory_space<vmem>>, vector<128x384xf32>
    %cst_24 = arith.constant dense<0.000000e+00> : vector<2x384xf32>
    %47 = tpu.matmul %45, %46, %cst_24 {dimension_numbers = #tpu.dot_dimension_numbers<[1], [0], [0], [1], [0, 0, 1, 1], [], []>} : vector<2x128xf32>, vector<128x384xf32>, vector<2x384xf32> -> vector<2x384xf32>
    %48 = vector.broadcast %4 : vector<1x384xf32> to vector<2x384xf32>
    %49 = arith.addf %47, %48 : vector<2x384xf32>
    %50 = vector.extract_strided_slice %49 {offsets = [0, 0], sizes = [2, 128], strides = [1, 1]} : vector<2x384xf32> to vector<2x128xf32>
    %51 = vector.extract_strided_slice %17 {offsets = [0, 0], sizes = [2, 128], strides = [1, 1]} : vector<2x384xf32> to vector<2x128xf32>
    %52 = arith.addf %50, %51 : vector<2x128xf32>
    %53 = arith.negf %52 : vector<2x128xf32>
    %54 = math.exp %53 : vector<2x128xf32>
    %cst_25 = arith.constant 1.000000e+00 : f32
    %55 = vector.broadcast %cst_25 : f32 to vector<2x128xf32>
    %56 = arith.addf %55, %54 : vector<2x128xf32>
    %57 = arith.divf %55, %56 : vector<2x128xf32>
    %58 = vector.extract_strided_slice %49 {offsets = [0, 128], sizes = [2, 128], strides = [1, 1]} : vector<2x384xf32> to vector<2x128xf32>
    %59 = vector.extract_strided_slice %17 {offsets = [0, 128], sizes = [2, 128], strides = [1, 1]} : vector<2x384xf32> to vector<2x128xf32>
    %60 = arith.addf %58, %59 : vector<2x128xf32>
    %61 = arith.negf %60 : vector<2x128xf32>
    %62 = math.exp %61 : vector<2x128xf32>
    %cst_26 = arith.constant 1.000000e+00 : f32
    %63 = vector.broadcast %cst_26 : f32 to vector<2x128xf32>
    %64 = arith.addf %63, %62 : vector<2x128xf32>
    %65 = arith.divf %63, %64 : vector<2x128xf32>
    %66 = vector.extract_strided_slice %49 {offsets = [0, 256], sizes = [2, 128], strides = [1, 1]} : vector<2x384xf32> to vector<2x128xf32>
    %67 = vector.extract_strided_slice %17 {offsets = [0, 256], sizes = [2, 128], strides = [1, 1]} : vector<2x384xf32> to vector<2x128xf32>
    %68 = arith.mulf %57, %67 : vector<2x128xf32>
    %69 = arith.addf %66, %68 : vector<2x128xf32>
    %70 = math.tanh %69 : vector<2x128xf32>
    %cst_27 = arith.constant 1.000000e+00 : f32
    %71 = vector.broadcast %cst_27 : f32 to vector<2x128xf32>
    %72 = arith.subf %71, %65 : vector<2x128xf32>
    %73 = arith.mulf %72, %70 : vector<2x128xf32>
    %74 = arith.mulf %65, %9 : vector<2x128xf32>
    %75 = arith.addf %73, %74 : vector<2x128xf32>
    %c0_28 = arith.constant 0 : index
    %c0_29 = arith.constant 0 : index
    %76 = vector.load %arg4[%c0_28, %c0_29] : memref<128x256xf32, #tpu.memory_space<vmem>>, vector<128x128xf32>
    %cst_30 = arith.constant dense<0.000000e+00> : vector<2x128xf32>
    %77 = tpu.matmul %75, %76, %cst_30 {dimension_numbers = #tpu.dot_dimension_numbers<[1], [0], [0], [1], [0, 0, 1, 1], [], []>} : vector<2x128xf32>, vector<128x128xf32>, vector<2x128xf32> -> vector<2x128xf32>
    %78 = vector.broadcast %6 : vector<1x128xf32> to vector<2x128xf32>
    %79 = arith.addf %77, %78 : vector<2x128xf32>
    %cst_31 = arith.constant 0.000000e+00 : f32
    %80 = vector.broadcast %cst_31 : f32 to vector<2x128xf32>
    %81 = arith.maximumf %79, %80 : vector<2x128xf32>
    %c0_32 = arith.constant 0 : index
    %c128_33 = arith.constant 128 : index
    %82 = vector.load %arg4[%c0_32, %c128_33] : memref<128x256xf32, #tpu.memory_space<vmem>>, vector<128x128xf32>
    %cst_34 = arith.constant dense<0.000000e+00> : vector<2x128xf32>
    %83 = tpu.matmul %81, %82, %cst_34 {dimension_numbers = #tpu.dot_dimension_numbers<[1], [0], [0], [1], [0, 0, 1, 1], [], []>} : vector<2x128xf32>, vector<128x128xf32>, vector<2x128xf32> -> vector<2x128xf32>
    %84 = vector.broadcast %7 : vector<1x128xf32> to vector<2x128xf32>
    %85 = arith.addf %83, %84 : vector<2x128xf32>
    %c0_35 = arith.constant 0 : index
    %c0_36 = arith.constant 0 : index
    %c0_37 = arith.constant 0 : index
    %86 = vector.load %arg6[%c0_35, %c0_36, %c0_37] : memref<8x2x128xf32, #tpu.memory_space<vmem>>, vector<1x2x128xf32>
    %87 = vector.shape_cast %86 : vector<1x2x128xf32> to vector<2x128xf32>
    %88 = vector.shape_cast %85 : vector<2x128xf32> to vector<1x2x128xf32>
    tpu.vector_store %arg6[%c0_35, %c0_36, %c0_37], %88 {strides = array<i32>} : memref<8x2x128xf32, #tpu.memory_space<vmem>>, vector<1x2x128xf32>,
    %c0_38 = arith.constant 0 : index
    %c0_39 = arith.constant 0 : index
    %89 = vector.load %arg2[%c0_38, %c0_39] : memref<128x1152xf32, #tpu.memory_space<vmem>>, vector<128x384xf32>
    %cst_40 = arith.constant dense<0.000000e+00> : vector<2x384xf32>
    %90 = tpu.matmul %45, %89, %cst_40 {dimension_numbers = #tpu.dot_dimension_numbers<[1], [0], [0], [1], [0, 0, 1, 1], [], []>} : vector<2x128xf32>, vector<128x384xf32>, vector<2x384xf32> -> vector<2x384xf32>
    %91 = vector.broadcast %3 : vector<1x384xf32> to vector<2x384xf32>
    %92 = arith.addf %90, %91 : vector<2x384xf32>
    %c0_41 = arith.constant 0 : index
    %c768_42 = arith.constant 768 : index
    %93 = vector.load %arg2[%c0_41, %c768_42] : memref<128x1152xf32, #tpu.memory_space<vmem>>, vector<128x384xf32>
    %cst_43 = arith.constant dense<0.000000e+00> : vector<2x384xf32>
    %94 = tpu.matmul %75, %93, %cst_43 {dimension_numbers = #tpu.dot_dimension_numbers<[1], [0], [0], [1], [0, 0, 1, 1], [], []>} : vector<2x128xf32>, vector<128x384xf32>, vector<2x384xf32> -> vector<2x384xf32>
    %95 = vector.broadcast %5 : vector<1x384xf32> to vector<2x384xf32>
    %96 = arith.addf %94, %95 : vector<2x384xf32>
    %c1 = arith.constant 1 : index
    %c0_44 = arith.constant 0 : index
    %c0_45 = arith.constant 0 : index
    %97 = vector.load %arg1[%c1, %c0_44, %c0_45] : memref<8x2x384xf32, #tpu.memory_space<vmem>>, vector<1x2x384xf32>
    %98 = vector.shape_cast %97 : vector<1x2x384xf32> to vector<2x384xf32>
    %99 = vector.extract_strided_slice %98 {offsets = [0, 0], sizes = [2, 128], strides = [1, 1]} : vector<2x384xf32> to vector<2x128xf32>
    %100 = vector.extract_strided_slice %92 {offsets = [0, 0], sizes = [2, 128], strides = [1, 1]} : vector<2x384xf32> to vector<2x128xf32>
    %101 = arith.addf %99, %100 : vector<2x128xf32>
    %102 = arith.negf %101 : vector<2x128xf32>
    %103 = math.exp %102 : vector<2x128xf32>
    %cst_46 = arith.constant 1.000000e+00 : f32
    %104 = vector.broadcast %cst_46 : f32 to vector<2x128xf32>
    %105 = arith.addf %104, %103 : vector<2x128xf32>
    %106 = arith.divf %104, %105 : vector<2x128xf32>
    %107 = vector.extract_strided_slice %98 {offsets = [0, 128], sizes = [2, 128], strides = [1, 1]} : vector<2x384xf32> to vector<2x128xf32>
    %108 = vector.extract_strided_slice %92 {offsets = [0, 128], sizes = [2, 128], strides = [1, 1]} : vector<2x384xf32> to vector<2x128xf32>
    %109 = arith.addf %107, %108 : vector<2x128xf32>
    %110 = arith.negf %109 : vector<2x128xf32>
    %111 = math.exp %110 : vector<2x128xf32>
    %cst_47 = arith.constant 1.000000e+00 : f32
    %112 = vector.broadcast %cst_47 : f32 to vector<2x128xf32>
    %113 = arith.addf %112, %111 : vector<2x128xf32>
    %114 = arith.divf %112, %113 : vector<2x128xf32>
    %115 = vector.extract_strided_slice %98 {offsets = [0, 256], sizes = [2, 128], strides = [1, 1]} : vector<2x384xf32> to vector<2x128xf32>
    %116 = vector.extract_strided_slice %92 {offsets = [0, 256], sizes = [2, 128], strides = [1, 1]} : vector<2x384xf32> to vector<2x128xf32>
    %117 = arith.mulf %106, %116 : vector<2x128xf32>
    %118 = arith.addf %115, %117 : vector<2x128xf32>
    %119 = math.tanh %118 : vector<2x128xf32>
    %cst_48 = arith.constant 1.000000e+00 : f32
    %120 = vector.broadcast %cst_48 : f32 to vector<2x128xf32>
    %121 = arith.subf %120, %114 : vector<2x128xf32>
    %122 = arith.mulf %121, %119 : vector<2x128xf32>
    %123 = arith.mulf %114, %45 : vector<2x128xf32>
    %124 = arith.addf %122, %123 : vector<2x128xf32>
    %c0_49 = arith.constant 0 : index
    %c384_50 = arith.constant 384 : index
    %125 = vector.load %arg2[%c0_49, %c384_50] : memref<128x1152xf32, #tpu.memory_space<vmem>>, vector<128x384xf32>
    %cst_51 = arith.constant dense<0.000000e+00> : vector<2x384xf32>
    %126 = tpu.matmul %124, %125, %cst_51 {dimension_numbers = #tpu.dot_dimension_numbers<[1], [0], [0], [1], [0, 0, 1, 1], [], []>} : vector<2x128xf32>, vector<128x384xf32>, vector<2x384xf32> -> vector<2x384xf32>
    %127 = vector.broadcast %4 : vector<1x384xf32> to vector<2x384xf32>
    %128 = arith.addf %126, %127 : vector<2x384xf32>
    %129 = vector.extract_strided_slice %128 {offsets = [0, 0], sizes = [2, 128], strides = [1, 1]} : vector<2x384xf32> to vector<2x128xf32>
    %130 = vector.extract_strided_slice %96 {offsets = [0, 0], sizes = [2, 128], strides = [1, 1]} : vector<2x384xf32> to vector<2x128xf32>
    %131 = arith.addf %129, %130 : vector<2x128xf32>
    %132 = arith.negf %131 : vector<2x128xf32>
    %133 = math.exp %132 : vector<2x128xf32>
    %cst_52 = arith.constant 1.000000e+00 : f32
    %134 = vector.broadcast %cst_52 : f32 to vector<2x128xf32>
    %135 = arith.addf %134, %133 : vector<2x128xf32>
    %136 = arith.divf %134, %135 : vector<2x128xf32>
    %137 = vector.extract_strided_slice %128 {offsets = [0, 128], sizes = [2, 128], strides = [1, 1]} : vector<2x384xf32> to vector<2x128xf32>
    %138 = vector.extract_strided_slice %96 {offsets = [0, 128], sizes = [2, 128], strides = [1, 1]} : vector<2x384xf32> to vector<2x128xf32>
    %139 = arith.addf %137, %138 : vector<2x128xf32>
    %140 = arith.negf %139 : vector<2x128xf32>
    %141 = math.exp %140 : vector<2x128xf32>
    %cst_53 = arith.constant 1.000000e+00 : f32
    %142 = vector.broadcast %cst_53 : f32 to vector<2x128xf32>
    %143 = arith.addf %142, %141 : vector<2x128xf32>
    %144 = arith.divf %142, %143 : vector<2x128xf32>
    %145 = vector.extract_strided_slice %128 {offsets = [0, 256], sizes = [2, 128], strides = [1, 1]} : vector<2x384xf32> to vector<2x128xf32>
    %146 = vector.extract_strided_slice %96 {offsets = [0, 256], sizes = [2, 128], strides = [1, 1]} : vector<2x384xf32> to vector<2x128xf32>
    %147 = arith.mulf %136, %146 : vector<2x128xf32>
    %148 = arith.addf %145, %147 : vector<2x128xf32>
    %149 = math.tanh %148 : vector<2x128xf32>
    %cst_54 = arith.constant 1.000000e+00 : f32
    %150 = vector.broadcast %cst_54 : f32 to vector<2x128xf32>
    %151 = arith.subf %150, %144 : vector<2x128xf32>
    %152 = arith.mulf %151, %149 : vector<2x128xf32>
    %153 = arith.mulf %144, %75 : vector<2x128xf32>
    %154 = arith.addf %152, %153 : vector<2x128xf32>
    %c0_55 = arith.constant 0 : index
    %c0_56 = arith.constant 0 : index
    %155 = vector.load %arg4[%c0_55, %c0_56] : memref<128x256xf32, #tpu.memory_space<vmem>>, vector<128x128xf32>
    %cst_57 = arith.constant dense<0.000000e+00> : vector<2x128xf32>
    %156 = tpu.matmul %154, %155, %cst_57 {dimension_numbers = #tpu.dot_dimension_numbers<[1], [0], [0], [1], [0, 0, 1, 1], [], []>} : vector<2x128xf32>, vector<128x128xf32>, vector<2x128xf32> -> vector<2x128xf32>
    %157 = vector.broadcast %6 : vector<1x128xf32> to vector<2x128xf32>
    %158 = arith.addf %156, %157 : vector<2x128xf32>
    %cst_58 = arith.constant 0.000000e+00 : f32
    %159 = vector.broadcast %cst_58 : f32 to vector<2x128xf32>
    %160 = arith.maximumf %158, %159 : vector<2x128xf32>
    %c0_59 = arith.constant 0 : index
    %c128_60 = arith.constant 128 : index
    %161 = vector.load %arg4[%c0_59, %c128_60] : memref<128x256xf32, #tpu.memory_space<vmem>>, vector<128x128xf32>
    %cst_61 = arith.constant dense<0.000000e+00> : vector<2x128xf32>
    %162 = tpu.matmul %160, %161, %cst_61 {dimension_numbers = #tpu.dot_dimension_numbers<[1], [0], [0], [1], [0, 0, 1, 1], [], []>} : vector<2x128xf32>, vector<128x128xf32>, vector<2x128xf32> -> vector<2x128xf32>
    %163 = vector.broadcast %7 : vector<1x128xf32> to vector<2x128xf32>
    %164 = arith.addf %162, %163 : vector<2x128xf32>
    %c1_62 = arith.constant 1 : index
    %c0_63 = arith.constant 0 : index
    %c0_64 = arith.constant 0 : index
    %165 = vector.load %arg6[%c1_62, %c0_63, %c0_64] : memref<8x2x128xf32, #tpu.memory_space<vmem>>, vector<1x2x128xf32>
    %166 = vector.shape_cast %165 : vector<1x2x128xf32> to vector<2x128xf32>
    %167 = vector.shape_cast %164 : vector<2x128xf32> to vector<1x2x128xf32>
    tpu.vector_store %arg6[%c1_62, %c0_63, %c0_64], %167 {strides = array<i32>} : memref<8x2x128xf32, #tpu.memory_space<vmem>>, vector<1x2x128xf32>,
    %c0_65 = arith.constant 0 : index
    %c0_66 = arith.constant 0 : index
    %168 = vector.load %arg2[%c0_65, %c0_66] : memref<128x1152xf32, #tpu.memory_space<vmem>>, vector<128x384xf32>
    %cst_67 = arith.constant dense<0.000000e+00> : vector<2x384xf32>
    %169 = tpu.matmul %124, %168, %cst_67 {dimension_numbers = #tpu.dot_dimension_numbers<[1], [0], [0], [1], [0, 0, 1, 1], [], []>} : vector<2x128xf32>, vector<128x384xf32>, vector<2x384xf32> -> vector<2x384xf32>
    %170 = vector.broadcast %3 : vector<1x384xf32> to vector<2x384xf32>
    %171 = arith.addf %169, %170 : vector<2x384xf32>
    %c0_68 = arith.constant 0 : index
    %c768_69 = arith.constant 768 : index
    %172 = vector.load %arg2[%c0_68, %c768_69] : memref<128x1152xf32, #tpu.memory_space<vmem>>, vector<128x384xf32>
    %cst_70 = arith.constant dense<0.000000e+00> : vector<2x384xf32>
    %173 = tpu.matmul %154, %172, %cst_70 {dimension_numbers = #tpu.dot_dimension_numbers<[1], [0], [0], [1], [0, 0, 1, 1], [], []>} : vector<2x128xf32>, vector<128x384xf32>, vector<2x384xf32> -> vector<2x384xf32>
    %174 = vector.broadcast %5 : vector<1x384xf32> to vector<2x384xf32>
    %175 = arith.addf %173, %174 : vector<2x384xf32>
    %c2 = arith.constant 2 : index
    %c0_71 = arith.constant 0 : index
    %c0_72 = arith.constant 0 : index
    %176 = vector.load %arg1[%c2, %c0_71, %c0_72] : memref<8x2x384xf32, #tpu.memory_space<vmem>>, vector<1x2x384xf32>
    %177 = vector.shape_cast %176 : vector<1x2x384xf32> to vector<2x384xf32>
    %178 = vector.extract_strided_slice %177 {offsets = [0, 0], sizes = [2, 128], strides = [1, 1]} : vector<2x384xf32> to vector<2x128xf32>
    %179 = vector.extract_strided_slice %171 {offsets = [0, 0], sizes = [2, 128], strides = [1, 1]} : vector<2x384xf32> to vector<2x128xf32>
    %180 = arith.addf %178, %179 : vector<2x128xf32>
    %181 = arith.negf %180 : vector<2x128xf32>
    %182 = math.exp %181 : vector<2x128xf32>
    %cst_73 = arith.constant 1.000000e+00 : f32
    %183 = vector.broadcast %cst_73 : f32 to vector<2x128xf32>
    %184 = arith.addf %183, %182 : vector<2x128xf32>
    %185 = arith.divf %183, %184 : vector<2x128xf32>
    %186 = vector.extract_strided_slice %177 {offsets = [0, 128], sizes = [2, 128], strides = [1, 1]} : vector<2x384xf32> to vector<2x128xf32>
    %187 = vector.extract_strided_slice %171 {offsets = [0, 128], sizes = [2, 128], strides = [1, 1]} : vector<2x384xf32> to vector<2x128xf32>
    %188 = arith.addf %186, %187 : vector<2x128xf32>
    %189 = arith.negf %188 : vector<2x128xf32>
    %190 = math.exp %189 : vector<2x128xf32>
    %cst_74 = arith.constant 1.000000e+00 : f32
    %191 = vector.broadcast %cst_74 : f32 to vector<2x128xf32>
    %192 = arith.addf %191, %190 : vector<2x128xf32>
    %193 = arith.divf %191, %192 : vector<2x128xf32>
    %194 = vector.extract_strided_slice %177 {offsets = [0, 256], sizes = [2, 128], strides = [1, 1]} : vector<2x384xf32> to vector<2x128xf32>
    %195 = vector.extract_strided_slice %171 {offsets = [0, 256], sizes = [2, 128], strides = [1, 1]} : vector<2x384xf32> to vector<2x128xf32>
    %196 = arith.mulf %185, %195 : vector<2x128xf32>
    %197 = arith.addf %194, %196 : vector<2x128xf32>
    %198 = math.tanh %197 : vector<2x128xf32>
    %cst_75 = arith.constant 1.000000e+00 : f32
    %199 = vector.broadcast %cst_75 : f32 to vector<2x128xf32>
    %200 = arith.subf %199, %193 : vector<2x128xf32>
    %201 = arith.mulf %200, %198 : vector<2x128xf32>
    %202 = arith.mulf %193, %124 : vector<2x128xf32>
    %203 = arith.addf %201, %202 : vector<2x128xf32>
    %c0_76 = arith.constant 0 : index
    %c384_77 = arith.constant 384 : index
    %204 = vector.load %arg2[%c0_76, %c384_77] : memref<128x1152xf32, #tpu.memory_space<vmem>>, vector<128x384xf32>
    %cst_78 = arith.constant dense<0.000000e+00> : vector<2x384xf32>
    %205 = tpu.matmul %203, %204, %cst_78 {dimension_numbers = #tpu.dot_dimension_numbers<[1], [0], [0], [1], [0, 0, 1, 1], [], []>} : vector<2x128xf32>, vector<128x384xf32>, vector<2x384xf32> -> vector<2x384xf32>
    %206 = vector.broadcast %4 : vector<1x384xf32> to vector<2x384xf32>
    %207 = arith.addf %205, %206 : vector<2x384xf32>
    %208 = vector.extract_strided_slice %207 {offsets = [0, 0], sizes = [2, 128], strides = [1, 1]} : vector<2x384xf32> to vector<2x128xf32>
    %209 = vector.extract_strided_slice %175 {offsets = [0, 0], sizes = [2, 128], strides = [1, 1]} : vector<2x384xf32> to vector<2x128xf32>
    %210 = arith.addf %208, %209 : vector<2x128xf32>
    %211 = arith.negf %210 : vector<2x128xf32>
    %212 = math.exp %211 : vector<2x128xf32>
    %cst_79 = arith.constant 1.000000e+00 : f32
    %213 = vector.broadcast %cst_79 : f32 to vector<2x128xf32>
    %214 = arith.addf %213, %212 : vector<2x128xf32>
    %215 = arith.divf %213, %214 : vector<2x128xf32>
    %216 = vector.extract_strided_slice %207 {offsets = [0, 128], sizes = [2, 128], strides = [1, 1]} : vector<2x384xf32> to vector<2x128xf32>
    %217 = vector.extract_strided_slice %175 {offsets = [0, 128], sizes = [2, 128], strides = [1, 1]} : vector<2x384xf32> to vector<2x128xf32>
    %218 = arith.addf %216, %217 : vector<2x128xf32>
    %219 = arith.negf %218 : vector<2x128xf32>
    %220 = math.exp %219 : vector<2x128xf32>
    %cst_80 = arith.constant 1.000000e+00 : f32
    %221 = vector.broadcast %cst_80 : f32 to vector<2x128xf32>
    %222 = arith.addf %221, %220 : vector<2x128xf32>
    %223 = arith.divf %221, %222 : vector<2x128xf32>
    %224 = vector.extract_strided_slice %207 {offsets = [0, 256], sizes = [2, 128], strides = [1, 1]} : vector<2x384xf32> to vector<2x128xf32>
    %225 = vector.extract_strided_slice %175 {offsets = [0, 256], sizes = [2, 128], strides = [1, 1]} : vector<2x384xf32> to vector<2x128xf32>
    %226 = arith.mulf %215, %225 : vector<2x128xf32>
    %227 = arith.addf %224, %226 : vector<2x128xf32>
    %228 = math.tanh %227 : vector<2x128xf32>
    %cst_81 = arith.constant 1.000000e+00 : f32
    %229 = vector.broadcast %cst_81 : f32 to vector<2x128xf32>
    %230 = arith.subf %229, %223 : vector<2x128xf32>
    %231 = arith.mulf %230, %228 : vector<2x128xf32>
    %232 = arith.mulf %223, %154 : vector<2x128xf32>
    %233 = arith.addf %231, %232 : vector<2x128xf32>
    %c0_82 = arith.constant 0 : index
    %c0_83 = arith.constant 0 : index
    %234 = vector.load %arg4[%c0_82, %c0_83] : memref<128x256xf32, #tpu.memory_space<vmem>>, vector<128x128xf32>
    %cst_84 = arith.constant dense<0.000000e+00> : vector<2x128xf32>
    %235 = tpu.matmul %233, %234, %cst_84 {dimension_numbers = #tpu.dot_dimension_numbers<[1], [0], [0], [1], [0, 0, 1, 1], [], []>} : vector<2x128xf32>, vector<128x128xf32>, vector<2x128xf32> -> vector<2x128xf32>
    %236 = vector.broadcast %6 : vector<1x128xf32> to vector<2x128xf32>
    %237 = arith.addf %235, %236 : vector<2x128xf32>
    %cst_85 = arith.constant 0.000000e+00 : f32
    %238 = vector.broadcast %cst_85 : f32 to vector<2x128xf32>
    %239 = arith.maximumf %237, %238 : vector<2x128xf32>
    %c0_86 = arith.constant 0 : index
    %c128_87 = arith.constant 128 : index
    %240 = vector.load %arg4[%c0_86, %c128_87] : memref<128x256xf32, #tpu.memory_space<vmem>>, vector<128x128xf32>
    %cst_88 = arith.constant dense<0.000000e+00> : vector<2x128xf32>
    %241 = tpu.matmul %239, %240, %cst_88 {dimension_numbers = #tpu.dot_dimension_numbers<[1], [0], [0], [1], [0, 0, 1, 1], [], []>} : vector<2x128xf32>, vector<128x128xf32>, vector<2x128xf32> -> vector<2x128xf32>
    %242 = vector.broadcast %7 : vector<1x128xf32> to vector<2x128xf32>
    %243 = arith.addf %241, %242 : vector<2x128xf32>
    %c2_89 = arith.constant 2 : index
    %c0_90 = arith.constant 0 : index
    %c0_91 = arith.constant 0 : index
    %244 = vector.load %arg6[%c2_89, %c0_90, %c0_91] : memref<8x2x128xf32, #tpu.memory_space<vmem>>, vector<1x2x128xf32>
    %245 = vector.shape_cast %244 : vector<1x2x128xf32> to vector<2x128xf32>
    %246 = vector.shape_cast %243 : vector<2x128xf32> to vector<1x2x128xf32>
    tpu.vector_store %arg6[%c2_89, %c0_90, %c0_91], %246 {strides = array<i32>} : memref<8x2x128xf32, #tpu.memory_space<vmem>>, vector<1x2x128xf32>,
    %c0_92 = arith.constant 0 : index
    %c0_93 = arith.constant 0 : index
    %247 = vector.load %arg2[%c0_92, %c0_93] : memref<128x1152xf32, #tpu.memory_space<vmem>>, vector<128x384xf32>
    %cst_94 = arith.constant dense<0.000000e+00> : vector<2x384xf32>
    %248 = tpu.matmul %203, %247, %cst_94 {dimension_numbers = #tpu.dot_dimension_numbers<[1], [0], [0], [1], [0, 0, 1, 1], [], []>} : vector<2x128xf32>, vector<128x384xf32>, vector<2x384xf32> -> vector<2x384xf32>
    %249 = vector.broadcast %3 : vector<1x384xf32> to vector<2x384xf32>
    %250 = arith.addf %248, %249 : vector<2x384xf32>
    %c0_95 = arith.constant 0 : index
    %c768_96 = arith.constant 768 : index
    %251 = vector.load %arg2[%c0_95, %c768_96] : memref<128x1152xf32, #tpu.memory_space<vmem>>, vector<128x384xf32>
    %cst_97 = arith.constant dense<0.000000e+00> : vector<2x384xf32>
    %252 = tpu.matmul %233, %251, %cst_97 {dimension_numbers = #tpu.dot_dimension_numbers<[1], [0], [0], [1], [0, 0, 1, 1], [], []>} : vector<2x128xf32>, vector<128x384xf32>, vector<2x384xf32> -> vector<2x384xf32>
    %253 = vector.broadcast %5 : vector<1x384xf32> to vector<2x384xf32>
    %254 = arith.addf %252, %253 : vector<2x384xf32>
    %c3 = arith.constant 3 : index
    %c0_98 = arith.constant 0 : index
    %c0_99 = arith.constant 0 : index
    %255 = vector.load %arg1[%c3, %c0_98, %c0_99] : memref<8x2x384xf32, #tpu.memory_space<vmem>>, vector<1x2x384xf32>
    %256 = vector.shape_cast %255 : vector<1x2x384xf32> to vector<2x384xf32>
    %257 = vector.extract_strided_slice %256 {offsets = [0, 0], sizes = [2, 128], strides = [1, 1]} : vector<2x384xf32> to vector<2x128xf32>
    %258 = vector.extract_strided_slice %250 {offsets = [0, 0], sizes = [2, 128], strides = [1, 1]} : vector<2x384xf32> to vector<2x128xf32>
    %259 = arith.addf %257, %258 : vector<2x128xf32>
    %260 = arith.negf %259 : vector<2x128xf32>
    %261 = math.exp %260 : vector<2x128xf32>
    %cst_100 = arith.constant 1.000000e+00 : f32
    %262 = vector.broadcast %cst_100 : f32 to vector<2x128xf32>
    %263 = arith.addf %262, %261 : vector<2x128xf32>
    %264 = arith.divf %262, %263 : vector<2x128xf32>
    %265 = vector.extract_strided_slice %256 {offsets = [0, 128], sizes = [2, 128], strides = [1, 1]} : vector<2x384xf32> to vector<2x128xf32>
    %266 = vector.extract_strided_slice %250 {offsets = [0, 128], sizes = [2, 128], strides = [1, 1]} : vector<2x384xf32> to vector<2x128xf32>
    %267 = arith.addf %265, %266 : vector<2x128xf32>
    %268 = arith.negf %267 : vector<2x128xf32>
    %269 = math.exp %268 : vector<2x128xf32>
    %cst_101 = arith.constant 1.000000e+00 : f32
    %270 = vector.broadcast %cst_101 : f32 to vector<2x128xf32>
    %271 = arith.addf %270, %269 : vector<2x128xf32>
    %272 = arith.divf %270, %271 : vector<2x128xf32>
    %273 = vector.extract_strided_slice %256 {offsets = [0, 256], sizes = [2, 128], strides = [1, 1]} : vector<2x384xf32> to vector<2x128xf32>
    %274 = vector.extract_strided_slice %250 {offsets = [0, 256], sizes = [2, 128], strides = [1, 1]} : vector<2x384xf32> to vector<2x128xf32>
    %275 = arith.mulf %264, %274 : vector<2x128xf32>
    %276 = arith.addf %273, %275 : vector<2x128xf32>
    %277 = math.tanh %276 : vector<2x128xf32>
    %cst_102 = arith.constant 1.000000e+00 : f32
    %278 = vector.broadcast %cst_102 : f32 to vector<2x128xf32>
    %279 = arith.subf %278, %272 : vector<2x128xf32>
    %280 = arith.mulf %279, %277 : vector<2x128xf32>
    %281 = arith.mulf %272, %203 : vector<2x128xf32>
    %282 = arith.addf %280, %281 : vector<2x128xf32>
    %c0_103 = arith.constant 0 : index
    %c384_104 = arith.constant 384 : index
    %283 = vector.load %arg2[%c0_103, %c384_104] : memref<128x1152xf32, #tpu.memory_space<vmem>>, vector<128x384xf32>
    %cst_105 = arith.constant dense<0.000000e+00> : vector<2x384xf32>
    %284 = tpu.matmul %282, %283, %cst_105 {dimension_numbers = #tpu.dot_dimension_numbers<[1], [0], [0], [1], [0, 0, 1, 1], [], []>} : vector<2x128xf32>, vector<128x384xf32>, vector<2x384xf32> -> vector<2x384xf32>
    %285 = vector.broadcast %4 : vector<1x384xf32> to vector<2x384xf32>
    %286 = arith.addf %284, %285 : vector<2x384xf32>
    %287 = vector.extract_strided_slice %286 {offsets = [0, 0], sizes = [2, 128], strides = [1, 1]} : vector<2x384xf32> to vector<2x128xf32>
    %288 = vector.extract_strided_slice %254 {offsets = [0, 0], sizes = [2, 128], strides = [1, 1]} : vector<2x384xf32> to vector<2x128xf32>
    %289 = arith.addf %287, %288 : vector<2x128xf32>
    %290 = arith.negf %289 : vector<2x128xf32>
    %291 = math.exp %290 : vector<2x128xf32>
    %cst_106 = arith.constant 1.000000e+00 : f32
    %292 = vector.broadcast %cst_106 : f32 to vector<2x128xf32>
    %293 = arith.addf %292, %291 : vector<2x128xf32>
    %294 = arith.divf %292, %293 : vector<2x128xf32>
    %295 = vector.extract_strided_slice %286 {offsets = [0, 128], sizes = [2, 128], strides = [1, 1]} : vector<2x384xf32> to vector<2x128xf32>
    %296 = vector.extract_strided_slice %254 {offsets = [0, 128], sizes = [2, 128], strides = [1, 1]} : vector<2x384xf32> to vector<2x128xf32>
    %297 = arith.addf %295, %296 : vector<2x128xf32>
    %298 = arith.negf %297 : vector<2x128xf32>
    %299 = math.exp %298 : vector<2x128xf32>
    %cst_107 = arith.constant 1.000000e+00 : f32
    %300 = vector.broadcast %cst_107 : f32 to vector<2x128xf32>
    %301 = arith.addf %300, %299 : vector<2x128xf32>
    %302 = arith.divf %300, %301 : vector<2x128xf32>
    %303 = vector.extract_strided_slice %286 {offsets = [0, 256], sizes = [2, 128], strides = [1, 1]} : vector<2x384xf32> to vector<2x128xf32>
    %304 = vector.extract_strided_slice %254 {offsets = [0, 256], sizes = [2, 128], strides = [1, 1]} : vector<2x384xf32> to vector<2x128xf32>
    %305 = arith.mulf %294, %304 : vector<2x128xf32>
    %306 = arith.addf %303, %305 : vector<2x128xf32>
    %307 = math.tanh %306 : vector<2x128xf32>
    %cst_108 = arith.constant 1.000000e+00 : f32
    %308 = vector.broadcast %cst_108 : f32 to vector<2x128xf32>
    %309 = arith.subf %308, %302 : vector<2x128xf32>
    %310 = arith.mulf %309, %307 : vector<2x128xf32>
    %311 = arith.mulf %302, %233 : vector<2x128xf32>
    %312 = arith.addf %310, %311 : vector<2x128xf32>
    %c0_109 = arith.constant 0 : index
    %c0_110 = arith.constant 0 : index
    %313 = vector.load %arg4[%c0_109, %c0_110] : memref<128x256xf32, #tpu.memory_space<vmem>>, vector<128x128xf32>
    %cst_111 = arith.constant dense<0.000000e+00> : vector<2x128xf32>
    %314 = tpu.matmul %312, %313, %cst_111 {dimension_numbers = #tpu.dot_dimension_numbers<[1], [0], [0], [1], [0, 0, 1, 1], [], []>} : vector<2x128xf32>, vector<128x128xf32>, vector<2x128xf32> -> vector<2x128xf32>
    %315 = vector.broadcast %6 : vector<1x128xf32> to vector<2x128xf32>
    %316 = arith.addf %314, %315 : vector<2x128xf32>
    %cst_112 = arith.constant 0.000000e+00 : f32
    %317 = vector.broadcast %cst_112 : f32 to vector<2x128xf32>
    %318 = arith.maximumf %316, %317 : vector<2x128xf32>
    %c0_113 = arith.constant 0 : index
    %c128_114 = arith.constant 128 : index
    %319 = vector.load %arg4[%c0_113, %c128_114] : memref<128x256xf32, #tpu.memory_space<vmem>>, vector<128x128xf32>
    %cst_115 = arith.constant dense<0.000000e+00> : vector<2x128xf32>
    %320 = tpu.matmul %318, %319, %cst_115 {dimension_numbers = #tpu.dot_dimension_numbers<[1], [0], [0], [1], [0, 0, 1, 1], [], []>} : vector<2x128xf32>, vector<128x128xf32>, vector<2x128xf32> -> vector<2x128xf32>
    %321 = vector.broadcast %7 : vector<1x128xf32> to vector<2x128xf32>
    %322 = arith.addf %320, %321 : vector<2x128xf32>
    %c3_116 = arith.constant 3 : index
    %c0_117 = arith.constant 0 : index
    %c0_118 = arith.constant 0 : index
    %323 = vector.load %arg6[%c3_116, %c0_117, %c0_118] : memref<8x2x128xf32, #tpu.memory_space<vmem>>, vector<1x2x128xf32>
    %324 = vector.shape_cast %323 : vector<1x2x128xf32> to vector<2x128xf32>
    %325 = vector.shape_cast %322 : vector<2x128xf32> to vector<1x2x128xf32>
    tpu.vector_store %arg6[%c3_116, %c0_117, %c0_118], %325 {strides = array<i32>} : memref<8x2x128xf32, #tpu.memory_space<vmem>>, vector<1x2x128xf32>,
    %c0_119 = arith.constant 0 : index
    %c0_120 = arith.constant 0 : index
    %326 = vector.load %arg2[%c0_119, %c0_120] : memref<128x1152xf32, #tpu.memory_space<vmem>>, vector<128x384xf32>
    %cst_121 = arith.constant dense<0.000000e+00> : vector<2x384xf32>
    %327 = tpu.matmul %282, %326, %cst_121 {dimension_numbers = #tpu.dot_dimension_numbers<[1], [0], [0], [1], [0, 0, 1, 1], [], []>} : vector<2x128xf32>, vector<128x384xf32>, vector<2x384xf32> -> vector<2x384xf32>
    %328 = vector.broadcast %3 : vector<1x384xf32> to vector<2x384xf32>
    %329 = arith.addf %327, %328 : vector<2x384xf32>
    %c0_122 = arith.constant 0 : index
    %c768_123 = arith.constant 768 : index
    %330 = vector.load %arg2[%c0_122, %c768_123] : memref<128x1152xf32, #tpu.memory_space<vmem>>, vector<128x384xf32>
    %cst_124 = arith.constant dense<0.000000e+00> : vector<2x384xf32>
    %331 = tpu.matmul %312, %330, %cst_124 {dimension_numbers = #tpu.dot_dimension_numbers<[1], [0], [0], [1], [0, 0, 1, 1], [], []>} : vector<2x128xf32>, vector<128x384xf32>, vector<2x384xf32> -> vector<2x384xf32>
    %332 = vector.broadcast %5 : vector<1x384xf32> to vector<2x384xf32>
    %333 = arith.addf %331, %332 : vector<2x384xf32>
    %c4 = arith.constant 4 : index
    %c0_125 = arith.constant 0 : index
    %c0_126 = arith.constant 0 : index
    %334 = vector.load %arg1[%c4, %c0_125, %c0_126] : memref<8x2x384xf32, #tpu.memory_space<vmem>>, vector<1x2x384xf32>
    %335 = vector.shape_cast %334 : vector<1x2x384xf32> to vector<2x384xf32>
    %336 = vector.extract_strided_slice %335 {offsets = [0, 0], sizes = [2, 128], strides = [1, 1]} : vector<2x384xf32> to vector<2x128xf32>
    %337 = vector.extract_strided_slice %329 {offsets = [0, 0], sizes = [2, 128], strides = [1, 1]} : vector<2x384xf32> to vector<2x128xf32>
    %338 = arith.addf %336, %337 : vector<2x128xf32>
    %339 = arith.negf %338 : vector<2x128xf32>
    %340 = math.exp %339 : vector<2x128xf32>
    %cst_127 = arith.constant 1.000000e+00 : f32
    %341 = vector.broadcast %cst_127 : f32 to vector<2x128xf32>
    %342 = arith.addf %341, %340 : vector<2x128xf32>
    %343 = arith.divf %341, %342 : vector<2x128xf32>
    %344 = vector.extract_strided_slice %335 {offsets = [0, 128], sizes = [2, 128], strides = [1, 1]} : vector<2x384xf32> to vector<2x128xf32>
    %345 = vector.extract_strided_slice %329 {offsets = [0, 128], sizes = [2, 128], strides = [1, 1]} : vector<2x384xf32> to vector<2x128xf32>
    %346 = arith.addf %344, %345 : vector<2x128xf32>
    %347 = arith.negf %346 : vector<2x128xf32>
    %348 = math.exp %347 : vector<2x128xf32>
    %cst_128 = arith.constant 1.000000e+00 : f32
    %349 = vector.broadcast %cst_128 : f32 to vector<2x128xf32>
    %350 = arith.addf %349, %348 : vector<2x128xf32>
    %351 = arith.divf %349, %350 : vector<2x128xf32>
    %352 = vector.extract_strided_slice %335 {offsets = [0, 256], sizes = [2, 128], strides = [1, 1]} : vector<2x384xf32> to vector<2x128xf32>
    %353 = vector.extract_strided_slice %329 {offsets = [0, 256], sizes = [2, 128], strides = [1, 1]} : vector<2x384xf32> to vector<2x128xf32>
    %354 = arith.mulf %343, %353 : vector<2x128xf32>
    %355 = arith.addf %352, %354 : vector<2x128xf32>
    %356 = math.tanh %355 : vector<2x128xf32>
    %cst_129 = arith.constant 1.000000e+00 : f32
    %357 = vector.broadcast %cst_129 : f32 to vector<2x128xf32>
    %358 = arith.subf %357, %351 : vector<2x128xf32>
    %359 = arith.mulf %358, %356 : vector<2x128xf32>
    %360 = arith.mulf %351, %282 : vector<2x128xf32>
    %361 = arith.addf %359, %360 : vector<2x128xf32>
    %c0_130 = arith.constant 0 : index
    %c384_131 = arith.constant 384 : index
    %362 = vector.load %arg2[%c0_130, %c384_131] : memref<128x1152xf32, #tpu.memory_space<vmem>>, vector<128x384xf32>
    %cst_132 = arith.constant dense<0.000000e+00> : vector<2x384xf32>
    %363 = tpu.matmul %361, %362, %cst_132 {dimension_numbers = #tpu.dot_dimension_numbers<[1], [0], [0], [1], [0, 0, 1, 1], [], []>} : vector<2x128xf32>, vector<128x384xf32>, vector<2x384xf32> -> vector<2x384xf32>
    %364 = vector.broadcast %4 : vector<1x384xf32> to vector<2x384xf32>
    %365 = arith.addf %363, %364 : vector<2x384xf32>
    %366 = vector.extract_strided_slice %365 {offsets = [0, 0], sizes = [2, 128], strides = [1, 1]} : vector<2x384xf32> to vector<2x128xf32>
    %367 = vector.extract_strided_slice %333 {offsets = [0, 0], sizes = [2, 128], strides = [1, 1]} : vector<2x384xf32> to vector<2x128xf32>
    %368 = arith.addf %366, %367 : vector<2x128xf32>
    %369 = arith.negf %368 : vector<2x128xf32>
    %370 = math.exp %369 : vector<2x128xf32>
    %cst_133 = arith.constant 1.000000e+00 : f32
    %371 = vector.broadcast %cst_133 : f32 to vector<2x128xf32>
    %372 = arith.addf %371, %370 : vector<2x128xf32>
    %373 = arith.divf %371, %372 : vector<2x128xf32>
    %374 = vector.extract_strided_slice %365 {offsets = [0, 128], sizes = [2, 128], strides = [1, 1]} : vector<2x384xf32> to vector<2x128xf32>
    %375 = vector.extract_strided_slice %333 {offsets = [0, 128], sizes = [2, 128], strides = [1, 1]} : vector<2x384xf32> to vector<2x128xf32>
    %376 = arith.addf %374, %375 : vector<2x128xf32>
    %377 = arith.negf %376 : vector<2x128xf32>
    %378 = math.exp %377 : vector<2x128xf32>
    %cst_134 = arith.constant 1.000000e+00 : f32
    %379 = vector.broadcast %cst_134 : f32 to vector<2x128xf32>
    %380 = arith.addf %379, %378 : vector<2x128xf32>
    %381 = arith.divf %379, %380 : vector<2x128xf32>
    %382 = vector.extract_strided_slice %365 {offsets = [0, 256], sizes = [2, 128], strides = [1, 1]} : vector<2x384xf32> to vector<2x128xf32>
    %383 = vector.extract_strided_slice %333 {offsets = [0, 256], sizes = [2, 128], strides = [1, 1]} : vector<2x384xf32> to vector<2x128xf32>
    %384 = arith.mulf %373, %383 : vector<2x128xf32>
    %385 = arith.addf %382, %384 : vector<2x128xf32>
    %386 = math.tanh %385 : vector<2x128xf32>
    %cst_135 = arith.constant 1.000000e+00 : f32
    %387 = vector.broadcast %cst_135 : f32 to vector<2x128xf32>
    %388 = arith.subf %387, %381 : vector<2x128xf32>
    %389 = arith.mulf %388, %386 : vector<2x128xf32>
    %390 = arith.mulf %381, %312 : vector<2x128xf32>
    %391 = arith.addf %389, %390 : vector<2x128xf32>
    %c0_136 = arith.constant 0 : index
    %c0_137 = arith.constant 0 : index
    %392 = vector.load %arg4[%c0_136, %c0_137] : memref<128x256xf32, #tpu.memory_space<vmem>>, vector<128x128xf32>
    %cst_138 = arith.constant dense<0.000000e+00> : vector<2x128xf32>
    %393 = tpu.matmul %391, %392, %cst_138 {dimension_numbers = #tpu.dot_dimension_numbers<[1], [0], [0], [1], [0, 0, 1, 1], [], []>} : vector<2x128xf32>, vector<128x128xf32>, vector<2x128xf32> -> vector<2x128xf32>
    %394 = vector.broadcast %6 : vector<1x128xf32> to vector<2x128xf32>
    %395 = arith.addf %393, %394 : vector<2x128xf32>
    %cst_139 = arith.constant 0.000000e+00 : f32
    %396 = vector.broadcast %cst_139 : f32 to vector<2x128xf32>
    %397 = arith.maximumf %395, %396 : vector<2x128xf32>
    %c0_140 = arith.constant 0 : index
    %c128_141 = arith.constant 128 : index
    %398 = vector.load %arg4[%c0_140, %c128_141] : memref<128x256xf32, #tpu.memory_space<vmem>>, vector<128x128xf32>
    %cst_142 = arith.constant dense<0.000000e+00> : vector<2x128xf32>
    %399 = tpu.matmul %397, %398, %cst_142 {dimension_numbers = #tpu.dot_dimension_numbers<[1], [0], [0], [1], [0, 0, 1, 1], [], []>} : vector<2x128xf32>, vector<128x128xf32>, vector<2x128xf32> -> vector<2x128xf32>
    %400 = vector.broadcast %7 : vector<1x128xf32> to vector<2x128xf32>
    %401 = arith.addf %399, %400 : vector<2x128xf32>
    %c4_143 = arith.constant 4 : index
    %c0_144 = arith.constant 0 : index
    %c0_145 = arith.constant 0 : index
    %402 = vector.load %arg6[%c4_143, %c0_144, %c0_145] : memref<8x2x128xf32, #tpu.memory_space<vmem>>, vector<1x2x128xf32>
    %403 = vector.shape_cast %402 : vector<1x2x128xf32> to vector<2x128xf32>
    %404 = vector.shape_cast %401 : vector<2x128xf32> to vector<1x2x128xf32>
    tpu.vector_store %arg6[%c4_143, %c0_144, %c0_145], %404 {strides = array<i32>} : memref<8x2x128xf32, #tpu.memory_space<vmem>>, vector<1x2x128xf32>,
    %c0_146 = arith.constant 0 : index
    %c0_147 = arith.constant 0 : index
    %405 = vector.load %arg2[%c0_146, %c0_147] : memref<128x1152xf32, #tpu.memory_space<vmem>>, vector<128x384xf32>
    %cst_148 = arith.constant dense<0.000000e+00> : vector<2x384xf32>
    %406 = tpu.matmul %361, %405, %cst_148 {dimension_numbers = #tpu.dot_dimension_numbers<[1], [0], [0], [1], [0, 0, 1, 1], [], []>} : vector<2x128xf32>, vector<128x384xf32>, vector<2x384xf32> -> vector<2x384xf32>
    %407 = vector.broadcast %3 : vector<1x384xf32> to vector<2x384xf32>
    %408 = arith.addf %406, %407 : vector<2x384xf32>
    %c0_149 = arith.constant 0 : index
    %c768_150 = arith.constant 768 : index
    %409 = vector.load %arg2[%c0_149, %c768_150] : memref<128x1152xf32, #tpu.memory_space<vmem>>, vector<128x384xf32>
    %cst_151 = arith.constant dense<0.000000e+00> : vector<2x384xf32>
    %410 = tpu.matmul %391, %409, %cst_151 {dimension_numbers = #tpu.dot_dimension_numbers<[1], [0], [0], [1], [0, 0, 1, 1], [], []>} : vector<2x128xf32>, vector<128x384xf32>, vector<2x384xf32> -> vector<2x384xf32>
    %411 = vector.broadcast %5 : vector<1x384xf32> to vector<2x384xf32>
    %412 = arith.addf %410, %411 : vector<2x384xf32>
    %c5 = arith.constant 5 : index
    %c0_152 = arith.constant 0 : index
    %c0_153 = arith.constant 0 : index
    %413 = vector.load %arg1[%c5, %c0_152, %c0_153] : memref<8x2x384xf32, #tpu.memory_space<vmem>>, vector<1x2x384xf32>
    %414 = vector.shape_cast %413 : vector<1x2x384xf32> to vector<2x384xf32>
    %415 = vector.extract_strided_slice %414 {offsets = [0, 0], sizes = [2, 128], strides = [1, 1]} : vector<2x384xf32> to vector<2x128xf32>
    %416 = vector.extract_strided_slice %408 {offsets = [0, 0], sizes = [2, 128], strides = [1, 1]} : vector<2x384xf32> to vector<2x128xf32>
    %417 = arith.addf %415, %416 : vector<2x128xf32>
    %418 = arith.negf %417 : vector<2x128xf32>
    %419 = math.exp %418 : vector<2x128xf32>
    %cst_154 = arith.constant 1.000000e+00 : f32
    %420 = vector.broadcast %cst_154 : f32 to vector<2x128xf32>
    %421 = arith.addf %420, %419 : vector<2x128xf32>
    %422 = arith.divf %420, %421 : vector<2x128xf32>
    %423 = vector.extract_strided_slice %414 {offsets = [0, 128], sizes = [2, 128], strides = [1, 1]} : vector<2x384xf32> to vector<2x128xf32>
    %424 = vector.extract_strided_slice %408 {offsets = [0, 128], sizes = [2, 128], strides = [1, 1]} : vector<2x384xf32> to vector<2x128xf32>
    %425 = arith.addf %423, %424 : vector<2x128xf32>
    %426 = arith.negf %425 : vector<2x128xf32>
    %427 = math.exp %426 : vector<2x128xf32>
    %cst_155 = arith.constant 1.000000e+00 : f32
    %428 = vector.broadcast %cst_155 : f32 to vector<2x128xf32>
    %429 = arith.addf %428, %427 : vector<2x128xf32>
    %430 = arith.divf %428, %429 : vector<2x128xf32>
    %431 = vector.extract_strided_slice %414 {offsets = [0, 256], sizes = [2, 128], strides = [1, 1]} : vector<2x384xf32> to vector<2x128xf32>
    %432 = vector.extract_strided_slice %408 {offsets = [0, 256], sizes = [2, 128], strides = [1, 1]} : vector<2x384xf32> to vector<2x128xf32>
    %433 = arith.mulf %422, %432 : vector<2x128xf32>
    %434 = arith.addf %431, %433 : vector<2x128xf32>
    %435 = math.tanh %434 : vector<2x128xf32>
    %cst_156 = arith.constant 1.000000e+00 : f32
    %436 = vector.broadcast %cst_156 : f32 to vector<2x128xf32>
    %437 = arith.subf %436, %430 : vector<2x128xf32>
    %438 = arith.mulf %437, %435 : vector<2x128xf32>
    %439 = arith.mulf %430, %361 : vector<2x128xf32>
    %440 = arith.addf %438, %439 : vector<2x128xf32>
    %c0_157 = arith.constant 0 : index
    %c384_158 = arith.constant 384 : index
    %441 = vector.load %arg2[%c0_157, %c384_158] : memref<128x1152xf32, #tpu.memory_space<vmem>>, vector<128x384xf32>
    %cst_159 = arith.constant dense<0.000000e+00> : vector<2x384xf32>
    %442 = tpu.matmul %440, %441, %cst_159 {dimension_numbers = #tpu.dot_dimension_numbers<[1], [0], [0], [1], [0, 0, 1, 1], [], []>} : vector<2x128xf32>, vector<128x384xf32>, vector<2x384xf32> -> vector<2x384xf32>
    %443 = vector.broadcast %4 : vector<1x384xf32> to vector<2x384xf32>
    %444 = arith.addf %442, %443 : vector<2x384xf32>
    %445 = vector.extract_strided_slice %444 {offsets = [0, 0], sizes = [2, 128], strides = [1, 1]} : vector<2x384xf32> to vector<2x128xf32>
    %446 = vector.extract_strided_slice %412 {offsets = [0, 0], sizes = [2, 128], strides = [1, 1]} : vector<2x384xf32> to vector<2x128xf32>
    %447 = arith.addf %445, %446 : vector<2x128xf32>
    %448 = arith.negf %447 : vector<2x128xf32>
    %449 = math.exp %448 : vector<2x128xf32>
    %cst_160 = arith.constant 1.000000e+00 : f32
    %450 = vector.broadcast %cst_160 : f32 to vector<2x128xf32>
    %451 = arith.addf %450, %449 : vector<2x128xf32>
    %452 = arith.divf %450, %451 : vector<2x128xf32>
    %453 = vector.extract_strided_slice %444 {offsets = [0, 128], sizes = [2, 128], strides = [1, 1]} : vector<2x384xf32> to vector<2x128xf32>
    %454 = vector.extract_strided_slice %412 {offsets = [0, 128], sizes = [2, 128], strides = [1, 1]} : vector<2x384xf32> to vector<2x128xf32>
    %455 = arith.addf %453, %454 : vector<2x128xf32>
    %456 = arith.negf %455 : vector<2x128xf32>
    %457 = math.exp %456 : vector<2x128xf32>
    %cst_161 = arith.constant 1.000000e+00 : f32
    %458 = vector.broadcast %cst_161 : f32 to vector<2x128xf32>
    %459 = arith.addf %458, %457 : vector<2x128xf32>
    %460 = arith.divf %458, %459 : vector<2x128xf32>
    %461 = vector.extract_strided_slice %444 {offsets = [0, 256], sizes = [2, 128], strides = [1, 1]} : vector<2x384xf32> to vector<2x128xf32>
    %462 = vector.extract_strided_slice %412 {offsets = [0, 256], sizes = [2, 128], strides = [1, 1]} : vector<2x384xf32> to vector<2x128xf32>
    %463 = arith.mulf %452, %462 : vector<2x128xf32>
    %464 = arith.addf %461, %463 : vector<2x128xf32>
    %465 = math.tanh %464 : vector<2x128xf32>
    %cst_162 = arith.constant 1.000000e+00 : f32
    %466 = vector.broadcast %cst_162 : f32 to vector<2x128xf32>
    %467 = arith.subf %466, %460 : vector<2x128xf32>
    %468 = arith.mulf %467, %465 : vector<2x128xf32>
    %469 = arith.mulf %460, %391 : vector<2x128xf32>
    %470 = arith.addf %468, %469 : vector<2x128xf32>
    %c0_163 = arith.constant 0 : index
    %c0_164 = arith.constant 0 : index
    %471 = vector.load %arg4[%c0_163, %c0_164] : memref<128x256xf32, #tpu.memory_space<vmem>>, vector<128x128xf32>
    %cst_165 = arith.constant dense<0.000000e+00> : vector<2x128xf32>
    %472 = tpu.matmul %470, %471, %cst_165 {dimension_numbers = #tpu.dot_dimension_numbers<[1], [0], [0], [1], [0, 0, 1, 1], [], []>} : vector<2x128xf32>, vector<128x128xf32>, vector<2x128xf32> -> vector<2x128xf32>
    %473 = vector.broadcast %6 : vector<1x128xf32> to vector<2x128xf32>
    %474 = arith.addf %472, %473 : vector<2x128xf32>
    %cst_166 = arith.constant 0.000000e+00 : f32
    %475 = vector.broadcast %cst_166 : f32 to vector<2x128xf32>
    %476 = arith.maximumf %474, %475 : vector<2x128xf32>
    %c0_167 = arith.constant 0 : index
    %c128_168 = arith.constant 128 : index
    %477 = vector.load %arg4[%c0_167, %c128_168] : memref<128x256xf32, #tpu.memory_space<vmem>>, vector<128x128xf32>
    %cst_169 = arith.constant dense<0.000000e+00> : vector<2x128xf32>
    %478 = tpu.matmul %476, %477, %cst_169 {dimension_numbers = #tpu.dot_dimension_numbers<[1], [0], [0], [1], [0, 0, 1, 1], [], []>} : vector<2x128xf32>, vector<128x128xf32>, vector<2x128xf32> -> vector<2x128xf32>
    %479 = vector.broadcast %7 : vector<1x128xf32> to vector<2x128xf32>
    %480 = arith.addf %478, %479 : vector<2x128xf32>
    %c5_170 = arith.constant 5 : index
    %c0_171 = arith.constant 0 : index
    %c0_172 = arith.constant 0 : index
    %481 = vector.load %arg6[%c5_170, %c0_171, %c0_172] : memref<8x2x128xf32, #tpu.memory_space<vmem>>, vector<1x2x128xf32>
    %482 = vector.shape_cast %481 : vector<1x2x128xf32> to vector<2x128xf32>
    %483 = vector.shape_cast %480 : vector<2x128xf32> to vector<1x2x128xf32>
    tpu.vector_store %arg6[%c5_170, %c0_171, %c0_172], %483 {strides = array<i32>} : memref<8x2x128xf32, #tpu.memory_space<vmem>>, vector<1x2x128xf32>,
    %c0_173 = arith.constant 0 : index
    %c0_174 = arith.constant 0 : index
    %484 = vector.load %arg2[%c0_173, %c0_174] : memref<128x1152xf32, #tpu.memory_space<vmem>>, vector<128x384xf32>
    %cst_175 = arith.constant dense<0.000000e+00> : vector<2x384xf32>
    %485 = tpu.matmul %440, %484, %cst_175 {dimension_numbers = #tpu.dot_dimension_numbers<[1], [0], [0], [1], [0, 0, 1, 1], [], []>} : vector<2x128xf32>, vector<128x384xf32>, vector<2x384xf32> -> vector<2x384xf32>
    %486 = vector.broadcast %3 : vector<1x384xf32> to vector<2x384xf32>
    %487 = arith.addf %485, %486 : vector<2x384xf32>
    %c0_176 = arith.constant 0 : index
    %c768_177 = arith.constant 768 : index
    %488 = vector.load %arg2[%c0_176, %c768_177] : memref<128x1152xf32, #tpu.memory_space<vmem>>, vector<128x384xf32>
    %cst_178 = arith.constant dense<0.000000e+00> : vector<2x384xf32>
    %489 = tpu.matmul %470, %488, %cst_178 {dimension_numbers = #tpu.dot_dimension_numbers<[1], [0], [0], [1], [0, 0, 1, 1], [], []>} : vector<2x128xf32>, vector<128x384xf32>, vector<2x384xf32> -> vector<2x384xf32>
    %490 = vector.broadcast %5 : vector<1x384xf32> to vector<2x384xf32>
    %491 = arith.addf %489, %490 : vector<2x384xf32>
    %c6 = arith.constant 6 : index
    %c0_179 = arith.constant 0 : index
    %c0_180 = arith.constant 0 : index
    %492 = vector.load %arg1[%c6, %c0_179, %c0_180] : memref<8x2x384xf32, #tpu.memory_space<vmem>>, vector<1x2x384xf32>
    %493 = vector.shape_cast %492 : vector<1x2x384xf32> to vector<2x384xf32>
    %494 = vector.extract_strided_slice %493 {offsets = [0, 0], sizes = [2, 128], strides = [1, 1]} : vector<2x384xf32> to vector<2x128xf32>
    %495 = vector.extract_strided_slice %487 {offsets = [0, 0], sizes = [2, 128], strides = [1, 1]} : vector<2x384xf32> to vector<2x128xf32>
    %496 = arith.addf %494, %495 : vector<2x128xf32>
    %497 = arith.negf %496 : vector<2x128xf32>
    %498 = math.exp %497 : vector<2x128xf32>
    %cst_181 = arith.constant 1.000000e+00 : f32
    %499 = vector.broadcast %cst_181 : f32 to vector<2x128xf32>
    %500 = arith.addf %499, %498 : vector<2x128xf32>
    %501 = arith.divf %499, %500 : vector<2x128xf32>
    %502 = vector.extract_strided_slice %493 {offsets = [0, 128], sizes = [2, 128], strides = [1, 1]} : vector<2x384xf32> to vector<2x128xf32>
    %503 = vector.extract_strided_slice %487 {offsets = [0, 128], sizes = [2, 128], strides = [1, 1]} : vector<2x384xf32> to vector<2x128xf32>
    %504 = arith.addf %502, %503 : vector<2x128xf32>
    %505 = arith.negf %504 : vector<2x128xf32>
    %506 = math.exp %505 : vector<2x128xf32>
    %cst_182 = arith.constant 1.000000e+00 : f32
    %507 = vector.broadcast %cst_182 : f32 to vector<2x128xf32>
    %508 = arith.addf %507, %506 : vector<2x128xf32>
    %509 = arith.divf %507, %508 : vector<2x128xf32>
    %510 = vector.extract_strided_slice %493 {offsets = [0, 256], sizes = [2, 128], strides = [1, 1]} : vector<2x384xf32> to vector<2x128xf32>
    %511 = vector.extract_strided_slice %487 {offsets = [0, 256], sizes = [2, 128], strides = [1, 1]} : vector<2x384xf32> to vector<2x128xf32>
    %512 = arith.mulf %501, %511 : vector<2x128xf32>
    %513 = arith.addf %510, %512 : vector<2x128xf32>
    %514 = math.tanh %513 : vector<2x128xf32>
    %cst_183 = arith.constant 1.000000e+00 : f32
    %515 = vector.broadcast %cst_183 : f32 to vector<2x128xf32>
    %516 = arith.subf %515, %509 : vector<2x128xf32>
    %517 = arith.mulf %516, %514 : vector<2x128xf32>
    %518 = arith.mulf %509, %440 : vector<2x128xf32>
    %519 = arith.addf %517, %518 : vector<2x128xf32>
    %c0_184 = arith.constant 0 : index
    %c384_185 = arith.constant 384 : index
    %520 = vector.load %arg2[%c0_184, %c384_185] : memref<128x1152xf32, #tpu.memory_space<vmem>>, vector<128x384xf32>
    %cst_186 = arith.constant dense<0.000000e+00> : vector<2x384xf32>
    %521 = tpu.matmul %519, %520, %cst_186 {dimension_numbers = #tpu.dot_dimension_numbers<[1], [0], [0], [1], [0, 0, 1, 1], [], []>} : vector<2x128xf32>, vector<128x384xf32>, vector<2x384xf32> -> vector<2x384xf32>
    %522 = vector.broadcast %4 : vector<1x384xf32> to vector<2x384xf32>
    %523 = arith.addf %521, %522 : vector<2x384xf32>
    %524 = vector.extract_strided_slice %523 {offsets = [0, 0], sizes = [2, 128], strides = [1, 1]} : vector<2x384xf32> to vector<2x128xf32>
    %525 = vector.extract_strided_slice %491 {offsets = [0, 0], sizes = [2, 128], strides = [1, 1]} : vector<2x384xf32> to vector<2x128xf32>
    %526 = arith.addf %524, %525 : vector<2x128xf32>
    %527 = arith.negf %526 : vector<2x128xf32>
    %528 = math.exp %527 : vector<2x128xf32>
    %cst_187 = arith.constant 1.000000e+00 : f32
    %529 = vector.broadcast %cst_187 : f32 to vector<2x128xf32>
    %530 = arith.addf %529, %528 : vector<2x128xf32>
    %531 = arith.divf %529, %530 : vector<2x128xf32>
    %532 = vector.extract_strided_slice %523 {offsets = [0, 128], sizes = [2, 128], strides = [1, 1]} : vector<2x384xf32> to vector<2x128xf32>
    %533 = vector.extract_strided_slice %491 {offsets = [0, 128], sizes = [2, 128], strides = [1, 1]} : vector<2x384xf32> to vector<2x128xf32>
    %534 = arith.addf %532, %533 : vector<2x128xf32>
    %535 = arith.negf %534 : vector<2x128xf32>
    %536 = math.exp %535 : vector<2x128xf32>
    %cst_188 = arith.constant 1.000000e+00 : f32
    %537 = vector.broadcast %cst_188 : f32 to vector<2x128xf32>
    %538 = arith.addf %537, %536 : vector<2x128xf32>
    %539 = arith.divf %537, %538 : vector<2x128xf32>
    %540 = vector.extract_strided_slice %523 {offsets = [0, 256], sizes = [2, 128], strides = [1, 1]} : vector<2x384xf32> to vector<2x128xf32>
    %541 = vector.extract_strided_slice %491 {offsets = [0, 256], sizes = [2, 128], strides = [1, 1]} : vector<2x384xf32> to vector<2x128xf32>
    %542 = arith.mulf %531, %541 : vector<2x128xf32>
    %543 = arith.addf %540, %542 : vector<2x128xf32>
    %544 = math.tanh %543 : vector<2x128xf32>
    %cst_189 = arith.constant 1.000000e+00 : f32
    %545 = vector.broadcast %cst_189 : f32 to vector<2x128xf32>
    %546 = arith.subf %545, %539 : vector<2x128xf32>
    %547 = arith.mulf %546, %544 : vector<2x128xf32>
    %548 = arith.mulf %539, %470 : vector<2x128xf32>
    %549 = arith.addf %547, %548 : vector<2x128xf32>
    %c0_190 = arith.constant 0 : index
    %c0_191 = arith.constant 0 : index
    %550 = vector.load %arg4[%c0_190, %c0_191] : memref<128x256xf32, #tpu.memory_space<vmem>>, vector<128x128xf32>
    %cst_192 = arith.constant dense<0.000000e+00> : vector<2x128xf32>
    %551 = tpu.matmul %549, %550, %cst_192 {dimension_numbers = #tpu.dot_dimension_numbers<[1], [0], [0], [1], [0, 0, 1, 1], [], []>} : vector<2x128xf32>, vector<128x128xf32>, vector<2x128xf32> -> vector<2x128xf32>
    %552 = vector.broadcast %6 : vector<1x128xf32> to vector<2x128xf32>
    %553 = arith.addf %551, %552 : vector<2x128xf32>
    %cst_193 = arith.constant 0.000000e+00 : f32
    %554 = vector.broadcast %cst_193 : f32 to vector<2x128xf32>
    %555 = arith.maximumf %553, %554 : vector<2x128xf32>
    %c0_194 = arith.constant 0 : index
    %c128_195 = arith.constant 128 : index
    %556 = vector.load %arg4[%c0_194, %c128_195] : memref<128x256xf32, #tpu.memory_space<vmem>>, vector<128x128xf32>
    %cst_196 = arith.constant dense<0.000000e+00> : vector<2x128xf32>
    %557 = tpu.matmul %555, %556, %cst_196 {dimension_numbers = #tpu.dot_dimension_numbers<[1], [0], [0], [1], [0, 0, 1, 1], [], []>} : vector<2x128xf32>, vector<128x128xf32>, vector<2x128xf32> -> vector<2x128xf32>
    %558 = vector.broadcast %7 : vector<1x128xf32> to vector<2x128xf32>
    %559 = arith.addf %557, %558 : vector<2x128xf32>
    %c6_197 = arith.constant 6 : index
    %c0_198 = arith.constant 0 : index
    %c0_199 = arith.constant 0 : index
    %560 = vector.load %arg6[%c6_197, %c0_198, %c0_199] : memref<8x2x128xf32, #tpu.memory_space<vmem>>, vector<1x2x128xf32>
    %561 = vector.shape_cast %560 : vector<1x2x128xf32> to vector<2x128xf32>
    %562 = vector.shape_cast %559 : vector<2x128xf32> to vector<1x2x128xf32>
    tpu.vector_store %arg6[%c6_197, %c0_198, %c0_199], %562 {strides = array<i32>} : memref<8x2x128xf32, #tpu.memory_space<vmem>>, vector<1x2x128xf32>,
    %c0_200 = arith.constant 0 : index
    %c0_201 = arith.constant 0 : index
    %563 = vector.load %arg2[%c0_200, %c0_201] : memref<128x1152xf32, #tpu.memory_space<vmem>>, vector<128x384xf32>
    %cst_202 = arith.constant dense<0.000000e+00> : vector<2x384xf32>
    %564 = tpu.matmul %519, %563, %cst_202 {dimension_numbers = #tpu.dot_dimension_numbers<[1], [0], [0], [1], [0, 0, 1, 1], [], []>} : vector<2x128xf32>, vector<128x384xf32>, vector<2x384xf32> -> vector<2x384xf32>
    %565 = vector.broadcast %3 : vector<1x384xf32> to vector<2x384xf32>
    %566 = arith.addf %564, %565 : vector<2x384xf32>
    %c0_203 = arith.constant 0 : index
    %c768_204 = arith.constant 768 : index
    %567 = vector.load %arg2[%c0_203, %c768_204] : memref<128x1152xf32, #tpu.memory_space<vmem>>, vector<128x384xf32>
    %cst_205 = arith.constant dense<0.000000e+00> : vector<2x384xf32>
    %568 = tpu.matmul %549, %567, %cst_205 {dimension_numbers = #tpu.dot_dimension_numbers<[1], [0], [0], [1], [0, 0, 1, 1], [], []>} : vector<2x128xf32>, vector<128x384xf32>, vector<2x384xf32> -> vector<2x384xf32>
    %569 = vector.broadcast %5 : vector<1x384xf32> to vector<2x384xf32>
    %570 = arith.addf %568, %569 : vector<2x384xf32>
    %c7 = arith.constant 7 : index
    %c0_206 = arith.constant 0 : index
    %c0_207 = arith.constant 0 : index
    %571 = vector.load %arg1[%c7, %c0_206, %c0_207] : memref<8x2x384xf32, #tpu.memory_space<vmem>>, vector<1x2x384xf32>
    %572 = vector.shape_cast %571 : vector<1x2x384xf32> to vector<2x384xf32>
    %573 = vector.extract_strided_slice %572 {offsets = [0, 0], sizes = [2, 128], strides = [1, 1]} : vector<2x384xf32> to vector<2x128xf32>
    %574 = vector.extract_strided_slice %566 {offsets = [0, 0], sizes = [2, 128], strides = [1, 1]} : vector<2x384xf32> to vector<2x128xf32>
    %575 = arith.addf %573, %574 : vector<2x128xf32>
    %576 = arith.negf %575 : vector<2x128xf32>
    %577 = math.exp %576 : vector<2x128xf32>
    %cst_208 = arith.constant 1.000000e+00 : f32
    %578 = vector.broadcast %cst_208 : f32 to vector<2x128xf32>
    %579 = arith.addf %578, %577 : vector<2x128xf32>
    %580 = arith.divf %578, %579 : vector<2x128xf32>
    %581 = vector.extract_strided_slice %572 {offsets = [0, 128], sizes = [2, 128], strides = [1, 1]} : vector<2x384xf32> to vector<2x128xf32>
    %582 = vector.extract_strided_slice %566 {offsets = [0, 128], sizes = [2, 128], strides = [1, 1]} : vector<2x384xf32> to vector<2x128xf32>
    %583 = arith.addf %581, %582 : vector<2x128xf32>
    %584 = arith.negf %583 : vector<2x128xf32>
    %585 = math.exp %584 : vector<2x128xf32>
    %cst_209 = arith.constant 1.000000e+00 : f32
    %586 = vector.broadcast %cst_209 : f32 to vector<2x128xf32>
    %587 = arith.addf %586, %585 : vector<2x128xf32>
    %588 = arith.divf %586, %587 : vector<2x128xf32>
    %589 = vector.extract_strided_slice %572 {offsets = [0, 256], sizes = [2, 128], strides = [1, 1]} : vector<2x384xf32> to vector<2x128xf32>
    %590 = vector.extract_strided_slice %566 {offsets = [0, 256], sizes = [2, 128], strides = [1, 1]} : vector<2x384xf32> to vector<2x128xf32>
    %591 = arith.mulf %580, %590 : vector<2x128xf32>
    %592 = arith.addf %589, %591 : vector<2x128xf32>
    %593 = math.tanh %592 : vector<2x128xf32>
    %cst_210 = arith.constant 1.000000e+00 : f32
    %594 = vector.broadcast %cst_210 : f32 to vector<2x128xf32>
    %595 = arith.subf %594, %588 : vector<2x128xf32>
    %596 = arith.mulf %595, %593 : vector<2x128xf32>
    %597 = arith.mulf %588, %519 : vector<2x128xf32>
    %598 = arith.addf %596, %597 : vector<2x128xf32>
    %c0_211 = arith.constant 0 : index
    %c384_212 = arith.constant 384 : index
    %599 = vector.load %arg2[%c0_211, %c384_212] : memref<128x1152xf32, #tpu.memory_space<vmem>>, vector<128x384xf32>
    %cst_213 = arith.constant dense<0.000000e+00> : vector<2x384xf32>
    %600 = tpu.matmul %598, %599, %cst_213 {dimension_numbers = #tpu.dot_dimension_numbers<[1], [0], [0], [1], [0, 0, 1, 1], [], []>} : vector<2x128xf32>, vector<128x384xf32>, vector<2x384xf32> -> vector<2x384xf32>
    %601 = vector.broadcast %4 : vector<1x384xf32> to vector<2x384xf32>
    %602 = arith.addf %600, %601 : vector<2x384xf32>
    %603 = vector.extract_strided_slice %602 {offsets = [0, 0], sizes = [2, 128], strides = [1, 1]} : vector<2x384xf32> to vector<2x128xf32>
    %604 = vector.extract_strided_slice %570 {offsets = [0, 0], sizes = [2, 128], strides = [1, 1]} : vector<2x384xf32> to vector<2x128xf32>
    %605 = arith.addf %603, %604 : vector<2x128xf32>
    %606 = arith.negf %605 : vector<2x128xf32>
    %607 = math.exp %606 : vector<2x128xf32>
    %cst_214 = arith.constant 1.000000e+00 : f32
    %608 = vector.broadcast %cst_214 : f32 to vector<2x128xf32>
    %609 = arith.addf %608, %607 : vector<2x128xf32>
    %610 = arith.divf %608, %609 : vector<2x128xf32>
    %611 = vector.extract_strided_slice %602 {offsets = [0, 128], sizes = [2, 128], strides = [1, 1]} : vector<2x384xf32> to vector<2x128xf32>
    %612 = vector.extract_strided_slice %570 {offsets = [0, 128], sizes = [2, 128], strides = [1, 1]} : vector<2x384xf32> to vector<2x128xf32>
    %613 = arith.addf %611, %612 : vector<2x128xf32>
    %614 = arith.negf %613 : vector<2x128xf32>
    %615 = math.exp %614 : vector<2x128xf32>
    %cst_215 = arith.constant 1.000000e+00 : f32
    %616 = vector.broadcast %cst_215 : f32 to vector<2x128xf32>
    %617 = arith.addf %616, %615 : vector<2x128xf32>
    %618 = arith.divf %616, %617 : vector<2x128xf32>
    %619 = vector.extract_strided_slice %602 {offsets = [0, 256], sizes = [2, 128], strides = [1, 1]} : vector<2x384xf32> to vector<2x128xf32>
    %620 = vector.extract_strided_slice %570 {offsets = [0, 256], sizes = [2, 128], strides = [1, 1]} : vector<2x384xf32> to vector<2x128xf32>
    %621 = arith.mulf %610, %620 : vector<2x128xf32>
    %622 = arith.addf %619, %621 : vector<2x128xf32>
    %623 = math.tanh %622 : vector<2x128xf32>
    %cst_216 = arith.constant 1.000000e+00 : f32
    %624 = vector.broadcast %cst_216 : f32 to vector<2x128xf32>
    %625 = arith.subf %624, %618 : vector<2x128xf32>
    %626 = arith.mulf %625, %623 : vector<2x128xf32>
    %627 = arith.mulf %618, %549 : vector<2x128xf32>
    %628 = arith.addf %626, %627 : vector<2x128xf32>
    %c0_217 = arith.constant 0 : index
    %c0_218 = arith.constant 0 : index
    %629 = vector.load %arg4[%c0_217, %c0_218] : memref<128x256xf32, #tpu.memory_space<vmem>>, vector<128x128xf32>
    %cst_219 = arith.constant dense<0.000000e+00> : vector<2x128xf32>
    %630 = tpu.matmul %628, %629, %cst_219 {dimension_numbers = #tpu.dot_dimension_numbers<[1], [0], [0], [1], [0, 0, 1, 1], [], []>} : vector<2x128xf32>, vector<128x128xf32>, vector<2x128xf32> -> vector<2x128xf32>
    %631 = vector.broadcast %6 : vector<1x128xf32> to vector<2x128xf32>
    %632 = arith.addf %630, %631 : vector<2x128xf32>
    %cst_220 = arith.constant 0.000000e+00 : f32
    %633 = vector.broadcast %cst_220 : f32 to vector<2x128xf32>
    %634 = arith.maximumf %632, %633 : vector<2x128xf32>
    %c0_221 = arith.constant 0 : index
    %c128_222 = arith.constant 128 : index
    %635 = vector.load %arg4[%c0_221, %c128_222] : memref<128x256xf32, #tpu.memory_space<vmem>>, vector<128x128xf32>
    %cst_223 = arith.constant dense<0.000000e+00> : vector<2x128xf32>
    %636 = tpu.matmul %634, %635, %cst_223 {dimension_numbers = #tpu.dot_dimension_numbers<[1], [0], [0], [1], [0, 0, 1, 1], [], []>} : vector<2x128xf32>, vector<128x128xf32>, vector<2x128xf32> -> vector<2x128xf32>
    %637 = vector.broadcast %7 : vector<1x128xf32> to vector<2x128xf32>
    %638 = arith.addf %636, %637 : vector<2x128xf32>
    %c7_224 = arith.constant 7 : index
    %c0_225 = arith.constant 0 : index
    %c0_226 = arith.constant 0 : index
    %639 = vector.load %arg6[%c7_224, %c0_225, %c0_226] : memref<8x2x128xf32, #tpu.memory_space<vmem>>, vector<1x2x128xf32>
    %640 = vector.shape_cast %639 : vector<1x2x128xf32> to vector<2x128xf32>
    %641 = vector.shape_cast %638 : vector<2x128xf32> to vector<1x2x128xf32>
    tpu.vector_store %arg6[%c7_224, %c0_225, %c0_226], %641 {strides = array<i32>} : memref<8x2x128xf32, #tpu.memory_space<vmem>>, vector<1x2x128xf32>,
    %c0_227 = arith.constant 0 : index
    %c0_228 = arith.constant 0 : index
    %642 = vector.load %arg8[%c0_227, %c0_228] : memref<2x128xf32, #tpu.memory_space<vmem>>, vector<2x128xf32>
    tpu.vector_store %arg8[%c0_227, %c0_228], %598 {strides = array<i32>} : memref<2x128xf32, #tpu.memory_space<vmem>>, vector<2x128xf32>,
    %c0_229 = arith.constant 0 : index
    %c0_230 = arith.constant 0 : index
    %643 = vector.load %arg9[%c0_229, %c0_230] : memref<2x128xf32, #tpu.memory_space<vmem>>, vector<2x128xf32>
    tpu.vector_store %arg9[%c0_229, %c0_230], %628 {strides = array<i32>} : memref<2x128xf32, #tpu.memory_space<vmem>>, vector<2x128xf32>,
    %c0_i32_231 = arith.constant 0 : i32
    %644 = arith.cmpi eq, %arg0, %c0_i32_231 : i32
    %645 = arith.extui %644 : i1 to i32
    %c0_i32_232 = arith.constant 0 : i32
    %646 = arith.cmpi ne, %645, %c0_i32_232 : i32
    scf.if %646 {
      %c0_233 = arith.constant 0 : index
      %c0_234 = arith.constant 0 : index
      %c0_235 = arith.constant 0 : index
      %647 = vector.load %arg7[%c0_233, %c0_234, %c0_235] : memref<2x2x128xf32, #tpu.memory_space<vmem>>, vector<1x2x128xf32>
      %648 = vector.shape_cast %647 : vector<1x2x128xf32> to vector<2x128xf32>
      %649 = vector.shape_cast %598 : vector<2x128xf32> to vector<1x2x128xf32>
      tpu.vector_store %arg7[%c0_233, %c0_234, %c0_235], %649 {strides = array<i32>} : memref<2x2x128xf32, #tpu.memory_space<vmem>>, vector<1x2x128xf32>,
      %c1_236 = arith.constant 1 : index
      %c0_237 = arith.constant 0 : index
      %c0_238 = arith.constant 0 : index
      %650 = vector.load %arg7[%c1_236, %c0_237, %c0_238] : memref<2x2x128xf32, #tpu.memory_space<vmem>>, vector<1x2x128xf32>
      %651 = vector.shape_cast %650 : vector<1x2x128xf32> to vector<2x128xf32>
      %652 = vector.shape_cast %628 : vector<2x128xf32> to vector<1x2x128xf32>
      tpu.vector_store %arg7[%c1_236, %c0_237, %c0_238], %652 {strides = array<i32>} : memref<2x2x128xf32, #tpu.memory_space<vmem>>, vector<1x2x128xf32>,
    } else {
    }
    return
  }
  func.func @transform_0(%arg0: i32) -> (i32, i32, i32) {
    %c0_i32 = arith.constant 0 : i32
    %c0_i32_0 = arith.constant 0 : i32
    %c0_i32_1 = arith.constant 0 : i32
    return %arg0, %c0_i32, %c0_i32_0 : i32, i32, i32
  }
  func.func @transform_1(%arg0: i32) -> (i32, i32) {
    %c0_i32 = arith.constant 0 : i32
    %c0_i32_0 = arith.constant 0 : i32
    %c0_i32_1 = arith.constant 0 : i32
    return %c0_i32, %c0_i32_0 : i32, i32
  }
  func.func @transform_2(%arg0: i32) -> (i32, i32) {
    %c0_i32 = arith.constant 0 : i32
    %c0_i32_0 = arith.constant 0 : i32
    %c0_i32_1 = arith.constant 0 : i32
    return %c0_i32, %c0_i32_0 : i32, i32
  }
  func.func @transform_3(%arg0: i32) -> (i32, i32) {
    %c0_i32 = arith.constant 0 : i32
    %c0_i32_0 = arith.constant 0 : i32
    %c0_i32_1 = arith.constant 0 : i32
    return %c0_i32, %c0_i32_0 : i32, i32
  }
  func.func @transform_4(%arg0: i32) -> (i32, i32) {
    %c0_i32 = arith.constant 0 : i32
    %c0_i32_0 = arith.constant 0 : i32
    %c0_i32_1 = arith.constant 0 : i32
    return %c0_i32, %c0_i32_0 : i32, i32
  }
  func.func @transform_5(%arg0: i32) -> (i32, i32, i32) {
    %c0_i32 = arith.constant 0 : i32
    %c0_i32_0 = arith.constant 0 : i32
    %c0_i32_1 = arith.constant 0 : i32
    return %arg0, %c0_i32, %c0_i32_0 : i32, i32, i32
  }
  func.func @transform_6(%arg0: i32) -> (i32, i32, i32) {
    %c0_i32 = arith.constant 0 : i32
    %c0_i32_0 = arith.constant 0 : i32
    %c0_i32_1 = arith.constant 0 : i32
    %c0_i32_2 = arith.constant 0 : i32
    return %c0_i32, %c0_i32_0, %c0_i32_1 : i32, i32, i32
  }
}

</mosaic_0001>

<llo_original>
// kernel: tpu_custom_call.1
$region0: #{tpu_custom_call.1}
  #allocation0 [shape = 'u32[]', space=smem, size = 0x4, offset = 0x4, fixed_abs, tag = 'smem constant byte address 0x4 - core index']
  #allocation1 [shape = 'u32[144,128]{1,0:T(1,128)}', space=vmem, size = 0x12000, scoped, tag = 'internal scratch']
  #allocation2 [shape = 'f32[2,128]{1,0:T(2,128)}', space=vmem, size = 0x400, scoped, tag = 'scratch operand']
  #allocation3 [shape = 'f32[2,128]{1,0:T(2,128)}', space=vmem, size = 0x400, scoped, tag = 'scratch operand']
  %s0 = inlined_call_operand.hbm [shape: f32[8,2,384], index: 0, kind: input, shape index: {}]
  %s1 = inlined_call_operand.hbm [shape: f32[128,1152], index: 1, kind: input, shape index: {}]
  %s2 = inlined_call_operand.hbm [shape: f32[1,1152], index: 2, kind: input, shape index: {}]
  %s3 = inlined_call_operand.hbm [shape: f32[128,256], index: 3, kind: input, shape index: {}]
  %s4 = inlined_call_operand.vmem [shape: f32[1,256], index: 4, kind: input, shape index: {}]
  %s5 = inlined_call_operand.hbm [shape: f32[8,2,128], index: 5, kind: output, shape index: {0}]
  %s6 = inlined_call_operand.hbm [shape: f32[2,2,128], index: 6, kind: output, shape index: {1}]
  %7 = xla_tuple %s5, %s6
  %s8 = sld [smem:[#allocation0]]
  $region62: #{tpu_custom_call.1} parent=0
    _
  %s10 = ssub.s32 1, %s8
  %s11 = scalar_select 0, %s10, %s8
  $region1: #{tpu_custom_call.1} parent=0
    #allocation4 [shape = 'u8[24576]{0}', space=vmem, size = 0x6000, scoped, tag = 'input window, operand 0, single buffered']
    #allocation5 [shape = 's32[1]{0}', space=sflag, size = 0x4, scoped, tag = 'scoped memory for tpu_custom_call.1']
    #allocation6 [shape = 's32[1]{0}', space=sflag, size = 0x4, scoped, tag = 'scoped memory for tpu_custom_call.1']
    #allocation7 [shape = 'u8[589824]{0}', space=vmem, size = 0x90000, scoped, tag = 'input window, operand 1, single buffered']
    #allocation8 [shape = 's32[1]{0}', space=sflag, size = 0x4, scoped, tag = 'scoped memory for tpu_custom_call.1']
    #allocation9 [shape = 'u8[4608]{0}', space=vmem, size = 0x1400, scoped, tag = 'input window, operand 2, single buffered']
    #allocation10 [shape = 'u8[131072]{0}', space=vmem, size = 0x20000, scoped, tag = 'input window, operand 3, single buffered']
    #allocation11 [shape = 's32[1]{0}', space=sflag, size = 0x4, scoped, tag = 'scoped memory for tpu_custom_call.1']
    #allocation12 [shape = 'u8[8192]{0}', space=vmem, size = 0x2000, scoped, tag = 'output window, operand 0, single buffered']
    #allocation13 [shape = 'u8[2048]{0}', space=vmem, size = 0x800, scoped, tag = 'output window, operand 1, single buffered']
    #allocation14 [shape = 's32[1]{0}', space=sflag, size = 0x4, scoped, tag = 'scoped memory for tpu_custom_call.1']
    %12 = vsyncpa [#allocation5], 0
    %13 = vsyncpa [#allocation8], 0
    %14 = vsyncpa [#allocation11], 0
    %15 = vsyncpa [#allocation6], 0
    %16 = vsyncpa [#allocation14], 0
    // Predicated region
    $region2: #{tpu_custom_call.1} parent=1 // pred_check
      _
    $region3: #{tpu_custom_call.1} parent=1 // pred_check_branch
      %18 = sbr.rel (0) target = $region5
    $region4: #{tpu_custom_call.1} parent=1 // pred_region
      %s20 = ssub.s32 768, 768
      %21 = vsyncadd [#allocation5], %s20
      %s22 = sshll.u32 [#allocation4], 4
      %s23 = int_to_ptr.vmem [resolvable:$true] %s22
      %28 = dma.hbm_to_vmem [thread:$0]  %s0, 768, %s23, [#allocation5], 96, 96, 6
    $region5: #{tpu_custom_call.1} parent=1 // pred_fallthru
      _
    // Predicated region
    $region6: #{tpu_custom_call.1} parent=1 // pred_check
      _
    $region7: #{tpu_custom_call.1} parent=1 // pred_check_branch
      %30 = sbr.rel (0) target = $region9
    $region8: #{tpu_custom_call.1} parent=1 // pred_region
      %s32 = ssub.s32 18432, 18432
      %33 = vsyncadd [#allocation8], %s32
      %s34 = sshll.u32 [#allocation7], 4
      %s35 = int_to_ptr.vmem [resolvable:$true] %s34
      %40 = dma.hbm_to_vmem [thread:$0]  %s1, 18432, %s35, [#allocation8], 1152, 1152, 72
    $region9: #{tpu_custom_call.1} parent=1 // pred_fallthru
      _
    // Predicated region
    $region10: #{tpu_custom_call.1} parent=1 // pred_check
      _
    $region11: #{tpu_custom_call.1} parent=1 // pred_check_branch
      %42 = sbr.rel (0) target = $region13
    $region12: #{tpu_custom_call.1} parent=1 // pred_region
      %s44 = ssub.s32 144, 144
      %45 = vsyncadd [#allocation8], %s44
      %s47 = sshll.u32 [#allocation9], 4
      %s48 = int_to_ptr.vmem [resolvable:$true] %s47
      %50 = dma.hbm_to_vmem [thread:$0]  %s2, 144, %s48, [#allocation8]
    $region13: #{tpu_custom_call.1} parent=1 // pred_fallthru
      _
    // Predicated region
    $region14: #{tpu_custom_call.1} parent=1 // pred_check
      _
    $region15: #{tpu_custom_call.1} parent=1 // pred_check_branch
      %52 = sbr.rel (0) target = $region17
    $region16: #{tpu_custom_call.1} parent=1 // pred_region
      %s54 = ssub.s32 4096, 4096
      %55 = vsyncadd [#allocation11], %s54
      %s56 = sshll.u32 [#allocation10], 4
      %s57 = int_to_ptr.vmem [resolvable:$true] %s56
      %62 = dma.hbm_to_vmem [thread:$0]  %s3, 4096, %s57, [#allocation11], 256, 256, 16
    $region17: #{tpu_custom_call.1} parent=1 // pred_fallthru
      _
    // Predicated region
    $region18: #{tpu_custom_call.1} parent=1 // pred_check
      _
    $region19: #{tpu_custom_call.1} parent=1 // pred_check_branch
      %64 = sbr.rel (0) target = $region21
    $region20: #{tpu_custom_call.1} parent=1 // pred_region
      _
    $region21: #{tpu_custom_call.1} parent=1 // pred_fallthru
      _
    // Predicated region
    $region22: #{tpu_custom_call.1} parent=1 // pred_check
      _
    $region23: #{tpu_custom_call.1} parent=1 // pred_check_branch
      %66 = sbr.rel (0) target = $region25
    $region24: #{tpu_custom_call.1} parent=1 // pred_region
      %67 = dma.done [#allocation5], 768
    $region25: #{tpu_custom_call.1} parent=1 // pred_fallthru
      _
    // Predicated region
    $region26: #{tpu_custom_call.1} parent=1 // pred_check
      _
    $region27: #{tpu_custom_call.1} parent=1 // pred_check_branch
      %69 = sbr.rel (0) target = $region29
    $region28: #{tpu_custom_call.1} parent=1 // pred_region
      %70 = dma.done [#allocation8], 18432
    $region29: #{tpu_custom_call.1} parent=1 // pred_fallthru
      _
    // Predicated region
    $region30: #{tpu_custom_call.1} parent=1 // pred_check
      _
    $region31: #{tpu_custom_call.1} parent=1 // pred_check_branch
      %72 = sbr.rel (0) target = $region33
    $region32: #{tpu_custom_call.1} parent=1 // pred_region
      %73 = dma.done [#allocation8], 144
    $region33: #{tpu_custom_call.1} parent=1 // pred_fallthru
      _
    // Predicated region
    $region34: #{tpu_custom_call.1} parent=1 // pred_check
      _
    $region35: #{tpu_custom_call.1} parent=1 // pred_check_branch
      %75 = sbr.rel (0) target = $region37
    $region36: #{tpu_custom_call.1} parent=1 // pred_region
      %76 = dma.done [#allocation11], 4096
    $region37: #{tpu_custom_call.1} parent=1 // pred_fallthru
      _
    %p77 = scmp.eq.s32.totalorder 0, 0
    // Predicated region
    $region38: #{tpu_custom_call.1} parent=1 // pred_check
      %p78 = pneg %p77
    $region39: #{tpu_custom_call.1} parent=1 // pred_check_branch
      %80 = sbr.rel (%p78) target = $region41
    $region40: #{tpu_custom_call.1} parent=1 // pred_region
      %81 = vst [vmem:[#allocation2] sm:$0x3] 0.0
      %82 = vst [vmem:[#allocation3] sm:$0x3] 0.0
    $region41: #{tpu_custom_call.1} parent=1 // pred_fallthru
      _
    %v83 = vld [vmem:[#allocation9] sm:$0x7]
    %v84 = vld [vmem:[#allocation9 + $0x3] sm:$0x7]
    %v85 = vld [vmem:[#allocation9 + $0x6] sm:$0x7]
    %v86 = vld [vmem:[%s4] sm:$0x1]
    %v87 = vld [vmem:[%s4 + $0x1] sm:$0x1]
    %v88 = vld [vmem:[#allocation2] sm:$0x3]
    %v89 = vld [vmem:[#allocation3] sm:$0x3]
    %v90 = vld [vmem:[#allocation7] sm:$0xff]
    %v91 = vld [vmem:[#allocation7 + $0x8] sm:$0xff]
    %v92 = vld [vmem:[#allocation7 + $0x10] sm:$0xff]
    %v93 = vld [vmem:[#allocation7 + $0x48] sm:$0xff]
    %v94 = vld [vmem:[#allocation7 + $0x50] sm:$0xff]
    %v95 = vld [vmem:[#allocation7 + $0x58] sm:$0xff]
    %v96 = vld [vmem:[#allocation7 + $0x90] sm:$0xff]
    %v97 = vld [vmem:[#allocation7 + $0x98] sm:$0xff]
    %v98 = vld [vmem:[#allocation7 + $0xa0] sm:$0xff]
    %v99 = vld [vmem:[#allocation7 + $0xd8] sm:$0xff]
    %v100 = vld [vmem:[#allocation7 + $0xe0] sm:$0xff]
    %v101 = vld [vmem:[#allocation7 + $0xe8] sm:$0xff]
    %v102 = vld [vmem:[#allocation7 + $0x120] sm:$0xff]
    %v103 = vld [vmem:[#allocation7 + $0x128] sm:$0xff]
    %v104 = vld [vmem:[#allocation7 + $0x130] sm:$0xff]
    %v105 = vld [vmem:[#allocation7 + $0x168] sm:$0xff]
    %v106 = vld [vmem:[#allocation7 + $0x170] sm:$0xff]
    %v107 = vld [vmem:[#allocation7 + $0x178] sm:$0xff]
    %v108 = vld [vmem:[#allocation7 + $0x1b0] sm:$0xff]
    %v109 = vld [vmem:[#allocation7 + $0x1b8] sm:$0xff]
    %v110 = vld [vmem:[#allocation7 + $0x1c0] sm:$0xff]
    %v111 = vld [vmem:[#allocation7 + $0x1f8] sm:$0xff]
    %v112 = vld [vmem:[#allocation7 + $0x200] sm:$0xff]
    %v113 = vld [vmem:[#allocation7 + $0x208] sm:$0xff]
    %v114 = vld [vmem:[#allocation7 + $0x240] sm:$0xff]
    %v115 = vld [vmem:[#allocation7 + $0x248] sm:$0xff]
    %v116 = vld [vmem:[#allocation7 + $0x250] sm:$0xff]
    %v117 = vld [vmem:[#allocation7 + $0x288] sm:$0xff]
    %v118 = vld [vmem:[#allocation7 + $0x290] sm:$0xff]
    %v119 = vld [vmem:[#allocation7 + $0x298] sm:$0xff]
    %v120 = vld [vmem:[#allocation7 + $0x2d0] sm:$0xff]
    %v121 = vld [vmem:[#allocation7 + $0x2d8] sm:$0xff]
    %v122 = vld [vmem:[#allocation7 + $0x2e0] sm:$0xff]
    %v123 = vld [vmem:[#allocation7 + $0x318] sm:$0xff]
    %v124 = vld [vmem:[#allocation7 + $0x320] sm:$0xff]
    %v125 = vld [vmem:[#allocation7 + $0x328] sm:$0xff]
    %v126 = vld [vmem:[#allocation7 + $0x360] sm:$0xff]
    %v127 = vld [vmem:[#allocation7 + $0x368] sm:$0xff]
    %v128 = vld [vmem:[#allocation7 + $0x370] sm:$0xff]
    %v129 = vld [vmem:[#allocation7 + $0x3a8] sm:$0xff]
    %v130 = vld [vmem:[#allocation7 + $0x3b0] sm:$0xff]
    %v131 = vld [vmem:[#allocation7 + $0x3b8] sm:$0xff]
    %v132 = vld [vmem:[#allocation7 + $0x3f0] sm:$0xff]
    %v133 = vld [vmem:[#allocation7 + $0x3f8] sm:$0xff]
    %v134 = vld [vmem:[#allocation7 + $0x400] sm:$0xff]
    %v135 = vld [vmem:[#allocation7 + $0x438] sm:$0xff]
    %v136 = vld [vmem:[#allocation7 + $0x440] sm:$0xff]
    %v137 = vld [vmem:[#allocation7 + $0x448] sm:$0xff]
    %v139 = vlaneseq
    %v140 = vshrl.u32 %v139, 7
    %v141 = vsub.s32 0, %v140
    %v142 = vrot.slane %v83, %v141
    %v143 = vlaneseq
    %v144 = vshrl.u32 %v143, 7
    %v145 = vsub.s32 1, %v144
    %v146 = vrot.slane %v83, %v145
    %v147 = vlaneseq
    %v148 = vshrl.u32 %v147, 7
    %v149 = vsub.s32 2, %v148
    %v150 = vrot.slane %v83, %v149
    %154 = vmatprep.subr.mxu0 %v91
    %155 = vmatpush1.msra.mxu0 %v90
    %156 = vmatprep.subr.mxu0 %v94
    %157 = vmatpush1.msra.mxu0 %v93
    %158 = vmatprep.subr.mxu0 %v97
    %159 = vmatpush1.msra.mxu0 %v96
    %160 = vmatprep.subr.mxu0 %v100
    %161 = vmatpush1.msra.mxu0 %v99
    %162 = vmatprep.subr.mxu0 %v103
    %163 = vmatpush1.msra.mxu0 %v102
    %164 = vmatprep.subr.mxu0 %v106
    %165 = vmatpush1.msra.mxu0 %v105
    %166 = vmatprep.subr.mxu0 %v109
    %167 = vmatpush1.msra.mxu0 %v108
    %168 = vmatprep.subr.mxu0 %v112
    %169 = vmatpush1.msra.mxu0 %v111
    %170 = vmatprep.subr.mxu0 %v115
    %171 = vmatpush1.msra.mxu0 %v114
    %172 = vmatprep.subr.mxu0 %v118
    %173 = vmatpush1.msra.mxu0 %v117
    %174 = vmatprep.subr.mxu0 %v121
    %175 = vmatpush1.msra.mxu0 %v120
    %176 = vmatprep.subr.mxu0 %v124
    %177 = vmatpush1.msra.mxu0 %v123
    %178 = vmatprep.subr.mxu0 %v127
    %179 = vmatpush1.msra.mxu0 %v126
    %180 = vmatprep.subr.mxu0 %v130
    %181 = vmatpush1.msra.mxu0 %v129
    %182 = vmatprep.subr.mxu0 %v133
    %183 = vmatpush1.msra.mxu0 %v132
    %184 = vmatprep.subr.mxu0 %v136
    %185 = vmatpush1.msra.mxu0 %v135
    %186 = vmatprep.subr.mxu0 0.0
    %187 = vmatpush1.msra.mxu0 0.0
    %188 = vmatprep.subr.mxu0 0.0
    %189 = vmatpush1.msra.mxu0 0.0
    %190 = vmatprep.subr.mxu0 0.0
    %191 = vmatpush1.msra.mxu0 0.0
    %192 = vmatprep.subr.mxu0 0.0
    %193 = vmatpush1.msra.mxu0 0.0
    %194 = vmatprep.subr.mxu0 0.0
    %195 = vmatpush1.msra.mxu0 0.0
    %196 = vmatprep.subr.mxu0 0.0
    %197 = vmatpush1.msra.mxu0 0.0
    %198 = vmatprep.subr.mxu0 0.0
    %199 = vmatpush1.msra.mxu0 0.0
    %200 = vmatprep.subr.mxu0 0.0
    %201 = vmatpush1.msra.mxu0 0.0
    %202 = vmatprep.subr.mxu0 0.0
    %203 = vmatpush1.msra.mxu0 0.0
    %204 = vmatprep.subr.mxu0 0.0
    %205 = vmatpush1.msra.mxu0 0.0
    %206 = vmatprep.subr.mxu0 0.0
    %207 = vmatpush1.msra.mxu0 0.0
    %208 = vmatprep.subr.mxu0 0.0
    %209 = vmatpush1.msra.mxu0 0.0
    %210 = vmatprep.subr.mxu0 0.0
    %211 = vmatpush1.msra.mxu0 0.0
    %212 = vmatprep.subr.mxu0 0.0
    %213 = vmatpush1.msra.mxu0 0.0
    %214 = vmatprep.subr.mxu0 0.0
    %215 = vmatpush1.msra.mxu0 0.0
    %216 = vmatprep.subr.mxu0 0.0
    %217 = vmatpush1.msra.mxu0 0.0
    %218 = vmatprep.mubr.f32.mxu0 0.0
    %219 = vmatmul.mubr.f32.gmra.mrb[0].mxu0 %v88
    %v220 = vpop.f32.mrb[0].mxu0
    %v221 = vadd.f32 %v142, %v220
    %v222 = vpop.f32.mrb[0].mxu0
    %v223 = vadd.f32 %v146, %v222
    %224 = vdwg.mxu0
    %225 = vmatprep.subr.mxu0 0.0
    %226 = vmatpush1.msra.mxu0 %v92
    %227 = vmatprep.subr.mxu0 0.0
    %228 = vmatpush1.msra.mxu0 %v95
    %229 = vmatprep.subr.mxu0 0.0
    %230 = vmatpush1.msra.mxu0 %v98
    %231 = vmatprep.subr.mxu0 0.0
    %232 = vmatpush1.msra.mxu0 %v101
    %233 = vmatprep.subr.mxu0 0.0
    %234 = vmatpush1.msra.mxu0 %v104
    %235 = vmatprep.subr.mxu0 0.0
    %236 = vmatpush1.msra.mxu0 %v107
    %237 = vmatprep.subr.mxu0 0.0
    %238 = vmatpush1.msra.mxu0 %v110
    %239 = vmatprep.subr.mxu0 0.0
    %240 = vmatpush1.msra.mxu0 %v113
    %241 = vmatprep.subr.mxu0 0.0
    %242 = vmatpush1.msra.mxu0 %v116
    %243 = vmatprep.subr.mxu0 0.0
    %244 = vmatpush1.msra.mxu0 %v119
    %245 = vmatprep.subr.mxu0 0.0
    %246 = vmatpush1.msra.mxu0 %v122
    %247 = vmatprep.subr.mxu0 0.0
    %248 = vmatpush1.msra.mxu0 %v125
    %249 = vmatprep.subr.mxu0 0.0
    %250 = vmatpush1.msra.mxu0 %v128
    %251 = vmatprep.subr.mxu0 0.0
    %252 = vmatpush1.msra.mxu0 %v131
    %253 = vmatprep.subr.mxu0 0.0
    %254 = vmatpush1.msra.mxu0 %v134
    %255 = vmatprep.subr.mxu0 0.0
    %256 = vmatpush1.msra.mxu0 %v137
    %257 = vmatprep.subr.mxu0 0.0
    %258 = vmatpush1.msra.mxu0 0.0
    %259 = vmatprep.subr.mxu0 0.0
    %260 = vmatpush1.msra.mxu0 0.0
    %261 = vmatprep.subr.mxu0 0.0
    %262 = vmatpush1.msra.mxu0 0.0
    %263 = vmatprep.subr.mxu0 0.0
    %264 = vmatpush1.msra.mxu0 0.0
    %265 = vmatprep.subr.mxu0 0.0
    %266 = vmatpush1.msra.mxu0 0.0
    %267 = vmatprep.subr.mxu0 0.0
    %268 = vmatpush1.msra.mxu0 0.0
    %269 = vmatprep.subr.mxu0 0.0
    %270 = vmatpush1.msra.mxu0 0.0
    %271 = vmatprep.subr.mxu0 0.0
    %272 = vmatpush1.msra.mxu0 0.0
    %273 = vmatprep.subr.mxu0 0.0
    %274 = vmatpush1.msra.mxu0 0.0
    %275 = vmatprep.subr.mxu0 0.0
    %276 = vmatpush1.msra.mxu0 0.0
    %277 = vmatprep.subr.mxu0 0.0
    %278 = vmatpush1.msra.mxu0 0.0
    %279 = vmatprep.subr.mxu0 0.0
    %280 = vmatpush1.msra.mxu0 0.0
    %281 = vmatprep.subr.mxu0 0.0
    %282 = vmatpush1.msra.mxu0 0.0
    %283 = vmatprep.subr.mxu0 0.0
    %284 = vmatpush1.msra.mxu0 0.0
    %285 = vmatprep.subr.mxu0 0.0
    %286 = vmatpush1.msra.mxu0 0.0
    %287 = vmatprep.subr.mxu0 0.0
    %288 = vmatpush1.msra.mxu0 0.0
    %289 = vmatprep.mubr.f32.mxu0 0.0
    %290 = vmatmul.mubr.f32.gmra.mrb[0].mxu0 %v88
    %v291 = vpop.f32.mrb[0].mxu0
    %v292 = vadd.f32 %v150, %v291
    %v293 = vpop.f32.mrb[0].mxu0
    %294 = vdwg.mxu0
    %v295 = vld [vmem:[#allocation7 + $0x30] sm:$0xff]
    %v296 = vld [vmem:[#allocation7 + $0x38] sm:$0xff]
    %v297 = vld [vmem:[#allocation7 + $0x40] sm:$0xff]
    %v298 = vld [vmem:[#allocation7 + $0x78] sm:$0xff]
    %v299 = vld [vmem:[#allocation7 + $0x80] sm:$0xff]
    %v300 = vld [vmem:[#allocation7 + $0x88] sm:$0xff]
    %v301 = vld [vmem:[#allocation7 + $0xc0] sm:$0xff]
    %v302 = vld [vmem:[#allocation7 + $0xc8] sm:$0xff]
    %v303 = vld [vmem:[#allocation7 + $0xd0] sm:$0xff]
    %v304 = vld [vmem:[#allocation7 + $0x108] sm:$0xff]
    %v305 = vld [vmem:[#allocation7 + $0x110] sm:$0xff]
    %v306 = vld [vmem:[#allocation7 + $0x118] sm:$0xff]
    %v307 = vld [vmem:[#allocation7 + $0x150] sm:$0xff]
    %v308 = vld [vmem:[#allocation7 + $0x158] sm:$0xff]
    %v309 = vld [vmem:[#allocation7 + $0x160] sm:$0xff]
    %v310 = vld [vmem:[#allocation7 + $0x198] sm:$0xff]
    %v311 = vld [vmem:[#allocation7 + $0x1a0] sm:$0xff]
    %v312 = vld [vmem:[#allocation7 + $0x1a8] sm:$0xff]
    %v313 = vld [vmem:[#allocation7 + $0x1e0] sm:$0xff]
    %v314 = vld [vmem:[#allocation7 + $0x1e8] sm:$0xff]
    %v315 = vld [vmem:[#allocation7 + $0x1f0] sm:$0xff]
    %v316 = vld [vmem:[#allocation7 + $0x228] sm:$0xff]
    %v317 = vld [vmem:[#allocation7 + $0x230] sm:$0xff]
    %v318 = vld [vmem:[#allocation7 + $0x238] sm:$0xff]
    %v319 = vld [vmem:[#allocation7 + $0x270] sm:$0xff]
    %v320 = vld [vmem:[#allocation7 + $0x278] sm:$0xff]
    %v321 = vld [vmem:[#allocation7 + $0x280] sm:$0xff]
    %v322 = vld [vmem:[#allocation7 + $0x2b8] sm:$0xff]
    %v323 = vld [vmem:[#allocation7 + $0x2c0] sm:$0xff]
    %v324 = vld [vmem:[#allocation7 + $0x2c8] sm:$0xff]
    %v325 = vld [vmem:[#allocation7 + $0x300] sm:$0xff]
    %v326 = vld [vmem:[#allocation7 + $0x308] sm:$0xff]
    %v327 = vld [vmem:[#allocation7 + $0x310] sm:$0xff]
    %v328 = vld [vmem:[#allocation7 + $0x348] sm:$0xff]
    %v329 = vld [vmem:[#allocation7 + $0x350] sm:$0xff]
    %v330 = vld [vmem:[#allocation7 + $0x358] sm:$0xff]
    %v331 = vld [vmem:[#allocation7 + $0x390] sm:$0xff]
    %v332 = vld [vmem:[#allocation7 + $0x398] sm:$0xff]
    %v333 = vld [vmem:[#allocation7 + $0x3a0] sm:$0xff]
    %v334 = vld [vmem:[#allocation7 + $0x3d8] sm:$0xff]
    %v335 = vld [vmem:[#allocation7 + $0x3e0] sm:$0xff]
    %v336 = vld [vmem:[#allocation7 + $0x3e8] sm:$0xff]
    %v337 = vld [vmem:[#allocation7 + $0x420] sm:$0xff]
    %v338 = vld [vmem:[#allocation7 + $0x428] sm:$0xff]
    %v339 = vld [vmem:[#allocation7 + $0x430] sm:$0xff]
    %v340 = vld [vmem:[#allocation7 + $0x468] sm:$0xff]
    %v341 = vld [vmem:[#allocation7 + $0x470] sm:$0xff]
    %v342 = vld [vmem:[#allocation7 + $0x478] sm:$0xff]
    %v344 = vlaneseq
    %v345 = vshrl.u32 %v344, 7
    %v346 = vsub.s32 0, %v345
    %v347 = vrot.slane %v85, %v346
    %v348 = vlaneseq
    %v349 = vshrl.u32 %v348, 7
    %v350 = vsub.s32 1, %v349
    %v351 = vrot.slane %v85, %v350
    %v352 = vlaneseq
    %v353 = vshrl.u32 %v352, 7
    %v354 = vsub.s32 2, %v353
    %v355 = vrot.slane %v85, %v354
    %359 = vmatprep.subr.mxu0 %v296
    %360 = vmatpush1.msra.mxu0 %v295
    %361 = vmatprep.subr.mxu0 %v299
    %362 = vmatpush1.msra.mxu0 %v298
    %363 = vmatprep.subr.mxu0 %v302
    %364 = vmatpush1.msra.mxu0 %v301
    %365 = vmatprep.subr.mxu0 %v305
    %366 = vmatpush1.msra.mxu0 %v304
    %367 = vmatprep.subr.mxu0 %v308
    %368 = vmatpush1.msra.mxu0 %v307
    %369 = vmatprep.subr.mxu0 %v311
    %370 = vmatpush1.msra.mxu0 %v310
    %371 = vmatprep.subr.mxu0 %v314
    %372 = vmatpush1.msra.mxu0 %v313
    %373 = vmatprep.subr.mxu0 %v317
    %374 = vmatpush1.msra.mxu0 %v316
    %375 = vmatprep.subr.mxu0 %v320
    %376 = vmatpush1.msra.mxu0 %v319
    %377 = vmatprep.subr.mxu0 %v323
    %378 = vmatpush1.msra.mxu0 %v322
    %379 = vmatprep.subr.mxu0 %v326
    %380 = vmatpush1.msra.mxu0 %v325
    %381 = vmatprep.subr.mxu0 %v329
    %382 = vmatpush1.msra.mxu0 %v328
    %383 = vmatprep.subr.mxu0 %v332
    %384 = vmatpush1.msra.mxu0 %v331
    %385 = vmatprep.subr.mxu0 %v335
    %386 = vmatpush1.msra.mxu0 %v334
    %387 = vmatprep.subr.mxu0 %v338
    %388 = vmatpush1.msra.mxu0 %v337
    %389 = vmatprep.subr.mxu0 %v341
    %390 = vmatpush1.msra.mxu0 %v340
    %391 = vmatprep.subr.mxu0 0.0
    %392 = vmatpush1.msra.mxu0 0.0
    %393 = vmatprep.subr.mxu0 0.0
    %394 = vmatpush1.msra.mxu0 0.0
    %395 = vmatprep.subr.mxu0 0.0
    %396 = vmatpush1.msra.mxu0 0.0
    %397 = vmatprep.subr.mxu0 0.0
    %398 = vmatpush1.msra.mxu0 0.0
    %399 = vmatprep.subr.mxu0 0.0
    %400 = vmatpush1.msra.mxu0 0.0
    %401 = vmatprep.subr.mxu0 0.0
    %402 = vmatpush1.msra.mxu0 0.0
    %403 = vmatprep.subr.mxu0 0.0
    %404 = vmatpush1.msra.mxu0 0.0
    %405 = vmatprep.subr.mxu0 0.0
    %406 = vmatpush1.msra.mxu0 0.0
    %407 = vmatprep.subr.mxu0 0.0
    %408 = vmatpush1.msra.mxu0 0.0
    %409 = vmatprep.subr.mxu0 0.0
    %410 = vmatpush1.msra.mxu0 0.0
    %411 = vmatprep.subr.mxu0 0.0
    %412 = vmatpush1.msra.mxu0 0.0
    %413 = vmatprep.subr.mxu0 0.0
    %414 = vmatpush1.msra.mxu0 0.0
    %415 = vmatprep.subr.mxu0 0.0
    %416 = vmatpush1.msra.mxu0 0.0
    %417 = vmatprep.subr.mxu0 0.0
    %418 = vmatpush1.msra.mxu0 0.0
    %419 = vmatprep.subr.mxu0 0.0
    %420 = vmatpush1.msra.mxu0 0.0
    %421 = vmatprep.subr.mxu0 0.0
    %422 = vmatpush1.msra.mxu0 0.0
    %423 = vmatprep.mubr.f32.mxu0 0.0
    %424 = vmatmul.mubr.f32.gmra.mrb[0].mxu0 %v89
    %v425 = vpop.f32.mrb[0].mxu0
    %v426 = vadd.f32 %v347, %v425
    %v427 = vpop.f32.mrb[0].mxu0
    %v428 = vadd.f32 %v351, %v427
    %429 = vdwg.mxu0
    %430 = vmatprep.subr.mxu0 0.0
    %431 = vmatpush1.msra.mxu0 %v297
    %432 = vmatprep.subr.mxu0 0.0
    %433 = vmatpush1.msra.mxu0 %v300
    %434 = vmatprep.subr.mxu0 0.0
    %435 = vmatpush1.msra.mxu0 %v303
    %436 = vmatprep.subr.mxu0 0.0
    %437 = vmatpush1.msra.mxu0 %v306
    %438 = vmatprep.subr.mxu0 0.0
    %439 = vmatpush1.msra.mxu0 %v309
    %440 = vmatprep.subr.mxu0 0.0
    %441 = vmatpush1.msra.mxu0 %v312
    %442 = vmatprep.subr.mxu0 0.0
    %443 = vmatpush1.msra.mxu0 %v315
    %444 = vmatprep.subr.mxu0 0.0
    %445 = vmatpush1.msra.mxu0 %v318
    %446 = vmatprep.subr.mxu0 0.0
    %447 = vmatpush1.msra.mxu0 %v321
    %448 = vmatprep.subr.mxu0 0.0
    %449 = vmatpush1.msra.mxu0 %v324
    %450 = vmatprep.subr.mxu0 0.0
    %451 = vmatpush1.msra.mxu0 %v327
    %452 = vmatprep.subr.mxu0 0.0
    %453 = vmatpush1.msra.mxu0 %v330
    %454 = vmatprep.subr.mxu0 0.0
    %455 = vmatpush1.msra.mxu0 %v333
    %456 = vmatprep.subr.mxu0 0.0
    %457 = vmatpush1.msra.mxu0 %v336
    %458 = vmatprep.subr.mxu0 0.0
    %459 = vmatpush1.msra.mxu0 %v339
    %460 = vmatprep.subr.mxu0 0.0
    %461 = vmatpush1.msra.mxu0 %v342
    %462 = vmatprep.subr.mxu0 0.0
    %463 = vmatpush1.msra.mxu0 0.0
    %464 = vmatprep.subr.mxu0 0.0
    %465 = vmatpush1.msra.mxu0 0.0
    %466 = vmatprep.subr.mxu0 0.0
    %467 = vmatpush1.msra.mxu0 0.0
    %468 = vmatprep.subr.mxu0 0.0
    %469 = vmatpush1.msra.mxu0 0.0
    %470 = vmatprep.subr.mxu0 0.0
    %471 = vmatpush1.msra.mxu0 0.0
    %472 = vmatprep.subr.mxu0 0.0
    %473 = vmatpush1.msra.mxu0 0.0
    %474 = vmatprep.subr.mxu0 0.0
    %475 = vmatpush1.msra.mxu0 0.0
    %476 = vmatprep.subr.mxu0 0.0
    %477 = vmatpush1.msra.mxu0 0.0
    %478 = vmatprep.subr.mxu0 0.0
    %479 = vmatpush1.msra.mxu0 0.0
    %480 = vmatprep.subr.mxu0 0.0
    %481 = vmatpush1.msra.mxu0 0.0
    %482 = vmatprep.subr.mxu0 0.0
    %483 = vmatpush1.msra.mxu0 0.0
    %484 = vmatprep.subr.mxu0 0.0
    %485 = vmatpush1.msra.mxu0 0.0
    %486 = vmatprep.subr.mxu0 0.0
    %487 = vmatpush1.msra.mxu0 0.0
    %488 = vmatprep.subr.mxu0 0.0
    %489 = vmatpush1.msra.mxu0 0.0
    %490 = vmatprep.subr.mxu0 0.0
    %491 = vmatpush1.msra.mxu0 0.0
    %492 = vmatprep.subr.mxu0 0.0
    %493 = vmatpush1.msra.mxu0 0.0
    %494 = vmatprep.mubr.f32.mxu0 0.0
    %495 = vmatmul.mubr.f32.gmra.mrb[0].mxu0 %v89
    %v496 = vpop.f32.mrb[0].mxu0
    %v497 = vadd.f32 %v355, %v496
    %v498 = vpop.f32.mrb[0].mxu0
    %499 = vdwg.mxu0
    %v500 = vld [vmem:[#allocation4] sm:$0x3f]
    %v501 = vadd.f32 %v500, %v221
    %v502 = vxor.u32 %v501, 2147483648
    %v503 = vmul.f32 %v502, 1.442695
    %v504 = vpow.pop %v503
    %v505 = vadd.f32 %v504, 1.0
    %v506 = vrcp.pop %v505
    %v507 = vmul.f32 1.0, %v506
    %v509 = vrot.slane %v500, 2
    %v511 = vadd.f32 %v509, %v223
    %v512 = vxor.u32 %v511, 2147483648
    %v513 = vmul.f32 %v512, 1.442695
    %v514 = vpow.pop %v513
    %v515 = vadd.f32 %v514, 1.0
    %v516 = vrcp.pop %v515
    %v517 = vmul.f32 1.0, %v516
    %v518 = vmul.f32 %v507, %v292
    %v519 = vrot.slane %v500, 4
    %v521 = vadd.f32 %v519, %v518
    %v522 = vtanh.pop %v521
    %v523 = vsub.f32 1.0, %v517
    %v524 = vmul.f32 %v523, %v522
    %v525 = vmul.f32 %v517, %v88
    %v526 = vadd.f32 %v524, %v525
    %v527 = vld [vmem:[#allocation7 + $0x18] sm:$0xff]
    %v528 = vld [vmem:[#allocation7 + $0x20] sm:$0xff]
    %v529 = vld [vmem:[#allocation7 + $0x28] sm:$0xff]
    %v530 = vld [vmem:[#allocation7 + $0x60] sm:$0xff]
    %v531 = vld [vmem:[#allocation7 + $0x68] sm:$0xff]
    %v532 = vld [vmem:[#allocation7 + $0x70] sm:$0xff]
    %v533 = vld [vmem:[#allocation7 + $0xa8] sm:$0xff]
    %v534 = vld [vmem:[#allocation7 + $0xb0] sm:$0xff]
    %v535 = vld [vmem:[#allocation7 + $0xb8] sm:$0xff]
    %v536 = vld [vmem:[#allocation7 + $0xf0] sm:$0xff]
    %v537 = vld [vmem:[#allocation7 + $0xf8] sm:$0xff]
    %v538 = vld [vmem:[#allocation7 + $0x100] sm:$0xff]
    %v539 = vld [vmem:[#allocation7 + $0x138] sm:$0xff]
    %v540 = vld [vmem:[#allocation7 + $0x140] sm:$0xff]
    %v541 = vld [vmem:[#allocation7 + $0x148] sm:$0xff]
    %v542 = vld [vmem:[#allocation7 + $0x180] sm:$0xff]
    %v543 = vld [vmem:[#allocation7 + $0x188] sm:$0xff]
    %v544 = vld [vmem:[#allocation7 + $0x190] sm:$0xff]
    %v545 = vld [vmem:[#allocation7 + $0x1c8] sm:$0xff]
    %v546 = vld [vmem:[#allocation7 + $0x1d0] sm:$0xff]
    %v547 = vld [vmem:[#allocation7 + $0x1d8] sm:$0xff]
    %v548 = vld [vmem:[#allocation7 + $0x210] sm:$0xff]
    %v549 = vld [vmem:[#allocation7 + $0x218] sm:$0xff]
    %v550 = vld [vmem:[#allocation7 + $0x220] sm:$0xff]
    %v551 = vld [vmem:[#allocation7 + $0x258] sm:$0xff]
    %v552 = vld [vmem:[#allocation7 + $0x260] sm:$0xff]
    %v553 = vld [vmem:[#allocation7 + $0x268] sm:$0xff]
    %v554 = vld [vmem:[#allocation7 + $0x2a0] sm:$0xff]
    %v555 = vld [vmem:[#allocation7 + $0x2a8] sm:$0xff]
    %v556 = vld [vmem:[#allocation7 + $0x2b0] sm:$0xff]
    %v557 = vld [vmem:[#allocation7 + $0x2e8] sm:$0xff]
    %v558 = vld [vmem:[#allocation7 + $0x2f0] sm:$0xff]
    %v559 = vld [vmem:[#allocation7 + $0x2f8] sm:$0xff]
    %v560 = vld [vmem:[#allocation7 + $0x330] sm:$0xff]
    %v561 = vld [vmem:[#allocation7 + $0x338] sm:$0xff]
    %v562 = vld [vmem:[#allocation7 + $0x340] sm:$0xff]
    %v563 = vld [vmem:[#allocation7 + $0x378] sm:$0xff]
    %v564 = vld [vmem:[#allocation7 + $0x380] sm:$0xff]
    %v565 = vld [vmem:[#allocation7 + $0x388] sm:$0xff]
    %v566 = vld [vmem:[#allocation7 + $0x3c0] sm:$0xff]
    %v567 = vld [vmem:[#allocation7 + $0x3c8] sm:$0xff]
    %v568 = vld [vmem:[#allocation7 + $0x3d0] sm:$0xff]
    %v569 = vld [vmem:[#allocation7 + $0x408] sm:$0xff]
    %v570 = vld [vmem:[#allocation7 + $0x410] sm:$0xff]
    %v571 = vld [vmem:[#allocation7 + $0x418] sm:$0xff]
    %v572 = vld [vmem:[#allocation7 + $0x450] sm:$0xff]
    %v573 = vld [vmem:[#allocation7 + $0x458] sm:$0xff]
    %v574 = vld [vmem:[#allocation7 + $0x460] sm:$0xff]
    %v576 = vlaneseq
    %v577 = vshrl.u32 %v576, 7
    %v578 = vsub.s32 0, %v577
    %v579 = vrot.slane %v84, %v578
    %v580 = vlaneseq
    %v581 = vshrl.u32 %v580, 7
    %v582 = vsub.s32 1, %v581
    %v583 = vrot.slane %v84, %v582
    %v584 = vlaneseq
    %v585 = vshrl.u32 %v584, 7
    %v586 = vsub.s32 2, %v585
    %v587 = vrot.slane %v84, %v586
    %591 = vmatprep.subr.mxu0 %v528
    %592 = vmatpush1.msra.mxu0 %v527
    %593 = vmatprep.subr.mxu0 %v531
    %594 = vmatpush1.msra.mxu0 %v530
    %595 = vmatprep.subr.mxu0 %v534
    %596 = vmatpush1.msra.mxu0 %v533
    %597 = vmatprep.subr.mxu0 %v537
    %598 = vmatpush1.msra.mxu0 %v536
    %599 = vmatprep.subr.mxu0 %v540
    %600 = vmatpush1.msra.mxu0 %v539
    %601 = vmatprep.subr.mxu0 %v543
    %602 = vmatpush1.msra.mxu0 %v542
    %603 = vmatprep.subr.mxu0 %v546
    %604 = vmatpush1.msra.mxu0 %v545
    %605 = vmatprep.subr.mxu0 %v549
    %606 = vmatpush1.msra.mxu0 %v548
    %607 = vmatprep.subr.mxu0 %v552
    %608 = vmatpush1.msra.mxu0 %v551
    %609 = vmatprep.subr.mxu0 %v555
    %610 = vmatpush1.msra.mxu0 %v554
    %611 = vmatprep.subr.mxu0 %v558
    %612 = vmatpush1.msra.mxu0 %v557
    %613 = vmatprep.subr.mxu0 %v561
    %614 = vmatpush1.msra.mxu0 %v560
    %615 = vmatprep.subr.mxu0 %v564
    %616 = vmatpush1.msra.mxu0 %v563
    %617 = vmatprep.subr.mxu0 %v567
    %618 = vmatpush1.msra.mxu0 %v566
    %619 = vmatprep.subr.mxu0 %v570
    %620 = vmatpush1.msra.mxu0 %v569
    %621 = vmatprep.subr.mxu0 %v573
    %622 = vmatpush1.msra.mxu0 %v572
    %623 = vmatprep.subr.mxu0 0.0
    %624 = vmatpush1.msra.mxu0 0.0
    %625 = vmatprep.subr.mxu0 0.0
    %626 = vmatpush1.msra.mxu0 0.0
    %627 = vmatprep.subr.mxu0 0.0
    %628 = vmatpush1.msra.mxu0 0.0
    %629 = vmatprep.subr.mxu0 0.0
    %630 = vmatpush1.msra.mxu0 0.0
    %631 = vmatprep.subr.mxu0 0.0
    %632 = vmatpush1.msra.mxu0 0.0
    %633 = vmatprep.subr.mxu0 0.0
    %634 = vmatpush1.msra.mxu0 0.0
    %635 = vmatprep.subr.mxu0 0.0
    %636 = vmatpush1.msra.mxu0 0.0
    %637 = vmatprep.subr.mxu0 0.0
    %638 = vmatpush1.msra.mxu0 0.0
    %639 = vmatprep.subr.mxu0 0.0
    %640 = vmatpush1.msra.mxu0 0.0
    %641 = vmatprep.subr.mxu0 0.0
    %642 = vmatpush1.msra.mxu0 0.0
    %643 = vmatprep.subr.mxu0 0.0
    %644 = vmatpush1.msra.mxu0 0.0
    %645 = vmatprep.subr.mxu0 0.0
    %646 = vmatpush1.msra.mxu0 0.0
    %647 = vmatprep.subr.mxu0 0.0
    %648 = vmatpush1.msra.mxu0 0.0
    %649 = vmatprep.subr.mxu0 0.0
    %650 = vmatpush1.msra.mxu0 0.0
    %651 = vmatprep.subr.mxu0 0.0
    %652 = vmatpush1.msra.mxu0 0.0
    %653 = vmatprep.subr.mxu0 0.0
    %654 = vmatpush1.msra.mxu0 0.0
    %655 = vmatprep.mubr.f32.mxu0 0.0
    %656 = vmatmul.mubr.f32.gmra.mrb[0].mxu0 %v526
    %v657 = vpop.f32.mrb[0].mxu0
    %v658 = vadd.f32 %v579, %v657
    %v659 = vpop.f32.mrb[0].mxu0
    %v660 = vadd.f32 %v583, %v659
    %661 = vdwg.mxu0
    %662 = vmatprep.subr.mxu0 0.0
    %663 = vmatpush1.msra.mxu0 %v529
    %664 = vmatprep.subr.mxu0 0.0
    %665 = vmatpush1.msra.mxu0 %v532
    %666 = vmatprep.subr.mxu0 0.0
    %667 = vmatpush1.msra.mxu0 %v535
    %668 = vmatprep.subr.mxu0 0.0
    %669 = vmatpush1.msra.mxu0 %v538
    %670 = vmatprep.subr.mxu0 0.0
    %671 = vmatpush1.msra.mxu0 %v541
    %672 = vmatprep.subr.mxu0 0.0
    %673 = vmatpush1.msra.mxu0 %v544
    %674 = vmatprep.subr.mxu0 0.0
    %675 = vmatpush1.msra.mxu0 %v547
    %676 = vmatprep.subr.mxu0 0.0
    %677 = vmatpush1.msra.mxu0 %v550
    %678 = vmatprep.subr.mxu0 0.0
    %679 = vmatpush1.msra.mxu0 %v553
    %680 = vmatprep.subr.mxu0 0.0
    %681 = vmatpush1.msra.mxu0 %v556
    %682 = vmatprep.subr.mxu0 0.0
    %683 = vmatpush1.msra.mxu0 %v559
    %684 = vmatprep.subr.mxu0 0.0
    %685 = vmatpush1.msra.mxu0 %v562
    %686 = vmatprep.subr.mxu0 0.0
    %687 = vmatpush1.msra.mxu0 %v565
    %688 = vmatprep.subr.mxu0 0.0
    %689 = vmatpush1.msra.mxu0 %v568
    %690 = vmatprep.subr.mxu0 0.0
    %691 = vmatpush1.msra.mxu0 %v571
    %692 = vmatprep.subr.mxu0 0.0
    %693 = vmatpush1.msra.mxu0 %v574
    %694 = vmatprep.subr.mxu0 0.0
    %695 = vmatpush1.msra.mxu0 0.0
    %696 = vmatprep.subr.mxu0 0.0
    %697 = vmatpush1.msra.mxu0 0.0
    %698 = vmatprep.subr.mxu0 0.0
    %699 = vmatpush1.msra.mxu0 0.0
    %700 = vmatprep.subr.mxu0 0.0
    %701 = vmatpush1.msra.mxu0 0.0
    %702 = vmatprep.subr.mxu0 0.0
    %703 = vmatpush1.msra.mxu0 0.0
    %704 = vmatprep.subr.mxu0 0.0
    %705 = vmatpush1.msra.mxu0 0.0
    %706 = vmatprep.subr.mxu0 0.0
    %707 = vmatpush1.msra.mxu0 0.0
    %708 = vmatprep.subr.mxu0 0.0
    %709 = vmatpush1.msra.mxu0 0.0
    %710 = vmatprep.subr.mxu0 0.0
    %711 = vmatpush1.msra.mxu0 0.0
    %712 = vmatprep.subr.mxu0 0.0
    %713 = vmatpush1.msra.mxu0 0.0
    %714 = vmatprep.subr.mxu0 0.0
    %715 = vmatpush1.msra.mxu0 0.0
    %716 = vmatprep.subr.mxu0 0.0
    %717 = vmatpush1.msra.mxu0 0.0
    %718 = vmatprep.subr.mxu0 0.0
    %719 = vmatpush1.msra.mxu0 0.0
    %720 = vmatprep.subr.mxu0 0.0
    %721 = vmatpush1.msra.mxu0 0.0
    %722 = vmatprep.subr.mxu0 0.0
    %723 = vmatpush1.msra.mxu0 0.0
    %724 = vmatprep.subr.mxu0 0.0
    %725 = vmatpush1.msra.mxu0 0.0
    %726 = vmatprep.mubr.f32.mxu0 0.0
    %727 = vmatmul.mubr.f32.gmra.mrb[0].mxu0 %v526
    %v728 = vpop.f32.mrb[0].mxu0
    %v729 = vadd.f32 %v587, %v728
    %v730 = vpop.f32.mrb[0].mxu0
    %731 = vdwg.mxu0
    %v732 = vadd.f32 %v658, %v426
    %v733 = vxor.u32 %v732, 2147483648
    %v734 = vmul.f32 %v733, 1.442695
    %v735 = vpow.pop %v734
    %v736 = vadd.f32 %v735, 1.0
    %v737 = vrcp.pop %v736
    %v738 = vmul.f32 1.0, %v737
    %v739 = vadd.f32 %v660, %v428
    %v740 = vxor.u32 %v739, 2147483648
    %v741 = vmul.f32 %v740, 1.442695
    %v742 = vpow.pop %v741
    %v743 = vadd.f32 %v742, 1.0
    %v744 = vrcp.pop %v743
    %v745 = vmul.f32 1.0, %v744
    %v746 = vmul.f32 %v738, %v497
    %v747 = vadd.f32 %v729, %v746
    %v748 = vtanh.pop %v747
    %v749 = vsub.f32 1.0, %v745
    %v750 = vmul.f32 %v749, %v748
    %v751 = vmul.f32 %v745, %v89
    %v752 = vadd.f32 %v750, %v751
    %v753 = vld [vmem:[#allocation10] sm:$0xff]
    %v754 = vld [vmem:[#allocation10 + $0x10] sm:$0xff]
    %v755 = vld [vmem:[#allocation10 + $0x20] sm:$0xff]
    %v756 = vld [vmem:[#allocation10 + $0x30] sm:$0xff]
    %v757 = vld [vmem:[#allocation10 + $0x40] sm:$0xff]
    %v758 = vld [vmem:[#allocation10 + $0x50] sm:$0xff]
    %v759 = vld [vmem:[#allocation10 + $0x60] sm:$0xff]
    %v760 = vld [vmem:[#allocation10 + $0x70] sm:$0xff]
    %v761 = vld [vmem:[#allocation10 + $0x80] sm:$0xff]
    %v762 = vld [vmem:[#allocation10 + $0x90] sm:$0xff]
    %v763 = vld [vmem:[#allocation10 + $0xa0] sm:$0xff]
    %v764 = vld [vmem:[#allocation10 + $0xb0] sm:$0xff]
    %v765 = vld [vmem:[#allocation10 + $0xc0] sm:$0xff]
    %v766 = vld [vmem:[#allocation10 + $0xd0] sm:$0xff]
    %v767 = vld [vmem:[#allocation10 + $0xe0] sm:$0xff]
    %v768 = vld [vmem:[#allocation10 + $0xf0] sm:$0xff]
    %v770 = vlaneseq
    %v771 = vshrl.u32 %v770, 7
    %v772 = vsub.s32 0, %v771
    %v773 = vrot.slane %v86, %v772
    %775 = vmatprep.subr.mxu0 0.0
    %776 = vmatpush1.msra.mxu0 %v753
    %777 = vmatprep.subr.mxu0 0.0
    %778 = vmatpush1.msra.mxu0 %v754
    %779 = vmatprep.subr.mxu0 0.0
    %780 = vmatpush1.msra.mxu0 %v755
    %781 = vmatprep.subr.mxu0 0.0
    %782 = vmatpush1.msra.mxu0 %v756
    %783 = vmatprep.subr.mxu0 0.0
    %784 = vmatpush1.msra.mxu0 %v757
    %785 = vmatprep.subr.mxu0 0.0
    %786 = vmatpush1.msra.mxu0 %v758
    %787 = vmatprep.subr.mxu0 0.0
    %788 = vmatpush1.msra.mxu0 %v759
    %789 = vmatprep.subr.mxu0 0.0
    %790 = vmatpush1.msra.mxu0 %v760
    %791 = vmatprep.subr.mxu0 0.0
    %792 = vmatpush1.msra.mxu0 %v761
    %793 = vmatprep.subr.mxu0 0.0
    %794 = vmatpush1.msra.mxu0 %v762
    %795 = vmatprep.subr.mxu0 0.0
    %796 = vmatpush1.msra.mxu0 %v763
    %797 = vmatprep.subr.mxu0 0.0
    %798 = vmatpush1.msra.mxu0 %v764
    %799 = vmatprep.subr.mxu0 0.0
    %800 = vmatpush1.msra.mxu0 %v765
    %801 = vmatprep.subr.mxu0 0.0
    %802 = vmatpush1.msra.mxu0 %v766
    %803 = vmatprep.subr.mxu0 0.0
    %804 = vmatpush1.msra.mxu0 %v767
    %805 = vmatprep.subr.mxu0 0.0
    %806 = vmatpush1.msra.mxu0 %v768
    %807 = vmatprep.subr.mxu0 0.0
    %808 = vmatpush1.msra.mxu0 0.0
    %809 = vmatprep.subr.mxu0 0.0
    %810 = vmatpush1.msra.mxu0 0.0
    %811 = vmatprep.subr.mxu0 0.0
    %812 = vmatpush1.msra.mxu0 0.0
    %813 = vmatprep.subr.mxu0 0.0
    %814 = vmatpush1.msra.mxu0 0.0
    %815 = vmatprep.subr.mxu0 0.0
    %816 = vmatpush1.msra.mxu0 0.0
    %817 = vmatprep.subr.mxu0 0.0
    %818 = vmatpush1.msra.mxu0 0.0
    %819 = vmatprep.subr.mxu0 0.0
    %820 = vmatpush1.msra.mxu0 0.0
    %821 = vmatprep.subr.mxu0 0.0
    %822 = vmatpush1.msra.mxu0 0.0
    %823 = vmatprep.subr.mxu0 0.0
    %824 = vmatpush1.msra.mxu0 0.0
    %825 = vmatprep.subr.mxu0 0.0
    %826 = vmatpush1.msra.mxu0 0.0
    %827 = vmatprep.subr.mxu0 0.0
    %828 = vmatpush1.msra.mxu0 0.0
    %829 = vmatprep.subr.mxu0 0.0
    %830 = vmatpush1.msra.mxu0 0.0
    %831 = vmatprep.subr.mxu0 0.0
    %832 = vmatpush1.msra.mxu0 0.0
    %833 = vmatprep.subr.mxu0 0.0
    %834 = vmatpush1.msra.mxu0 0.0
    %835 = vmatprep.subr.mxu0 0.0
    %836 = vmatpush1.msra.mxu0 0.0
    %837 = vmatprep.subr.mxu0 0.0
    %838 = vmatpush1.msra.mxu0 0.0
    %839 = vmatprep.mubr.f32.mxu0 0.0
    %840 = vmatmul.mubr.f32.gmra.mrb[0].mxu0 %v752
    %v841 = vpop.f32.mrb[0].mxu0
    %v842 = vadd.f32 %v773, %v841
    %v843 = vpop.f32.mrb[0].mxu0
    %844 = vdwg.mxu0
    %v845 = vmax.f32 %v842, 0.0
    %v846 = vld [vmem:[#allocation10 + $0x8] sm:$0xff]
    %v847 = vld [vmem:[#allocation10 + $0x18] sm:$0xff]
    %v848 = vld [vmem:[#allocation10 + $0x28] sm:$0xff]
    %v849 = vld [vmem:[#allocation10 + $0x38] sm:$0xff]
    %v850 = vld [vmem:[#allocation10 + $0x48] sm:$0xff]
    %v851 = vld [vmem:[#allocation10 + $0x58] sm:$0xff]
    %v852 = vld [vmem:[#allocation10 + $0x68] sm:$0xff]
    %v853 = vld [vmem:[#allocation10 + $0x78] sm:$0xff]
    %v854 = vld [vmem:[#allocation10 + $0x88] sm:$0xff]
    %v855 = vld [vmem:[#allocation10 + $0x98] sm:$0xff]
    %v856 = vld [vmem:[#allocation10 + $0xa8] sm:$0xff]
    %v857 = vld [vmem:[#allocation10 + $0xb8] sm:$0xff]
    %v858 = vld [vmem:[#allocation10 + $0xc8] sm:$0xff]
    %v859 = vld [vmem:[#allocation10 + $0xd8] sm:$0xff]
    %v860 = vld [vmem:[#allocation10 + $0xe8] sm:$0xff]
    %v861 = vld [vmem:[#allocation10 + $0xf8] sm:$0xff]
    %v863 = vlaneseq
    %v864 = vshrl.u32 %v863, 7
    %v865 = vsub.s32 0, %v864
    %v866 = vrot.slane %v87, %v865
    %868 = vmatprep.subr.mxu0 0.0
    %869 = vmatpush1.msra.mxu0 %v846
    %870 = vmatprep.subr.mxu0 0.0
    %871 = vmatpush1.msra.mxu0 %v847
    %872 = vmatprep.subr.mxu0 0.0
    %873 = vmatpush1.msra.mxu0 %v848
    %874 = vmatprep.subr.mxu0 0.0
    %875 = vmatpush1.msra.mxu0 %v849
    %876 = vmatprep.subr.mxu0 0.0
    %877 = vmatpush1.msra.mxu0 %v850
    %878 = vmatprep.subr.mxu0 0.0
    %879 = vmatpush1.msra.mxu0 %v851
    %880 = vmatprep.subr.mxu0 0.0
    %881 = vmatpush1.msra.mxu0 %v852
    %882 = vmatprep.subr.mxu0 0.0
    %883 = vmatpush1.msra.mxu0 %v853
    %884 = vmatprep.subr.mxu0 0.0
    %885 = vmatpush1.msra.mxu0 %v854
    %886 = vmatprep.subr.mxu0 0.0
    %887 = vmatpush1.msra.mxu0 %v855
    %888 = vmatprep.subr.mxu0 0.0
    %889 = vmatpush1.msra.mxu0 %v856
    %890 = vmatprep.subr.mxu0 0.0
    %891 = vmatpush1.msra.mxu0 %v857
    %892 = vmatprep.subr.mxu0 0.0
    %893 = vmatpush1.msra.mxu0 %v858
    %894 = vmatprep.subr.mxu0 0.0
    %895 = vmatpush1.msra.mxu0 %v859
    %896 = vmatprep.subr.mxu0 0.0
    %897 = vmatpush1.msra.mxu0 %v860
    %898 = vmatprep.subr.mxu0 0.0
    %899 = vmatpush1.msra.mxu0 %v861
    %900 = vmatprep.subr.mxu0 0.0
    %901 = vmatpush1.msra.mxu0 0.0
    %902 = vmatprep.subr.mxu0 0.0
    %903 = vmatpush1.msra.mxu0 0.0
    %904 = vmatprep.subr.mxu0 0.0
    %905 = vmatpush1.msra.mxu0 0.0
    %906 = vmatprep.subr.mxu0 0.0
    %907 = vmatpush1.msra.mxu0 0.0
    %908 = vmatprep.subr.mxu0 0.0
    %909 = vmatpush1.msra.mxu0 0.0
    %910 = vmatprep.subr.mxu0 0.0
    %911 = vmatpush1.msra.mxu0 0.0
    %912 = vmatprep.subr.mxu0 0.0
    %913 = vmatpush1.msra.mxu0 0.0
    %914 = vmatprep.subr.mxu0 0.0
    %915 = vmatpush1.msra.mxu0 0.0
    %916 = vmatprep.subr.mxu0 0.0
    %917 = vmatpush1.msra.mxu0 0.0
    %918 = vmatprep.subr.mxu0 0.0
    %919 = vmatpush1.msra.mxu0 0.0
    %920 = vmatprep.subr.mxu0 0.0
    %921 = vmatpush1.msra.mxu0 0.0
    %922 = vmatprep.subr.mxu0 0.0
    %923 = vmatpush1.msra.mxu0 0.0
    %924 = vmatprep.subr.mxu0 0.0
    %925 = vmatpush1.msra.mxu0 0.0
    %926 = vmatprep.subr.mxu0 0.0
    %927 = vmatpush1.msra.mxu0 0.0
    %928 = vmatprep.subr.mxu0 0.0
    %929 = vmatpush1.msra.mxu0 0.0
    %930 = vmatprep.subr.mxu0 0.0
    %931 = vmatpush1.msra.mxu0 0.0
    %932 = vmatprep.mubr.f32.mxu0 0.0
    %933 = vmatmul.mubr.f32.gmra.mrb[0].mxu0 %v845
    %v934 = vpop.f32.mrb[0].mxu0
    %v935 = vadd.f32 %v866, %v934
    %v936 = vpop.f32.mrb[0].mxu0
    %937 = vdwg.mxu0
    %938 = vst [vmem:[#allocation12] sm:$0x3] %v935
    %v939 = vld [vmem:[#allocation7] sm:$0xff]
    %v940 = vld [vmem:[#allocation7 + $0x8] sm:$0xff]
    %v941 = vld [vmem:[#allocation7 + $0x10] sm:$0xff]
    %v942 = vld [vmem:[#allocation7 + $0x48] sm:$0xff]
    %v943 = vld [vmem:[#allocation7 + $0x50] sm:$0xff]
    %v944 = vld [vmem:[#allocation7 + $0x58] sm:$0xff]
    %v945 = vld [vmem:[#allocation7 + $0x90] sm:$0xff]
    %v946 = vld [vmem:[#allocation7 + $0x98] sm:$0xff]
    %v947 = vld [vmem:[#allocation7 + $0xa0] sm:$0xff]
    %v948 = vld [vmem:[#allocation7 + $0xd8] sm:$0xff]
    %v949 = vld [vmem:[#allocation7 + $0xe0] sm:$0xff]
    %v950 = vld [vmem:[#allocation7 + $0xe8] sm:$0xff]
    %v951 = vld [vmem:[#allocation7 + $0x120] sm:$0xff]
    %v952 = vld [vmem:[#allocation7 + $0x128] sm:$0xff]
    %v953 = vld [vmem:[#allocation7 + $0x130] sm:$0xff]
    %v954 = vld [vmem:[#allocation7 + $0x168] sm:$0xff]
    %v955 = vld [vmem:[#allocation7 + $0x170] sm:$0xff]
    %v956 = vld [vmem:[#allocation7 + $0x178] sm:$0xff]
    %v957 = vld [vmem:[#allocation7 + $0x1b0] sm:$0xff]
    %v958 = vld [vmem:[#allocation7 + $0x1b8] sm:$0xff]
    %v959 = vld [vmem:[#allocation7 + $0x1c0] sm:$0xff]
    %v960 = vld [vmem:[#allocation7 + $0x1f8] sm:$0xff]
    %v961 = vld [vmem:[#allocation7 + $0x200] sm:$0xff]
    %v962 = vld [vmem:[#allocation7 + $0x208] sm:$0xff]
    %v963 = vld [vmem:[#allocation7 + $0x240] sm:$0xff]
    %v964 = vld [vmem:[#allocation7 + $0x248] sm:$0xff]
    %v965 = vld [vmem:[#allocation7 + $0x250] sm:$0xff]
    %v966 = vld [vmem:[#allocation7 + $0x288] sm:$0xff]
    %v967 = vld [vmem:[#allocation7 + $0x290] sm:$0xff]
    %v968 = vld [vmem:[#allocation7 + $0x298] sm:$0xff]
    %v969 = vld [vmem:[#allocation7 + $0x2d0] sm:$0xff]
    %v970 = vld [vmem:[#allocation7 + $0x2d8] sm:$0xff]
    %v971 = vld [vmem:[#allocation7 + $0x2e0] sm:$0xff]
    %v972 = vld [vmem:[#allocation7 + $0x318] sm:$0xff]
    %v973 = vld [vmem:[#allocation7 + $0x320] sm:$0xff]
    %v974 = vld [vmem:[#allocation7 + $0x328] sm:$0xff]
    %v975 = vld [vmem:[#allocation7 + $0x360] sm:$0xff]
    %v976 = vld [vmem:[#allocation7 + $0x368] sm:$0xff]
    %v977 = vld [vmem:[#allocation7 + $0x370] sm:$0xff]
    %v978 = vld [vmem:[#allocation7 + $0x3a8] sm:$0xff]
    %v979 = vld [vmem:[#allocation7 + $0x3b0] sm:$0xff]
    %v980 = vld [vmem:[#allocation7 + $0x3b8] sm:$0xff]
    %v981 = vld [vmem:[#allocation7 + $0x3f0] sm:$0xff]
    %v982 = vld [vmem:[#allocation7 + $0x3f8] sm:$0xff]
    %v983 = vld [vmem:[#allocation7 + $0x400] sm:$0xff]
    %v984 = vld [vmem:[#allocation7 + $0x438] sm:$0xff]
    %v985 = vld [vmem:[#allocation7 + $0x440] sm:$0xff]
    %v986 = vld [vmem:[#allocation7 + $0x448] sm:$0xff]
    %987 = vmatprep.subr.mxu0 %v940
    %988 = vmatpush1.msra.mxu0 %v939
    %989 = vmatprep.subr.mxu0 %v943
    %990 = vmatpush1.msra.mxu0 %v942
    %991 = vmatprep.subr.mxu0 %v946
    %992 = vmatpush1.msra.mxu0 %v945
    %993 = vmatprep.subr.mxu0 %v949
    %994 = vmatpush1.msra.mxu0 %v948
    %995 = vmatprep.subr.mxu0 %v952
    %996 = vmatpush1.msra.mxu0 %v951
    %997 = vmatprep.subr.mxu0 %v955
    %998 = vmatpush1.msra.mxu0 %v954
    %999 = vmatprep.subr.mxu0 %v958
    %1000 = vmatpush1.msra.mxu0 %v957
    %1001 = vmatprep.subr.mxu0 %v961
    %1002 = vmatpush1.msra.mxu0 %v960
    %1003 = vmatprep.subr.mxu0 %v964
    %1004 = vmatpush1.msra.mxu0 %v963
    %1005 = vmatprep.subr.mxu0 %v967
    %1006 = vmatpush1.msra.mxu0 %v966
    %1007 = vmatprep.subr.mxu0 %v970
    %1008 = vmatpush1.msra.mxu0 %v969
    %1009 = vmatprep.subr.mxu0 %v973
    %1010 = vmatpush1.msra.mxu0 %v972
    %1011 = vmatprep.subr.mxu0 %v976
    %1012 = vmatpush1.msra.mxu0 %v975
    %1013 = vmatprep.subr.mxu0 %v979
    %1014 = vmatpush1.msra.mxu0 %v978
    %1015 = vmatprep.subr.mxu0 %v982
    %1016 = vmatpush1.msra.mxu0 %v981
    %1017 = vmatprep.subr.mxu0 %v985
    %1018 = vmatpush1.msra.mxu0 %v984
    %1019 = vmatprep.subr.mxu0 0.0
    %1020 = vmatpush1.msra.mxu0 0.0
    %1021 = vmatprep.subr.mxu0 0.0
    %1022 = vmatpush1.msra.mxu0 0.0
    %1023 = vmatprep.subr.mxu0 0.0
    %1024 = vmatpush1.msra.mxu0 0.0
    %1025 = vmatprep.subr.mxu0 0.0
    %1026 = vmatpush1.msra.mxu0 0.0
    %1027 = vmatprep.subr.mxu0 0.0
    %1028 = vmatpush1.msra.mxu0 0.0
    %1029 = vmatprep.subr.mxu0 0.0
    %1030 = vmatpush1.msra.mxu0 0.0
    %1031 = vmatprep.subr.mxu0 0.0
    %1032 = vmatpush1.msra.mxu0 0.0
    %1033 = vmatprep.subr.mxu0 0.0
    %1034 = vmatpush1.msra.mxu0 0.0
    %1035 = vmatprep.subr.mxu0 0.0
    %1036 = vmatpush1.msra.mxu0 0.0
    %1037 = vmatprep.subr.mxu0 0.0
    %1038 = vmatpush1.msra.mxu0 0.0
    %1039 = vmatprep.subr.mxu0 0.0
    %1040 = vmatpush1.msra.mxu0 0.0
    %1041 = vmatprep.subr.mxu0 0.0
    %1042 = vmatpush1.msra.mxu0 0.0
    %1043 = vmatprep.subr.mxu0 0.0
    %1044 = vmatpush1.msra.mxu0 0.0
    %1045 = vmatprep.subr.mxu0 0.0
    %1046 = vmatpush1.msra.mxu0 0.0
    %1047 = vmatprep.subr.mxu0 0.0
    %1048 = vmatpush1.msra.mxu0 0.0
    %1049 = vmatprep.subr.mxu0 0.0
    %1050 = vmatpush1.msra.mxu0 0.0
    %1051 = vmatprep.mubr.f32.mxu0 0.0
    %1052 = vmatmul.mubr.f32.gmra.mrb[0].mxu0 %v526
    %v1053 = vpop.f32.mrb[0].mxu0
    %v1054 = vadd.f32 %v142, %v1053
    %v1055 = vpop.f32.mrb[0].mxu0
    %v1056 = vadd.f32 %v146, %v1055
    %1057 = vdwg.mxu0
    %1058 = vmatprep.subr.mxu0 0.0
    %1059 = vmatpush1.msra.mxu0 %v941
    %1060 = vmatprep.subr.mxu0 0.0
    %1061 = vmatpush1.msra.mxu0 %v944
    %1062 = vmatprep.subr.mxu0 0.0
    %1063 = vmatpush1.msra.mxu0 %v947
    %1064 = vmatprep.subr.mxu0 0.0
    %1065 = vmatpush1.msra.mxu0 %v950
    %1066 = vmatprep.subr.mxu0 0.0
    %1067 = vmatpush1.msra.mxu0 %v953
    %1068 = vmatprep.subr.mxu0 0.0
    %1069 = vmatpush1.msra.mxu0 %v956
    %1070 = vmatprep.subr.mxu0 0.0
    %1071 = vmatpush1.msra.mxu0 %v959
    %1072 = vmatprep.subr.mxu0 0.0
    %1073 = vmatpush1.msra.mxu0 %v962
    %1074 = vmatprep.subr.mxu0 0.0
    %1075 = vmatpush1.msra.mxu0 %v965
    %1076 = vmatprep.subr.mxu0 0.0
    %1077 = vmatpush1.msra.mxu0 %v968
    %1078 = vmatprep.subr.mxu0 0.0
    %1079 = vmatpush1.msra.mxu0 %v971
    %1080 = vmatprep.subr.mxu0 0.0
    %1081 = vmatpush1.msra.mxu0 %v974
    %1082 = vmatprep.subr.mxu0 0.0
    %1083 = vmatpush1.msra.mxu0 %v977
    %1084 = vmatprep.subr.mxu0 0.0
    %1085 = vmatpush1.msra.mxu0 %v980
    %1086 = vmatprep.subr.mxu0 0.0
    %1087 = vmatpush1.msra.mxu0 %v983
    %1088 = vmatprep.subr.mxu0 0.0
    %1089 = vmatpush1.msra.mxu0 %v986
    %1090 = vmatprep.subr.mxu0 0.0
    %1091 = vmatpush1.msra.mxu0 0.0
    %1092 = vmatprep.subr.mxu0 0.0
    %1093 = vmatpush1.msra.mxu0 0.0
    %1094 = vmatprep.subr.mxu0 0.0
    %1095 = vmatpush1.msra.mxu0 0.0
    %1096 = vmatprep.subr.mxu0 0.0
    %1097 = vmatpush1.msra.mxu0 0.0
    %1098 = vmatprep.subr.mxu0 0.0
    %1099 = vmatpush1.msra.mxu0 0.0
    %1100 = vmatprep.subr.mxu0 0.0
    %1101 = vmatpush1.msra.mxu0 0.0
    %1102 = vmatprep.subr.mxu0 0.0
    %1103 = vmatpush1.msra.mxu0 0.0
    %1104 = vmatprep.subr.mxu0 0.0
    %1105 = vmatpush1.msra.mxu0 0.0
    %1106 = vmatprep.subr.mxu0 0.0
    %1107 = vmatpush1.msra.mxu0 0.0
    %1108 = vmatprep.subr.mxu0 0.0
    %1109 = vmatpush1.msra.mxu0 0.0
    %1110 = vmatprep.subr.mxu0 0.0
    %1111 = vmatpush1.msra.mxu0 0.0
    %1112 = vmatprep.subr.mxu0 0.0
    %1113 = vmatpush1.msra.mxu0 0.0
    %1114 = vmatprep.subr.mxu0 0.0
    %1115 = vmatpush1.msra.mxu0 0.0
    %1116 = vmatprep.subr.mxu0 0.0
    %1117 = vmatpush1.msra.mxu0 0.0
    %1118 = vmatprep.subr.mxu0 0.0
    %1119 = vmatpush1.msra.mxu0 0.0
    %1120 = vmatprep.subr.mxu0 0.0
    %1121 = vmatpush1.msra.mxu0 0.0
    %1122 = vmatprep.mubr.f32.mxu0 0.0
    %1123 = vmatmul.mubr.f32.gmra.mrb[0].mxu0 %v526
    %v1124 = vpop.f32.mrb[0].mxu0
    %v1125 = vadd.f32 %v150, %v1124
    %v1126 = vpop.f32.mrb[0].mxu0
    %1127 = vdwg.mxu0
    %v1128 = vld [vmem:[#allocation7 + $0x30] sm:$0xff]
    %v1129 = vld [vmem:[#allocation7 + $0x38] sm:$0xff]
    %v1130 = vld [vmem:[#allocation7 + $0x40] sm:$0xff]
    %v1131 = vld [vmem:[#allocation7 + $0x78] sm:$0xff]
    %v1132 = vld [vmem:[#allocation7 + $0x80] sm:$0xff]
    %v1133 = vld [vmem:[#allocation7 + $0x88] sm:$0xff]
    %v1134 = vld [vmem:[#allocation7 + $0xc0] sm:$0xff]
    %v1135 = vld [vmem:[#allocation7 + $0xc8] sm:$0xff]
    %v1136 = vld [vmem:[#allocation7 + $0xd0] sm:$0xff]
    %v1137 = vld [vmem:[#allocation7 + $0x108] sm:$0xff]
    %v1138 = vld [vmem:[#allocation7 + $0x110] sm:$0xff]
    %v1139 = vld [vmem:[#allocation7 + $0x118] sm:$0xff]
    %v1140 = vld [vmem:[#allocation7 + $0x150] sm:$0xff]
    %v1141 = vld [vmem:[#allocation7 + $0x158] sm:$0xff]
    %v1142 = vld [vmem:[#allocation7 + $0x160] sm:$0xff]
    %v1143 = vld [vmem:[#allocation7 + $0x198] sm:$0xff]
    %v1144 = vld [vmem:[#allocation7 + $0x1a0] sm:$0xff]
    %v1145 = vld [vmem:[#allocation7 + $0x1a8] sm:$0xff]
    %v1146 = vld [vmem:[#allocation7 + $0x1e0] sm:$0xff]
    %v1147 = vld [vmem:[#allocation7 + $0x1e8] sm:$0xff]
    %v1148 = vld [vmem:[#allocation7 + $0x1f0] sm:$0xff]
    %v1149 = vld [vmem:[#allocation7 + $0x228] sm:$0xff]
    %v1150 = vld [vmem:[#allocation7 + $0x230] sm:$0xff]
    %v1151 = vld [vmem:[#allocation7 + $0x238] sm:$0xff]
    %v1152 = vld [vmem:[#allocation7 + $0x270] sm:$0xff]
    %v1153 = vld [vmem:[#allocation7 + $0x278] sm:$0xff]
    %v1154 = vld [vmem:[#allocation7 + $0x280] sm:$0xff]
    %v1155 = vld [vmem:[#allocation7 + $0x2b8] sm:$0xff]
    %v1156 = vld [vmem:[#allocation7 + $0x2c0] sm:$0xff]
    %v1157 = vld [vmem:[#allocation7 + $0x2c8] sm:$0xff]
    %v1158 = vld [vmem:[#allocation7 + $0x300] sm:$0xff]
    %v1159 = vld [vmem:[#allocation7 + $0x308] sm:$0xff]
    %v1160 = vld [vmem:[#allocation7 + $0x310] sm:$0xff]
    %v1161 = vld [vmem:[#allocation7 + $0x348] sm:$0xff]
    %v1162 = vld [vmem:[#allocation7 + $0x350] sm:$0xff]
    %v1163 = vld [vmem:[#allocation7 + $0x358] sm:$0xff]
    %v1164 = vld [vmem:[#allocation7 + $0x390] sm:$0xff]
    %v1165 = vld [vmem:[#allocation7 + $0x398] sm:$0xff]
    %v1166 = vld [vmem:[#allocation7 + $0x3a0] sm:$0xff]
    %v1167 = vld [vmem:[#allocation7 + $0x3d8] sm:$0xff]
    %v1168 = vld [vmem:[#allocation7 + $0x3e0] sm:$0xff]
    %v1169 = vld [vmem:[#allocation7 + $0x3e8] sm:$0xff]
    %v1170 = vld [vmem:[#allocation7 + $0x420] sm:$0xff]
    %v1171 = vld [vmem:[#allocation7 + $0x428] sm:$0xff]
    %v1172 = vld [vmem:[#allocation7 + $0x430] sm:$0xff]
    %v1173 = vld [vmem:[#allocation7 + $0x468] sm:$0xff]
    %v1174 = vld [vmem:[#allocation7 + $0x470] sm:$0xff]
    %v1175 = vld [vmem:[#allocation7 + $0x478] sm:$0xff]
    %1176 = vmatprep.subr.mxu0 %v1129
    %1177 = vmatpush1.msra.mxu0 %v1128
    %1178 = vmatprep.subr.mxu0 %v1132
    %1179 = vmatpush1.msra.mxu0 %v1131
    %1180 = vmatprep.subr.mxu0 %v1135
    %1181 = vmatpush1.msra.mxu0 %v1134
    %1182 = vmatprep.subr.mxu0 %v1138
    %1183 = vmatpush1.msra.mxu0 %v1137
    %1184 = vmatprep.subr.mxu0 %v1141
    %1185 = vmatpush1.msra.mxu0 %v1140
    %1186 = vmatprep.subr.mxu0 %v1144
    %1187 = vmatpush1.msra.mxu0 %v1143
    %1188 = vmatprep.subr.mxu0 %v1147
    %1189 = vmatpush1.msra.mxu0 %v1146
    %1190 = vmatprep.subr.mxu0 %v1150
    %1191 = vmatpush1.msra.mxu0 %v1149
    %1192 = vmatprep.subr.mxu0 %v1153
    %1193 = vmatpush1.msra.mxu0 %v1152
    %1194 = vmatprep.subr.mxu0 %v1156
    %1195 = vmatpush1.msra.mxu0 %v1155
    %1196 = vmatprep.subr.mxu0 %v1159
    %1197 = vmatpush1.msra.mxu0 %v1158
    %1198 = vmatprep.subr.mxu0 %v1162
    %1199 = vmatpush1.msra.mxu0 %v1161
    %1200 = vmatprep.subr.mxu0 %v1165
    %1201 = vmatpush1.msra.mxu0 %v1164
    %1202 = vmatprep.subr.mxu0 %v1168
    %1203 = vmatpush1.msra.mxu0 %v1167
    %1204 = vmatprep.subr.mxu0 %v1171
    %1205 = vmatpush1.msra.mxu0 %v1170
    %1206 = vmatprep.subr.mxu0 %v1174
    %1207 = vmatpush1.msra.mxu0 %v1173
    %1208 = vmatprep.subr.mxu0 0.0
    %1209 = vmatpush1.msra.mxu0 0.0
    %1210 = vmatprep.subr.mxu0 0.0
    %1211 = vmatpush1.msra.mxu0 0.0
    %1212 = vmatprep.subr.mxu0 0.0
    %1213 = vmatpush1.msra.mxu0 0.0
    %1214 = vmatprep.subr.mxu0 0.0
    %1215 = vmatpush1.msra.mxu0 0.0
    %1216 = vmatprep.subr.mxu0 0.0
    %1217 = vmatpush1.msra.mxu0 0.0
    %1218 = vmatprep.subr.mxu0 0.0
    %1219 = vmatpush1.msra.mxu0 0.0
    %1220 = vmatprep.subr.mxu0 0.0
    %1221 = vmatpush1.msra.mxu0 0.0
    %1222 = vmatprep.subr.mxu0 0.0
    %1223 = vmatpush1.msra.mxu0 0.0
    %1224 = vmatprep.subr.mxu0 0.0
    %1225 = vmatpush1.msra.mxu0 0.0
    %1226 = vmatprep.subr.mxu0 0.0
    %1227 = vmatpush1.msra.mxu0 0.0
    %1228 = vmatprep.subr.mxu0 0.0
    %1229 = vmatpush1.msra.mxu0 0.0
    %1230 = vmatprep.subr.mxu0 0.0
    %1231 = vmatpush1.msra.mxu0 0.0
    %1232 = vmatprep.subr.mxu0 0.0
    %1233 = vmatpush1.msra.mxu0 0.0
    %1234 = vmatprep.subr.mxu0 0.0
    %1235 = vmatpush1.msra.mxu0 0.0
    %1236 = vmatprep.subr.mxu0 0.0
    %1237 = vmatpush1.msra.mxu0 0.0
    %1238 = vmatprep.subr.mxu0 0.0
    %1239 = vmatpush1.msra.mxu0 0.0
    %1240 = vmatprep.mubr.f32.mxu0 0.0
    %1241 = vmatmul.mubr.f32.gmra.mrb[0].mxu0 %v752
    %v1242 = vpop.f32.mrb[0].mxu0
    %v1243 = vadd.f32 %v347, %v1242
    %v1244 = vpop.f32.mrb[0].mxu0
    %v1245 = vadd.f32 %v351, %v1244
    %1246 = vdwg.mxu0
    %1247 = vmatprep.subr.mxu0 0.0
    %1248 = vmatpush1.msra.mxu0 %v1130
    %1249 = vmatprep.subr.mxu0 0.0
    %1250 = vmatpush1.msra.mxu0 %v1133
    %1251 = vmatprep.subr.mxu0 0.0
    %1252 = vmatpush1.msra.mxu0 %v1136
    %1253 = vmatprep.subr.mxu0 0.0
    %1254 = vmatpush1.msra.mxu0 %v1139
    %1255 = vmatprep.subr.mxu0 0.0
    %1256 = vmatpush1.msra.mxu0 %v1142
    %1257 = vmatprep.subr.mxu0 0.0
    %1258 = vmatpush1.msra.mxu0 %v1145
    %1259 = vmatprep.subr.mxu0 0.0
    %1260 = vmatpush1.msra.mxu0 %v1148
    %1261 = vmatprep.subr.mxu0 0.0
    %1262 = vmatpush1.msra.mxu0 %v1151
    %1263 = vmatprep.subr.mxu0 0.0
    %1264 = vmatpush1.msra.mxu0 %v1154
    %1265 = vmatprep.subr.mxu0 0.0
    %1266 = vmatpush1.msra.mxu0 %v1157
    %1267 = vmatprep.subr.mxu0 0.0
    %1268 = vmatpush1.msra.mxu0 %v1160
    %1269 = vmatprep.subr.mxu0 0.0
    %1270 = vmatpush1.msra.mxu0 %v1163
    %1271 = vmatprep.subr.mxu0 0.0
    %1272 = vmatpush1.msra.mxu0 %v1166
    %1273 = vmatprep.subr.mxu0 0.0
    %1274 = vmatpush1.msra.mxu0 %v1169
    %1275 = vmatprep.subr.mxu0 0.0
    %1276 = vmatpush1.msra.mxu0 %v1172
    %1277 = vmatprep.subr.mxu0 0.0
    %1278 = vmatpush1.msra.mxu0 %v1175
    %1279 = vmatprep.subr.mxu0 0.0
    %1280 = vmatpush1.msra.mxu0 0.0
    %1281 = vmatprep.subr.mxu0 0.0
    %1282 = vmatpush1.msra.mxu0 0.0
    %1283 = vmatprep.subr.mxu0 0.0
    %1284 = vmatpush1.msra.mxu0 0.0
    %1285 = vmatprep.subr.mxu0 0.0
    %1286 = vmatpush1.msra.mxu0 0.0
    %1287 = vmatprep.subr.mxu0 0.0
    %1288 = vmatpush1.msra.mxu0 0.0
    %1289 = vmatprep.subr.mxu0 0.0
    %1290 = vmatpush1.msra.mxu0 0.0
    %1291 = vmatprep.subr.mxu0 0.0
    %1292 = vmatpush1.msra.mxu0 0.0
    %1293 = vmatprep.subr.mxu0 0.0
    %1294 = vmatpush1.msra.mxu0 0.0
    %1295 = vmatprep.subr.mxu0 0.0
    %1296 = vmatpush1.msra.mxu0 0.0
    %1297 = vmatprep.subr.mxu0 0.0
    %1298 = vmatpush1.msra.mxu0 0.0
    %1299 = vmatprep.subr.mxu0 0.0
    %1300 = vmatpush1.msra.mxu0 0.0
    %1301 = vmatprep.subr.mxu0 0.0
    %1302 = vmatpush1.msra.mxu0 0.0
    %1303 = vmatprep.subr.mxu0 0.0
    %1304 = vmatpush1.msra.mxu0 0.0
    %1305 = vmatprep.subr.mxu0 0.0
    %1306 = vmatpush1.msra.mxu0 0.0
    %1307 = vmatprep.subr.mxu0 0.0
    %1308 = vmatpush1.msra.mxu0 0.0
    %1309 = vmatprep.subr.mxu0 0.0
    %1310 = vmatpush1.msra.mxu0 0.0
    %1311 = vmatprep.mubr.f32.mxu0 0.0
    %1312 = vmatmul.mubr.f32.gmra.mrb[0].mxu0 %v752
    %v1313 = vpop.f32.mrb[0].mxu0
    %v1314 = vadd.f32 %v355, %v1313
    %v1315 = vpop.f32.mrb[0].mxu0
    %1316 = vdwg.mxu0
    %s1317 = scalar_lea.vmem [#allocation4], 6
    %v1318 = vld [vmem:[%s1317] sm:$0x3f]
    %v1319 = vadd.f32 %v1318, %v1054
    %v1320 = vxor.u32 %v1319, 2147483648
    %v1321 = vmul.f32 %v1320, 1.442695
    %v1322 = vpow.pop %v1321
    %v1323 = vadd.f32 %v1322, 1.0
    %v1324 = vrcp.pop %v1323
    %v1325 = vmul.f32 1.0, %v1324
    %v1327 = vrot.slane %v1318, 2
    %v1329 = vadd.f32 %v1327, %v1056
    %v1330 = vxor.u32 %v1329, 2147483648
    %v1331 = vmul.f32 %v1330, 1.442695
    %v1332 = vpow.pop %v1331
    %v1333 = vadd.f32 %v1332, 1.0
    %v1334 = vrcp.pop %v1333
    %v1335 = vmul.f32 1.0, %v1334
    %v1336 = vmul.f32 %v1325, %v1125
    %v1337 = vrot.slane %v1318, 4
    %v1339 = vadd.f32 %v1337, %v1336
    %v1340 = vtanh.pop %v1339
    %v1341 = vsub.f32 1.0, %v1335
    %v1342 = vmul.f32 %v1341, %v1340
    %v1343 = vmul.f32 %v1335, %v526
    %v1344 = vadd.f32 %v1342, %v1343
    %v1345 = vld [vmem:[#allocation7 + $0x18] sm:$0xff]
    %v1346 = vld [vmem:[#allocation7 + $0x20] sm:$0xff]
    %v1347 = vld [vmem:[#allocation7 + $0x28] sm:$0xff]
    %v1348 = vld [vmem:[#allocation7 + $0x60] sm:$0xff]
    %v1349 = vld [vmem:[#allocation7 + $0x68] sm:$0xff]
    %v1350 = vld [vmem:[#allocation7 + $0x70] sm:$0xff]
    %v1351 = vld [vmem:[#allocation7 + $0xa8] sm:$0xff]
    %v1352 = vld [vmem:[#allocation7 + $0xb0] sm:$0xff]
    %v1353 = vld [vmem:[#allocation7 + $0xb8] sm:$0xff]
    %v1354 = vld [vmem:[#allocation7 + $0xf0] sm:$0xff]
    %v1355 = vld [vmem:[#allocation7 + $0xf8] sm:$0xff]
    %v1356 = vld [vmem:[#allocation7 + $0x100] sm:$0xff]
    %v1357 = vld [vmem:[#allocation7 + $0x138] sm:$0xff]
    %v1358 = vld [vmem:[#allocation7 + $0x140] sm:$0xff]
    %v1359 = vld [vmem:[#allocation7 + $0x148] sm:$0xff]
    %v1360 = vld [vmem:[#allocation7 + $0x180] sm:$0xff]
    %v1361 = vld [vmem:[#allocation7 + $0x188] sm:$0xff]
    %v1362 = vld [vmem:[#allocation7 + $0x190] sm:$0xff]
    %v1363 = vld [vmem:[#allocation7 + $0x1c8] sm:$0xff]
    %v1364 = vld [vmem:[#allocation7 + $0x1d0] sm:$0xff]
    %v1365 = vld [vmem:[#allocation7 + $0x1d8] sm:$0xff]
    %v1366 = vld [vmem:[#allocation7 + $0x210] sm:$0xff]
    %v1367 = vld [vmem:[#allocation7 + $0x218] sm:$0xff]
    %v1368 = vld [vmem:[#allocation7 + $0x220] sm:$0xff]
    %v1369 = vld [vmem:[#allocation7 + $0x258] sm:$0xff]
    %v1370 = vld [vmem:[#allocation7 + $0x260] sm:$0xff]
    %v1371 = vld [vmem:[#allocation7 + $0x268] sm:$0xff]
    %v1372 = vld [vmem:[#allocation7 + $0x2a0] sm:$0xff]
    %v1373 = vld [vmem:[#allocation7 + $0x2a8] sm:$0xff]
    %v1374 = vld [vmem:[#allocation7 + $0x2b0] sm:$0xff]
    %v1375 = vld [vmem:[#allocation7 + $0x2e8] sm:$0xff]
    %v1376 = vld [vmem:[#allocation7 + $0x2f0] sm:$0xff]
    %v1377 = vld [vmem:[#allocation7 + $0x2f8] sm:$0xff]
    %v1378 = vld [vmem:[#allocation7 + $0x330] sm:$0xff]
    %v1379 = vld [vmem:[#allocation7 + $0x338] sm:$0xff]
    %v1380 = vld [vmem:[#allocation7 + $0x340] sm:$0xff]
    %v1381 = vld [vmem:[#allocation7 + $0x378] sm:$0xff]
    %v1382 = vld [vmem:[#allocation7 + $0x380] sm:$0xff]
    %v1383 = vld [vmem:[#allocation7 + $0x388] sm:$0xff]
    %v1384 = vld [vmem:[#allocation7 + $0x3c0] sm:$0xff]
    %v1385 = vld [vmem:[#allocation7 + $0x3c8] sm:$0xff]
    %v1386 = vld [vmem:[#allocation7 + $0x3d0] sm:$0xff]
    %v1387 = vld [vmem:[#allocation7 + $0x408] sm:$0xff]
    %v1388 = vld [vmem:[#allocation7 + $0x410] sm:$0xff]
    %v1389 = vld [vmem:[#allocation7 + $0x418] sm:$0xff]
    %v1390 = vld [vmem:[#allocation7 + $0x450] sm:$0xff]
    %v1391 = vld [vmem:[#allocation7 + $0x458] sm:$0xff]
    %v1392 = vld [vmem:[#allocation7 + $0x460] sm:$0xff]
    %1393 = vmatprep.subr.mxu0 %v1346
    %1394 = vmatpush1.msra.mxu0 %v1345
    %1395 = vmatprep.subr.mxu0 %v1349
    %1396 = vmatpush1.msra.mxu0 %v1348
    %1397 = vmatprep.subr.mxu0 %v1352
    %1398 = vmatpush1.msra.mxu0 %v1351
    %1399 = vmatprep.subr.mxu0 %v1355
    %1400 = vmatpush1.msra.mxu0 %v1354
    %1401 = vmatprep.subr.mxu0 %v1358
    %1402 = vmatpush1.msra.mxu0 %v1357
    %1403 = vmatprep.subr.mxu0 %v1361
    %1404 = vmatpush1.msra.mxu0 %v1360
    %1405 = vmatprep.subr.mxu0 %v1364
    %1406 = vmatpush1.msra.mxu0 %v1363
    %1407 = vmatprep.subr.mxu0 %v1367
    %1408 = vmatpush1.msra.mxu0 %v1366
    %1409 = vmatprep.subr.mxu0 %v1370
    %1410 = vmatpush1.msra.mxu0 %v1369
    %1411 = vmatprep.subr.mxu0 %v1373
    %1412 = vmatpush1.msra.mxu0 %v1372
    %1413 = vmatprep.subr.mxu0 %v1376
    %1414 = vmatpush1.msra.mxu0 %v1375
    %1415 = vmatprep.subr.mxu0 %v1379
    %1416 = vmatpush1.msra.mxu0 %v1378
    %1417 = vmatprep.subr.mxu0 %v1382
    %1418 = vmatpush1.msra.mxu0 %v1381
    %1419 = vmatprep.subr.mxu0 %v1385
    %1420 = vmatpush1.msra.mxu0 %v1384
    %1421 = vmatprep.subr.mxu0 %v1388
    %1422 = vmatpush1.msra.mxu0 %v1387
    %1423 = vmatprep.subr.mxu0 %v1391
    %1424 = vmatpush1.msra.mxu0 %v1390
    %1425 = vmatprep.subr.mxu0 0.0
    %1426 = vmatpush1.msra.mxu0 0.0
    %1427 = vmatprep.subr.mxu0 0.0
    %1428 = vmatpush1.msra.mxu0 0.0
    %1429 = vmatprep.subr.mxu0 0.0
    %1430 = vmatpush1.msra.mxu0 0.0
    %1431 = vmatprep.subr.mxu0 0.0
    %1432 = vmatpush1.msra.mxu0 0.0
    %1433 = vmatprep.subr.mxu0 0.0
    %1434 = vmatpush1.msra.mxu0 0.0
    %1435 = vmatprep.subr.mxu0 0.0
    %1436 = vmatpush1.msra.mxu0 0.0
    %1437 = vmatprep.subr.mxu0 0.0
    %1438 = vmatpush1.msra.mxu0 0.0
    %1439 = vmatprep.subr.mxu0 0.0
    %1440 = vmatpush1.msra.mxu0 0.0
    %1441 = vmatprep.subr.mxu0 0.0
    %1442 = vmatpush1.msra.mxu0 0.0
    %1443 = vmatprep.subr.mxu0 0.0
    %1444 = vmatpush1.msra.mxu0 0.0
    %1445 = vmatprep.subr.mxu0 0.0
    %1446 = vmatpush1.msra.mxu0 0.0
    %1447 = vmatprep.subr.mxu0 0.0
    %1448 = vmatpush1.msra.mxu0 0.0
    %1449 = vmatprep.subr.mxu0 0.0
    %1450 = vmatpush1.msra.mxu0 0.0
    %1451 = vmatprep.subr.mxu0 0.0
    %1452 = vmatpush1.msra.mxu0 0.0
    %1453 = vmatprep.subr.mxu0 0.0
    %1454 = vmatpush1.msra.mxu0 0.0
    %1455 = vmatprep.subr.mxu0 0.0
    %1456 = vmatpush1.msra.mxu0 0.0
    %1457 = vmatprep.mubr.f32.mxu0 0.0
    %1458 = vmatmul.mubr.f32.gmra.mrb[0].mxu0 %v1344
    %v1459 = vpop.f32.mrb[0].mxu0
    %v1460 = vadd.f32 %v579, %v1459
    %v1461 = vpop.f32.mrb[0].mxu0
    %v1462 = vadd.f32 %v583, %v1461
    %1463 = vdwg.mxu0
    %1464 = vmatprep.subr.mxu0 0.0
    %1465 = vmatpush1.msra.mxu0 %v1347
    %1466 = vmatprep.subr.mxu0 0.0
    %1467 = vmatpush1.msra.mxu0 %v1350
    %1468 = vmatprep.subr.mxu0 0.0
    %1469 = vmatpush1.msra.mxu0 %v1353
    %1470 = vmatprep.subr.mxu0 0.0
    %1471 = vmatpush1.msra.mxu0 %v1356
    %1472 = vmatprep.subr.mxu0 0.0
    %1473 = vmatpush1.msra.mxu0 %v1359
    %1474 = vmatprep.subr.mxu0 0.0
    %1475 = vmatpush1.msra.mxu0 %v1362
    %1476 = vmatprep.subr.mxu0 0.0
    %1477 = vmatpush1.msra.mxu0 %v1365
    %1478 = vmatprep.subr.mxu0 0.0
    %1479 = vmatpush1.msra.mxu0 %v1368
    %1480 = vmatprep.subr.mxu0 0.0
    %1481 = vmatpush1.msra.mxu0 %v1371
    %1482 = vmatprep.subr.mxu0 0.0
    %1483 = vmatpush1.msra.mxu0 %v1374
    %1484 = vmatprep.subr.mxu0 0.0
    %1485 = vmatpush1.msra.mxu0 %v1377
    %1486 = vmatprep.subr.mxu0 0.0
    %1487 = vmatpush1.msra.mxu0 %v1380
    %1488 = vmatprep.subr.mxu0 0.0
    %1489 = vmatpush1.msra.mxu0 %v1383
    %1490 = vmatprep.subr.mxu0 0.0
    %1491 = vmatpush1.msra.mxu0 %v1386
    %1492 = vmatprep.subr.mxu0 0.0
    %1493 = vmatpush1.msra.mxu0 %v1389
    %1494 = vmatprep.subr.mxu0 0.0
    %1495 = vmatpush1.msra.mxu0 %v1392
    %1496 = vmatprep.subr.mxu0 0.0
    %1497 = vmatpush1.msra.mxu0 0.0
    %1498 = vmatprep.subr.mxu0 0.0
    %1499 = vmatpush1.msra.mxu0 0.0
    %1500 = vmatprep.subr.mxu0 0.0
    %1501 = vmatpush1.msra.mxu0 0.0
    %1502 = vmatprep.subr.mxu0 0.0
    %1503 = vmatpush1.msra.mxu0 0.0
    %1504 = vmatprep.subr.mxu0 0.0
    %1505 = vmatpush1.msra.mxu0 0.0
    %1506 = vmatprep.subr.mxu0 0.0
    %1507 = vmatpush1.msra.mxu0 0.0
    %1508 = vmatprep.subr.mxu0 0.0
    %1509 = vmatpush1.msra.mxu0 0.0
    %1510 = vmatprep.subr.mxu0 0.0
    %1511 = vmatpush1.msra.mxu0 0.0
    %1512 = vmatprep.subr.mxu0 0.0
    %1513 = vmatpush1.msra.mxu0 0.0
    %1514 = vmatprep.subr.mxu0 0.0
    %1515 = vmatpush1.msra.mxu0 0.0
    %1516 = vmatprep.subr.mxu0 0.0
    %1517 = vmatpush1.msra.mxu0 0.0
    %1518 = vmatprep.subr.mxu0 0.0
    %1519 = vmatpush1.msra.mxu0 0.0
    %1520 = vmatprep.subr.mxu0 0.0
    %1521 = vmatpush1.msra.mxu0 0.0
    %1522 = vmatprep.subr.mxu0 0.0
    %1523 = vmatpush1.msra.mxu0 0.0
    %1524 = vmatprep.subr.mxu0 0.0
    %1525 = vmatpush1.msra.mxu0 0.0
    %1526 = vmatprep.subr.mxu0 0.0
    %1527 = vmatpush1.msra.mxu0 0.0
    %1528 = vmatprep.mubr.f32.mxu0 0.0
    %1529 = vmatmul.mubr.f32.gmra.mrb[0].mxu0 %v1344
    %v1530 = vpop.f32.mrb[0].mxu0
    %v1531 = vadd.f32 %v587, %v1530
    %v1532 = vpop.f32.mrb[0].mxu0
    %1533 = vdwg.mxu0
    %v1534 = vadd.f32 %v1460, %v1243
    %v1535 = vxor.u32 %v1534, 2147483648
    %v1536 = vmul.f32 %v1535, 1.442695
    %v1537 = vpow.pop %v1536
    %v1538 = vadd.f32 %v1537, 1.0
    %v1539 = vrcp.pop %v1538
    %v1540 = vmul.f32 1.0, %v1539
    %v1541 = vadd.f32 %v1462, %v1245
    %v1542 = vxor.u32 %v1541, 2147483648
    %v1543 = vmul.f32 %v1542, 1.442695
    %v1544 = vpow.pop %v1543
    %v1545 = vadd.f32 %v1544, 1.0
    %v1546 = vrcp.pop %v1545
    %v1547 = vmul.f32 1.0, %v1546
    %v1548 = vmul.f32 %v1540, %v1314
    %v1549 = vadd.f32 %v1531, %v1548
    %v1550 = vtanh.pop %v1549
    %v1551 = vsub.f32 1.0, %v1547
    %v1552 = vmul.f32 %v1551, %v1550
    %v1553 = vmul.f32 %v1547, %v752
    %v1554 = vadd.f32 %v1552, %v1553
    %v1555 = vld [vmem:[#allocation10] sm:$0xff]
    %v1556 = vld [vmem:[#allocation10 + $0x10] sm:$0xff]
    %v1557 = vld [vmem:[#allocation10 + $0x20] sm:$0xff]
    %v1558 = vld [vmem:[#allocation10 + $0x30] sm:$0xff]
    %v1559 = vld [vmem:[#allocation10 + $0x40] sm:$0xff]
    %v1560 = vld [vmem:[#allocation10 + $0x50] sm:$0xff]
    %v1561 = vld [vmem:[#allocation10 + $0x60] sm:$0xff]
    %v1562 = vld [vmem:[#allocation10 + $0x70] sm:$0xff]
    %v1563 = vld [vmem:[#allocation10 + $0x80] sm:$0xff]
    %v1564 = vld [vmem:[#allocation10 + $0x90] sm:$0xff]
    %v1565 = vld [vmem:[#allocation10 + $0xa0] sm:$0xff]
    %v1566 = vld [vmem:[#allocation10 + $0xb0] sm:$0xff]
    %v1567 = vld [vmem:[#allocation10 + $0xc0] sm:$0xff]
    %v1568 = vld [vmem:[#allocation10 + $0xd0] sm:$0xff]
    %v1569 = vld [vmem:[#allocation10 + $0xe0] sm:$0xff]
    %v1570 = vld [vmem:[#allocation10 + $0xf0] sm:$0xff]
    %1571 = vmatprep.subr.mxu0 0.0
    %1572 = vmatpush1.msra.mxu0 %v1555
    %1573 = vmatprep.subr.mxu0 0.0
    %1574 = vmatpush1.msra.mxu0 %v1556
    %1575 = vmatprep.subr.mxu0 0.0
    %1576 = vmatpush1.msra.mxu0 %v1557
    %1577 = vmatprep.subr.mxu0 0.0
    %1578 = vmatpush1.msra.mxu0 %v1558
    %1579 = vmatprep.subr.mxu0 0.0
    %1580 = vmatpush1.msra.mxu0 %v1559
    %1581 = vmatprep.subr.mxu0 0.0
    %1582 = vmatpush1.msra.mxu0 %v1560
    %1583 = vmatprep.subr.mxu0 0.0
    %1584 = vmatpush1.msra.mxu0 %v1561
    %1585 = vmatprep.subr.mxu0 0.0
    %1586 = vmatpush1.msra.mxu0 %v1562
    %1587 = vmatprep.subr.mxu0 0.0
    %1588 = vmatpush1.msra.mxu0 %v1563
    %1589 = vmatprep.subr.mxu0 0.0
    %1590 = vmatpush1.msra.mxu0 %v1564
    %1591 = vmatprep.subr.mxu0 0.0
    %1592 = vmatpush1.msra.mxu0 %v1565
    %1593 = vmatprep.subr.mxu0 0.0
    %1594 = vmatpush1.msra.mxu0 %v1566
    %1595 = vmatprep.subr.mxu0 0.0
    %1596 = vmatpush1.msra.mxu0 %v1567
    %1597 = vmatprep.subr.mxu0 0.0
    %1598 = vmatpush1.msra.mxu0 %v1568
    %1599 = vmatprep.subr.mxu0 0.0
    %1600 = vmatpush1.msra.mxu0 %v1569
    %1601 = vmatprep.subr.mxu0 0.0
    %1602 = vmatpush1.msra.mxu0 %v1570
    %1603 = vmatprep.subr.mxu0 0.0
    %1604 = vmatpush1.msra.mxu0 0.0
    %1605 = vmatprep.subr.mxu0 0.0
    %1606 = vmatpush1.msra.mxu0 0.0
    %1607 = vmatprep.subr.mxu0 0.0
    %1608 = vmatpush1.msra.mxu0 0.0
    %1609 = vmatprep.subr.mxu0 0.0
    %1610 = vmatpush1.msra.mxu0 0.0
    %1611 = vmatprep.subr.mxu0 0.0
    %1612 = vmatpush1.msra.mxu0 0.0
    %1613 = vmatprep.subr.mxu0 0.0
    %1614 = vmatpush1.msra.mxu0 0.0
    %1615 = vmatprep.subr.mxu0 0.0
    %1616 = vmatpush1.msra.mxu0 0.0
    %1617 = vmatprep.subr.mxu0 0.0
    %1618 = vmatpush1.msra.mxu0 0.0
    %1619 = vmatprep.subr.mxu0 0.0
    %1620 = vmatpush1.msra.mxu0 0.0
    %1621 = vmatprep.subr.mxu0 0.0
    %1622 = vmatpush1.msra.mxu0 0.0
    %1623 = vmatprep.subr.mxu0 0.0
    %1624 = vmatpush1.msra.mxu0 0.0
    %1625 = vmatprep.subr.mxu0 0.0
    %1626 = vmatpush1.msra.mxu0 0.0
    %1627 = vmatprep.subr.mxu0 0.0
    %1628 = vmatpush1.msra.mxu0 0.0
    %1629 = vmatprep.subr.mxu0 0.0
    %1630 = vmatpush1.msra.mxu0 0.0
    %1631 = vmatprep.subr.mxu0 0.0
    %1632 = vmatpush1.msra.mxu0 0.0
    %1633 = vmatprep.subr.mxu0 0.0
    %1634 = vmatpush1.msra.mxu0 0.0
    %1635 = vmatprep.mubr.f32.mxu0 0.0
    %1636 = vmatmul.mubr.f32.gmra.mrb[0].mxu0 %v1554
    %v1637 = vpop.f32.mrb[0].mxu0
    %v1638 = vadd.f32 %v773, %v1637
    %v1639 = vpop.f32.mrb[0].mxu0
    %1640 = vdwg.mxu0
    %v1641 = vmax.f32 %v1638, 0.0
    %v1642 = vld [vmem:[#allocation10 + $0x8] sm:$0xff]
    %v1643 = vld [vmem:[#allocation10 + $0x18] sm:$0xff]
    %v1644 = vld [vmem:[#allocation10 + $0x28] sm:$0xff]
    %v1645 = vld [vmem:[#allocation10 + $0x38] sm:$0xff]
    %v1646 = vld [vmem:[#allocation10 + $0x48] sm:$0xff]
    %v1647 = vld [vmem:[#allocation10 + $0x58] sm:$0xff]
    %v1648 = vld [vmem:[#allocation10 + $0x68] sm:$0xff]
    %v1649 = vld [vmem:[#allocation10 + $0x78] sm:$0xff]
    %v1650 = vld [vmem:[#allocation10 + $0x88] sm:$0xff]
    %v1651 = vld [vmem:[#allocation10 + $0x98] sm:$0xff]
    %v1652 = vld [vmem:[#allocation10 + $0xa8] sm:$0xff]
    %v1653 = vld [vmem:[#allocation10 + $0xb8] sm:$0xff]
    %v1654 = vld [vmem:[#allocation10 + $0xc8] sm:$0xff]
    %v1655 = vld [vmem:[#allocation10 + $0xd8] sm:$0xff]
    %v1656 = vld [vmem:[#allocation10 + $0xe8] sm:$0xff]
    %v1657 = vld [vmem:[#allocation10 + $0xf8] sm:$0xff]
    %1658 = vmatprep.subr.mxu0 0.0
    %1659 = vmatpush1.msra.mxu0 %v1642
    %1660 = vmatprep.subr.mxu0 0.0
    %1661 = vmatpush1.msra.mxu0 %v1643
    %1662 = vmatprep.subr.mxu0 0.0
    %1663 = vmatpush1.msra.mxu0 %v1644
    %1664 = vmatprep.subr.mxu0 0.0
    %1665 = vmatpush1.msra.mxu0 %v1645
    %1666 = vmatprep.subr.mxu0 0.0
    %1667 = vmatpush1.msra.mxu0 %v1646
    %1668 = vmatprep.subr.mxu0 0.0
    %1669 = vmatpush1.msra.mxu0 %v1647
    %1670 = vmatprep.subr.mxu0 0.0
    %1671 = vmatpush1.msra.mxu0 %v1648
    %1672 = vmatprep.subr.mxu0 0.0
    %1673 = vmatpush1.msra.mxu0 %v1649
    %1674 = vmatprep.subr.mxu0 0.0
    %1675 = vmatpush1.msra.mxu0 %v1650
    %1676 = vmatprep.subr.mxu0 0.0
    %1677 = vmatpush1.msra.mxu0 %v1651
    %1678 = vmatprep.subr.mxu0 0.0
    %1679 = vmatpush1.msra.mxu0 %v1652
    %1680 = vmatprep.subr.mxu0 0.0
    %1681 = vmatpush1.msra.mxu0 %v1653
    %1682 = vmatprep.subr.mxu0 0.0
    %1683 = vmatpush1.msra.mxu0 %v1654
    %1684 = vmatprep.subr.mxu0 0.0
    %1685 = vmatpush1.msra.mxu0 %v1655
    %1686 = vmatprep.subr.mxu0 0.0
    %1687 = vmatpush1.msra.mxu0 %v1656
    %1688 = vmatprep.subr.mxu0 0.0
    %1689 = vmatpush1.msra.mxu0 %v1657
    %1690 = vmatprep.subr.mxu0 0.0
    %1691 = vmatpush1.msra.mxu0 0.0
    %1692 = vmatprep.subr.mxu0 0.0
    %1693 = vmatpush1.msra.mxu0 0.0
    %1694 = vmatprep.subr.mxu0 0.0
    %1695 = vmatpush1.msra.mxu0 0.0
    %1696 = vmatprep.subr.mxu0 0.0
    %1697 = vmatpush1.msra.mxu0 0.0
    %1698 = vmatprep.subr.mxu0 0.0
    %1699 = vmatpush1.msra.mxu0 0.0
    %1700 = vmatprep.subr.mxu0 0.0
    %1701 = vmatpush1.msra.mxu0 0.0
    %1702 = vmatprep.subr.mxu0 0.0
    %1703 = vmatpush1.msra.mxu0 0.0
    %1704 = vmatprep.subr.mxu0 0.0
    %1705 = vmatpush1.msra.mxu0 0.0
    %1706 = vmatprep.subr.mxu0 0.0
    %1707 = vmatpush1.msra.mxu0 0.0
    %1708 = vmatprep.subr.mxu0 0.0
    %1709 = vmatpush1.msra.mxu0 0.0
    %1710 = vmatprep.subr.mxu0 0.0
    %1711 = vmatpush1.msra.mxu0 0.0
    %1712 = vmatprep.subr.mxu0 0.0
    %1713 = vmatpush1.msra.mxu0 0.0
    %1714 = vmatprep.subr.mxu0 0.0
    %1715 = vmatpush1.msra.mxu0 0.0
    %1716 = vmatprep.subr.mxu0 0.0
    %1717 = vmatpush1.msra.mxu0 0.0
    %1718 = vmatprep.subr.mxu0 0.0
    %1719 = vmatpush1.msra.mxu0 0.0
    %1720 = vmatprep.subr.mxu0 0.0
    %1721 = vmatpush1.msra.mxu0 0.0
    %1722 = vmatprep.mubr.f32.mxu0 0.0
    %1723 = vmatmul.mubr.f32.gmra.mrb[0].mxu0 %v1641
    %v1724 = vpop.f32.mrb[0].mxu0
    %v1725 = vadd.f32 %v866, %v1724
    %v1726 = vpop.f32.mrb[0].mxu0
    %1727 = vdwg.mxu0
    %s1728 = scalar_lea.vmem [#allocation12], 2
    %1729 = vst [vmem:[%s1728] sm:$0x3] %v1725
    %v1730 = vld [vmem:[#allocation7] sm:$0xff]
    %v1731 = vld [vmem:[#allocation7 + $0x8] sm:$0xff]
    %v1732 = vld [vmem:[#allocation7 + $0x10] sm:$0xff]
    %v1733 = vld [vmem:[#allocation7 + $0x48] sm:$0xff]
    %v1734 = vld [vmem:[#allocation7 + $0x50] sm:$0xff]
    %v1735 = vld [vmem:[#allocation7 + $0x58] sm:$0xff]
    %v1736 = vld [vmem:[#allocation7 + $0x90] sm:$0xff]
    %v1737 = vld [vmem:[#allocation7 + $0x98] sm:$0xff]
    %v1738 = vld [vmem:[#allocation7 + $0xa0] sm:$0xff]
    %v1739 = vld [vmem:[#allocation7 + $0xd8] sm:$0xff]
    %v1740 = vld [vmem:[#allocation7 + $0xe0] sm:$0xff]
    %v1741 = vld [vmem:[#allocation7 + $0xe8] sm:$0xff]
    %v1742 = vld [vmem:[#allocation7 + $0x120] sm:$0xff]
    %v1743 = vld [vmem:[#allocation7 + $0x128] sm:$0xff]
    %v1744 = vld [vmem:[#allocation7 + $0x130] sm:$0xff]
    %v1745 = vld [vmem:[#allocation7 + $0x168] sm:$0xff]
    %v1746 = vld [vmem:[#allocation7 + $0x170] sm:$0xff]
    %v1747 = vld [vmem:[#allocation7 + $0x178] sm:$0xff]
    %v1748 = vld [vmem:[#allocation7 + $0x1b0] sm:$0xff]
    %v1749 = vld [vmem:[#allocation7 + $0x1b8] sm:$0xff]
    %v1750 = vld [vmem:[#allocation7 + $0x1c0] sm:$0xff]
    %v1751 = vld [vmem:[#allocation7 + $0x1f8] sm:$0xff]
    %v1752 = vld [vmem:[#allocation7 + $0x200] sm:$0xff]
    %v1753 = vld [vmem:[#allocation7 + $0x208] sm:$0xff]
    %v1754 = vld [vmem:[#allocation7 + $0x240] sm:$0xff]
    %v1755 = vld [vmem:[#allocation7 + $0x248] sm:$0xff]
    %v1756 = vld [vmem:[#allocation7 + $0x250] sm:$0xff]
    %v1757 = vld [vmem:[#allocation7 + $0x288] sm:$0xff]
    %v1758 = vld [vmem:[#allocation7 + $0x290] sm:$0xff]
    %v1759 = vld [vmem:[#allocation7 + $0x298] sm:$0xff]
    %v1760 = vld [vmem:[#allocation7 + $0x2d0] sm:$0xff]
    %v1761 = vld [vmem:[#allocation7 + $0x2d8] sm:$0xff]
    %v1762 = vld [vmem:[#allocation7 + $0x2e0] sm:$0xff]
    %v1763 = vld [vmem:[#allocation7 + $0x318] sm:$0xff]
    %v1764 = vld [vmem:[#allocation7 + $0x320] sm:$0xff]
    %v1765 = vld [vmem:[#allocation7 + $0x328] sm:$0xff]
    %v1766 = vld [vmem:[#allocation7 + $0x360] sm:$0xff]
    %v1767 = vld [vmem:[#allocation7 + $0x368] sm:$0xff]
    %v1768 = vld [vmem:[#allocation7 + $0x370] sm:$0xff]
    %v1769 = vld [vmem:[#allocation7 + $0x3a8] sm:$0xff]
    %v1770 = vld [vmem:[#allocation7 + $0x3b0] sm:$0xff]
    %v1771 = vld [vmem:[#allocation7 + $0x3b8] sm:$0xff]
    %v1772 = vld [vmem:[#allocation7 + $0x3f0] sm:$0xff]
    %v1773 = vld [vmem:[#allocation7 + $0x3f8] sm:$0xff]
    %v1774 = vld [vmem:[#allocation7 + $0x400] sm:$0xff]
    %v1775 = vld [vmem:[#allocation7 + $0x438] sm:$0xff]
    %v1776 = vld [vmem:[#allocation7 + $0x440] sm:$0xff]
    %v1777 = vld [vmem:[#allocation7 + $0x448] sm:$0xff]
    %1778 = vmatprep.subr.mxu0 %v1731
    %1779 = vmatpush1.msra.mxu0 %v1730
    %1780 = vmatprep.subr.mxu0 %v1734
    %1781 = vmatpush1.msra.mxu0 %v1733
    %1782 = vmatprep.subr.mxu0 %v1737
    %1783 = vmatpush1.msra.mxu0 %v1736
    %1784 = vmatprep.subr.mxu0 %v1740
    %1785 = vmatpush1.msra.mxu0 %v1739
    %1786 = vmatprep.subr.mxu0 %v1743
    %1787 = vmatpush1.msra.mxu0 %v1742
    %1788 = vmatprep.subr.mxu0 %v1746
    %1789 = vmatpush1.msra.mxu0 %v1745
    %1790 = vmatprep.subr.mxu0 %v1749
    %1791 = vmatpush1.msra.mxu0 %v1748
    %1792 = vmatprep.subr.mxu0 %v1752
    %1793 = vmatpush1.msra.mxu0 %v1751
    %1794 = vmatprep.subr.mxu0 %v1755
    %1795 = vmatpush1.msra.mxu0 %v1754
    %1796 = vmatprep.subr.mxu0 %v1758
    %1797 = vmatpush1.msra.mxu0 %v1757
    %1798 = vmatprep.subr.mxu0 %v1761
    %1799 = vmatpush1.msra.mxu0 %v1760
    %1800 = vmatprep.subr.mxu0 %v1764
    %1801 = vmatpush1.msra.mxu0 %v1763
    %1802 = vmatprep.subr.mxu0 %v1767
    %1803 = vmatpush1.msra.mxu0 %v1766
    %1804 = vmatprep.subr.mxu0 %v1770
    %1805 = vmatpush1.msra.mxu0 %v1769
    %1806 = vmatprep.subr.mxu0 %v1773
    %1807 = vmatpush1.msra.mxu0 %v1772
    %1808 = vmatprep.subr.mxu0 %v1776
    %1809 = vmatpush1.msra.mxu0 %v1775
    %1810 = vmatprep.subr.mxu0 0.0
    %1811 = vmatpush1.msra.mxu0 0.0
    %1812 = vmatprep.subr.mxu0 0.0
    %1813 = vmatpush1.msra.mxu0 0.0
    %1814 = vmatprep.subr.mxu0 0.0
    %1815 = vmatpush1.msra.mxu0 0.0
    %1816 = vmatprep.subr.mxu0 0.0
    %1817 = vmatpush1.msra.mxu0 0.0
    %1818 = vmatprep.subr.mxu0 0.0
    %1819 = vmatpush1.msra.mxu0 0.0
    %1820 = vmatprep.subr.mxu0 0.0
    %1821 = vmatpush1.msra.mxu0 0.0
    %1822 = vmatprep.subr.mxu0 0.0
    %1823 = vmatpush1.msra.mxu0 0.0
    %1824 = vmatprep.subr.mxu0 0.0
    %1825 = vmatpush1.msra.mxu0 0.0
    %1826 = vmatprep.subr.mxu0 0.0
    %1827 = vmatpush1.msra.mxu0 0.0
    %1828 = vmatprep.subr.mxu0 0.0
    %1829 = vmatpush1.msra.mxu0 0.0
    %1830 = vmatprep.subr.mxu0 0.0
    %1831 = vmatpush1.msra.mxu0 0.0
    %1832 = vmatprep.subr.mxu0 0.0
    %1833 = vmatpush1.msra.mxu0 0.0
    %1834 = vmatprep.subr.mxu0 0.0
    %1835 = vmatpush1.msra.mxu0 0.0
    %1836 = vmatprep.subr.mxu0 0.0
    %1837 = vmatpush1.msra.mxu0 0.0
    %1838 = vmatprep.subr.mxu0 0.0
    %1839 = vmatpush1.msra.mxu0 0.0
    %1840 = vmatprep.subr.mxu0 0.0
    %1841 = vmatpush1.msra.mxu0 0.0
    %1842 = vmatprep.mubr.f32.mxu0 0.0
    %1843 = vmatmul.mubr.f32.gmra.mrb[0].mxu0 %v1344
    %v1844 = vpop.f32.mrb[0].mxu0
    %v1845 = vadd.f32 %v142, %v1844
    %v1846 = vpop.f32.mrb[0].mxu0
    %v1847 = vadd.f32 %v146, %v1846
    %1848 = vdwg.mxu0
    %1849 = vmatprep.subr.mxu0 0.0
    %1850 = vmatpush1.msra.mxu0 %v1732
    %1851 = vmatprep.subr.mxu0 0.0
    %1852 = vmatpush1.msra.mxu0 %v1735
    %1853 = vmatprep.subr.mxu0 0.0
    %1854 = vmatpush1.msra.mxu0 %v1738
    %1855 = vmatprep.subr.mxu0 0.0
    %1856 = vmatpush1.msra.mxu0 %v1741
    %1857 = vmatprep.subr.mxu0 0.0
    %1858 = vmatpush1.msra.mxu0 %v1744
    %1859 = vmatprep.subr.mxu0 0.0
    %1860 = vmatpush1.msra.mxu0 %v1747
    %1861 = vmatprep.subr.mxu0 0.0
    %1862 = vmatpush1.msra.mxu0 %v1750
    %1863 = vmatprep.subr.mxu0 0.0
    %1864 = vmatpush1.msra.mxu0 %v1753
    %1865 = vmatprep.subr.mxu0 0.0
    %1866 = vmatpush1.msra.mxu0 %v1756
    %1867 = vmatprep.subr.mxu0 0.0
    %1868 = vmatpush1.msra.mxu0 %v1759
    %1869 = vmatprep.subr.mxu0 0.0
    %1870 = vmatpush1.msra.mxu0 %v1762
    %1871 = vmatprep.subr.mxu0 0.0
    %1872 = vmatpush1.msra.mxu0 %v1765
    %1873 = vmatprep.subr.mxu0 0.0
    %1874 = vmatpush1.msra.mxu0 %v1768
    %1875 = vmatprep.subr.mxu0 0.0
    %1876 = vmatpush1.msra.mxu0 %v1771
    %1877 = vmatprep.subr.mxu0 0.0
    %1878 = vmatpush1.msra.mxu0 %v1774
    %1879 = vmatprep.subr.mxu0 0.0
    %1880 = vmatpush1.msra.mxu0 %v1777
    %1881 = vmatprep.subr.mxu0 0.0
    %1882 = vmatpush1.msra.mxu0 0.0
    %1883 = vmatprep.subr.mxu0 0.0
    %1884 = vmatpush1.msra.mxu0 0.0
    %1885 = vmatprep.subr.mxu0 0.0
    %1886 = vmatpush1.msra.mxu0 0.0
    %1887 = vmatprep.subr.mxu0 0.0
    %1888 = vmatpush1.msra.mxu0 0.0
    %1889 = vmatprep.subr.mxu0 0.0
    %1890 = vmatpush1.msra.mxu0 0.0
    %1891 = vmatprep.subr.mxu0 0.0
    %1892 = vmatpush1.msra.mxu0 0.0
    %1893 = vmatprep.subr.mxu0 0.0
    %1894 = vmatpush1.msra.mxu0 0.0
    %1895 = vmatprep.subr.mxu0 0.0
    %1896 = vmatpush1.msra.mxu0 0.0
    %1897 = vmatprep.subr.mxu0 0.0
    %1898 = vmatpush1.msra.mxu0 0.0
    %1899 = vmatprep.subr.mxu0 0.0
    %1900 = vmatpush1.msra.mxu0 0.0
    %1901 = vmatprep.subr.mxu0 0.0
    %1902 = vmatpush1.msra.mxu0 0.0
    %1903 = vmatprep.subr.mxu0 0.0
    %1904 = vmatpush1.msra.mxu0 0.0
    %1905 = vmatprep.subr.mxu0 0.0
    %1906 = vmatpush1.msra.mxu0 0.0
    %1907 = vmatprep.subr.mxu0 0.0
    %1908 = vmatpush1.msra.mxu0 0.0
    %1909 = vmatprep.subr.mxu0 0.0
    %1910 = vmatpush1.msra.mxu0 0.0
    %1911 = vmatprep.subr.mxu0 0.0
    %1912 = vmatpush1.msra.mxu0 0.0
    %1913 = vmatprep.mubr.f32.mxu0 0.0
    %1914 = vmatmul.mubr.f32.gmra.mrb[0].mxu0 %v1344
    %v1915 = vpop.f32.mrb[0].mxu0
    %v1916 = vadd.f32 %v150, %v1915
    %v1917 = vpop.f32.mrb[0].mxu0
    %1918 = vdwg.mxu0
    %v1919 = vld [vmem:[#allocation7 + $0x30] sm:$0xff]
    %v1920 = vld [vmem:[#allocation7 + $0x38] sm:$0xff]
    %v1921 = vld [vmem:[#allocation7 + $0x40] sm:$0xff]
    %v1922 = vld [vmem:[#allocation7 + $0x78] sm:$0xff]
    %v1923 = vld [vmem:[#allocation7 + $0x80] sm:$0xff]
    %v1924 = vld [vmem:[#allocation7 + $0x88] sm:$0xff]
    %v1925 = vld [vmem:[#allocation7 + $0xc0] sm:$0xff]
    %v1926 = vld [vmem:[#allocation7 + $0xc8] sm:$0xff]
    %v1927 = vld [vmem:[#allocation7 + $0xd0] sm:$0xff]
    %v1928 = vld [vmem:[#allocation7 + $0x108] sm:$0xff]
    %v1929 = vld [vmem:[#allocation7 + $0x110] sm:$0xff]
    %v1930 = vld [vmem:[#allocation7 + $0x118] sm:$0xff]
    %v1931 = vld [vmem:[#allocation7 + $0x150] sm:$0xff]
    %v1932 = vld [vmem:[#allocation7 + $0x158] sm:$0xff]
    %v1933 = vld [vmem:[#allocation7 + $0x160] sm:$0xff]
    %v1934 = vld [vmem:[#allocation7 + $0x198] sm:$0xff]
    %v1935 = vld [vmem:[#allocation7 + $0x1a0] sm:$0xff]
    %v1936 = vld [vmem:[#allocation7 + $0x1a8] sm:$0xff]
    %v1937 = vld [vmem:[#allocation7 + $0x1e0] sm:$0xff]
    %v1938 = vld [vmem:[#allocation7 + $0x1e8] sm:$0xff]
    %v1939 = vld [vmem:[#allocation7 + $0x1f0] sm:$0xff]
    %v1940 = vld [vmem:[#allocation7 + $0x228] sm:$0xff]
    %v1941 = vld [vmem:[#allocation7 + $0x230] sm:$0xff]
    %v1942 = vld [vmem:[#allocation7 + $0x238] sm:$0xff]
    %v1943 = vld [vmem:[#allocation7 + $0x270] sm:$0xff]
    %v1944 = vld [vmem:[#allocation7 + $0x278] sm:$0xff]
    %v1945 = vld [vmem:[#allocation7 + $0x280] sm:$0xff]
    %v1946 = vld [vmem:[#allocation7 + $0x2b8] sm:$0xff]
    %v1947 = vld [vmem:[#allocation7 + $0x2c0] sm:$0xff]
    %v1948 = vld [vmem:[#allocation7 + $0x2c8] sm:$0xff]
    %v1949 = vld [vmem:[#allocation7 + $0x300] sm:$0xff]
    %v1950 = vld [vmem:[#allocation7 + $0x308] sm:$0xff]
    %v1951 = vld [vmem:[#allocation7 + $0x310] sm:$0xff]
    %v1952 = vld [vmem:[#allocation7 + $0x348] sm:$0xff]
    %v1953 = vld [vmem:[#allocation7 + $0x350] sm:$0xff]
    %v1954 = vld [vmem:[#allocation7 + $0x358] sm:$0xff]
    %v1955 = vld [vmem:[#allocation7 + $0x390] sm:$0xff]
    %v1956 = vld [vmem:[#allocation7 + $0x398] sm:$0xff]
    %v1957 = vld [vmem:[#allocation7 + $0x3a0] sm:$0xff]
    %v1958 = vld [vmem:[#allocation7 + $0x3d8] sm:$0xff]
    %v1959 = vld [vmem:[#allocation7 + $0x3e0] sm:$0xff]
    %v1960 = vld [vmem:[#allocation7 + $0x3e8] sm:$0xff]
    %v1961 = vld [vmem:[#allocation7 + $0x420] sm:$0xff]
    %v1962 = vld [vmem:[#allocation7 + $0x428] sm:$0xff]
    %v1963 = vld [vmem:[#allocation7 + $0x430] sm:$0xff]
    %v1964 = vld [vmem:[#allocation7 + $0x468] sm:$0xff]
    %v1965 = vld [vmem:[#allocation7 + $0x470] sm:$0xff]
    %v1966 = vld [vmem:[#allocation7 + $0x478] sm:$0xff]
    %1967 = vmatprep.subr.mxu0 %v1920
    %1968 = vmatpush1.msra.mxu0 %v1919
    %1969 = vmatprep.subr.mxu0 %v1923
    %1970 = vmatpush1.msra.mxu0 %v1922
    %1971 = vmatprep.subr.mxu0 %v1926
    %1972 = vmatpush1.msra.mxu0 %v1925
    %1973 = vmatprep.subr.mxu0 %v1929
    %1974 = vmatpush1.msra.mxu0 %v1928
    %1975 = vmatprep.subr.mxu0 %v1932
    %1976 = vmatpush1.msra.mxu0 %v1931
    %1977 = vmatprep.subr.mxu0 %v1935
    %1978 = vmatpush1.msra.mxu0 %v1934
    %1979 = vmatprep.subr.mxu0 %v1938
    %1980 = vmatpush1.msra.mxu0 %v1937
    %1981 = vmatprep.subr.mxu0 %v1941
    %1982 = vmatpush1.msra.mxu0 %v1940
    %1983 = vmatprep.subr.mxu0 %v1944
    %1984 = vmatpush1.msra.mxu0 %v1943
    %1985 = vmatprep.subr.mxu0 %v1947
    %1986 = vmatpush1.msra.mxu0 %v1946
    %1987 = vmatprep.subr.mxu0 %v1950
    %1988 = vmatpush1.msra.mxu0 %v1949
    %1989 = vmatprep.subr.mxu0 %v1953
    %1990 = vmatpush1.msra.mxu0 %v1952
    %1991 = vmatprep.subr.mxu0 %v1956
    %1992 = vmatpush1.msra.mxu0 %v1955
    %1993 = vmatprep.subr.mxu0 %v1959
    %1994 = vmatpush1.msra.mxu0 %v1958
    %1995 = vmatprep.subr.mxu0 %v1962
    %1996 = vmatpush1.msra.mxu0 %v1961
    %1997 = vmatprep.subr.mxu0 %v1965
    %1998 = vmatpush1.msra.mxu0 %v1964
    %1999 = vmatprep.subr.mxu0 0.0
    %2000 = vmatpush1.msra.mxu0 0.0
    %2001 = vmatprep.subr.mxu0 0.0
    %2002 = vmatpush1.msra.mxu0 0.0
    %2003 = vmatprep.subr.mxu0 0.0
    %2004 = vmatpush1.msra.mxu0 0.0
    %2005 = vmatprep.subr.mxu0 0.0
    %2006 = vmatpush1.msra.mxu0 0.0
    %2007 = vmatprep.subr.mxu0 0.0
    %2008 = vmatpush1.msra.mxu0 0.0
    %2009 = vmatprep.subr.mxu0 0.0
    %2010 = vmatpush1.msra.mxu0 0.0
    %2011 = vmatprep.subr.mxu0 0.0
    %2012 = vmatpush1.msra.mxu0 0.0
    %2013 = vmatprep.subr.mxu0 0.0
    %2014 = vmatpush1.msra.mxu0 0.0
    %2015 = vmatprep.subr.mxu0 0.0
    %2016 = vmatpush1.msra.mxu0 0.0
    %2017 = vmatprep.subr.mxu0 0.0
    %2018 = vmatpush1.msra.mxu0 0.0
    %2019 = vmatprep.subr.mxu0 0.0
    %2020 = vmatpush1.msra.mxu0 0.0
    %2021 = vmatprep.subr.mxu0 0.0
    %2022 = vmatpush1.msra.mxu0 0.0
    %2023 = vmatprep.subr.mxu0 0.0
    %2024 = vmatpush1.msra.mxu0 0.0
    %2025 = vmatprep.subr.mxu0 0.0
    %2026 = vmatpush1.msra.mxu0 0.0
    %2027 = vmatprep.subr.mxu0 0.0
    %2028 = vmatpush1.msra.mxu0 0.0
    %2029 = vmatprep.subr.mxu0 0.0
    %2030 = vmatpush1.msra.mxu0 0.0
    %2031 = vmatprep.mubr.f32.mxu0 0.0
    %2032 = vmatmul.mubr.f32.gmra.mrb[0].mxu0 %v1554
    %v2033 = vpop.f32.mrb[0].mxu0
    %v2034 = vadd.f32 %v347, %v2033
    %v2035 = vpop.f32.mrb[0].mxu0
    %v2036 = vadd.f32 %v351, %v2035
    %2037 = vdwg.mxu0
    %2038 = vmatprep.subr.mxu0 0.0
    %2039 = vmatpush1.msra.mxu0 %v1921
    %2040 = vmatprep.subr.mxu0 0.0
    %2041 = vmatpush1.msra.mxu0 %v1924
    %2042 = vmatprep.subr.mxu0 0.0
    %2043 = vmatpush1.msra.mxu0 %v1927
    %2044 = vmatprep.subr.mxu0 0.0
    %2045 = vmatpush1.msra.mxu0 %v1930
    %2046 = vmatprep.subr.mxu0 0.0
    %2047 = vmatpush1.msra.mxu0 %v1933
    %2048 = vmatprep.subr.mxu0 0.0
    %2049 = vmatpush1.msra.mxu0 %v1936
    %2050 = vmatprep.subr.mxu0 0.0
    %2051 = vmatpush1.msra.mxu0 %v1939
    %2052 = vmatprep.subr.mxu0 0.0
    %2053 = vmatpush1.msra.mxu0 %v1942
    %2054 = vmatprep.subr.mxu0 0.0
    %2055 = vmatpush1.msra.mxu0 %v1945
    %2056 = vmatprep.subr.mxu0 0.0
    %2057 = vmatpush1.msra.mxu0 %v1948
    %2058 = vmatprep.subr.mxu0 0.0
    %2059 = vmatpush1.msra.mxu0 %v1951
    %2060 = vmatprep.subr.mxu0 0.0
    %2061 = vmatpush1.msra.mxu0 %v1954
    %2062 = vmatprep.subr.mxu0 0.0
    %2063 = vmatpush1.msra.mxu0 %v1957
    %2064 = vmatprep.subr.mxu0 0.0
    %2065 = vmatpush1.msra.mxu0 %v1960
    %2066 = vmatprep.subr.mxu0 0.0
    %2067 = vmatpush1.msra.mxu0 %v1963
    %2068 = vmatprep.subr.mxu0 0.0
    %2069 = vmatpush1.msra.mxu0 %v1966
    %2070 = vmatprep.subr.mxu0 0.0
    %2071 = vmatpush1.msra.mxu0 0.0
    %2072 = vmatprep.subr.mxu0 0.0
    %2073 = vmatpush1.msra.mxu0 0.0
    %2074 = vmatprep.subr.mxu0 0.0
    %2075 = vmatpush1.msra.mxu0 0.0
    %2076 = vmatprep.subr.mxu0 0.0
    %2077 = vmatpush1.msra.mxu0 0.0
    %2078 = vmatprep.subr.mxu0 0.0
    %2079 = vmatpush1.msra.mxu0 0.0
    %2080 = vmatprep.subr.mxu0 0.0
    %2081 = vmatpush1.msra.mxu0 0.0
    %2082 = vmatprep.subr.mxu0 0.0
    %2083 = vmatpush1.msra.mxu0 0.0
    %2084 = vmatprep.subr.mxu0 0.0
    %2085 = vmatpush1.msra.mxu0 0.0
    %2086 = vmatprep.subr.mxu0 0.0
    %2087 = vmatpush1.msra.mxu0 0.0
    %2088 = vmatprep.subr.mxu0 0.0
    %2089 = vmatpush1.msra.mxu0 0.0
    %2090 = vmatprep.subr.mxu0 0.0
    %2091 = vmatpush1.msra.mxu0 0.0
    %2092 = vmatprep.subr.mxu0 0.0
    %2093 = vmatpush1.msra.mxu0 0.0
    %2094 = vmatprep.subr.mxu0 0.0
    %2095 = vmatpush1.msra.mxu0 0.0
    %2096 = vmatprep.subr.mxu0 0.0
    %2097 = vmatpush1.msra.mxu0 0.0
    %2098 = vmatprep.subr.mxu0 0.0
    %2099 = vmatpush1.msra.mxu0 0.0
    %2100 = vmatprep.subr.mxu0 0.0
    %2101 = vmatpush1.msra.mxu0 0.0
    %2102 = vmatprep.mubr.f32.mxu0 0.0
    %2103 = vmatmul.mubr.f32.gmra.mrb[0].mxu0 %v1554
    %v2104 = vpop.f32.mrb[0].mxu0
    %v2105 = vadd.f32 %v355, %v2104
    %v2106 = vpop.f32.mrb[0].mxu0
    %2107 = vdwg.mxu0
    %s2108 = scalar_lea.vmem [#allocation4], 12
    %v2109 = vld [vmem:[%s2108] sm:$0x3f]
    %v2110 = vadd.f32 %v2109, %v1845
    %v2111 = vxor.u32 %v2110, 2147483648
    %v2112 = vmul.f32 %v2111, 1.442695
    %v2113 = vpow.pop %v2112
    %v2114 = vadd.f32 %v2113, 1.0
    %v2115 = vrcp.pop %v2114
    %v2116 = vmul.f32 1.0, %v2115
    %v2118 = vrot.slane %v2109, 2
    %v2120 = vadd.f32 %v2118, %v1847
    %v2121 = vxor.u32 %v2120, 2147483648
    %v2122 = vmul.f32 %v2121, 1.442695
    %v2123 = vpow.pop %v2122
    %v2124 = vadd.f32 %v2123, 1.0
    %v2125 = vrcp.pop %v2124
    %v2126 = vmul.f32 1.0, %v2125
    %v2127 = vmul.f32 %v2116, %v1916
    %v2128 = vrot.slane %v2109, 4
    %v2130 = vadd.f32 %v2128, %v2127
    %v2131 = vtanh.pop %v2130
    %v2132 = vsub.f32 1.0, %v2126
    %v2133 = vmul.f32 %v2132, %v2131
    %v2134 = vmul.f32 %v2126, %v1344
    %v2135 = vadd.f32 %v2133, %v2134
    %v2136 = vld [vmem:[#allocation7 + $0x18] sm:$0xff]
    %v2137 = vld [vmem:[#allocation7 + $0x20] sm:$0xff]
    %v2138 = vld [vmem:[#allocation7 + $0x28] sm:$0xff]
    %v2139 = vld [vmem:[#allocation7 + $0x60] sm:$0xff]
    %v2140 = vld [vmem:[#allocation7 + $0x68] sm:$0xff]
    %v2141 = vld [vmem:[#allocation7 + $0x70] sm:$0xff]
    %v2142 = vld [vmem:[#allocation7 + $0xa8] sm:$0xff]
    %v2143 = vld [vmem:[#allocation7 + $0xb0] sm:$0xff]
    %v2144 = vld [vmem:[#allocation7 + $0xb8] sm:$0xff]
    %v2145 = vld [vmem:[#allocation7 + $0xf0] sm:$0xff]
    %v2146 = vld [vmem:[#allocation7 + $0xf8] sm:$0xff]
    %v2147 = vld [vmem:[#allocation7 + $0x100] sm:$0xff]
    %v2148 = vld [vmem:[#allocation7 + $0x138] sm:$0xff]
    %v2149 = vld [vmem:[#allocation7 + $0x140] sm:$0xff]
    %v2150 = vld [vmem:[#allocation7 + $0x148] sm:$0xff]
    %v2151 = vld [vmem:[#allocation7 + $0x180] sm:$0xff]
    %v2152 = vld [vmem:[#allocation7 + $0x188] sm:$0xff]
    %v2153 = vld [vmem:[#allocation7 + $0x190] sm:$0xff]
    %v2154 = vld [vmem:[#allocation7 + $0x1c8] sm:$0xff]
    %v2155 = vld [vmem:[#allocation7 + $0x1d0] sm:$0xff]
    %v2156 = vld [vmem:[#allocation7 + $0x1d8] sm:$0xff]
    %v2157 = vld [vmem:[#allocation7 + $0x210] sm:$0xff]
    %v2158 = vld [vmem:[#allocation7 + $0x218] sm:$0xff]
    %v2159 = vld [vmem:[#allocation7 + $0x220] sm:$0xff]
    %v2160 = vld [vmem:[#allocation7 + $0x258] sm:$0xff]
    %v2161 = vld [vmem:[#allocation7 + $0x260] sm:$0xff]
    %v2162 = vld [vmem:[#allocation7 + $0x268] sm:$0xff]
    %v2163 = vld [vmem:[#allocation7 + $0x2a0] sm:$0xff]
    %v2164 = vld [vmem:[#allocation7 + $0x2a8] sm:$0xff]
    %v2165 = vld [vmem:[#allocation7 + $0x2b0] sm:$0xff]
    %v2166 = vld [vmem:[#allocation7 + $0x2e8] sm:$0xff]
    %v2167 = vld [vmem:[#allocation7 + $0x2f0] sm:$0xff]
    %v2168 = vld [vmem:[#allocation7 + $0x2f8] sm:$0xff]
    %v2169 = vld [vmem:[#allocation7 + $0x330] sm:$0xff]
    %v2170 = vld [vmem:[#allocation7 + $0x338] sm:$0xff]
    %v2171 = vld [vmem:[#allocation7 + $0x340] sm:$0xff]
    %v2172 = vld [vmem:[#allocation7 + $0x378] sm:$0xff]
    %v2173 = vld [vmem:[#allocation7 + $0x380] sm:$0xff]
    %v2174 = vld [vmem:[#allocation7 + $0x388] sm:$0xff]
    %v2175 = vld [vmem:[#allocation7 + $0x3c0] sm:$0xff]
    %v2176 = vld [vmem:[#allocation7 + $0x3c8] sm:$0xff]
    %v2177 = vld [vmem:[#allocation7 + $0x3d0] sm:$0xff]
    %v2178 = vld [vmem:[#allocation7 + $0x408] sm:$0xff]
    %v2179 = vld [vmem:[#allocation7 + $0x410] sm:$0xff]
    %v2180 = vld [vmem:[#allocation7 + $0x418] sm:$0xff]
    %v2181 = vld [vmem:[#allocation7 + $0x450] sm:$0xff]
    %v2182 = vld [vmem:[#allocation7 + $0x458] sm:$0xff]
    %v2183 = vld [vmem:[#allocation7 + $0x460] sm:$0xff]
    %2184 = vmatprep.subr.mxu0 %v2137
    %2185 = vmatpush1.msra.mxu0 %v2136
    %2186 = vmatprep.subr.mxu0 %v2140
    %2187 = vmatpush1.msra.mxu0 %v2139
    %2188 = vmatprep.subr.mxu0 %v2143
    %2189 = vmatpush1.msra.mxu0 %v2142
    %2190 = vmatprep.subr.mxu0 %v2146
    %2191 = vmatpush1.msra.mxu0 %v2145
    %2192 = vmatprep.subr.mxu0 %v2149
    %2193 = vmatpush1.msra.mxu0 %v2148
    %2194 = vmatprep.subr.mxu0 %v2152
    %2195 = vmatpush1.msra.mxu0 %v2151
    %2196 = vmatprep.subr.mxu0 %v2155
    %2197 = vmatpush1.msra.mxu0 %v2154
    %2198 = vmatprep.subr.mxu0 %v2158
    %2199 = vmatpush1.msra.mxu0 %v2157
    %2200 = vmatprep.subr.mxu0 %v2161
    %2201 = vmatpush1.msra.mxu0 %v2160
    %2202 = vmatprep.subr.mxu0 %v2164
    %2203 = vmatpush1.msra.mxu0 %v2163
    %2204 = vmatprep.subr.mxu0 %v2167
    %2205 = vmatpush1.msra.mxu0 %v2166
    %2206 = vmatprep.subr.mxu0 %v2170
    %2207 = vmatpush1.msra.mxu0 %v2169
    %2208 = vmatprep.subr.mxu0 %v2173
    %2209 = vmatpush1.msra.mxu0 %v2172
    %2210 = vmatprep.subr.mxu0 %v2176
    %2211 = vmatpush1.msra.mxu0 %v2175
    %2212 = vmatprep.subr.mxu0 %v2179
    %2213 = vmatpush1.msra.mxu0 %v2178
    %2214 = vmatprep.subr.mxu0 %v2182
    %2215 = vmatpush1.msra.mxu0 %v2181
    %2216 = vmatprep.subr.mxu0 0.0
    %2217 = vmatpush1.msra.mxu0 0.0
    %2218 = vmatprep.subr.mxu0 0.0
    %2219 = vmatpush1.msra.mxu0 0.0
    %2220 = vmatprep.subr.mxu0 0.0
    %2221 = vmatpush1.msra.mxu0 0.0
    %2222 = vmatprep.subr.mxu0 0.0
    %2223 = vmatpush1.msra.mxu0 0.0
    %2224 = vmatprep.subr.mxu0 0.0
    %2225 = vmatpush1.msra.mxu0 0.0
    %2226 = vmatprep.subr.mxu0 0.0
    %2227 = vmatpush1.msra.mxu0 0.0
    %2228 = vmatprep.subr.mxu0 0.0
    %2229 = vmatpush1.msra.mxu0 0.0
    %2230 = vmatprep.subr.mxu0 0.0
    %2231 = vmatpush1.msra.mxu0 0.0
    %2232 = vmatprep.subr.mxu0 0.0
    %2233 = vmatpush1.msra.mxu0 0.0
    %2234 = vmatprep.subr.mxu0 0.0
    %2235 = vmatpush1.msra.mxu0 0.0
    %2236 = vmatprep.subr.mxu0 0.0
    %2237 = vmatpush1.msra.mxu0 0.0
    %2238 = vmatprep.subr.mxu0 0.0
    %2239 = vmatpush1.msra.mxu0 0.0
    %2240 = vmatprep.subr.mxu0 0.0
    %2241 = vmatpush1.msra.mxu0 0.0
    %2242 = vmatprep.subr.mxu0 0.0
    %2243 = vmatpush1.msra.mxu0 0.0
    %2244 = vmatprep.subr.mxu0 0.0
    %2245 = vmatpush1.msra.mxu0 0.0
    %2246 = vmatprep.subr.mxu0 0.0
    %2247 = vmatpush1.msra.mxu0 0.0
    %2248 = vmatprep.mubr.f32.mxu0 0.0
    %2249 = vmatmul.mubr.f32.gmra.mrb[0].mxu0 %v2135
    %v2250 = vpop.f32.mrb[0].mxu0
    %v2251 = vadd.f32 %v579, %v2250
    %v2252 = vpop.f32.mrb[0].mxu0
    %v2253 = vadd.f32 %v583, %v2252
    %2254 = vdwg.mxu0
    %2255 = vmatprep.subr.mxu0 0.0
    %2256 = vmatpush1.msra.mxu0 %v2138
    %2257 = vmatprep.subr.mxu0 0.0
    %2258 = vmatpush1.msra.mxu0 %v2141
    %2259 = vmatprep.subr.mxu0 0.0
    %2260 = vmatpush1.msra.mxu0 %v2144
    %2261 = vmatprep.subr.mxu0 0.0
    %2262 = vmatpush1.msra.mxu0 %v2147
    %2263 = vmatprep.subr.mxu0 0.0
    %2264 = vmatpush1.msra.mxu0 %v2150
    %2265 = vmatprep.subr.mxu0 0.0
    %2266 = vmatpush1.msra.mxu0 %v2153
    %2267 = vmatprep.subr.mxu0 0.0
    %2268 = vmatpush1.msra.mxu0 %v2156
    %2269 = vmatprep.subr.mxu0 0.0
    %2270 = vmatpush1.msra.mxu0 %v2159
    %2271 = vmatprep.subr.mxu0 0.0
    %2272 = vmatpush1.msra.mxu0 %v2162
    %2273 = vmatprep.subr.mxu0 0.0
    %2274 = vmatpush1.msra.mxu0 %v2165
    %2275 = vmatprep.subr.mxu0 0.0
    %2276 = vmatpush1.msra.mxu0 %v2168
    %2277 = vmatprep.subr.mxu0 0.0
    %2278 = vmatpush1.msra.mxu0 %v2171
    %2279 = vmatprep.subr.mxu0 0.0
    %2280 = vmatpush1.msra.mxu0 %v2174
    %2281 = vmatprep.subr.mxu0 0.0
    %2282 = vmatpush1.msra.mxu0 %v2177
    %2283 = vmatprep.subr.mxu0 0.0
    %2284 = vmatpush1.msra.mxu0 %v2180
    %2285 = vmatprep.subr.mxu0 0.0
    %2286 = vmatpush1.msra.mxu0 %v2183
    %2287 = vmatprep.subr.mxu0 0.0
    %2288 = vmatpush1.msra.mxu0 0.0
    %2289 = vmatprep.subr.mxu0 0.0
    %2290 = vmatpush1.msra.mxu0 0.0
    %2291 = vmatprep.subr.mxu0 0.0
    %2292 = vmatpush1.msra.mxu0 0.0
    %2293 = vmatprep.subr.mxu0 0.0
    %2294 = vmatpush1.msra.mxu0 0.0
    %2295 = vmatprep.subr.mxu0 0.0
    %2296 = vmatpush1.msra.mxu0 0.0
    %2297 = vmatprep.subr.mxu0 0.0
    %2298 = vmatpush1.msra.mxu0 0.0
    %2299 = vmatprep.subr.mxu0 0.0
    %2300 = vmatpush1.msra.mxu0 0.0
    %2301 = vmatprep.subr.mxu0 0.0
    %2302 = vmatpush1.msra.mxu0 0.0
    %2303 = vmatprep.subr.mxu0 0.0
    %2304 = vmatpush1.msra.mxu0 0.0
    %2305 = vmatprep.subr.mxu0 0.0
    %2306 = vmatpush1.msra.mxu0 0.0
    %2307 = vmatprep.subr.mxu0 0.0
    %2308 = vmatpush1.msra.mxu0 0.0
    %2309 = vmatprep.subr.mxu0 0.0
    %2310 = vmatpush1.msra.mxu0 0.0
    %2311 = vmatprep.subr.mxu0 0.0
    %2312 = vmatpush1.msra.mxu0 0.0
    %2313 = vmatprep.subr.mxu0 0.0
    %2314 = vmatpush1.msra.mxu0 0.0
    %2315 = vmatprep.subr.mxu0 0.0
    %2316 = vmatpush1.msra.mxu0 0.0
    %2317 = vmatprep.subr.mxu0 0.0
    %2318 = vmatpush1.msra.mxu0 0.0
    %2319 = vmatprep.mubr.f32.mxu0 0.0
    %2320 = vmatmul.mubr.f32.gmra.mrb[0].mxu0 %v2135
    %v2321 = vpop.f32.mrb[0].mxu0
    %v2322 = vadd.f32 %v587, %v2321
    %v2323 = vpop.f32.mrb[0].mxu0
    %2324 = vdwg.mxu0
    %v2325 = vadd.f32 %v2251, %v2034
    %v2326 = vxor.u32 %v2325, 2147483648
    %v2327 = vmul.f32 %v2326, 1.442695
    %v2328 = vpow.pop %v2327
    %v2329 = vadd.f32 %v2328, 1.0
    %v2330 = vrcp.pop %v2329
    %v2331 = vmul.f32 1.0, %v2330
    %v2332 = vadd.f32 %v2253, %v2036
    %v2333 = vxor.u32 %v2332, 2147483648
    %v2334 = vmul.f32 %v2333, 1.442695
    %v2335 = vpow.pop %v2334
    %v2336 = vadd.f32 %v2335, 1.0
    %v2337 = vrcp.pop %v2336
    %v2338 = vmul.f32 1.0, %v2337
    %v2339 = vmul.f32 %v2331, %v2105
    %v2340 = vadd.f32 %v2322, %v2339
    %v2341 = vtanh.pop %v2340
    %v2342 = vsub.f32 1.0, %v2338
    %v2343 = vmul.f32 %v2342, %v2341
    %v2344 = vmul.f32 %v2338, %v1554
    %v2345 = vadd.f32 %v2343, %v2344
    %v2346 = vld [vmem:[#allocation10] sm:$0xff]
    %v2347 = vld [vmem:[#allocation10 + $0x10] sm:$0xff]
    %v2348 = vld [vmem:[#allocation10 + $0x20] sm:$0xff]
    %v2349 = vld [vmem:[#allocation10 + $0x30] sm:$0xff]
    %v2350 = vld [vmem:[#allocation10 + $0x40] sm:$0xff]
    %v2351 = vld [vmem:[#allocation10 + $0x50] sm:$0xff]
    %v2352 = vld [vmem:[#allocation10 + $0x60] sm:$0xff]
    %v2353 = vld [vmem:[#allocation10 + $0x70] sm:$0xff]
    %v2354 = vld [vmem:[#allocation10 + $0x80] sm:$0xff]
    %v2355 = vld [vmem:[#allocation10 + $0x90] sm:$0xff]
    %v2356 = vld [vmem:[#allocation10 + $0xa0] sm:$0xff]
    %v2357 = vld [vmem:[#allocation10 + $0xb0] sm:$0xff]
    %v2358 = vld [vmem:[#allocation10 + $0xc0] sm:$0xff]
    %v2359 = vld [vmem:[#allocation10 + $0xd0] sm:$0xff]
    %v2360 = vld [vmem:[#allocation10 + $0xe0] sm:$0xff]
    %v2361 = vld [vmem:[#allocation10 + $0xf0] sm:$0xff]
    %2362 = vmatprep.subr.mxu0 0.0
    %2363 = vmatpush1.msra.mxu0 %v2346
    %2364 = vmatprep.subr.mxu0 0.0
    %2365 = vmatpush1.msra.mxu0 %v2347
    %2366 = vmatprep.subr.mxu0 0.0
    %2367 = vmatpush1.msra.mxu0 %v2348
    %2368 = vmatprep.subr.mxu0 0.0
    %2369 = vmatpush1.msra.mxu0 %v2349
    %2370 = vmatprep.subr.mxu0 0.0
    %2371 = vmatpush1.msra.mxu0 %v2350
    %2372 = vmatprep.subr.mxu0 0.0
    %2373 = vmatpush1.msra.mxu0 %v2351
    %2374 = vmatprep.subr.mxu0 0.0
    %2375 = vmatpush1.msra.mxu0 %v2352
    %2376 = vmatprep.subr.mxu0 0.0
    %2377 = vmatpush1.msra.mxu0 %v2353
    %2378 = vmatprep.subr.mxu0 0.0
    %2379 = vmatpush1.msra.mxu0 %v2354
    %2380 = vmatprep.subr.mxu0 0.0
    %2381 = vmatpush1.msra.mxu0 %v2355
    %2382 = vmatprep.subr.mxu0 0.0
    %2383 = vmatpush1.msra.mxu0 %v2356
    %2384 = vmatprep.subr.mxu0 0.0
    %2385 = vmatpush1.msra.mxu0 %v2357
    %2386 = vmatprep.subr.mxu0 0.0
    %2387 = vmatpush1.msra.mxu0 %v2358
    %2388 = vmatprep.subr.mxu0 0.0
    %2389 = vmatpush1.msra.mxu0 %v2359
    %2390 = vmatprep.subr.mxu0 0.0
    %2391 = vmatpush1.msra.mxu0 %v2360
    %2392 = vmatprep.subr.mxu0 0.0
    %2393 = vmatpush1.msra.mxu0 %v2361
    %2394 = vmatprep.subr.mxu0 0.0
    %2395 = vmatpush1.msra.mxu0 0.0
    %2396 = vmatprep.subr.mxu0 0.0
    %2397 = vmatpush1.msra.mxu0 0.0
    %2398 = vmatprep.subr.mxu0 0.0
    %2399 = vmatpush1.msra.mxu0 0.0
    %2400 = vmatprep.subr.mxu0 0.0
    %2401 = vmatpush1.msra.mxu0 0.0
    %2402 = vmatprep.subr.mxu0 0.0
    %2403 = vmatpush1.msra.mxu0 0.0
    %2404 = vmatprep.subr.mxu0 0.0
    %2405 = vmatpush1.msra.mxu0 0.0
    %2406 = vmatprep.subr.mxu0 0.0
    %2407 = vmatpush1.msra.mxu0 0.0
    %2408 = vmatprep.subr.mxu0 0.0
    %2409 = vmatpush1.msra.mxu0 0.0
    %2410 = vmatprep.subr.mxu0 0.0
    %2411 = vmatpush1.msra.mxu0 0.0
    %2412 = vmatprep.subr.mxu0 0.0
    %2413 = vmatpush1.msra.mxu0 0.0
    %2414 = vmatprep.subr.mxu0 0.0
    %2415 = vmatpush1.msra.mxu0 0.0
    %2416 = vmatprep.subr.mxu0 0.0
    %2417 = vmatpush1.msra.mxu0 0.0
    %2418 = vmatprep.subr.mxu0 0.0
    %2419 = vmatpush1.msra.mxu0 0.0
    %2420 = vmatprep.subr.mxu0 0.0
    %2421 = vmatpush1.msra.mxu0 0.0
    %2422 = vmatprep.subr.mxu0 0.0
    %2423 = vmatpush1.msra.mxu0 0.0
    %2424 = vmatprep.subr.mxu0 0.0
    %2425 = vmatpush1.msra.mxu0 0.0
    %2426 = vmatprep.mubr.f32.mxu0 0.0
    %2427 = vmatmul.mubr.f32.gmra.mrb[0].mxu0 %v2345
    %v2428 = vpop.f32.mrb[0].mxu0
    %v2429 = vadd.f32 %v773, %v2428
    %v2430 = vpop.f32.mrb[0].mxu0
    %2431 = vdwg.mxu0
    %v2432 = vmax.f32 %v2429, 0.0
    %v2433 = vld [vmem:[#allocation10 + $0x8] sm:$0xff]
    %v2434 = vld [vmem:[#allocation10 + $0x18] sm:$0xff]
    %v2435 = vld [vmem:[#allocation10 + $0x28] sm:$0xff]
    %v2436 = vld [vmem:[#allocation10 + $0x38] sm:$0xff]
    %v2437 = vld [vmem:[#allocation10 + $0x48] sm:$0xff]
    %v2438 = vld [vmem:[#allocation10 + $0x58] sm:$0xff]
    %v2439 = vld [vmem:[#allocation10 + $0x68] sm:$0xff]
    %v2440 = vld [vmem:[#allocation10 + $0x78] sm:$0xff]
    %v2441 = vld [vmem:[#allocation10 + $0x88] sm:$0xff]
    %v2442 = vld [vmem:[#allocation10 + $0x98] sm:$0xff]
    %v2443 = vld [vmem:[#allocation10 + $0xa8] sm:$0xff]
    %v2444 = vld [vmem:[#allocation10 + $0xb8] sm:$0xff]
    %v2445 = vld [vmem:[#allocation10 + $0xc8] sm:$0xff]
    %v2446 = vld [vmem:[#allocation10 + $0xd8] sm:$0xff]
    %v2447 = vld [vmem:[#allocation10 + $0xe8] sm:$0xff]
    %v2448 = vld [vmem:[#allocation10 + $0xf8] sm:$0xff]
    %2449 = vmatprep.subr.mxu0 0.0
    %2450 = vmatpush1.msra.mxu0 %v2433
    %2451 = vmatprep.subr.mxu0 0.0
    %2452 = vmatpush1.msra.mxu0 %v2434
    %2453 = vmatprep.subr.mxu0 0.0
    %2454 = vmatpush1.msra.mxu0 %v2435
    %2455 = vmatprep.subr.mxu0 0.0
    %2456 = vmatpush1.msra.mxu0 %v2436
    %2457 = vmatprep.subr.mxu0 0.0
    %2458 = vmatpush1.msra.mxu0 %v2437
    %2459 = vmatprep.subr.mxu0 0.0
    %2460 = vmatpush1.msra.mxu0 %v2438
    %2461 = vmatprep.subr.mxu0 0.0
    %2462 = vmatpush1.msra.mxu0 %v2439
    %2463 = vmatprep.subr.mxu0 0.0
    %2464 = vmatpush1.msra.mxu0 %v2440
    %2465 = vmatprep.subr.mxu0 0.0
    %2466 = vmatpush1.msra.mxu0 %v2441
    %2467 = vmatprep.subr.mxu0 0.0
    %2468 = vmatpush1.msra.mxu0 %v2442
    %2469 = vmatprep.subr.mxu0 0.0
    %2470 = vmatpush1.msra.mxu0 %v2443
    %2471 = vmatprep.subr.mxu0 0.0
    %2472 = vmatpush1.msra.mxu0 %v2444
    %2473 = vmatprep.subr.mxu0 0.0
    %2474 = vmatpush1.msra.mxu0 %v2445
    %2475 = vmatprep.subr.mxu0 0.0
    %2476 = vmatpush1.msra.mxu0 %v2446
    %2477 = vmatprep.subr.mxu0 0.0
    %2478 = vmatpush1.msra.mxu0 %v2447
    %2479 = vmatprep.subr.mxu0 0.0
    %2480 = vmatpush1.msra.mxu0 %v2448
    %2481 = vmatprep.subr.mxu0 0.0
    %2482 = vmatpush1.msra.mxu0 0.0
    %2483 = vmatprep.subr.mxu0 0.0
    %2484 = vmatpush1.msra.mxu0 0.0
    %2485 = vmatprep.subr.mxu0 0.0
    %2486 = vmatpush1.msra.mxu0 0.0
    %2487 = vmatprep.subr.mxu0 0.0
    %2488 = vmatpush1.msra.mxu0 0.0
    %2489 = vmatprep.subr.mxu0 0.0
    %2490 = vmatpush1.msra.mxu0 0.0
    %2491 = vmatprep.subr.mxu0 0.0
    %2492 = vmatpush1.msra.mxu0 0.0
    %2493 = vmatprep.subr.mxu0 0.0
    %2494 = vmatpush1.msra.mxu0 0.0
    %2495 = vmatprep.subr.mxu0 0.0
    %2496 = vmatpush1.msra.mxu0 0.0
    %2497 = vmatprep.subr.mxu0 0.0
    %2498 = vmatpush1.msra.mxu0 0.0
    %2499 = vmatprep.subr.mxu0 0.0
    %2500 = vmatpush1.msra.mxu0 0.0
    %2501 = vmatprep.subr.mxu0 0.0
    %2502 = vmatpush1.msra.mxu0 0.0
    %2503 = vmatprep.subr.mxu0 0.0
    %2504 = vmatpush1.msra.mxu0 0.0
    %2505 = vmatprep.subr.mxu0 0.0
    %2506 = vmatpush1.msra.mxu0 0.0
    %2507 = vmatprep.subr.mxu0 0.0
    %2508 = vmatpush1.msra.mxu0 0.0
    %2509 = vmatprep.subr.mxu0 0.0
    %2510 = vmatpush1.msra.mxu0 0.0
    %2511 = vmatprep.subr.mxu0 0.0
    %2512 = vmatpush1.msra.mxu0 0.0
    %2513 = vmatprep.mubr.f32.mxu0 0.0
    %2514 = vmatmul.mubr.f32.gmra.mrb[0].mxu0 %v2432
    %v2515 = vpop.f32.mrb[0].mxu0
    %v2516 = vadd.f32 %v866, %v2515
    %v2517 = vpop.f32.mrb[0].mxu0
    %2518 = vdwg.mxu0
    %s2519 = scalar_lea.vmem [#allocation12], 4
    %2520 = vst [vmem:[%s2519] sm:$0x3] %v2516
    %v2521 = vld [vmem:[#allocation7] sm:$0xff]
    %v2522 = vld [vmem:[#allocation7 + $0x8] sm:$0xff]
    %v2523 = vld [vmem:[#allocation7 + $0x10] sm:$0xff]
    %v2524 = vld [vmem:[#allocation7 + $0x48] sm:$0xff]
    %v2525 = vld [vmem:[#allocation7 + $0x50] sm:$0xff]
    %v2526 = vld [vmem:[#allocation7 + $0x58] sm:$0xff]
    %v2527 = vld [vmem:[#allocation7 + $0x90] sm:$0xff]
    %v2528 = vld [vmem:[#allocation7 + $0x98] sm:$0xff]
    %v2529 = vld [vmem:[#allocation7 + $0xa0] sm:$0xff]
    %v2530 = vld [vmem:[#allocation7 + $0xd8] sm:$0xff]
    %v2531 = vld [vmem:[#allocation7 + $0xe0] sm:$0xff]
    %v2532 = vld [vmem:[#allocation7 + $0xe8] sm:$0xff]
    %v2533 = vld [vmem:[#allocation7 + $0x120] sm:$0xff]
    %v2534 = vld [vmem:[#allocation7 + $0x128] sm:$0xff]
    %v2535 = vld [vmem:[#allocation7 + $0x130] sm:$0xff]
    %v2536 = vld [vmem:[#allocation7 + $0x168] sm:$0xff]
    %v2537 = vld [vmem:[#allocation7 + $0x170] sm:$0xff]
    %v2538 = vld [vmem:[#allocation7 + $0x178] sm:$0xff]
    %v2539 = vld [vmem:[#allocation7 + $0x1b0] sm:$0xff]
    %v2540 = vld [vmem:[#allocation7 + $0x1b8] sm:$0xff]
    %v2541 = vld [vmem:[#allocation7 + $0x1c0] sm:$0xff]
    %v2542 = vld [vmem:[#allocation7 + $0x1f8] sm:$0xff]
    %v2543 = vld [vmem:[#allocation7 + $0x200] sm:$0xff]
    %v2544 = vld [vmem:[#allocation7 + $0x208] sm:$0xff]
    %v2545 = vld [vmem:[#allocation7 + $0x240] sm:$0xff]
    %v2546 = vld [vmem:[#allocation7 + $0x248] sm:$0xff]
    %v2547 = vld [vmem:[#allocation7 + $0x250] sm:$0xff]
    %v2548 = vld [vmem:[#allocation7 + $0x288] sm:$0xff]
    %v2549 = vld [vmem:[#allocation7 + $0x290] sm:$0xff]
    %v2550 = vld [vmem:[#allocation7 + $0x298] sm:$0xff]
    %v2551 = vld [vmem:[#allocation7 + $0x2d0] sm:$0xff]
    %v2552 = vld [vmem:[#allocation7 + $0x2d8] sm:$0xff]
    %v2553 = vld [vmem:[#allocation7 + $0x2e0] sm:$0xff]
    %v2554 = vld [vmem:[#allocation7 + $0x318] sm:$0xff]
    %v2555 = vld [vmem:[#allocation7 + $0x320] sm:$0xff]
    %v2556 = vld [vmem:[#allocation7 + $0x328] sm:$0xff]
    %v2557 = vld [vmem:[#allocation7 + $0x360] sm:$0xff]
    %v2558 = vld [vmem:[#allocation7 + $0x368] sm:$0xff]
    %v2559 = vld [vmem:[#allocation7 + $0x370] sm:$0xff]
    %v2560 = vld [vmem:[#allocation7 + $0x3a8] sm:$0xff]
    %v2561 = vld [vmem:[#allocation7 + $0x3b0] sm:$0xff]
    %v2562 = vld [vmem:[#allocation7 + $0x3b8] sm:$0xff]
    %v2563 = vld [vmem:[#allocation7 + $0x3f0] sm:$0xff]
    %v2564 = vld [vmem:[#allocation7 + $0x3f8] sm:$0xff]
    %v2565 = vld [vmem:[#allocation7 + $0x400] sm:$0xff]
    %v2566 = vld [vmem:[#allocation7 + $0x438] sm:$0xff]
    %v2567 = vld [vmem:[#allocation7 + $0x440] sm:$0xff]
    %v2568 = vld [vmem:[#allocation7 + $0x448] sm:$0xff]
    %2569 = vmatprep.subr.mxu0 %v2522
    %2570 = vmatpush1.msra.mxu0 %v2521
    %2571 = vmatprep.subr.mxu0 %v2525
    %2572 = vmatpush1.msra.mxu0 %v2524
    %2573 = vmatprep.subr.mxu0 %v2528
    %2574 = vmatpush1.msra.mxu0 %v2527
    %2575 = vmatprep.subr.mxu0 %v2531
    %2576 = vmatpush1.msra.mxu0 %v2530
    %2577 = vmatprep.subr.mxu0 %v2534
    %2578 = vmatpush1.msra.mxu0 %v2533
    %2579 = vmatprep.subr.mxu0 %v2537
    %2580 = vmatpush1.msra.mxu0 %v2536
    %2581 = vmatprep.subr.mxu0 %v2540
    %2582 = vmatpush1.msra.mxu0 %v2539
    %2583 = vmatprep.subr.mxu0 %v2543
    %2584 = vmatpush1.msra.mxu0 %v2542
    %2585 = vmatprep.subr.mxu0 %v2546
    %2586 = vmatpush1.msra.mxu0 %v2545
    %2587 = vmatprep.subr.mxu0 %v2549
    %2588 = vmatpush1.msra.mxu0 %v2548
    %2589 = vmatprep.subr.mxu0 %v2552
    %2590 = vmatpush1.msra.mxu0 %v2551
    %2591 = vmatprep.subr.mxu0 %v2555
    %2592 = vmatpush1.msra.mxu0 %v2554
    %2593 = vmatprep.subr.mxu0 %v2558
    %2594 = vmatpush1.msra.mxu0 %v2557
    %2595 = vmatprep.subr.mxu0 %v2561
    %2596 = vmatpush1.msra.mxu0 %v2560
    %2597 = vmatprep.subr.mxu0 %v2564
    %2598 = vmatpush1.msra.mxu0 %v2563
    %2599 = vmatprep.subr.mxu0 %v2567
    %2600 = vmatpush1.msra.mxu0 %v2566
    %2601 = vmatprep.subr.mxu0 0.0
    %2602 = vmatpush1.msra.mxu0 0.0
    %2603 = vmatprep.subr.mxu0 0.0
    %2604 = vmatpush1.msra.mxu0 0.0
    %2605 = vmatprep.subr.mxu0 0.0
    %2606 = vmatpush1.msra.mxu0 0.0
    %2607 = vmatprep.subr.mxu0 0.0
    %2608 = vmatpush1.msra.mxu0 0.0
    %2609 = vmatprep.subr.mxu0 0.0
    %2610 = vmatpush1.msra.mxu0 0.0
    %2611 = vmatprep.subr.mxu0 0.0
    %2612 = vmatpush1.msra.mxu0 0.0
    %2613 = vmatprep.subr.mxu0 0.0
    %2614 = vmatpush1.msra.mxu0 0.0
    %2615 = vmatprep.subr.mxu0 0.0
    %2616 = vmatpush1.msra.mxu0 0.0
    %2617 = vmatprep.subr.mxu0 0.0
    %2618 = vmatpush1.msra.mxu0 0.0
    %2619 = vmatprep.subr.mxu0 0.0
    %2620 = vmatpush1.msra.mxu0 0.0
    %2621 = vmatprep.subr.mxu0 0.0
    %2622 = vmatpush1.msra.mxu0 0.0
    %2623 = vmatprep.subr.mxu0 0.0
    %2624 = vmatpush1.msra.mxu0 0.0
    %2625 = vmatprep.subr.mxu0 0.0
    %2626 = vmatpush1.msra.mxu0 0.0
    %2627 = vmatprep.subr.mxu0 0.0
    %2628 = vmatpush1.msra.mxu0 0.0
    %2629 = vmatprep.subr.mxu0 0.0
    %2630 = vmatpush1.msra.mxu0 0.0
    %2631 = vmatprep.subr.mxu0 0.0
    %2632 = vmatpush1.msra.mxu0 0.0
    %2633 = vmatprep.mubr.f32.mxu0 0.0
    %2634 = vmatmul.mubr.f32.gmra.mrb[0].mxu0 %v2135
    %v2635 = vpop.f32.mrb[0].mxu0
    %v2636 = vadd.f32 %v142, %v2635
    %v2637 = vpop.f32.mrb[0].mxu0
    %v2638 = vadd.f32 %v146, %v2637
    %2639 = vdwg.mxu0
    %2640 = vmatprep.subr.mxu0 0.0
    %2641 = vmatpush1.msra.mxu0 %v2523
    %2642 = vmatprep.subr.mxu0 0.0
    %2643 = vmatpush1.msra.mxu0 %v2526
    %2644 = vmatprep.subr.mxu0 0.0
    %2645 = vmatpush1.msra.mxu0 %v2529
    %2646 = vmatprep.subr.mxu0 0.0
    %2647 = vmatpush1.msra.mxu0 %v2532
    %2648 = vmatprep.subr.mxu0 0.0
    %2649 = vmatpush1.msra.mxu0 %v2535
    %2650 = vmatprep.subr.mxu0 0.0
    %2651 = vmatpush1.msra.mxu0 %v2538
    %2652 = vmatprep.subr.mxu0 0.0
    %2653 = vmatpush1.msra.mxu0 %v2541
    %2654 = vmatprep.subr.mxu0 0.0
    %2655 = vmatpush1.msra.mxu0 %v2544
    %2656 = vmatprep.subr.mxu0 0.0
    %2657 = vmatpush1.msra.mxu0 %v2547
    %2658 = vmatprep.subr.mxu0 0.0
    %2659 = vmatpush1.msra.mxu0 %v2550
    %2660 = vmatprep.subr.mxu0 0.0
    %2661 = vmatpush1.msra.mxu0 %v2553
    %2662 = vmatprep.subr.mxu0 0.0
    %2663 = vmatpush1.msra.mxu0 %v2556
    %2664 = vmatprep.subr.mxu0 0.0
    %2665 = vmatpush1.msra.mxu0 %v2559
    %2666 = vmatprep.subr.mxu0 0.0
    %2667 = vmatpush1.msra.mxu0 %v2562
    %2668 = vmatprep.subr.mxu0 0.0
    %2669 = vmatpush1.msra.mxu0 %v2565
    %2670 = vmatprep.subr.mxu0 0.0
    %2671 = vmatpush1.msra.mxu0 %v2568
    %2672 = vmatprep.subr.mxu0 0.0
    %2673 = vmatpush1.msra.mxu0 0.0
    %2674 = vmatprep.subr.mxu0 0.0
    %2675 = vmatpush1.msra.mxu0 0.0
    %2676 = vmatprep.subr.mxu0 0.0
    %2677 = vmatpush1.msra.mxu0 0.0
    %2678 = vmatprep.subr.mxu0 0.0
    %2679 = vmatpush1.msra.mxu0 0.0
    %2680 = vmatprep.subr.mxu0 0.0
    %2681 = vmatpush1.msra.mxu0 0.0
    %2682 = vmatprep.subr.mxu0 0.0
    %2683 = vmatpush1.msra.mxu0 0.0
    %2684 = vmatprep.subr.mxu0 0.0
    %2685 = vmatpush1.msra.mxu0 0.0
    %2686 = vmatprep.subr.mxu0 0.0
    %2687 = vmatpush1.msra.mxu0 0.0
    %2688 = vmatprep.subr.mxu0 0.0
    %2689 = vmatpush1.msra.mxu0 0.0
    %2690 = vmatprep.subr.mxu0 0.0
    %2691 = vmatpush1.msra.mxu0 0.0
    %2692 = vmatprep.subr.mxu0 0.0
    %2693 = vmatpush1.msra.mxu0 0.0
    %2694 = vmatprep.subr.mxu0 0.0
    %2695 = vmatpush1.msra.mxu0 0.0
    %2696 = vmatprep.subr.mxu0 0.0
    %2697 = vmatpush1.msra.mxu0 0.0
    %2698 = vmatprep.subr.mxu0 0.0
    %2699 = vmatpush1.msra.mxu0 0.0
    %2700 = vmatprep.subr.mxu0 0.0
    %2701 = vmatpush1.msra.mxu0 0.0
    %2702 = vmatprep.subr.mxu0 0.0
    %2703 = vmatpush1.msra.mxu0 0.0
    %2704 = vmatprep.mubr.f32.mxu0 0.0
    %2705 = vmatmul.mubr.f32.gmra.mrb[0].mxu0 %v2135
    %v2706 = vpop.f32.mrb[0].mxu0
    %v2707 = vadd.f32 %v150, %v2706
    %v2708 = vpop.f32.mrb[0].mxu0
    %2709 = vdwg.mxu0
    %v2710 = vld [vmem:[#allocation7 + $0x30] sm:$0xff]
    %v2711 = vld [vmem:[#allocation7 + $0x38] sm:$0xff]
    %v2712 = vld [vmem:[#allocation7 + $0x40] sm:$0xff]
    %v2713 = vld [vmem:[#allocation7 + $0x78] sm:$0xff]
    %v2714 = vld [vmem:[#allocation7 + $0x80] sm:$0xff]
    %v2715 = vld [vmem:[#allocation7 + $0x88] sm:$0xff]
    %v2716 = vld [vmem:[#allocation7 + $0xc0] sm:$0xff]
    %v2717 = vld [vmem:[#allocation7 + $0xc8] sm:$0xff]
    %v2718 = vld [vmem:[#allocation7 + $0xd0] sm:$0xff]
    %v2719 = vld [vmem:[#allocation7 + $0x108] sm:$0xff]
    %v2720 = vld [vmem:[#allocation7 + $0x110] sm:$0xff]
    %v2721 = vld [vmem:[#allocation7 + $0x118] sm:$0xff]
    %v2722 = vld [vmem:[#allocation7 + $0x150] sm:$0xff]
    %v2723 = vld [vmem:[#allocation7 + $0x158] sm:$0xff]
    %v2724 = vld [vmem:[#allocation7 + $0x160] sm:$0xff]
    %v2725 = vld [vmem:[#allocation7 + $0x198] sm:$0xff]
    %v2726 = vld [vmem:[#allocation7 + $0x1a0] sm:$0xff]
    %v2727 = vld [vmem:[#allocation7 + $0x1a8] sm:$0xff]
    %v2728 = vld [vmem:[#allocation7 + $0x1e0] sm:$0xff]
    %v2729 = vld [vmem:[#allocation7 + $0x1e8] sm:$0xff]
    %v2730 = vld [vmem:[#allocation7 + $0x1f0] sm:$0xff]
    %v2731 = vld [vmem:[#allocation7 + $0x228] sm:$0xff]
    %v2732 = vld [vmem:[#allocation7 + $0x230] sm:$0xff]
    %v2733 = vld [vmem:[#allocation7 + $0x238] sm:$0xff]
    %v2734 = vld [vmem:[#allocation7 + $0x270] sm:$0xff]
    %v2735 = vld [vmem:[#allocation7 + $0x278] sm:$0xff]
    %v2736 = vld [vmem:[#allocation7 + $0x280] sm:$0xff]
    %v2737 = vld [vmem:[#allocation7 + $0x2b8] sm:$0xff]
    %v2738 = vld [vmem:[#allocation7 + $0x2c0] sm:$0xff]
    %v2739 = vld [vmem:[#allocation7 + $0x2c8] sm:$0xff]
    %v2740 = vld [vmem:[#allocation7 + $0x300] sm:$0xff]
    %v2741 = vld [vmem:[#allocation7 + $0x308] sm:$0xff]
    %v2742 = vld [vmem:[#allocation7 + $0x310] sm:$0xff]
    %v2743 = vld [vmem:[#allocation7 + $0x348] sm:$0xff]
    %v2744 = vld [vmem:[#allocation7 + $0x350] sm:$0xff]
    %v2745 = vld [vmem:[#allocation7 + $0x358] sm:$0xff]
    %v2746 = vld [vmem:[#allocation7 + $0x390] sm:$0xff]
    %v2747 = vld [vmem:[#allocation7 + $0x398] sm:$0xff]
    %v2748 = vld [vmem:[#allocation7 + $0x3a0] sm:$0xff]
    %v2749 = vld [vmem:[#allocation7 + $0x3d8] sm:$0xff]
    %v2750 = vld [vmem:[#allocation7 + $0x3e0] sm:$0xff]
    %v2751 = vld [vmem:[#allocation7 + $0x3e8] sm:$0xff]
    %v2752 = vld [vmem:[#allocation7 + $0x420] sm:$0xff]
    %v2753 = vld [vmem:[#allocation7 + $0x428] sm:$0xff]
    %v2754 = vld [vmem:[#allocation7 + $0x430] sm:$0xff]
    %v2755 = vld [vmem:[#allocation7 + $0x468] sm:$0xff]
    %v2756 = vld [vmem:[#allocation7 + $0x470] sm:$0xff]
    %v2757 = vld [vmem:[#allocation7 + $0x478] sm:$0xff]
    %2758 = vmatprep.subr.mxu0 %v2711
    %2759 = vmatpush1.msra.mxu0 %v2710
    %2760 = vmatprep.subr.mxu0 %v2714
    %2761 = vmatpush1.msra.mxu0 %v2713
    %2762 = vmatprep.subr.mxu0 %v2717
    %2763 = vmatpush1.msra.mxu0 %v2716
    %2764 = vmatprep.subr.mxu0 %v2720
    %2765 = vmatpush1.msra.mxu0 %v2719
    %2766 = vmatprep.subr.mxu0 %v2723
    %2767 = vmatpush1.msra.mxu0 %v2722
    %2768 = vmatprep.subr.mxu0 %v2726
    %2769 = vmatpush1.msra.mxu0 %v2725
    %2770 = vmatprep.subr.mxu0 %v2729
    %2771 = vmatpush1.msra.mxu0 %v2728
    %2772 = vmatprep.subr.mxu0 %v2732
    %2773 = vmatpush1.msra.mxu0 %v2731
    %2774 = vmatprep.subr.mxu0 %v2735
    %2775 = vmatpush1.msra.mxu0 %v2734
    %2776 = vmatprep.subr.mxu0 %v2738
    %2777 = vmatpush1.msra.mxu0 %v2737
    %2778 = vmatprep.subr.mxu0 %v2741
    %2779 = vmatpush1.msra.mxu0 %v2740
    %2780 = vmatprep.subr.mxu0 %v2744
    %2781 = vmatpush1.msra.mxu0 %v2743
    %2782 = vmatprep.subr.mxu0 %v2747
    %2783 = vmatpush1.msra.mxu0 %v2746
    %2784 = vmatprep.subr.mxu0 %v2750
    %2785 = vmatpush1.msra.mxu0 %v2749
    %2786 = vmatprep.subr.mxu0 %v2753
    %2787 = vmatpush1.msra.mxu0 %v2752
    %2788 = vmatprep.subr.mxu0 %v2756
    %2789 = vmatpush1.msra.mxu0 %v2755
    %2790 = vmatprep.subr.mxu0 0.0
    %2791 = vmatpush1.msra.mxu0 0.0
    %2792 = vmatprep.subr.mxu0 0.0
    %2793 = vmatpush1.msra.mxu0 0.0
    %2794 = vmatprep.subr.mxu0 0.0
    %2795 = vmatpush1.msra.mxu0 0.0
    %2796 = vmatprep.subr.mxu0 0.0
    %2797 = vmatpush1.msra.mxu0 0.0
    %2798 = vmatprep.subr.mxu0 0.0
    %2799 = vmatpush1.msra.mxu0 0.0
    %2800 = vmatprep.subr.mxu0 0.0
    %2801 = vmatpush1.msra.mxu0 0.0
    %2802 = vmatprep.subr.mxu0 0.0
    %2803 = vmatpush1.msra.mxu0 0.0
    %2804 = vmatprep.subr.mxu0 0.0
    %2805 = vmatpush1.msra.mxu0 0.0
    %2806 = vmatprep.subr.mxu0 0.0
    %2807 = vmatpush1.msra.mxu0 0.0
    %2808 = vmatprep.subr.mxu0 0.0
    %2809 = vmatpush1.msra.mxu0 0.0
    %2810 = vmatprep.subr.mxu0 0.0
    %2811 = vmatpush1.msra.mxu0 0.0
    %2812 = vmatprep.subr.mxu0 0.0
    %2813 = vmatpush1.msra.mxu0 0.0
    %2814 = vmatprep.subr.mxu0 0.0
    %2815 = vmatpush1.msra.mxu0 0.0
    %2816 = vmatprep.subr.mxu0 0.0
    %2817 = vmatpush1.msra.mxu0 0.0
    %2818 = vmatprep.subr.mxu0 0.0
    %2819 = vmatpush1.msra.mxu0 0.0
    %2820 = vmatprep.subr.mxu0 0.0
    %2821 = vmatpush1.msra.mxu0 0.0
    %2822 = vmatprep.mubr.f32.mxu0 0.0
    %2823 = vmatmul.mubr.f32.gmra.mrb[0].mxu0 %v2345
    %v2824 = vpop.f32.mrb[0].mxu0
    %v2825 = vadd.f32 %v347, %v2824
    %v2826 = vpop.f32.mrb[0].mxu0
    %v2827 = vadd.f32 %v351, %v2826
    %2828 = vdwg.mxu0
    %2829 = vmatprep.subr.mxu0 0.0
    %2830 = vmatpush1.msra.mxu0 %v2712
    %2831 = vmatprep.subr.mxu0 0.0
    %2832 = vmatpush1.msra.mxu0 %v2715
    %2833 = vmatprep.subr.mxu0 0.0
    %2834 = vmatpush1.msra.mxu0 %v2718
    %2835 = vmatprep.subr.mxu0 0.0
    %2836 = vmatpush1.msra.mxu0 %v2721
    %2837 = vmatprep.subr.mxu0 0.0
    %2838 = vmatpush1.msra.mxu0 %v2724
    %2839 = vmatprep.subr.mxu0 0.0
    %2840 = vmatpush1.msra.mxu0 %v2727
    %2841 = vmatprep.subr.mxu0 0.0
    %2842 = vmatpush1.msra.mxu0 %v2730
    %2843 = vmatprep.subr.mxu0 0.0
    %2844 = vmatpush1.msra.mxu0 %v2733
    %2845 = vmatprep.subr.mxu0 0.0
    %2846 = vmatpush1.msra.mxu0 %v2736
    %2847 = vmatprep.subr.mxu0 0.0
    %2848 = vmatpush1.msra.mxu0 %v2739
    %2849 = vmatprep.subr.mxu0 0.0
    %2850 = vmatpush1.msra.mxu0 %v2742
    %2851 = vmatprep.subr.mxu0 0.0
    %2852 = vmatpush1.msra.mxu0 %v2745
    %2853 = vmatprep.subr.mxu0 0.0
    %2854 = vmatpush1.msra.mxu0 %v2748
    %2855 = vmatprep.subr.mxu0 0.0
    %2856 = vmatpush1.msra.mxu0 %v2751
    %2857 = vmatprep.subr.mxu0 0.0
    %2858 = vmatpush1.msra.mxu0 %v2754
    %2859 = vmatprep.subr.mxu0 0.0
    %2860 = vmatpush1.msra.mxu0 %v2757
    %2861 = vmatprep.subr.mxu0 0.0
    %2862 = vmatpush1.msra.mxu0 0.0
    %2863 = vmatprep.subr.mxu0 0.0
    %2864 = vmatpush1.msra.mxu0 0.0
    %2865 = vmatprep.subr.mxu0 0.0
    %2866 = vmatpush1.msra.mxu0 0.0
    %2867 = vmatprep.subr.mxu0 0.0
    %2868 = vmatpush1.msra.mxu0 0.0
    %2869 = vmatprep.subr.mxu0 0.0
    %2870 = vmatpush1.msra.mxu0 0.0
    %2871 = vmatprep.subr.mxu0 0.0
    %2872 = vmatpush1.msra.mxu0 0.0
    %2873 = vmatprep.subr.mxu0 0.0
    %2874 = vmatpush1.msra.mxu0 0.0
    %2875 = vmatprep.subr.mxu0 0.0
    %2876 = vmatpush1.msra.mxu0 0.0
    %2877 = vmatprep.subr.mxu0 0.0
    %2878 = vmatpush1.msra.mxu0 0.0
    %2879 = vmatprep.subr.mxu0 0.0
    %2880 = vmatpush1.msra.mxu0 0.0
    %2881 = vmatprep.subr.mxu0 0.0
    %2882 = vmatpush1.msra.mxu0 0.0
    %2883 = vmatprep.subr.mxu0 0.0
    %2884 = vmatpush1.msra.mxu0 0.0
    %2885 = vmatprep.subr.mxu0 0.0
    %2886 = vmatpush1.msra.mxu0 0.0
    %2887 = vmatprep.subr.mxu0 0.0
    %2888 = vmatpush1.msra.mxu0 0.0
    %2889 = vmatprep.subr.mxu0 0.0
    %2890 = vmatpush1.msra.mxu0 0.0
    %2891 = vmatprep.subr.mxu0 0.0
    %2892 = vmatpush1.msra.mxu0 0.0
    %2893 = vmatprep.mubr.f32.mxu0 0.0
    %2894 = vmatmul.mubr.f32.gmra.mrb[0].mxu0 %v2345
    %v2895 = vpop.f32.mrb[0].mxu0
    %v2896 = vadd.f32 %v355, %v2895
    %v2897 = vpop.f32.mrb[0].mxu0
    %2898 = vdwg.mxu0
    %s2899 = scalar_lea.vmem [#allocation4], 18
    %v2900 = vld [vmem:[%s2899] sm:$0x3f]
    %v2901 = vadd.f32 %v2900, %v2636
    %v2902 = vxor.u32 %v2901, 2147483648
    %v2903 = vmul.f32 %v2902, 1.442695
    %v2904 = vpow.pop %v2903
    %v2905 = vadd.f32 %v2904, 1.0
    %v2906 = vrcp.pop %v2905
    %v2907 = vmul.f32 1.0, %v2906
    %v2909 = vrot.slane %v2900, 2
    %v2911 = vadd.f32 %v2909, %v2638
    %v2912 = vxor.u32 %v2911, 2147483648
    %v2913 = vmul.f32 %v2912, 1.442695
    %v2914 = vpow.pop %v2913
    %v2915 = vadd.f32 %v2914, 1.0
    %v2916 = vrcp.pop %v2915
    %v2917 = vmul.f32 1.0, %v2916
    %v2918 = vmul.f32 %v2907, %v2707
    %v2919 = vrot.slane %v2900, 4
    %v2921 = vadd.f32 %v2919, %v2918
    %v2922 = vtanh.pop %v2921
    %v2923 = vsub.f32 1.0, %v2917
    %v2924 = vmul.f32 %v2923, %v2922
    %v2925 = vmul.f32 %v2917, %v2135
    %v2926 = vadd.f32 %v2924, %v2925
    %v2927 = vld [vmem:[#allocation7 + $0x18] sm:$0xff]
    %v2928 = vld [vmem:[#allocation7 + $0x20] sm:$0xff]
    %v2929 = vld [vmem:[#allocation7 + $0x28] sm:$0xff]
    %v2930 = vld [vmem:[#allocation7 + $0x60] sm:$0xff]
    %v2931 = vld [vmem:[#allocation7 + $0x68] sm:$0xff]
    %v2932 = vld [vmem:[#allocation7 + $0x70] sm:$0xff]
    %v2933 = vld [vmem:[#allocation7 + $0xa8] sm:$0xff]
    %v2934 = vld [vmem:[#allocation7 + $0xb0] sm:$0xff]
    %v2935 = vld [vmem:[#allocation7 + $0xb8] sm:$0xff]
    %v2936 = vld [vmem:[#allocation7 + $0xf0] sm:$0xff]
    %v2937 = vld [vmem:[#allocation7 + $0xf8] sm:$0xff]
    %v2938 = vld [vmem:[#allocation7 + $0x100] sm:$0xff]
    %v2939 = vld [vmem:[#allocation7 + $0x138] sm:$0xff]
    %v2940 = vld [vmem:[#allocation7 + $0x140] sm:$0xff]
    %v2941 = vld [vmem:[#allocation7 + $0x148] sm:$0xff]
    %v2942 = vld [vmem:[#allocation7 + $0x180] sm:$0xff]
    %v2943 = vld [vmem:[#allocation7 + $0x188] sm:$0xff]
    %v2944 = vld [vmem:[#allocation7 + $0x190] sm:$0xff]
    %v2945 = vld [vmem:[#allocation7 + $0x1c8] sm:$0xff]
    %v2946 = vld [vmem:[#allocation7 + $0x1d0] sm:$0xff]
    %v2947 = vld [vmem:[#allocation7 + $0x1d8] sm:$0xff]
    %v2948 = vld [vmem:[#allocation7 + $0x210] sm:$0xff]
    %v2949 = vld [vmem:[#allocation7 + $0x218] sm:$0xff]
    %v2950 = vld [vmem:[#allocation7 + $0x220] sm:$0xff]
    %v2951 = vld [vmem:[#allocation7 + $0x258] sm:$0xff]
    %v2952 = vld [vmem:[#allocation7 + $0x260] sm:$0xff]
    %v2953 = vld [vmem:[#allocation7 + $0x268] sm:$0xff]
    %v2954 = vld [vmem:[#allocation7 + $0x2a0] sm:$0xff]
    %v2955 = vld [vmem:[#allocation7 + $0x2a8] sm:$0xff]
    %v2956 = vld [vmem:[#allocation7 + $0x2b0] sm:$0xff]
    %v2957 = vld [vmem:[#allocation7 + $0x2e8] sm:$0xff]
    %v2958 = vld [vmem:[#allocation7 + $0x2f0] sm:$0xff]
    %v2959 = vld [vmem:[#allocation7 + $0x2f8] sm:$0xff]
    %v2960 = vld [vmem:[#allocation7 + $0x330] sm:$0xff]
    %v2961 = vld [vmem:[#allocation7 + $0x338] sm:$0xff]
    %v2962 = vld [vmem:[#allocation7 + $0x340] sm:$0xff]
    %v2963 = vld [vmem:[#allocation7 + $0x378] sm:$0xff]
    %v2964 = vld [vmem:[#allocation7 + $0x380] sm:$0xff]
    %v2965 = vld [vmem:[#allocation7 + $0x388] sm:$0xff]
    %v2966 = vld [vmem:[#allocation7 + $0x3c0] sm:$0xff]
    %v2967 = vld [vmem:[#allocation7 + $0x3c8] sm:$0xff]
    %v2968 = vld [vmem:[#allocation7 + $0x3d0] sm:$0xff]
    %v2969 = vld [vmem:[#allocation7 + $0x408] sm:$0xff]
    %v2970 = vld [vmem:[#allocation7 + $0x410] sm:$0xff]
    %v2971 = vld [vmem:[#allocation7 + $0x418] sm:$0xff]
    %v2972 = vld [vmem:[#allocation7 + $0x450] sm:$0xff]
    %v2973 = vld [vmem:[#allocation7 + $0x458] sm:$0xff]
    %v2974 = vld [vmem:[#allocation7 + $0x460] sm:$0xff]
    %2975 = vmatprep.subr.mxu0 %v2928
    %2976 = vmatpush1.msra.mxu0 %v2927
    %2977 = vmatprep.subr.mxu0 %v2931
    %2978 = vmatpush1.msra.mxu0 %v2930
    %2979 = vmatprep.subr.mxu0 %v2934
    %2980 = vmatpush1.msra.mxu0 %v2933
    %2981 = vmatprep.subr.mxu0 %v2937
    %2982 = vmatpush1.msra.mxu0 %v2936
    %2983 = vmatprep.subr.mxu0 %v2940
    %2984 = vmatpush1.msra.mxu0 %v2939
    %2985 = vmatprep.subr.mxu0 %v2943
    %2986 = vmatpush1.msra.mxu0 %v2942
    %2987 = vmatprep.subr.mxu0 %v2946
    %2988 = vmatpush1.msra.mxu0 %v2945
    %2989 = vmatprep.subr.mxu0 %v2949
    %2990 = vmatpush1.msra.mxu0 %v2948
    %2991 = vmatprep.subr.mxu0 %v2952
    %2992 = vmatpush1.msra.mxu0 %v2951
    %2993 = vmatprep.subr.mxu0 %v2955
    %2994 = vmatpush1.msra.mxu0 %v2954
    %2995 = vmatprep.subr.mxu0 %v2958
    %2996 = vmatpush1.msra.mxu0 %v2957
    %2997 = vmatprep.subr.mxu0 %v2961
    %2998 = vmatpush1.msra.mxu0 %v2960
    %2999 = vmatprep.subr.mxu0 %v2964
    %3000 = vmatpush1.msra.mxu0 %v2963
    %3001 = vmatprep.subr.mxu0 %v2967
    %3002 = vmatpush1.msra.mxu0 %v2966
    %3003 = vmatprep.subr.mxu0 %v2970
    %3004 = vmatpush1.msra.mxu0 %v2969
    %3005 = vmatprep.subr.mxu0 %v2973
    %3006 = vmatpush1.msra.mxu0 %v2972
    %3007 = vmatprep.subr.mxu0 0.0
    %3008 = vmatpush1.msra.mxu0 0.0
    %3009 = vmatprep.subr.mxu0 0.0
    %3010 = vmatpush1.msra.mxu0 0.0
    %3011 = vmatprep.subr.mxu0 0.0
    %3012 = vmatpush1.msra.mxu0 0.0
    %3013 = vmatprep.subr.mxu0 0.0
    %3014 = vmatpush1.msra.mxu0 0.0
    %3015 = vmatprep.subr.mxu0 0.0
    %3016 = vmatpush1.msra.mxu0 0.0
    %3017 = vmatprep.subr.mxu0 0.0
    %3018 = vmatpush1.msra.mxu0 0.0
    %3019 = vmatprep.subr.mxu0 0.0
    %3020 = vmatpush1.msra.mxu0 0.0
    %3021 = vmatprep.subr.mxu0 0.0
    %3022 = vmatpush1.msra.mxu0 0.0
    %3023 = vmatprep.subr.mxu0 0.0
    %3024 = vmatpush1.msra.mxu0 0.0
    %3025 = vmatprep.subr.mxu0 0.0
    %3026 = vmatpush1.msra.mxu0 0.0
    %3027 = vmatprep.subr.mxu0 0.0
    %3028 = vmatpush1.msra.mxu0 0.0
    %3029 = vmatprep.subr.mxu0 0.0
    %3030 = vmatpush1.msra.mxu0 0.0
    %3031 = vmatprep.subr.mxu0 0.0
    %3032 = vmatpush1.msra.mxu0 0.0
    %3033 = vmatprep.subr.mxu0 0.0
    %3034 = vmatpush1.msra.mxu0 0.0
    %3035 = vmatprep.subr.mxu0 0.0
    %3036 = vmatpush1.msra.mxu0 0.0
    %3037 = vmatprep.subr.mxu0 0.0
    %3038 = vmatpush1.msra.mxu0 0.0
    %3039 = vmatprep.mubr.f32.mxu0 0.0
    %3040 = vmatmul.mubr.f32.gmra.mrb[0].mxu0 %v2926
    %v3041 = vpop.f32.mrb[0].mxu0
    %v3042 = vadd.f32 %v579, %v3041
    %v3043 = vpop.f32.mrb[0].mxu0
    %v3044 = vadd.f32 %v583, %v3043
    %3045 = vdwg.mxu0
    %3046 = vmatprep.subr.mxu0 0.0
    %3047 = vmatpush1.msra.mxu0 %v2929
    %3048 = vmatprep.subr.mxu0 0.0
    %3049 = vmatpush1.msra.mxu0 %v2932
    %3050 = vmatprep.subr.mxu0 0.0
    %3051 = vmatpush1.msra.mxu0 %v2935
    %3052 = vmatprep.subr.mxu0 0.0
    %3053 = vmatpush1.msra.mxu0 %v2938
    %3054 = vmatprep.subr.mxu0 0.0
    %3055 = vmatpush1.msra.mxu0 %v2941
    %3056 = vmatprep.subr.mxu0 0.0
    %3057 = vmatpush1.msra.mxu0 %v2944
    %3058 = vmatprep.subr.mxu0 0.0
    %3059 = vmatpush1.msra.mxu0 %v2947
    %3060 = vmatprep.subr.mxu0 0.0
    %3061 = vmatpush1.msra.mxu0 %v2950
    %3062 = vmatprep.subr.mxu0 0.0
    %3063 = vmatpush1.msra.mxu0 %v2953
    %3064 = vmatprep.subr.mxu0 0.0
    %3065 = vmatpush1.msra.mxu0 %v2956
    %3066 = vmatprep.subr.mxu0 0.0
    %3067 = vmatpush1.msra.mxu0 %v2959
    %3068 = vmatprep.subr.mxu0 0.0
    %3069 = vmatpush1.msra.mxu0 %v2962
    %3070 = vmatprep.subr.mxu0 0.0
    %3071 = vmatpush1.msra.mxu0 %v2965
    %3072 = vmatprep.subr.mxu0 0.0
    %3073 = vmatpush1.msra.mxu0 %v2968
    %3074 = vmatprep.subr.mxu0 0.0
    %3075 = vmatpush1.msra.mxu0 %v2971
    %3076 = vmatprep.subr.mxu0 0.0
    %3077 = vmatpush1.msra.mxu0 %v2974
    %3078 = vmatprep.subr.mxu0 0.0
    %3079 = vmatpush1.msra.mxu0 0.0
    %3080 = vmatprep.subr.mxu0 0.0
    %3081 = vmatpush1.msra.mxu0 0.0
    %3082 = vmatprep.subr.mxu0 0.0
    %3083 = vmatpush1.msra.mxu0 0.0
    %3084 = vmatprep.subr.mxu0 0.0
    %3085 = vmatpush1.msra.mxu0 0.0
    %3086 = vmatprep.subr.mxu0 0.0
    %3087 = vmatpush1.msra.mxu0 0.0
    %3088 = vmatprep.subr.mxu0 0.0
    %3089 = vmatpush1.msra.mxu0 0.0
    %3090 = vmatprep.subr.mxu0 0.0
    %3091 = vmatpush1.msra.mxu0 0.0
    %3092 = vmatprep.subr.mxu0 0.0
    %3093 = vmatpush1.msra.mxu0 0.0
    %3094 = vmatprep.subr.mxu0 0.0
    %3095 = vmatpush1.msra.mxu0 0.0
    %3096 = vmatprep.subr.mxu0 0.0
    %3097 = vmatpush1.msra.mxu0 0.0
    %3098 = vmatprep.subr.mxu0 0.0
    %3099 = vmatpush1.msra.mxu0 0.0
    %3100 = vmatprep.subr.mxu0 0.0
    %3101 = vmatpush1.msra.mxu0 0.0
    %3102 = vmatprep.subr.mxu0 0.0
    %3103 = vmatpush1.msra.mxu0 0.0
    %3104 = vmatprep.subr.mxu0 0.0
    %3105 = vmatpush1.msra.mxu0 0.0
    %3106 = vmatprep.subr.mxu0 0.0
    %3107 = vmatpush1.msra.mxu0 0.0
    %3108 = vmatprep.subr.mxu0 0.0
    %3109 = vmatpush1.msra.mxu0 0.0
    %3110 = vmatprep.mubr.f32.mxu0 0.0
    %3111 = vmatmul.mubr.f32.gmra.mrb[0].mxu0 %v2926
    %v3112 = vpop.f32.mrb[0].mxu0
    %v3113 = vadd.f32 %v587, %v3112
    %v3114 = vpop.f32.mrb[0].mxu0
    %3115 = vdwg.mxu0
    %v3116 = vadd.f32 %v3042, %v2825
    %v3117 = vxor.u32 %v3116, 2147483648
    %v3118 = vmul.f32 %v3117, 1.442695
    %v3119 = vpow.pop %v3118
    %v3120 = vadd.f32 %v3119, 1.0
    %v3121 = vrcp.pop %v3120
    %v3122 = vmul.f32 1.0, %v3121
    %v3123 = vadd.f32 %v3044, %v2827
    %v3124 = vxor.u32 %v3123, 2147483648
    %v3125 = vmul.f32 %v3124, 1.442695
    %v3126 = vpow.pop %v3125
    %v3127 = vadd.f32 %v3126, 1.0
    %v3128 = vrcp.pop %v3127
    %v3129 = vmul.f32 1.0, %v3128
    %v3130 = vmul.f32 %v3122, %v2896
    %v3131 = vadd.f32 %v3113, %v3130
    %v3132 = vtanh.pop %v3131
    %v3133 = vsub.f32 1.0, %v3129
    %v3134 = vmul.f32 %v3133, %v3132
    %v3135 = vmul.f32 %v3129, %v2345
    %v3136 = vadd.f32 %v3134, %v3135
    %v3137 = vld [vmem:[#allocation10] sm:$0xff]
    %v3138 = vld [vmem:[#allocation10 + $0x10] sm:$0xff]
    %v3139 = vld [vmem:[#allocation10 + $0x20] sm:$0xff]
    %v3140 = vld [vmem:[#allocation10 + $0x30] sm:$0xff]
    %v3141 = vld [vmem:[#allocation10 + $0x40] sm:$0xff]
    %v3142 = vld [vmem:[#allocation10 + $0x50] sm:$0xff]
    %v3143 = vld [vmem:[#allocation10 + $0x60] sm:$0xff]
    %v3144 = vld [vmem:[#allocation10 + $0x70] sm:$0xff]
    %v3145 = vld [vmem:[#allocation10 + $0x80] sm:$0xff]
    %v3146 = vld [vmem:[#allocation10 + $0x90] sm:$0xff]
    %v3147 = vld [vmem:[#allocation10 + $0xa0] sm:$0xff]
    %v3148 = vld [vmem:[#allocation10 + $0xb0] sm:$0xff]
    %v3149 = vld [vmem:[#allocation10 + $0xc0] sm:$0xff]
    %v3150 = vld [vmem:[#allocation10 + $0xd0] sm:$0xff]
    %v3151 = vld [vmem:[#allocation10 + $0xe0] sm:$0xff]
    %v3152 = vld [vmem:[#allocation10 + $0xf0] sm:$0xff]
    %3153 = vmatprep.subr.mxu0 0.0
    %3154 = vmatpush1.msra.mxu0 %v3137
    %3155 = vmatprep.subr.mxu0 0.0
    %3156 = vmatpush1.msra.mxu0 %v3138
    %3157 = vmatprep.subr.mxu0 0.0
    %3158 = vmatpush1.msra.mxu0 %v3139
    %3159 = vmatprep.subr.mxu0 0.0
    %3160 = vmatpush1.msra.mxu0 %v3140
    %3161 = vmatprep.subr.mxu0 0.0
    %3162 = vmatpush1.msra.mxu0 %v3141
    %3163 = vmatprep.subr.mxu0 0.0
    %3164 = vmatpush1.msra.mxu0 %v3142
    %3165 = vmatprep.subr.mxu0 0.0
    %3166 = vmatpush1.msra.mxu0 %v3143
    %3167 = vmatprep.subr.mxu0 0.0
    %3168 = vmatpush1.msra.mxu0 %v3144
    %3169 = vmatprep.subr.mxu0 0.0
    %3170 = vmatpush1.msra.mxu0 %v3145
    %3171 = vmatprep.subr.mxu0 0.0
    %3172 = vmatpush1.msra.mxu0 %v3146
    %3173 = vmatprep.subr.mxu0 0.0
    %3174 = vmatpush1.msra.mxu0 %v3147
    %3175 = vmatprep.subr.mxu0 0.0
    %3176 = vmatpush1.msra.mxu0 %v3148
    %3177 = vmatprep.subr.mxu0 0.0
    %3178 = vmatpush1.msra.mxu0 %v3149
    %3179 = vmatprep.subr.mxu0 0.0
    %3180 = vmatpush1.msra.mxu0 %v3150
    %3181 = vmatprep.subr.mxu0 0.0
    %3182 = vmatpush1.msra.mxu0 %v3151
    %3183 = vmatprep.subr.mxu0 0.0
    %3184 = vmatpush1.msra.mxu0 %v3152
    %3185 = vmatprep.subr.mxu0 0.0
    %3186 = vmatpush1.msra.mxu0 0.0
    %3187 = vmatprep.subr.mxu0 0.0
    %3188 = vmatpush1.msra.mxu0 0.0
    %3189 = vmatprep.subr.mxu0 0.0
    %3190 = vmatpush1.msra.mxu0 0.0
    %3191 = vmatprep.subr.mxu0 0.0
    %3192 = vmatpush1.msra.mxu0 0.0
    %3193 = vmatprep.subr.mxu0 0.0
    %3194 = vmatpush1.msra.mxu0 0.0
    %3195 = vmatprep.subr.mxu0 0.0
    %3196 = vmatpush1.msra.mxu0 0.0
    %3197 = vmatprep.subr.mxu0 0.0
    %3198 = vmatpush1.msra.mxu0 0.0
    %3199 = vmatprep.subr.mxu0 0.0
    %3200 = vmatpush1.msra.mxu0 0.0
    %3201 = vmatprep.subr.mxu0 0.0
    %3202 = vmatpush1.msra.mxu0 0.0
    %3203 = vmatprep.subr.mxu0 0.0
    %3204 = vmatpush1.msra.mxu0 0.0
    %3205 = vmatprep.subr.mxu0 0.0
    %3206 = vmatpush1.msra.mxu0 0.0
    %3207 = vmatprep.subr.mxu0 0.0
    %3208 = vmatpush1.msra.mxu0 0.0
    %3209 = vmatprep.subr.mxu0 0.0
    %3210 = vmatpush1.msra.mxu0 0.0
    %3211 = vmatprep.subr.mxu0 0.0
    %3212 = vmatpush1.msra.mxu0 0.0
    %3213 = vmatprep.subr.mxu0 0.0
    %3214 = vmatpush1.msra.mxu0 0.0
    %3215 = vmatprep.subr.mxu0 0.0
    %3216 = vmatpush1.msra.mxu0 0.0
    %3217 = vmatprep.mubr.f32.mxu0 0.0
    %3218 = vmatmul.mubr.f32.gmra.mrb[0].mxu0 %v3136
    %v3219 = vpop.f32.mrb[0].mxu0
    %v3220 = vadd.f32 %v773, %v3219
    %v3221 = vpop.f32.mrb[0].mxu0
    %3222 = vdwg.mxu0
    %v3223 = vmax.f32 %v3220, 0.0
    %v3224 = vld [vmem:[#allocation10 + $0x8] sm:$0xff]
    %v3225 = vld [vmem:[#allocation10 + $0x18] sm:$0xff]
    %v3226 = vld [vmem:[#allocation10 + $0x28] sm:$0xff]
    %v3227 = vld [vmem:[#allocation10 + $0x38] sm:$0xff]
    %v3228 = vld [vmem:[#allocation10 + $0x48] sm:$0xff]
    %v3229 = vld [vmem:[#allocation10 + $0x58] sm:$0xff]
    %v3230 = vld [vmem:[#allocation10 + $0x68] sm:$0xff]
    %v3231 = vld [vmem:[#allocation10 + $0x78] sm:$0xff]
    %v3232 = vld [vmem:[#allocation10 + $0x88] sm:$0xff]
    %v3233 = vld [vmem:[#allocation10 + $0x98] sm:$0xff]
    %v3234 = vld [vmem:[#allocation10 + $0xa8] sm:$0xff]
    %v3235 = vld [vmem:[#allocation10 + $0xb8] sm:$0xff]
    %v3236 = vld [vmem:[#allocation10 + $0xc8] sm:$0xff]
    %v3237 = vld [vmem:[#allocation10 + $0xd8] sm:$0xff]
    %v3238 = vld [vmem:[#allocation10 + $0xe8] sm:$0xff]
    %v3239 = vld [vmem:[#allocation10 + $0xf8] sm:$0xff]
    %3240 = vmatprep.subr.mxu0 0.0
    %3241 = vmatpush1.msra.mxu0 %v3224
    %3242 = vmatprep.subr.mxu0 0.0
    %3243 = vmatpush1.msra.mxu0 %v3225
    %3244 = vmatprep.subr.mxu0 0.0
    %3245 = vmatpush1.msra.mxu0 %v3226
    %3246 = vmatprep.subr.mxu0 0.0
    %3247 = vmatpush1.msra.mxu0 %v3227
    %3248 = vmatprep.subr.mxu0 0.0
    %3249 = vmatpush1.msra.mxu0 %v3228
    %3250 = vmatprep.subr.mxu0 0.0
    %3251 = vmatpush1.msra.mxu0 %v3229
    %3252 = vmatprep.subr.mxu0 0.0
    %3253 = vmatpush1.msra.mxu0 %v3230
    %3254 = vmatprep.subr.mxu0 0.0
    %3255 = vmatpush1.msra.mxu0 %v3231
    %3256 = vmatprep.subr.mxu0 0.0
    %3257 = vmatpush1.msra.mxu0 %v3232
    %3258 = vmatprep.subr.mxu0 0.0
    %3259 = vmatpush1.msra.mxu0 %v3233
    %3260 = vmatprep.subr.mxu0 0.0
    %3261 = vmatpush1.msra.mxu0 %v3234
    %3262 = vmatprep.subr.mxu0 0.0
    %3263 = vmatpush1.msra.mxu0 %v3235
    %3264 = vmatprep.subr.mxu0 0.0
    %3265 = vmatpush1.msra.mxu0 %v3236
    %3266 = vmatprep.subr.mxu0 0.0
    %3267 = vmatpush1.msra.mxu0 %v3237
    %3268 = vmatprep.subr.mxu0 0.0
    %3269 = vmatpush1.msra.mxu0 %v3238
    %3270 = vmatprep.subr.mxu0 0.0
    %3271 = vmatpush1.msra.mxu0 %v3239
    %3272 = vmatprep.subr.mxu0 0.0
    %3273 = vmatpush1.msra.mxu0 0.0
    %3274 = vmatprep.subr.mxu0 0.0
    %3275 = vmatpush1.msra.mxu0 0.0
    %3276 = vmatprep.subr.mxu0 0.0
    %3277 = vmatpush1.msra.mxu0 0.0
    %3278 = vmatprep.subr.mxu0 0.0
    %3279 = vmatpush1.msra.mxu0 0.0
    %3280 = vmatprep.subr.mxu0 0.0
    %3281 = vmatpush1.msra.mxu0 0.0
    %3282 = vmatprep.subr.mxu0 0.0
    %3283 = vmatpush1.msra.mxu0 0.0
    %3284 = vmatprep.subr.mxu0 0.0
    %3285 = vmatpush1.msra.mxu0 0.0
    %3286 = vmatprep.subr.mxu0 0.0
    %3287 = vmatpush1.msra.mxu0 0.0
    %3288 = vmatprep.subr.mxu0 0.0
    %3289 = vmatpush1.msra.mxu0 0.0
    %3290 = vmatprep.subr.mxu0 0.0
    %3291 = vmatpush1.msra.mxu0 0.0
    %3292 = vmatprep.subr.mxu0 0.0
    %3293 = vmatpush1.msra.mxu0 0.0
    %3294 = vmatprep.subr.mxu0 0.0
    %3295 = vmatpush1.msra.mxu0 0.0
    %3296 = vmatprep.subr.mxu0 0.0
    %3297 = vmatpush1.msra.mxu0 0.0
    %3298 = vmatprep.subr.mxu0 0.0
    %3299 = vmatpush1.msra.mxu0 0.0
    %3300 = vmatprep.subr.mxu0 0.0
    %3301 = vmatpush1.msra.mxu0 0.0
    %3302 = vmatprep.subr.mxu0 0.0
    %3303 = vmatpush1.msra.mxu0 0.0
    %3304 = vmatprep.mubr.f32.mxu0 0.0
    %3305 = vmatmul.mubr.f32.gmra.mrb[0].mxu0 %v3223
    %v3306 = vpop.f32.mrb[0].mxu0
    %v3307 = vadd.f32 %v866, %v3306
    %v3308 = vpop.f32.mrb[0].mxu0
    %3309 = vdwg.mxu0
    %s3310 = scalar_lea.vmem [#allocation12], 6
    %3311 = vst [vmem:[%s3310] sm:$0x3] %v3307
    %v3312 = vld [vmem:[#allocation7] sm:$0xff]
    %v3313 = vld [vmem:[#allocation7 + $0x8] sm:$0xff]
    %v3314 = vld [vmem:[#allocation7 + $0x10] sm:$0xff]
    %v3315 = vld [vmem:[#allocation7 + $0x48] sm:$0xff]
    %v3316 = vld [vmem:[#allocation7 + $0x50] sm:$0xff]
    %v3317 = vld [vmem:[#allocation7 + $0x58] sm:$0xff]
    %v3318 = vld [vmem:[#allocation7 + $0x90] sm:$0xff]
    %v3319 = vld [vmem:[#allocation7 + $0x98] sm:$0xff]
    %v3320 = vld [vmem:[#allocation7 + $0xa0] sm:$0xff]
    %v3321 = vld [vmem:[#allocation7 + $0xd8] sm:$0xff]
    %v3322 = vld [vmem:[#allocation7 + $0xe0] sm:$0xff]
    %v3323 = vld [vmem:[#allocation7 + $0xe8] sm:$0xff]
    %v3324 = vld [vmem:[#allocation7 + $0x120] sm:$0xff]
    %v3325 = vld [vmem:[#allocation7 + $0x128] sm:$0xff]
    %v3326 = vld [vmem:[#allocation7 + $0x130] sm:$0xff]
    %v3327 = vld [vmem:[#allocation7 + $0x168] sm:$0xff]
    %v3328 = vld [vmem:[#allocation7 + $0x170] sm:$0xff]
    %v3329 = vld [vmem:[#allocation7 + $0x178] sm:$0xff]
    %v3330 = vld [vmem:[#allocation7 + $0x1b0] sm:$0xff]
    %v3331 = vld [vmem:[#allocation7 + $0x1b8] sm:$0xff]
    %v3332 = vld [vmem:[#allocation7 + $0x1c0] sm:$0xff]
    %v3333 = vld [vmem:[#allocation7 + $0x1f8] sm:$0xff]
    %v3334 = vld [vmem:[#allocation7 + $0x200] sm:$0xff]
    %v3335 = vld [vmem:[#allocation7 + $0x208] sm:$0xff]
    %v3336 = vld [vmem:[#allocation7 + $0x240] sm:$0xff]
    %v3337 = vld [vmem:[#allocation7 + $0x248] sm:$0xff]
    %v3338 = vld [vmem:[#allocation7 + $0x250] sm:$0xff]
    %v3339 = vld [vmem:[#allocation7 + $0x288] sm:$0xff]
    %v3340 = vld [vmem:[#allocation7 + $0x290] sm:$0xff]
    %v3341 = vld [vmem:[#allocation7 + $0x298] sm:$0xff]
    %v3342 = vld [vmem:[#allocation7 + $0x2d0] sm:$0xff]
    %v3343 = vld [vmem:[#allocation7 + $0x2d8] sm:$0xff]
    %v3344 = vld [vmem:[#allocation7 + $0x2e0] sm:$0xff]
    %v3345 = vld [vmem:[#allocation7 + $0x318] sm:$0xff]
    %v3346 = vld [vmem:[#allocation7 + $0x320] sm:$0xff]
    %v3347 = vld [vmem:[#allocation7 + $0x328] sm:$0xff]
    %v3348 = vld [vmem:[#allocation7 + $0x360] sm:$0xff]
    %v3349 = vld [vmem:[#allocation7 + $0x368] sm:$0xff]
    %v3350 = vld [vmem:[#allocation7 + $0x370] sm:$0xff]
    %v3351 = vld [vmem:[#allocation7 + $0x3a8] sm:$0xff]
    %v3352 = vld [vmem:[#allocation7 + $0x3b0] sm:$0xff]
    %v3353 = vld [vmem:[#allocation7 + $0x3b8] sm:$0xff]
    %v3354 = vld [vmem:[#allocation7 + $0x3f0] sm:$0xff]
    %v3355 = vld [vmem:[#allocation7 + $0x3f8] sm:$0xff]
    %v3356 = vld [vmem:[#allocation7 + $0x400] sm:$0xff]
    %v3357 = vld [vmem:[#allocation7 + $0x438] sm:$0xff]
    %v3358 = vld [vmem:[#allocation7 + $0x440] sm:$0xff]
    %v3359 = vld [vmem:[#allocation7 + $0x448] sm:$0xff]
    %3360 = vmatprep.subr.mxu0 %v3313
    %3361 = vmatpush1.msra.mxu0 %v3312
    %3362 = vmatprep.subr.mxu0 %v3316
    %3363 = vmatpush1.msra.mxu0 %v3315
    %3364 = vmatprep.subr.mxu0 %v3319
    %3365 = vmatpush1.msra.mxu0 %v3318
    %3366 = vmatprep.subr.mxu0 %v3322
    %3367 = vmatpush1.msra.mxu0 %v3321
    %3368 = vmatprep.subr.mxu0 %v3325
    %3369 = vmatpush1.msra.mxu0 %v3324
    %3370 = vmatprep.subr.mxu0 %v3328
    %3371 = vmatpush1.msra.mxu0 %v3327
    %3372 = vmatprep.subr.mxu0 %v3331
    %3373 = vmatpush1.msra.mxu0 %v3330
    %3374 = vmatprep.subr.mxu0 %v3334
    %3375 = vmatpush1.msra.mxu0 %v3333
    %3376 = vmatprep.subr.mxu0 %v3337
    %3377 = vmatpush1.msra.mxu0 %v3336
    %3378 = vmatprep.subr.mxu0 %v3340
    %3379 = vmatpush1.msra.mxu0 %v3339
    %3380 = vmatprep.subr.mxu0 %v3343
    %3381 = vmatpush1.msra.mxu0 %v3342
    %3382 = vmatprep.subr.mxu0 %v3346
    %3383 = vmatpush1.msra.mxu0 %v3345
    %3384 = vmatprep.subr.mxu0 %v3349
    %3385 = vmatpush1.msra.mxu0 %v3348
    %3386 = vmatprep.subr.mxu0 %v3352
    %3387 = vmatpush1.msra.mxu0 %v3351
    %3388 = vmatprep.subr.mxu0 %v3355
    %3389 = vmatpush1.msra.mxu0 %v3354
    %3390 = vmatprep.subr.mxu0 %v3358
    %3391 = vmatpush1.msra.mxu0 %v3357
    %3392 = vmatprep.subr.mxu0 0.0
    %3393 = vmatpush1.msra.mxu0 0.0
    %3394 = vmatprep.subr.mxu0 0.0
    %3395 = vmatpush1.msra.mxu0 0.0
    %3396 = vmatprep.subr.mxu0 0.0
    %3397 = vmatpush1.msra.mxu0 0.0
    %3398 = vmatprep.subr.mxu0 0.0
    %3399 = vmatpush1.msra.mxu0 0.0
    %3400 = vmatprep.subr.mxu0 0.0
    %3401 = vmatpush1.msra.mxu0 0.0
    %3402 = vmatprep.subr.mxu0 0.0
    %3403 = vmatpush1.msra.mxu0 0.0
    %3404 = vmatprep.subr.mxu0 0.0
    %3405 = vmatpush1.msra.mxu0 0.0
    %3406 = vmatprep.subr.mxu0 0.0
    %3407 = vmatpush1.msra.mxu0 0.0
    %3408 = vmatprep.subr.mxu0 0.0
    %3409 = vmatpush1.msra.mxu0 0.0
    %3410 = vmatprep.subr.mxu0 0.0
    %3411 = vmatpush1.msra.mxu0 0.0
    %3412 = vmatprep.subr.mxu0 0.0
    %3413 = vmatpush1.msra.mxu0 0.0
    %3414 = vmatprep.subr.mxu0 0.0
    %3415 = vmatpush1.msra.mxu0 0.0
    %3416 = vmatprep.subr.mxu0 0.0
    %3417 = vmatpush1.msra.mxu0 0.0
    %3418 = vmatprep.subr.mxu0 0.0
    %3419 = vmatpush1.msra.mxu0 0.0
    %3420 = vmatprep.subr.mxu0 0.0
    %3421 = vmatpush1.msra.mxu0 0.0
    %3422 = vmatprep.subr.mxu0 0.0
    %3423 = vmatpush1.msra.mxu0 0.0
    %3424 = vmatprep.mubr.f32.mxu0 0.0
    %3425 = vmatmul.mubr.f32.gmra.mrb[0].mxu0 %v2926
    %v3426 = vpop.f32.mrb[0].mxu0
    %v3427 = vadd.f32 %v142, %v3426
    %v3428 = vpop.f32.mrb[0].mxu0
    %v3429 = vadd.f32 %v146, %v3428
    %3430 = vdwg.mxu0
    %3431 = vmatprep.subr.mxu0 0.0
    %3432 = vmatpush1.msra.mxu0 %v3314
    %3433 = vmatprep.subr.mxu0 0.0
    %3434 = vmatpush1.msra.mxu0 %v3317
    %3435 = vmatprep.subr.mxu0 0.0
    %3436 = vmatpush1.msra.mxu0 %v3320
    %3437 = vmatprep.subr.mxu0 0.0
    %3438 = vmatpush1.msra.mxu0 %v3323
    %3439 = vmatprep.subr.mxu0 0.0
    %3440 = vmatpush1.msra.mxu0 %v3326
    %3441 = vmatprep.subr.mxu0 0.0
    %3442 = vmatpush1.msra.mxu0 %v3329
    %3443 = vmatprep.subr.mxu0 0.0
    %3444 = vmatpush1.msra.mxu0 %v3332
    %3445 = vmatprep.subr.mxu0 0.0
    %3446 = vmatpush1.msra.mxu0 %v3335
    %3447 = vmatprep.subr.mxu0 0.0
    %3448 = vmatpush1.msra.mxu0 %v3338
    %3449 = vmatprep.subr.mxu0 0.0
    %3450 = vmatpush1.msra.mxu0 %v3341
    %3451 = vmatprep.subr.mxu0 0.0
    %3452 = vmatpush1.msra.mxu0 %v3344
    %3453 = vmatprep.subr.mxu0 0.0
    %3454 = vmatpush1.msra.mxu0 %v3347
    %3455 = vmatprep.subr.mxu0 0.0
    %3456 = vmatpush1.msra.mxu0 %v3350
    %3457 = vmatprep.subr.mxu0 0.0
    %3458 = vmatpush1.msra.mxu0 %v3353
    %3459 = vmatprep.subr.mxu0 0.0
    %3460 = vmatpush1.msra.mxu0 %v3356
    %3461 = vmatprep.subr.mxu0 0.0
    %3462 = vmatpush1.msra.mxu0 %v3359
    %3463 = vmatprep.subr.mxu0 0.0
    %3464 = vmatpush1.msra.mxu0 0.0
    %3465 = vmatprep.subr.mxu0 0.0
    %3466 = vmatpush1.msra.mxu0 0.0
    %3467 = vmatprep.subr.mxu0 0.0
    %3468 = vmatpush1.msra.mxu0 0.0
    %3469 = vmatprep.subr.mxu0 0.0
    %3470 = vmatpush1.msra.mxu0 0.0
    %3471 = vmatprep.subr.mxu0 0.0
    %3472 = vmatpush1.msra.mxu0 0.0
    %3473 = vmatprep.subr.mxu0 0.0
    %3474 = vmatpush1.msra.mxu0 0.0
    %3475 = vmatprep.subr.mxu0 0.0
    %3476 = vmatpush1.msra.mxu0 0.0
    %3477 = vmatprep.subr.mxu0 0.0
    %3478 = vmatpush1.msra.mxu0 0.0
    %3479 = vmatprep.subr.mxu0 0.0
    %3480 = vmatpush1.msra.mxu0 0.0
    %3481 = vmatprep.subr.mxu0 0.0
    %3482 = vmatpush1.msra.mxu0 0.0
    %3483 = vmatprep.subr.mxu0 0.0
    %3484 = vmatpush1.msra.mxu0 0.0
    %3485 = vmatprep.subr.mxu0 0.0
    %3486 = vmatpush1.msra.mxu0 0.0
    %3487 = vmatprep.subr.mxu0 0.0
    %3488 = vmatpush1.msra.mxu0 0.0
    %3489 = vmatprep.subr.mxu0 0.0
    %3490 = vmatpush1.msra.mxu0 0.0
    %3491 = vmatprep.subr.mxu0 0.0
    %3492 = vmatpush1.msra.mxu0 0.0
    %3493 = vmatprep.subr.mxu0 0.0
    %3494 = vmatpush1.msra.mxu0 0.0
    %3495 = vmatprep.mubr.f32.mxu0 0.0
    %3496 = vmatmul.mubr.f32.gmra.mrb[0].mxu0 %v2926
    %v3497 = vpop.f32.mrb[0].mxu0
    %v3498 = vadd.f32 %v150, %v3497
    %v3499 = vpop.f32.mrb[0].mxu0
    %3500 = vdwg.mxu0
    %v3501 = vld [vmem:[#allocation7 + $0x30] sm:$0xff]
    %v3502 = vld [vmem:[#allocation7 + $0x38] sm:$0xff]
    %v3503 = vld [vmem:[#allocation7 + $0x40] sm:$0xff]
    %v3504 = vld [vmem:[#allocation7 + $0x78] sm:$0xff]
    %v3505 = vld [vmem:[#allocation7 + $0x80] sm:$0xff]
    %v3506 = vld [vmem:[#allocation7 + $0x88] sm:$0xff]
    %v3507 = vld [vmem:[#allocation7 + $0xc0] sm:$0xff]
    %v3508 = vld [vmem:[#allocation7 + $0xc8] sm:$0xff]
    %v3509 = vld [vmem:[#allocation7 + $0xd0] sm:$0xff]
    %v3510 = vld [vmem:[#allocation7 + $0x108] sm:$0xff]
    %v3511 = vld [vmem:[#allocation7 + $0x110] sm:$0xff]
    %v3512 = vld [vmem:[#allocation7 + $0x118] sm:$0xff]
    %v3513 = vld [vmem:[#allocation7 + $0x150] sm:$0xff]
    %v3514 = vld [vmem:[#allocation7 + $0x158] sm:$0xff]
    %v3515 = vld [vmem:[#allocation7 + $0x160] sm:$0xff]
    %v3516 = vld [vmem:[#allocation7 + $0x198] sm:$0xff]
    %v3517 = vld [vmem:[#allocation7 + $0x1a0] sm:$0xff]
    %v3518 = vld [vmem:[#allocation7 + $0x1a8] sm:$0xff]
    %v3519 = vld [vmem:[#allocation7 + $0x1e0] sm:$0xff]
    %v3520 = vld [vmem:[#allocation7 + $0x1e8] sm:$0xff]
    %v3521 = vld [vmem:[#allocation7 + $0x1f0] sm:$0xff]
    %v3522 = vld [vmem:[#allocation7 + $0x228] sm:$0xff]
    %v3523 = vld [vmem:[#allocation7 + $0x230] sm:$0xff]
    %v3524 = vld [vmem:[#allocation7 + $0x238] sm:$0xff]
    %v3525 = vld [vmem:[#allocation7 + $0x270] sm:$0xff]
    %v3526 = vld [vmem:[#allocation7 + $0x278] sm:$0xff]
    %v3527 = vld [vmem:[#allocation7 + $0x280] sm:$0xff]
    %v3528 = vld [vmem:[#allocation7 + $0x2b8] sm:$0xff]
    %v3529 = vld [vmem:[#allocation7 + $0x2c0] sm:$0xff]
    %v3530 = vld [vmem:[#allocation7 + $0x2c8] sm:$0xff]
    %v3531 = vld [vmem:[#allocation7 + $0x300] sm:$0xff]
    %v3532 = vld [vmem:[#allocation7 + $0x308] sm:$0xff]
    %v3533 = vld [vmem:[#allocation7 + $0x310] sm:$0xff]
    %v3534 = vld [vmem:[#allocation7 + $0x348] sm:$0xff]
    %v3535 = vld [vmem:[#allocation7 + $0x350] sm:$0xff]
    %v3536 = vld [vmem:[#allocation7 + $0x358] sm:$0xff]
    %v3537 = vld [vmem:[#allocation7 + $0x390] sm:$0xff]
    %v3538 = vld [vmem:[#allocation7 + $0x398] sm:$0xff]
    %v3539 = vld [vmem:[#allocation7 + $0x3a0] sm:$0xff]
    %v3540 = vld [vmem:[#allocation7 + $0x3d8] sm:$0xff]
    %v3541 = vld [vmem:[#allocation7 + $0x3e0] sm:$0xff]
    %v3542 = vld [vmem:[#allocation7 + $0x3e8] sm:$0xff]
    %v3543 = vld [vmem:[#allocation7 + $0x420] sm:$0xff]
    %v3544 = vld [vmem:[#allocation7 + $0x428] sm:$0xff]
    %v3545 = vld [vmem:[#allocation7 + $0x430] sm:$0xff]
    %v3546 = vld [vmem:[#allocation7 + $0x468] sm:$0xff]
    %v3547 = vld [vmem:[#allocation7 + $0x470] sm:$0xff]
    %v3548 = vld [vmem:[#allocation7 + $0x478] sm:$0xff]
    %3549 = vmatprep.subr.mxu0 %v3502
    %3550 = vmatpush1.msra.mxu0 %v3501
    %3551 = vmatprep.subr.mxu0 %v3505
    %3552 = vmatpush1.msra.mxu0 %v3504
    %3553 = vmatprep.subr.mxu0 %v3508
    %3554 = vmatpush1.msra.mxu0 %v3507
    %3555 = vmatprep.subr.mxu0 %v3511
    %3556 = vmatpush1.msra.mxu0 %v3510
    %3557 = vmatprep.subr.mxu0 %v3514
    %3558 = vmatpush1.msra.mxu0 %v3513
    %3559 = vmatprep.subr.mxu0 %v3517
    %3560 = vmatpush1.msra.mxu0 %v3516
    %3561 = vmatprep.subr.mxu0 %v3520
    %3562 = vmatpush1.msra.mxu0 %v3519
    %3563 = vmatprep.subr.mxu0 %v3523
    %3564 = vmatpush1.msra.mxu0 %v3522
    %3565 = vmatprep.subr.mxu0 %v3526
    %3566 = vmatpush1.msra.mxu0 %v3525
    %3567 = vmatprep.subr.mxu0 %v3529
    %3568 = vmatpush1.msra.mxu0 %v3528
    %3569 = vmatprep.subr.mxu0 %v3532
    %3570 = vmatpush1.msra.mxu0 %v3531
    %3571 = vmatprep.subr.mxu0 %v3535
    %3572 = vmatpush1.msra.mxu0 %v3534
    %3573 = vmatprep.subr.mxu0 %v3538
    %3574 = vmatpush1.msra.mxu0 %v3537
    %3575 = vmatprep.subr.mxu0 %v3541
    %3576 = vmatpush1.msra.mxu0 %v3540
    %3577 = vmatprep.subr.mxu0 %v3544
    %3578 = vmatpush1.msra.mxu0 %v3543
    %3579 = vmatprep.subr.mxu0 %v3547
    %3580 = vmatpush1.msra.mxu0 %v3546
    %3581 = vmatprep.subr.mxu0 0.0
    %3582 = vmatpush1.msra.mxu0 0.0
    %3583 = vmatprep.subr.mxu0 0.0
    %3584 = vmatpush1.msra.mxu0 0.0
    %3585 = vmatprep.subr.mxu0 0.0
    %3586 = vmatpush1.msra.mxu0 0.0
    %3587 = vmatprep.subr.mxu0 0.0
    %3588 = vmatpush1.msra.mxu0 0.0
    %3589 = vmatprep.subr.mxu0 0.0
    %3590 = vmatpush1.msra.mxu0 0.0
    %3591 = vmatprep.subr.mxu0 0.0
    %3592 = vmatpush1.msra.mxu0 0.0
    %3593 = vmatprep.subr.mxu0 0.0
    %3594 = vmatpush1.msra.mxu0 0.0
    %3595 = vmatprep.subr.mxu0 0.0
    %3596 = vmatpush1.msra.mxu0 0.0
    %3597 = vmatprep.subr.mxu0 0.0
    %3598 = vmatpush1.msra.mxu0 0.0
    %3599 = vmatprep.subr.mxu0 0.0
    %3600 = vmatpush1.msra.mxu0 0.0
    %3601 = vmatprep.subr.mxu0 0.0
    %3602 = vmatpush1.msra.mxu0 0.0
    %3603 = vmatprep.subr.mxu0 0.0
    %3604 = vmatpush1.msra.mxu0 0.0
    %3605 = vmatprep.subr.mxu0 0.0
    %3606 = vmatpush1.msra.mxu0 0.0
    %3607 = vmatprep.subr.mxu0 0.0
    %3608 = vmatpush1.msra.mxu0 0.0
    %3609 = vmatprep.subr.mxu0 0.0
    %3610 = vmatpush1.msra.mxu0 0.0
    %3611 = vmatprep.subr.mxu0 0.0
    %3612 = vmatpush1.msra.mxu0 0.0
    %3613 = vmatprep.mubr.f32.mxu0 0.0
    %3614 = vmatmul.mubr.f32.gmra.mrb[0].mxu0 %v3136
    %v3615 = vpop.f32.mrb[0].mxu0
    %v3616 = vadd.f32 %v347, %v3615
    %v3617 = vpop.f32.mrb[0].mxu0
    %v3618 = vadd.f32 %v351, %v3617
    %3619 = vdwg.mxu0
    %3620 = vmatprep.subr.mxu0 0.0
    %3621 = vmatpush1.msra.mxu0 %v3503
    %3622 = vmatprep.subr.mxu0 0.0
    %3623 = vmatpush1.msra.mxu0 %v3506
    %3624 = vmatprep.subr.mxu0 0.0
    %3625 = vmatpush1.msra.mxu0 %v3509
    %3626 = vmatprep.subr.mxu0 0.0
    %3627 = vmatpush1.msra.mxu0 %v3512
    %3628 = vmatprep.subr.mxu0 0.0
    %3629 = vmatpush1.msra.mxu0 %v3515
    %3630 = vmatprep.subr.mxu0 0.0
    %3631 = vmatpush1.msra.mxu0 %v3518
    %3632 = vmatprep.subr.mxu0 0.0
    %3633 = vmatpush1.msra.mxu0 %v3521
    %3634 = vmatprep.subr.mxu0 0.0
    %3635 = vmatpush1.msra.mxu0 %v3524
    %3636 = vmatprep.subr.mxu0 0.0
    %3637 = vmatpush1.msra.mxu0 %v3527
    %3638 = vmatprep.subr.mxu0 0.0
    %3639 = vmatpush1.msra.mxu0 %v3530
    %3640 = vmatprep.subr.mxu0 0.0
    %3641 = vmatpush1.msra.mxu0 %v3533
    %3642 = vmatprep.subr.mxu0 0.0
    %3643 = vmatpush1.msra.mxu0 %v3536
    %3644 = vmatprep.subr.mxu0 0.0
    %3645 = vmatpush1.msra.mxu0 %v3539
    %3646 = vmatprep.subr.mxu0 0.0
    %3647 = vmatpush1.msra.mxu0 %v3542
    %3648 = vmatprep.subr.mxu0 0.0
    %3649 = vmatpush1.msra.mxu0 %v3545
    %3650 = vmatprep.subr.mxu0 0.0
    %3651 = vmatpush1.msra.mxu0 %v3548
    %3652 = vmatprep.subr.mxu0 0.0
    %3653 = vmatpush1.msra.mxu0 0.0
    %3654 = vmatprep.subr.mxu0 0.0
    %3655 = vmatpush1.msra.mxu0 0.0
    %3656 = vmatprep.subr.mxu0 0.0
    %3657 = vmatpush1.msra.mxu0 0.0
    %3658 = vmatprep.subr.mxu0 0.0
    %3659 = vmatpush1.msra.mxu0 0.0
    %3660 = vmatprep.subr.mxu0 0.0
    %3661 = vmatpush1.msra.mxu0 0.0
    %3662 = vmatprep.subr.mxu0 0.0
    %3663 = vmatpush1.msra.mxu0 0.0
    %3664 = vmatprep.subr.mxu0 0.0
    %3665 = vmatpush1.msra.mxu0 0.0
    %3666 = vmatprep.subr.mxu0 0.0
    %3667 = vmatpush1.msra.mxu0 0.0
    %3668 = vmatprep.subr.mxu0 0.0
    %3669 = vmatpush1.msra.mxu0 0.0
    %3670 = vmatprep.subr.mxu0 0.0
    %3671 = vmatpush1.msra.mxu0 0.0
    %3672 = vmatprep.subr.mxu0 0.0
    %3673 = vmatpush1.msra.mxu0 0.0
    %3674 = vmatprep.subr.mxu0 0.0
    %3675 = vmatpush1.msra.mxu0 0.0
    %3676 = vmatprep.subr.mxu0 0.0
    %3677 = vmatpush1.msra.mxu0 0.0
    %3678 = vmatprep.subr.mxu0 0.0
    %3679 = vmatpush1.msra.mxu0 0.0
    %3680 = vmatprep.subr.mxu0 0.0
    %3681 = vmatpush1.msra.mxu0 0.0
    %3682 = vmatprep.subr.mxu0 0.0
    %3683 = vmatpush1.msra.mxu0 0.0
    %3684 = vmatprep.mubr.f32.mxu0 0.0
    %3685 = vmatmul.mubr.f32.gmra.mrb[0].mxu0 %v3136
    %v3686 = vpop.f32.mrb[0].mxu0
    %v3687 = vadd.f32 %v355, %v3686
    %v3688 = vpop.f32.mrb[0].mxu0
    %3689 = vdwg.mxu0
    %s3690 = scalar_lea.vmem [#allocation4], 24
    %v3691 = vld [vmem:[%s3690] sm:$0x3f]
    %v3692 = vadd.f32 %v3691, %v3427
    %v3693 = vxor.u32 %v3692, 2147483648
    %v3694 = vmul.f32 %v3693, 1.442695
    %v3695 = vpow.pop %v3694
    %v3696 = vadd.f32 %v3695, 1.0
    %v3697 = vrcp.pop %v3696
    %v3698 = vmul.f32 1.0, %v3697
    %v3700 = vrot.slane %v3691, 2
    %v3702 = vadd.f32 %v3700, %v3429
    %v3703 = vxor.u32 %v3702, 2147483648
    %v3704 = vmul.f32 %v3703, 1.442695
    %v3705 = vpow.pop %v3704
    %v3706 = vadd.f32 %v3705, 1.0
    %v3707 = vrcp.pop %v3706
    %v3708 = vmul.f32 1.0, %v3707
    %v3709 = vmul.f32 %v3698, %v3498
    %v3710 = vrot.slane %v3691, 4
    %v3712 = vadd.f32 %v3710, %v3709
    %v3713 = vtanh.pop %v3712
    %v3714 = vsub.f32 1.0, %v3708
    %v3715 = vmul.f32 %v3714, %v3713
    %v3716 = vmul.f32 %v3708, %v2926
    %v3717 = vadd.f32 %v3715, %v3716
    %v3718 = vld [vmem:[#allocation7 + $0x18] sm:$0xff]
    %v3719 = vld [vmem:[#allocation7 + $0x20] sm:$0xff]
    %v3720 = vld [vmem:[#allocation7 + $0x28] sm:$0xff]
    %v3721 = vld [vmem:[#allocation7 + $0x60] sm:$0xff]
    %v3722 = vld [vmem:[#allocation7 + $0x68] sm:$0xff]
    %v3723 = vld [vmem:[#allocation7 + $0x70] sm:$0xff]
    %v3724 = vld [vmem:[#allocation7 + $0xa8] sm:$0xff]
    %v3725 = vld [vmem:[#allocation7 + $0xb0] sm:$0xff]
    %v3726 = vld [vmem:[#allocation7 + $0xb8] sm:$0xff]
    %v3727 = vld [vmem:[#allocation7 + $0xf0] sm:$0xff]
    %v3728 = vld [vmem:[#allocation7 + $0xf8] sm:$0xff]
    %v3729 = vld [vmem:[#allocation7 + $0x100] sm:$0xff]
    %v3730 = vld [vmem:[#allocation7 + $0x138] sm:$0xff]
    %v3731 = vld [vmem:[#allocation7 + $0x140] sm:$0xff]
    %v3732 = vld [vmem:[#allocation7 + $0x148] sm:$0xff]
    %v3733 = vld [vmem:[#allocation7 + $0x180] sm:$0xff]
    %v3734 = vld [vmem:[#allocation7 + $0x188] sm:$0xff]
    %v3735 = vld [vmem:[#allocation7 + $0x190] sm:$0xff]
    %v3736 = vld [vmem:[#allocation7 + $0x1c8] sm:$0xff]
    %v3737 = vld [vmem:[#allocation7 + $0x1d0] sm:$0xff]
    %v3738 = vld [vmem:[#allocation7 + $0x1d8] sm:$0xff]
    %v3739 = vld [vmem:[#allocation7 + $0x210] sm:$0xff]
    %v3740 = vld [vmem:[#allocation7 + $0x218] sm:$0xff]
    %v3741 = vld [vmem:[#allocation7 + $0x220] sm:$0xff]
    %v3742 = vld [vmem:[#allocation7 + $0x258] sm:$0xff]
    %v3743 = vld [vmem:[#allocation7 + $0x260] sm:$0xff]
    %v3744 = vld [vmem:[#allocation7 + $0x268] sm:$0xff]
    %v3745 = vld [vmem:[#allocation7 + $0x2a0] sm:$0xff]
    %v3746 = vld [vmem:[#allocation7 + $0x2a8] sm:$0xff]
    %v3747 = vld [vmem:[#allocation7 + $0x2b0] sm:$0xff]
    %v3748 = vld [vmem:[#allocation7 + $0x2e8] sm:$0xff]
    %v3749 = vld [vmem:[#allocation7 + $0x2f0] sm:$0xff]
    %v3750 = vld [vmem:[#allocation7 + $0x2f8] sm:$0xff]
    %v3751 = vld [vmem:[#allocation7 + $0x330] sm:$0xff]
    %v3752 = vld [vmem:[#allocation7 + $0x338] sm:$0xff]
    %v3753 = vld [vmem:[#allocation7 + $0x340] sm:$0xff]
    %v3754 = vld [vmem:[#allocation7 + $0x378] sm:$0xff]
    %v3755 = vld [vmem:[#allocation7 + $0x380] sm:$0xff]
    %v3756 = vld [vmem:[#allocation7 + $0x388] sm:$0xff]
    %v3757 = vld [vmem:[#allocation7 + $0x3c0] sm:$0xff]
    %v3758 = vld [vmem:[#allocation7 + $0x3c8] sm:$0xff]
    %v3759 = vld [vmem:[#allocation7 + $0x3d0] sm:$0xff]
    %v3760 = vld [vmem:[#allocation7 + $0x408] sm:$0xff]
    %v3761 = vld [vmem:[#allocation7 + $0x410] sm:$0xff]
    %v3762 = vld [vmem:[#allocation7 + $0x418] sm:$0xff]
    %v3763 = vld [vmem:[#allocation7 + $0x450] sm:$0xff]
    %v3764 = vld [vmem:[#allocation7 + $0x458] sm:$0xff]
    %v3765 = vld [vmem:[#allocation7 + $0x460] sm:$0xff]
    %3766 = vmatprep.subr.mxu0 %v3719
    %3767 = vmatpush1.msra.mxu0 %v3718
    %3768 = vmatprep.subr.mxu0 %v3722
    %3769 = vmatpush1.msra.mxu0 %v3721
    %3770 = vmatprep.subr.mxu0 %v3725
    %3771 = vmatpush1.msra.mxu0 %v3724
    %3772 = vmatprep.subr.mxu0 %v3728
    %3773 = vmatpush1.msra.mxu0 %v3727
    %3774 = vmatprep.subr.mxu0 %v3731
    %3775 = vmatpush1.msra.mxu0 %v3730
    %3776 = vmatprep.subr.mxu0 %v3734
    %3777 = vmatpush1.msra.mxu0 %v3733
    %3778 = vmatprep.subr.mxu0 %v3737
    %3779 = vmatpush1.msra.mxu0 %v3736
    %3780 = vmatprep.subr.mxu0 %v3740
    %3781 = vmatpush1.msra.mxu0 %v3739
    %3782 = vmatprep.subr.mxu0 %v3743
    %3783 = vmatpush1.msra.mxu0 %v3742
    %3784 = vmatprep.subr.mxu0 %v3746
    %3785 = vmatpush1.msra.mxu0 %v3745
    %3786 = vmatprep.subr.mxu0 %v3749
    %3787 = vmatpush1.msra.mxu0 %v3748
    %3788 = vmatprep.subr.mxu0 %v3752
    %3789 = vmatpush1.msra.mxu0 %v3751
    %3790 = vmatprep.subr.mxu0 %v3755
    %3791 = vmatpush1.msra.mxu0 %v3754
    %3792 = vmatprep.subr.mxu0 %v3758
    %3793 = vmatpush1.msra.mxu0 %v3757
    %3794 = vmatprep.subr.mxu0 %v3761
    %3795 = vmatpush1.msra.mxu0 %v3760
    %3796 = vmatprep.subr.mxu0 %v3764
    %3797 = vmatpush1.msra.mxu0 %v3763
    %3798 = vmatprep.subr.mxu0 0.0
    %3799 = vmatpush1.msra.mxu0 0.0
    %3800 = vmatprep.subr.mxu0 0.0
    %3801 = vmatpush1.msra.mxu0 0.0
    %3802 = vmatprep.subr.mxu0 0.0
    %3803 = vmatpush1.msra.mxu0 0.0
    %3804 = vmatprep.subr.mxu0 0.0
    %3805 = vmatpush1.msra.mxu0 0.0
    %3806 = vmatprep.subr.mxu0 0.0
    %3807 = vmatpush1.msra.mxu0 0.0
    %3808 = vmatprep.subr.mxu0 0.0
    %3809 = vmatpush1.msra.mxu0 0.0
    %3810 = vmatprep.subr.mxu0 0.0
    %3811 = vmatpush1.msra.mxu0 0.0
    %3812 = vmatprep.subr.mxu0 0.0
    %3813 = vmatpush1.msra.mxu0 0.0
    %3814 = vmatprep.subr.mxu0 0.0
    %3815 = vmatpush1.msra.mxu0 0.0
    %3816 = vmatprep.subr.mxu0 0.0
    %3817 = vmatpush1.msra.mxu0 0.0
    %3818 = vmatprep.subr.mxu0 0.0
    %3819 = vmatpush1.msra.mxu0 0.0
    %3820 = vmatprep.subr.mxu0 0.0
    %3821 = vmatpush1.msra.mxu0 0.0
    %3822 = vmatprep.subr.mxu0 0.0
    %3823 = vmatpush1.msra.mxu0 0.0
    %3824 = vmatprep.subr.mxu0 0.0
    %3825 = vmatpush1.msra.mxu0 0.0
    %3826 = vmatprep.subr.mxu0 0.0
    %3827 = vmatpush1.msra.mxu0 0.0
    %3828 = vmatprep.subr.mxu0 0.0
    %3829 = vmatpush1.msra.mxu0 0.0
    %3830 = vmatprep.mubr.f32.mxu0 0.0
    %3831 = vmatmul.mubr.f32.gmra.mrb[0].mxu0 %v3717
    %v3832 = vpop.f32.mrb[0].mxu0
    %v3833 = vadd.f32 %v579, %v3832
    %v3834 = vpop.f32.mrb[0].mxu0
    %v3835 = vadd.f32 %v583, %v3834
    %3836 = vdwg.mxu0
    %3837 = vmatprep.subr.mxu0 0.0
    %3838 = vmatpush1.msra.mxu0 %v3720
    %3839 = vmatprep.subr.mxu0 0.0
    %3840 = vmatpush1.msra.mxu0 %v3723
    %3841 = vmatprep.subr.mxu0 0.0
    %3842 = vmatpush1.msra.mxu0 %v3726
    %3843 = vmatprep.subr.mxu0 0.0
    %3844 = vmatpush1.msra.mxu0 %v3729
    %3845 = vmatprep.subr.mxu0 0.0
    %3846 = vmatpush1.msra.mxu0 %v3732
    %3847 = vmatprep.subr.mxu0 0.0
    %3848 = vmatpush1.msra.mxu0 %v3735
    %3849 = vmatprep.subr.mxu0 0.0
    %3850 = vmatpush1.msra.mxu0 %v3738
    %3851 = vmatprep.subr.mxu0 0.0
    %3852 = vmatpush1.msra.mxu0 %v3741
    %3853 = vmatprep.subr.mxu0 0.0
    %3854 = vmatpush1.msra.mxu0 %v3744
    %3855 = vmatprep.subr.mxu0 0.0
    %3856 = vmatpush1.msra.mxu0 %v3747
    %3857 = vmatprep.subr.mxu0 0.0
    %3858 = vmatpush1.msra.mxu0 %v3750
    %3859 = vmatprep.subr.mxu0 0.0
    %3860 = vmatpush1.msra.mxu0 %v3753
    %3861 = vmatprep.subr.mxu0 0.0
    %3862 = vmatpush1.msra.mxu0 %v3756
    %3863 = vmatprep.subr.mxu0 0.0
    %3864 = vmatpush1.msra.mxu0 %v3759
    %3865 = vmatprep.subr.mxu0 0.0
    %3866 = vmatpush1.msra.mxu0 %v3762
    %3867 = vmatprep.subr.mxu0 0.0
    %3868 = vmatpush1.msra.mxu0 %v3765
    %3869 = vmatprep.subr.mxu0 0.0
    %3870 = vmatpush1.msra.mxu0 0.0
    %3871 = vmatprep.subr.mxu0 0.0
    %3872 = vmatpush1.msra.mxu0 0.0
    %3873 = vmatprep.subr.mxu0 0.0
    %3874 = vmatpush1.msra.mxu0 0.0
    %3875 = vmatprep.subr.mxu0 0.0
    %3876 = vmatpush1.msra.mxu0 0.0
    %3877 = vmatprep.subr.mxu0 0.0
    %3878 = vmatpush1.msra.mxu0 0.0
    %3879 = vmatprep.subr.mxu0 0.0
    %3880 = vmatpush1.msra.mxu0 0.0
    %3881 = vmatprep.subr.mxu0 0.0
    %3882 = vmatpush1.msra.mxu0 0.0
    %3883 = vmatprep.subr.mxu0 0.0
    %3884 = vmatpush1.msra.mxu0 0.0
    %3885 = vmatprep.subr.mxu0 0.0
    %3886 = vmatpush1.msra.mxu0 0.0
    %3887 = vmatprep.subr.mxu0 0.0
    %3888 = vmatpush1.msra.mxu0 0.0
    %3889 = vmatprep.subr.mxu0 0.0
    %3890 = vmatpush1.msra.mxu0 0.0
    %3891 = vmatprep.subr.mxu0 0.0
    %3892 = vmatpush1.msra.mxu0 0.0
    %3893 = vmatprep.subr.mxu0 0.0
    %3894 = vmatpush1.msra.mxu0 0.0
    %3895 = vmatprep.subr.mxu0 0.0
    %3896 = vmatpush1.msra.mxu0 0.0
    %3897 = vmatprep.subr.mxu0 0.0
    %3898 = vmatpush1.msra.mxu0 0.0
    %3899 = vmatprep.subr.mxu0 0.0
    %3900 = vmatpush1.msra.mxu0 0.0
    %3901 = vmatprep.mubr.f32.mxu0 0.0
    %3902 = vmatmul.mubr.f32.gmra.mrb[0].mxu0 %v3717
    %v3903 = vpop.f32.mrb[0].mxu0
    %v3904 = vadd.f32 %v587, %v3903
    %v3905 = vpop.f32.mrb[0].mxu0
    %3906 = vdwg.mxu0
    %v3907 = vadd.f32 %v3833, %v3616
    %v3908 = vxor.u32 %v3907, 2147483648
    %v3909 = vmul.f32 %v3908, 1.442695
    %v3910 = vpow.pop %v3909
    %v3911 = vadd.f32 %v3910, 1.0
    %v3912 = vrcp.pop %v3911
    %v3913 = vmul.f32 1.0, %v3912
    %v3914 = vadd.f32 %v3835, %v3618
    %v3915 = vxor.u32 %v3914, 2147483648
    %v3916 = vmul.f32 %v3915, 1.442695
    %v3917 = vpow.pop %v3916
    %v3918 = vadd.f32 %v3917, 1.0
    %v3919 = vrcp.pop %v3918
    %v3920 = vmul.f32 1.0, %v3919
    %v3921 = vmul.f32 %v3913, %v3687
    %v3922 = vadd.f32 %v3904, %v3921
    %v3923 = vtanh.pop %v3922
    %v3924 = vsub.f32 1.0, %v3920
    %v3925 = vmul.f32 %v3924, %v3923
    %v3926 = vmul.f32 %v3920, %v3136
    %v3927 = vadd.f32 %v3925, %v3926
    %v3928 = vld [vmem:[#allocation10] sm:$0xff]
    %v3929 = vld [vmem:[#allocation10 + $0x10] sm:$0xff]
    %v3930 = vld [vmem:[#allocation10 + $0x20] sm:$0xff]
    %v3931 = vld [vmem:[#allocation10 + $0x30] sm:$0xff]
    %v3932 = vld [vmem:[#allocation10 + $0x40] sm:$0xff]
    %v3933 = vld [vmem:[#allocation10 + $0x50] sm:$0xff]
    %v3934 = vld [vmem:[#allocation10 + $0x60] sm:$0xff]
    %v3935 = vld [vmem:[#allocation10 + $0x70] sm:$0xff]
    %v3936 = vld [vmem:[#allocation10 + $0x80] sm:$0xff]
    %v3937 = vld [vmem:[#allocation10 + $0x90] sm:$0xff]
    %v3938 = vld [vmem:[#allocation10 + $0xa0] sm:$0xff]
    %v3939 = vld [vmem:[#allocation10 + $0xb0] sm:$0xff]
    %v3940 = vld [vmem:[#allocation10 + $0xc0] sm:$0xff]
    %v3941 = vld [vmem:[#allocation10 + $0xd0] sm:$0xff]
    %v3942 = vld [vmem:[#allocation10 + $0xe0] sm:$0xff]
    %v3943 = vld [vmem:[#allocation10 + $0xf0] sm:$0xff]
    %3944 = vmatprep.subr.mxu0 0.0
    %3945 = vmatpush1.msra.mxu0 %v3928
    %3946 = vmatprep.subr.mxu0 0.0
    %3947 = vmatpush1.msra.mxu0 %v3929
    %3948 = vmatprep.subr.mxu0 0.0
    %3949 = vmatpush1.msra.mxu0 %v3930
    %3950 = vmatprep.subr.mxu0 0.0
    %3951 = vmatpush1.msra.mxu0 %v3931
    %3952 = vmatprep.subr.mxu0 0.0
    %3953 = vmatpush1.msra.mxu0 %v3932
    %3954 = vmatprep.subr.mxu0 0.0
    %3955 = vmatpush1.msra.mxu0 %v3933
    %3956 = vmatprep.subr.mxu0 0.0
    %3957 = vmatpush1.msra.mxu0 %v3934
    %3958 = vmatprep.subr.mxu0 0.0
    %3959 = vmatpush1.msra.mxu0 %v3935
    %3960 = vmatprep.subr.mxu0 0.0
    %3961 = vmatpush1.msra.mxu0 %v3936
    %3962 = vmatprep.subr.mxu0 0.0
    %3963 = vmatpush1.msra.mxu0 %v3937
    %3964 = vmatprep.subr.mxu0 0.0
    %3965 = vmatpush1.msra.mxu0 %v3938
    %3966 = vmatprep.subr.mxu0 0.0
    %3967 = vmatpush1.msra.mxu0 %v3939
    %3968 = vmatprep.subr.mxu0 0.0
    %3969 = vmatpush1.msra.mxu0 %v3940
    %3970 = vmatprep.subr.mxu0 0.0
    %3971 = vmatpush1.msra.mxu0 %v3941
    %3972 = vmatprep.subr.mxu0 0.0
    %3973 = vmatpush1.msra.mxu0 %v3942
    %3974 = vmatprep.subr.mxu0 0.0
    %3975 = vmatpush1.msra.mxu0 %v3943
    %3976 = vmatprep.subr.mxu0 0.0
    %3977 = vmatpush1.msra.mxu0 0.0
    %3978 = vmatprep.subr.mxu0 0.0
    %3979 = vmatpush1.msra.mxu0 0.0
    %3980 = vmatprep.subr.mxu0 0.0
    %3981 = vmatpush1.msra.mxu0 0.0
    %3982 = vmatprep.subr.mxu0 0.0
    %3983 = vmatpush1.msra.mxu0 0.0
    %3984 = vmatprep.subr.mxu0 0.0
    %3985 = vmatpush1.msra.mxu0 0.0
    %3986 = vmatprep.subr.mxu0 0.0
    %3987 = vmatpush1.msra.mxu0 0.0
    %3988 = vmatprep.subr.mxu0 0.0
    %3989 = vmatpush1.msra.mxu0 0.0
    %3990 = vmatprep.subr.mxu0 0.0
    %3991 = vmatpush1.msra.mxu0 0.0
    %3992 = vmatprep.subr.mxu0 0.0
    %3993 = vmatpush1.msra.mxu0 0.0
    %3994 = vmatprep.subr.mxu0 0.0
    %3995 = vmatpush1.msra.mxu0 0.0
    %3996 = vmatprep.subr.mxu0 0.0
    %3997 = vmatpush1.msra.mxu0 0.0
    %3998 = vmatprep.subr.mxu0 0.0
    %3999 = vmatpush1.msra.mxu0 0.0
    %4000 = vmatprep.subr.mxu0 0.0
    %4001 = vmatpush1.msra.mxu0 0.0
    %4002 = vmatprep.subr.mxu0 0.0
    %4003 = vmatpush1.msra.mxu0 0.0
    %4004 = vmatprep.subr.mxu0 0.0
    %4005 = vmatpush1.msra.mxu0 0.0
    %4006 = vmatprep.subr.mxu0 0.0
    %4007 = vmatpush1.msra.mxu0 0.0
    %4008 = vmatprep.mubr.f32.mxu0 0.0
    %4009 = vmatmul.mubr.f32.gmra.mrb[0].mxu0 %v3927
    %v4010 = vpop.f32.mrb[0].mxu0
    %v4011 = vadd.f32 %v773, %v4010
    %v4012 = vpop.f32.mrb[0].mxu0
    %4013 = vdwg.mxu0
    %v4014 = vmax.f32 %v4011, 0.0
    %v4015 = vld [vmem:[#allocation10 + $0x8] sm:$0xff]
    %v4016 = vld [vmem:[#allocation10 + $0x18] sm:$0xff]
    %v4017 = vld [vmem:[#allocation10 + $0x28] sm:$0xff]
    %v4018 = vld [vmem:[#allocation10 + $0x38] sm:$0xff]
    %v4019 = vld [vmem:[#allocation10 + $0x48] sm:$0xff]
    %v4020 = vld [vmem:[#allocation10 + $0x58] sm:$0xff]
    %v4021 = vld [vmem:[#allocation10 + $0x68] sm:$0xff]
    %v4022 = vld [vmem:[#allocation10 + $0x78] sm:$0xff]
    %v4023 = vld [vmem:[#allocation10 + $0x88] sm:$0xff]
    %v4024 = vld [vmem:[#allocation10 + $0x98] sm:$0xff]
    %v4025 = vld [vmem:[#allocation10 + $0xa8] sm:$0xff]
    %v4026 = vld [vmem:[#allocation10 + $0xb8] sm:$0xff]
    %v4027 = vld [vmem:[#allocation10 + $0xc8] sm:$0xff]
    %v4028 = vld [vmem:[#allocation10 + $0xd8] sm:$0xff]
    %v4029 = vld [vmem:[#allocation10 + $0xe8] sm:$0xff]
    %v4030 = vld [vmem:[#allocation10 + $0xf8] sm:$0xff]
    %4031 = vmatprep.subr.mxu0 0.0
    %4032 = vmatpush1.msra.mxu0 %v4015
    %4033 = vmatprep.subr.mxu0 0.0
    %4034 = vmatpush1.msra.mxu0 %v4016
    %4035 = vmatprep.subr.mxu0 0.0
    %4036 = vmatpush1.msra.mxu0 %v4017
    %4037 = vmatprep.subr.mxu0 0.0
    %4038 = vmatpush1.msra.mxu0 %v4018
    %4039 = vmatprep.subr.mxu0 0.0
    %4040 = vmatpush1.msra.mxu0 %v4019
    %4041 = vmatprep.subr.mxu0 0.0
    %4042 = vmatpush1.msra.mxu0 %v4020
    %4043 = vmatprep.subr.mxu0 0.0
    %4044 = vmatpush1.msra.mxu0 %v4021
    %4045 = vmatprep.subr.mxu0 0.0
    %4046 = vmatpush1.msra.mxu0 %v4022
    %4047 = vmatprep.subr.mxu0 0.0
    %4048 = vmatpush1.msra.mxu0 %v4023
    %4049 = vmatprep.subr.mxu0 0.0
    %4050 = vmatpush1.msra.mxu0 %v4024
    %4051 = vmatprep.subr.mxu0 0.0
    %4052 = vmatpush1.msra.mxu0 %v4025
    %4053 = vmatprep.subr.mxu0 0.0
    %4054 = vmatpush1.msra.mxu0 %v4026
    %4055 = vmatprep.subr.mxu0 0.0
    %4056 = vmatpush1.msra.mxu0 %v4027
    %4057 = vmatprep.subr.mxu0 0.0
    %4058 = vmatpush1.msra.mxu0 %v4028
    %4059 = vmatprep.subr.mxu0 0.0
    %4060 = vmatpush1.msra.mxu0 %v4029
    %4061 = vmatprep.subr.mxu0 0.0
    %4062 = vmatpush1.msra.mxu0 %v4030
    %4063 = vmatprep.subr.mxu0 0.0
    %4064 = vmatpush1.msra.mxu0 0.0
    %4065 = vmatprep.subr.mxu0 0.0
    %4066 = vmatpush1.msra.mxu0 0.0
    %4067 = vmatprep.subr.mxu0 0.0
    %4068 = vmatpush1.msra.mxu0 0.0
    %4069 = vmatprep.subr.mxu0 0.0
    %4070 = vmatpush1.msra.mxu0 0.0
    %4071 = vmatprep.subr.mxu0 0.0
    %4072 = vmatpush1.msra.mxu0 0.0
    %4073 = vmatprep.subr.mxu0 0.0
    %4074 = vmatpush1.msra.mxu0 0.0
    %4075 = vmatprep.subr.mxu0 0.0
    %4076 = vmatpush1.msra.mxu0 0.0
    %4077 = vmatprep.subr.mxu0 0.0
    %4078 = vmatpush1.msra.mxu0 0.0
    %4079 = vmatprep.subr.mxu0 0.0
    %4080 = vmatpush1.msra.mxu0 0.0
    %4081 = vmatprep.subr.mxu0 0.0
    %4082 = vmatpush1.msra.mxu0 0.0
    %4083 = vmatprep.subr.mxu0 0.0
    %4084 = vmatpush1.msra.mxu0 0.0
    %4085 = vmatprep.subr.mxu0 0.0
    %4086 = vmatpush1.msra.mxu0 0.0
    %4087 = vmatprep.subr.mxu0 0.0
    %4088 = vmatpush1.msra.mxu0 0.0
    %4089 = vmatprep.subr.mxu0 0.0
    %4090 = vmatpush1.msra.mxu0 0.0
    %4091 = vmatprep.subr.mxu0 0.0
    %4092 = vmatpush1.msra.mxu0 0.0
    %4093 = vmatprep.subr.mxu0 0.0
    %4094 = vmatpush1.msra.mxu0 0.0
    %4095 = vmatprep.mubr.f32.mxu0 0.0
    %4096 = vmatmul.mubr.f32.gmra.mrb[0].mxu0 %v4014
    %v4097 = vpop.f32.mrb[0].mxu0
    %v4098 = vadd.f32 %v866, %v4097
    %v4099 = vpop.f32.mrb[0].mxu0
    %4100 = vdwg.mxu0
    %s4101 = scalar_lea.vmem [#allocation12], 8
    %4102 = vst [vmem:[%s4101] sm:$0x3] %v4098
    %v4103 = vld [vmem:[#allocation7] sm:$0xff]
    %v4104 = vld [vmem:[#allocation7 + $0x8] sm:$0xff]
    %v4105 = vld [vmem:[#allocation7 + $0x10] sm:$0xff]
    %v4106 = vld [vmem:[#allocation7 + $0x48] sm:$0xff]
    %v4107 = vld [vmem:[#allocation7 + $0x50] sm:$0xff]
    %v4108 = vld [vmem:[#allocation7 + $0x58] sm:$0xff]
    %v4109 = vld [vmem:[#allocation7 + $0x90] sm:$0xff]
    %v4110 = vld [vmem:[#allocation7 + $0x98] sm:$0xff]
    %v4111 = vld [vmem:[#allocation7 + $0xa0] sm:$0xff]
    %v4112 = vld [vmem:[#allocation7 + $0xd8] sm:$0xff]
    %v4113 = vld [vmem:[#allocation7 + $0xe0] sm:$0xff]
    %v4114 = vld [vmem:[#allocation7 + $0xe8] sm:$0xff]
    %v4115 = vld [vmem:[#allocation7 + $0x120] sm:$0xff]
    %v4116 = vld [vmem:[#allocation7 + $0x128] sm:$0xff]
    %v4117 = vld [vmem:[#allocation7 + $0x130] sm:$0xff]
    %v4118 = vld [vmem:[#allocation7 + $0x168] sm:$0xff]
    %v4119 = vld [vmem:[#allocation7 + $0x170] sm:$0xff]
    %v4120 = vld [vmem:[#allocation7 + $0x178] sm:$0xff]
    %v4121 = vld [vmem:[#allocation7 + $0x1b0] sm:$0xff]
    %v4122 = vld [vmem:[#allocation7 + $0x1b8] sm:$0xff]
    %v4123 = vld [vmem:[#allocation7 + $0x1c0] sm:$0xff]
    %v4124 = vld [vmem:[#allocation7 + $0x1f8] sm:$0xff]
    %v4125 = vld [vmem:[#allocation7 + $0x200] sm:$0xff]
    %v4126 = vld [vmem:[#allocation7 + $0x208] sm:$0xff]
    %v4127 = vld [vmem:[#allocation7 + $0x240] sm:$0xff]
    %v4128 = vld [vmem:[#allocation7 + $0x248] sm:$0xff]
    %v4129 = vld [vmem:[#allocation7 + $0x250] sm:$0xff]
    %v4130 = vld [vmem:[#allocation7 + $0x288] sm:$0xff]
    %v4131 = vld [vmem:[#allocation7 + $0x290] sm:$0xff]
    %v4132 = vld [vmem:[#allocation7 + $0x298] sm:$0xff]
    %v4133 = vld [vmem:[#allocation7 + $0x2d0] sm:$0xff]
    %v4134 = vld [vmem:[#allocation7 + $0x2d8] sm:$0xff]
    %v4135 = vld [vmem:[#allocation7 + $0x2e0] sm:$0xff]
    %v4136 = vld [vmem:[#allocation7 + $0x318] sm:$0xff]
    %v4137 = vld [vmem:[#allocation7 + $0x320] sm:$0xff]
    %v4138 = vld [vmem:[#allocation7 + $0x328] sm:$0xff]
    %v4139 = vld [vmem:[#allocation7 + $0x360] sm:$0xff]
    %v4140 = vld [vmem:[#allocation7 + $0x368] sm:$0xff]
    %v4141 = vld [vmem:[#allocation7 + $0x370] sm:$0xff]
    %v4142 = vld [vmem:[#allocation7 + $0x3a8] sm:$0xff]
    %v4143 = vld [vmem:[#allocation7 + $0x3b0] sm:$0xff]
    %v4144 = vld [vmem:[#allocation7 + $0x3b8] sm:$0xff]
    %v4145 = vld [vmem:[#allocation7 + $0x3f0] sm:$0xff]
    %v4146 = vld [vmem:[#allocation7 + $0x3f8] sm:$0xff]
    %v4147 = vld [vmem:[#allocation7 + $0x400] sm:$0xff]
    %v4148 = vld [vmem:[#allocation7 + $0x438] sm:$0xff]
    %v4149 = vld [vmem:[#allocation7 + $0x440] sm:$0xff]
    %v4150 = vld [vmem:[#allocation7 + $0x448] sm:$0xff]
    %4151 = vmatprep.subr.mxu0 %v4104
    %4152 = vmatpush1.msra.mxu0 %v4103
    %4153 = vmatprep.subr.mxu0 %v4107
    %4154 = vmatpush1.msra.mxu0 %v4106
    %4155 = vmatprep.subr.mxu0 %v4110
    %4156 = vmatpush1.msra.mxu0 %v4109
    %4157 = vmatprep.subr.mxu0 %v4113
    %4158 = vmatpush1.msra.mxu0 %v4112
    %4159 = vmatprep.subr.mxu0 %v4116
    %4160 = vmatpush1.msra.mxu0 %v4115
    %4161 = vmatprep.subr.mxu0 %v4119
    %4162 = vmatpush1.msra.mxu0 %v4118
    %4163 = vmatprep.subr.mxu0 %v4122
    %4164 = vmatpush1.msra.mxu0 %v4121
    %4165 = vmatprep.subr.mxu0 %v4125
    %4166 = vmatpush1.msra.mxu0 %v4124
    %4167 = vmatprep.subr.mxu0 %v4128
    %4168 = vmatpush1.msra.mxu0 %v4127
    %4169 = vmatprep.subr.mxu0 %v4131
    %4170 = vmatpush1.msra.mxu0 %v4130
    %4171 = vmatprep.subr.mxu0 %v4134
    %4172 = vmatpush1.msra.mxu0 %v4133
    %4173 = vmatprep.subr.mxu0 %v4137
    %4174 = vmatpush1.msra.mxu0 %v4136
    %4175 = vmatprep.subr.mxu0 %v4140
    %4176 = vmatpush1.msra.mxu0 %v4139
    %4177 = vmatprep.subr.mxu0 %v4143
    %4178 = vmatpush1.msra.mxu0 %v4142
    %4179 = vmatprep.subr.mxu0 %v4146
    %4180 = vmatpush1.msra.mxu0 %v4145
    %4181 = vmatprep.subr.mxu0 %v4149
    %4182 = vmatpush1.msra.mxu0 %v4148
    %4183 = vmatprep.subr.mxu0 0.0
    %4184 = vmatpush1.msra.mxu0 0.0
    %4185 = vmatprep.subr.mxu0 0.0
    %4186 = vmatpush1.msra.mxu0 0.0
    %4187 = vmatprep.subr.mxu0 0.0
    %4188 = vmatpush1.msra.mxu0 0.0
    %4189 = vmatprep.subr.mxu0 0.0
    %4190 = vmatpush1.msra.mxu0 0.0
    %4191 = vmatprep.subr.mxu0 0.0
    %4192 = vmatpush1.msra.mxu0 0.0
    %4193 = vmatprep.subr.mxu0 0.0
    %4194 = vmatpush1.msra.mxu0 0.0
    %4195 = vmatprep.subr.mxu0 0.0
    %4196 = vmatpush1.msra.mxu0 0.0
    %4197 = vmatprep.subr.mxu0 0.0
    %4198 = vmatpush1.msra.mxu0 0.0
    %4199 = vmatprep.subr.mxu0 0.0
    %4200 = vmatpush1.msra.mxu0 0.0
    %4201 = vmatprep.subr.mxu0 0.0
    %4202 = vmatpush1.msra.mxu0 0.0
    %4203 = vmatprep.subr.mxu0 0.0
    %4204 = vmatpush1.msra.mxu0 0.0
    %4205 = vmatprep.subr.mxu0 0.0
    %4206 = vmatpush1.msra.mxu0 0.0
    %4207 = vmatprep.subr.mxu0 0.0
    %4208 = vmatpush1.msra.mxu0 0.0
    %4209 = vmatprep.subr.mxu0 0.0
    %4210 = vmatpush1.msra.mxu0 0.0
    %4211 = vmatprep.subr.mxu0 0.0
    %4212 = vmatpush1.msra.mxu0 0.0
    %4213 = vmatprep.subr.mxu0 0.0
    %4214 = vmatpush1.msra.mxu0 0.0
    %4215 = vmatprep.mubr.f32.mxu0 0.0
    %4216 = vmatmul.mubr.f32.gmra.mrb[0].mxu0 %v3717
    %v4217 = vpop.f32.mrb[0].mxu0
    %v4218 = vadd.f32 %v142, %v4217
    %v4219 = vpop.f32.mrb[0].mxu0
    %v4220 = vadd.f32 %v146, %v4219
    %4221 = vdwg.mxu0
    %4222 = vmatprep.subr.mxu0 0.0
    %4223 = vmatpush1.msra.mxu0 %v4105
    %4224 = vmatprep.subr.mxu0 0.0
    %4225 = vmatpush1.msra.mxu0 %v4108
    %4226 = vmatprep.subr.mxu0 0.0
    %4227 = vmatpush1.msra.mxu0 %v4111
    %4228 = vmatprep.subr.mxu0 0.0
    %4229 = vmatpush1.msra.mxu0 %v4114
    %4230 = vmatprep.subr.mxu0 0.0
    %4231 = vmatpush1.msra.mxu0 %v4117
    %4232 = vmatprep.subr.mxu0 0.0
    %4233 = vmatpush1.msra.mxu0 %v4120
    %4234 = vmatprep.subr.mxu0 0.0
    %4235 = vmatpush1.msra.mxu0 %v4123
    %4236 = vmatprep.subr.mxu0 0.0
    %4237 = vmatpush1.msra.mxu0 %v4126
    %4238 = vmatprep.subr.mxu0 0.0
    %4239 = vmatpush1.msra.mxu0 %v4129
    %4240 = vmatprep.subr.mxu0 0.0
    %4241 = vmatpush1.msra.mxu0 %v4132
    %4242 = vmatprep.subr.mxu0 0.0
    %4243 = vmatpush1.msra.mxu0 %v4135
    %4244 = vmatprep.subr.mxu0 0.0
    %4245 = vmatpush1.msra.mxu0 %v4138
    %4246 = vmatprep.subr.mxu0 0.0
    %4247 = vmatpush1.msra.mxu0 %v4141
    %4248 = vmatprep.subr.mxu0 0.0
    %4249 = vmatpush1.msra.mxu0 %v4144
    %4250 = vmatprep.subr.mxu0 0.0
    %4251 = vmatpush1.msra.mxu0 %v4147
    %4252 = vmatprep.subr.mxu0 0.0
    %4253 = vmatpush1.msra.mxu0 %v4150
    %4254 = vmatprep.subr.mxu0 0.0
    %4255 = vmatpush1.msra.mxu0 0.0
    %4256 = vmatprep.subr.mxu0 0.0
    %4257 = vmatpush1.msra.mxu0 0.0
    %4258 = vmatprep.subr.mxu0 0.0
    %4259 = vmatpush1.msra.mxu0 0.0
    %4260 = vmatprep.subr.mxu0 0.0
    %4261 = vmatpush1.msra.mxu0 0.0
    %4262 = vmatprep.subr.mxu0 0.0
    %4263 = vmatpush1.msra.mxu0 0.0
    %4264 = vmatprep.subr.mxu0 0.0
    %4265 = vmatpush1.msra.mxu0 0.0
    %4266 = vmatprep.subr.mxu0 0.0
    %4267 = vmatpush1.msra.mxu0 0.0
    %4268 = vmatprep.subr.mxu0 0.0
    %4269 = vmatpush1.msra.mxu0 0.0
    %4270 = vmatprep.subr.mxu0 0.0
    %4271 = vmatpush1.msra.mxu0 0.0
    %4272 = vmatprep.subr.mxu0 0.0
    %4273 = vmatpush1.msra.mxu0 0.0
    %4274 = vmatprep.subr.mxu0 0.0
    %4275 = vmatpush1.msra.mxu0 0.0
    %4276 = vmatprep.subr.mxu0 0.0
    %4277 = vmatpush1.msra.mxu0 0.0
    %4278 = vmatprep.subr.mxu0 0.0
    %4279 = vmatpush1.msra.mxu0 0.0
    %4280 = vmatprep.subr.mxu0 0.0
    %4281 = vmatpush1.msra.mxu0 0.0
    %4282 = vmatprep.subr.mxu0 0.0
    %4283 = vmatpush1.msra.mxu0 0.0
    %4284 = vmatprep.subr.mxu0 0.0
    %4285 = vmatpush1.msra.mxu0 0.0
    %4286 = vmatprep.mubr.f32.mxu0 0.0
    %4287 = vmatmul.mubr.f32.gmra.mrb[0].mxu0 %v3717
    %v4288 = vpop.f32.mrb[0].mxu0
    %v4289 = vadd.f32 %v150, %v4288
    %v4290 = vpop.f32.mrb[0].mxu0
    %4291 = vdwg.mxu0
    %v4292 = vld [vmem:[#allocation7 + $0x30] sm:$0xff]
    %v4293 = vld [vmem:[#allocation7 + $0x38] sm:$0xff]
    %v4294 = vld [vmem:[#allocation7 + $0x40] sm:$0xff]
    %v4295 = vld [vmem:[#allocation7 + $0x78] sm:$0xff]
    %v4296 = vld [vmem:[#allocation7 + $0x80] sm:$0xff]
    %v4297 = vld [vmem:[#allocation7 + $0x88] sm:$0xff]
    %v4298 = vld [vmem:[#allocation7 + $0xc0] sm:$0xff]
    %v4299 = vld [vmem:[#allocation7 + $0xc8] sm:$0xff]
    %v4300 = vld [vmem:[#allocation7 + $0xd0] sm:$0xff]
    %v4301 = vld [vmem:[#allocation7 + $0x108] sm:$0xff]
    %v4302 = vld [vmem:[#allocation7 + $0x110] sm:$0xff]
    %v4303 = vld [vmem:[#allocation7 + $0x118] sm:$0xff]
    %v4304 = vld [vmem:[#allocation7 + $0x150] sm:$0xff]
    %v4305 = vld [vmem:[#allocation7 + $0x158] sm:$0xff]
    %v4306 = vld [vmem:[#allocation7 + $0x160] sm:$0xff]
    %v4307 = vld [vmem:[#allocation7 + $0x198] sm:$0xff]
    %v4308 = vld [vmem:[#allocation7 + $0x1a0] sm:$0xff]
    %v4309 = vld [vmem:[#allocation7 + $0x1a8] sm:$0xff]
    %v4310 = vld [vmem:[#allocation7 + $0x1e0] sm:$0xff]
    %v4311 = vld [vmem:[#allocation7 + $0x1e8] sm:$0xff]
    %v4312 = vld [vmem:[#allocation7 + $0x1f0] sm:$0xff]
    %v4313 = vld [vmem:[#allocation7 + $0x228] sm:$0xff]
    %v4314 = vld [vmem:[#allocation7 + $0x230] sm:$0xff]
    %v4315 = vld [vmem:[#allocation7 + $0x238] sm:$0xff]
    %v4316 = vld [vmem:[#allocation7 + $0x270] sm:$0xff]
    %v4317 = vld [vmem:[#allocation7 + $0x278] sm:$0xff]
    %v4318 = vld [vmem:[#allocation7 + $0x280] sm:$0xff]
    %v4319 = vld [vmem:[#allocation7 + $0x2b8] sm:$0xff]
    %v4320 = vld [vmem:[#allocation7 + $0x2c0] sm:$0xff]
    %v4321 = vld [vmem:[#allocation7 + $0x2c8] sm:$0xff]
    %v4322 = vld [vmem:[#allocation7 + $0x300] sm:$0xff]
    %v4323 = vld [vmem:[#allocation7 + $0x308] sm:$0xff]
    %v4324 = vld [vmem:[#allocation7 + $0x310] sm:$0xff]
    %v4325 = vld [vmem:[#allocation7 + $0x348] sm:$0xff]
    %v4326 = vld [vmem:[#allocation7 + $0x350] sm:$0xff]
    %v4327 = vld [vmem:[#allocation7 + $0x358] sm:$0xff]
    %v4328 = vld [vmem:[#allocation7 + $0x390] sm:$0xff]
    %v4329 = vld [vmem:[#allocation7 + $0x398] sm:$0xff]
    %v4330 = vld [vmem:[#allocation7 + $0x3a0] sm:$0xff]
    %v4331 = vld [vmem:[#allocation7 + $0x3d8] sm:$0xff]
    %v4332 = vld [vmem:[#allocation7 + $0x3e0] sm:$0xff]
    %v4333 = vld [vmem:[#allocation7 + $0x3e8] sm:$0xff]
    %v4334 = vld [vmem:[#allocation7 + $0x420] sm:$0xff]
    %v4335 = vld [vmem:[#allocation7 + $0x428] sm:$0xff]
    %v4336 = vld [vmem:[#allocation7 + $0x430] sm:$0xff]
    %v4337 = vld [vmem:[#allocation7 + $0x468] sm:$0xff]
    %v4338 = vld [vmem:[#allocation7 + $0x470] sm:$0xff]
    %v4339 = vld [vmem:[#allocation7 + $0x478] sm:$0xff]
    %4340 = vmatprep.subr.mxu0 %v4293
    %4341 = vmatpush1.msra.mxu0 %v4292
    %4342 = vmatprep.subr.mxu0 %v4296
    %4343 = vmatpush1.msra.mxu0 %v4295
    %4344 = vmatprep.subr.mxu0 %v4299
    %4345 = vmatpush1.msra.mxu0 %v4298
    %4346 = vmatprep.subr.mxu0 %v4302
    %4347 = vmatpush1.msra.mxu0 %v4301
    %4348 = vmatprep.subr.mxu0 %v4305
    %4349 = vmatpush1.msra.mxu0 %v4304
    %4350 = vmatprep.subr.mxu0 %v4308
    %4351 = vmatpush1.msra.mxu0 %v4307
    %4352 = vmatprep.subr.mxu0 %v4311
    %4353 = vmatpush1.msra.mxu0 %v4310
    %4354 = vmatprep.subr.mxu0 %v4314
    %4355 = vmatpush1.msra.mxu0 %v4313
    %4356 = vmatprep.subr.mxu0 %v4317
    %4357 = vmatpush1.msra.mxu0 %v4316
    %4358 = vmatprep.subr.mxu0 %v4320
    %4359 = vmatpush1.msra.mxu0 %v4319
    %4360 = vmatprep.subr.mxu0 %v4323
    %4361 = vmatpush1.msra.mxu0 %v4322
    %4362 = vmatprep.subr.mxu0 %v4326
    %4363 = vmatpush1.msra.mxu0 %v4325
    %4364 = vmatprep.subr.mxu0 %v4329
    %4365 = vmatpush1.msra.mxu0 %v4328
    %4366 = vmatprep.subr.mxu0 %v4332
    %4367 = vmatpush1.msra.mxu0 %v4331
    %4368 = vmatprep.subr.mxu0 %v4335
    %4369 = vmatpush1.msra.mxu0 %v4334
    %4370 = vmatprep.subr.mxu0 %v4338
    %4371 = vmatpush1.msra.mxu0 %v4337
    %4372 = vmatprep.subr.mxu0 0.0
    %4373 = vmatpush1.msra.mxu0 0.0
    %4374 = vmatprep.subr.mxu0 0.0
    %4375 = vmatpush1.msra.mxu0 0.0
    %4376 = vmatprep.subr.mxu0 0.0
    %4377 = vmatpush1.msra.mxu0 0.0
    %4378 = vmatprep.subr.mxu0 0.0
    %4379 = vmatpush1.msra.mxu0 0.0
    %4380 = vmatprep.subr.mxu0 0.0
    %4381 = vmatpush1.msra.mxu0 0.0
    %4382 = vmatprep.subr.mxu0 0.0
    %4383 = vmatpush1.msra.mxu0 0.0
    %4384 = vmatprep.subr.mxu0 0.0
    %4385 = vmatpush1.msra.mxu0 0.0
    %4386 = vmatprep.subr.mxu0 0.0
    %4387 = vmatpush1.msra.mxu0 0.0
    %4388 = vmatprep.subr.mxu0 0.0
    %4389 = vmatpush1.msra.mxu0 0.0
    %4390 = vmatprep.subr.mxu0 0.0
    %4391 = vmatpush1.msra.mxu0 0.0
    %4392 = vmatprep.subr.mxu0 0.0
    %4393 = vmatpush1.msra.mxu0 0.0
    %4394 = vmatprep.subr.mxu0 0.0
    %4395 = vmatpush1.msra.mxu0 0.0
    %4396 = vmatprep.subr.mxu0 0.0
    %4397 = vmatpush1.msra.mxu0 0.0
    %4398 = vmatprep.subr.mxu0 0.0
    %4399 = vmatpush1.msra.mxu0 0.0
    %4400 = vmatprep.subr.mxu0 0.0
    %4401 = vmatpush1.msra.mxu0 0.0
    %4402 = vmatprep.subr.mxu0 0.0
    %4403 = vmatpush1.msra.mxu0 0.0
    %4404 = vmatprep.mubr.f32.mxu0 0.0
    %4405 = vmatmul.mubr.f32.gmra.mrb[0].mxu0 %v3927
    %v4406 = vpop.f32.mrb[0].mxu0
    %v4407 = vadd.f32 %v347, %v4406
    %v4408 = vpop.f32.mrb[0].mxu0
    %v4409 = vadd.f32 %v351, %v4408
    %4410 = vdwg.mxu0
    %4411 = vmatprep.subr.mxu0 0.0
    %4412 = vmatpush1.msra.mxu0 %v4294
    %4413 = vmatprep.subr.mxu0 0.0
    %4414 = vmatpush1.msra.mxu0 %v4297
    %4415 = vmatprep.subr.mxu0 0.0
    %4416 = vmatpush1.msra.mxu0 %v4300
    %4417 = vmatprep.subr.mxu0 0.0
    %4418 = vmatpush1.msra.mxu0 %v4303
    %4419 = vmatprep.subr.mxu0 0.0
    %4420 = vmatpush1.msra.mxu0 %v4306
    %4421 = vmatprep.subr.mxu0 0.0
    %4422 = vmatpush1.msra.mxu0 %v4309
    %4423 = vmatprep.subr.mxu0 0.0
    %4424 = vmatpush1.msra.mxu0 %v4312
    %4425 = vmatprep.subr.mxu0 0.0
    %4426 = vmatpush1.msra.mxu0 %v4315
    %4427 = vmatprep.subr.mxu0 0.0
    %4428 = vmatpush1.msra.mxu0 %v4318
    %4429 = vmatprep.subr.mxu0 0.0
    %4430 = vmatpush1.msra.mxu0 %v4321
    %4431 = vmatprep.subr.mxu0 0.0
    %4432 = vmatpush1.msra.mxu0 %v4324
    %4433 = vmatprep.subr.mxu0 0.0
    %4434 = vmatpush1.msra.mxu0 %v4327
    %4435 = vmatprep.subr.mxu0 0.0
    %4436 = vmatpush1.msra.mxu0 %v4330
    %4437 = vmatprep.subr.mxu0 0.0
    %4438 = vmatpush1.msra.mxu0 %v4333
    %4439 = vmatprep.subr.mxu0 0.0
    %4440 = vmatpush1.msra.mxu0 %v4336
    %4441 = vmatprep.subr.mxu0 0.0
    %4442 = vmatpush1.msra.mxu0 %v4339
    %4443 = vmatprep.subr.mxu0 0.0
    %4444 = vmatpush1.msra.mxu0 0.0
    %4445 = vmatprep.subr.mxu0 0.0
    %4446 = vmatpush1.msra.mxu0 0.0
    %4447 = vmatprep.subr.mxu0 0.0
    %4448 = vmatpush1.msra.mxu0 0.0
    %4449 = vmatprep.subr.mxu0 0.0
    %4450 = vmatpush1.msra.mxu0 0.0
    %4451 = vmatprep.subr.mxu0 0.0
    %4452 = vmatpush1.msra.mxu0 0.0
    %4453 = vmatprep.subr.mxu0 0.0
    %4454 = vmatpush1.msra.mxu0 0.0
    %4455 = vmatprep.subr.mxu0 0.0
    %4456 = vmatpush1.msra.mxu0 0.0
    %4457 = vmatprep.subr.mxu0 0.0
    %4458 = vmatpush1.msra.mxu0 0.0
    %4459 = vmatprep.subr.mxu0 0.0
    %4460 = vmatpush1.msra.mxu0 0.0
    %4461 = vmatprep.subr.mxu0 0.0
    %4462 = vmatpush1.msra.mxu0 0.0
    %4463 = vmatprep.subr.mxu0 0.0
    %4464 = vmatpush1.msra.mxu0 0.0
    %4465 = vmatprep.subr.mxu0 0.0
    %4466 = vmatpush1.msra.mxu0 0.0
    %4467 = vmatprep.subr.mxu0 0.0
    %4468 = vmatpush1.msra.mxu0 0.0
    %4469 = vmatprep.subr.mxu0 0.0
    %4470 = vmatpush1.msra.mxu0 0.0
    %4471 = vmatprep.subr.mxu0 0.0
    %4472 = vmatpush1.msra.mxu0 0.0
    %4473 = vmatprep.subr.mxu0 0.0
    %4474 = vmatpush1.msra.mxu0 0.0
    %4475 = vmatprep.mubr.f32.mxu0 0.0
    %4476 = vmatmul.mubr.f32.gmra.mrb[0].mxu0 %v3927
    %v4477 = vpop.f32.mrb[0].mxu0
    %v4478 = vadd.f32 %v355, %v4477
    %v4479 = vpop.f32.mrb[0].mxu0
    %4480 = vdwg.mxu0
    %s4481 = scalar_lea.vmem [#allocation4], 30
    %v4482 = vld [vmem:[%s4481] sm:$0x3f]
    %v4483 = vadd.f32 %v4482, %v4218
    %v4484 = vxor.u32 %v4483, 2147483648
    %v4485 = vmul.f32 %v4484, 1.442695
    %v4486 = vpow.pop %v4485
    %v4487 = vadd.f32 %v4486, 1.0
    %v4488 = vrcp.pop %v4487
    %v4489 = vmul.f32 1.0, %v4488
    %v4491 = vrot.slane %v4482, 2
    %v4493 = vadd.f32 %v4491, %v4220
    %v4494 = vxor.u32 %v4493, 2147483648
    %v4495 = vmul.f32 %v4494, 1.442695
    %v4496 = vpow.pop %v4495
    %v4497 = vadd.f32 %v4496, 1.0
    %v4498 = vrcp.pop %v4497
    %v4499 = vmul.f32 1.0, %v4498
    %v4500 = vmul.f32 %v4489, %v4289
    %v4501 = vrot.slane %v4482, 4
    %v4503 = vadd.f32 %v4501, %v4500
    %v4504 = vtanh.pop %v4503
    %v4505 = vsub.f32 1.0, %v4499
    %v4506 = vmul.f32 %v4505, %v4504
    %v4507 = vmul.f32 %v4499, %v3717
    %v4508 = vadd.f32 %v4506, %v4507
    %v4509 = vld [vmem:[#allocation7 + $0x18] sm:$0xff]
    %v4510 = vld [vmem:[#allocation7 + $0x20] sm:$0xff]
    %v4511 = vld [vmem:[#allocation7 + $0x28] sm:$0xff]
    %v4512 = vld [vmem:[#allocation7 + $0x60] sm:$0xff]
    %v4513 = vld [vmem:[#allocation7 + $0x68] sm:$0xff]
    %v4514 = vld [vmem:[#allocation7 + $0x70] sm:$0xff]
    %v4515 = vld [vmem:[#allocation7 + $0xa8] sm:$0xff]
    %v4516 = vld [vmem:[#allocation7 + $0xb0] sm:$0xff]
    %v4517 = vld [vmem:[#allocation7 + $0xb8] sm:$0xff]
    %v4518 = vld [vmem:[#allocation7 + $0xf0] sm:$0xff]
    %v4519 = vld [vmem:[#allocation7 + $0xf8] sm:$0xff]
    %v4520 = vld [vmem:[#allocation7 + $0x100] sm:$0xff]
    %v4521 = vld [vmem:[#allocation7 + $0x138] sm:$0xff]
    %v4522 = vld [vmem:[#allocation7 + $0x140] sm:$0xff]
    %v4523 = vld [vmem:[#allocation7 + $0x148] sm:$0xff]
    %v4524 = vld [vmem:[#allocation7 + $0x180] sm:$0xff]
    %v4525 = vld [vmem:[#allocation7 + $0x188] sm:$0xff]
    %v4526 = vld [vmem:[#allocation7 + $0x190] sm:$0xff]
    %v4527 = vld [vmem:[#allocation7 + $0x1c8] sm:$0xff]
    %v4528 = vld [vmem:[#allocation7 + $0x1d0] sm:$0xff]
    %v4529 = vld [vmem:[#allocation7 + $0x1d8] sm:$0xff]
    %v4530 = vld [vmem:[#allocation7 + $0x210] sm:$0xff]
    %v4531 = vld [vmem:[#allocation7 + $0x218] sm:$0xff]
    %v4532 = vld [vmem:[#allocation7 + $0x220] sm:$0xff]
    %v4533 = vld [vmem:[#allocation7 + $0x258] sm:$0xff]
    %v4534 = vld [vmem:[#allocation7 + $0x260] sm:$0xff]
    %v4535 = vld [vmem:[#allocation7 + $0x268] sm:$0xff]
    %v4536 = vld [vmem:[#allocation7 + $0x2a0] sm:$0xff]
    %v4537 = vld [vmem:[#allocation7 + $0x2a8] sm:$0xff]
    %v4538 = vld [vmem:[#allocation7 + $0x2b0] sm:$0xff]
    %v4539 = vld [vmem:[#allocation7 + $0x2e8] sm:$0xff]
    %v4540 = vld [vmem:[#allocation7 + $0x2f0] sm:$0xff]
    %v4541 = vld [vmem:[#allocation7 + $0x2f8] sm:$0xff]
    %v4542 = vld [vmem:[#allocation7 + $0x330] sm:$0xff]
    %v4543 = vld [vmem:[#allocation7 + $0x338] sm:$0xff]
    %v4544 = vld [vmem:[#allocation7 + $0x340] sm:$0xff]
    %v4545 = vld [vmem:[#allocation7 + $0x378] sm:$0xff]
    %v4546 = vld [vmem:[#allocation7 + $0x380] sm:$0xff]
    %v4547 = vld [vmem:[#allocation7 + $0x388] sm:$0xff]
    %v4548 = vld [vmem:[#allocation7 + $0x3c0] sm:$0xff]
    %v4549 = vld [vmem:[#allocation7 + $0x3c8] sm:$0xff]
    %v4550 = vld [vmem:[#allocation7 + $0x3d0] sm:$0xff]
    %v4551 = vld [vmem:[#allocation7 + $0x408] sm:$0xff]
    %v4552 = vld [vmem:[#allocation7 + $0x410] sm:$0xff]
    %v4553 = vld [vmem:[#allocation7 + $0x418] sm:$0xff]
    %v4554 = vld [vmem:[#allocation7 + $0x450] sm:$0xff]
    %v4555 = vld [vmem:[#allocation7 + $0x458] sm:$0xff]
    %v4556 = vld [vmem:[#allocation7 + $0x460] sm:$0xff]
    %4557 = vmatprep.subr.mxu0 %v4510
    %4558 = vmatpush1.msra.mxu0 %v4509
    %4559 = vmatprep.subr.mxu0 %v4513
    %4560 = vmatpush1.msra.mxu0 %v4512
    %4561 = vmatprep.subr.mxu0 %v4516
    %4562 = vmatpush1.msra.mxu0 %v4515
    %4563 = vmatprep.subr.mxu0 %v4519
    %4564 = vmatpush1.msra.mxu0 %v4518
    %4565 = vmatprep.subr.mxu0 %v4522
    %4566 = vmatpush1.msra.mxu0 %v4521
    %4567 = vmatprep.subr.mxu0 %v4525
    %4568 = vmatpush1.msra.mxu0 %v4524
    %4569 = vmatprep.subr.mxu0 %v4528
    %4570 = vmatpush1.msra.mxu0 %v4527
    %4571 = vmatprep.subr.mxu0 %v4531
    %4572 = vmatpush1.msra.mxu0 %v4530
    %4573 = vmatprep.subr.mxu0 %v4534
    %4574 = vmatpush1.msra.mxu0 %v4533
    %4575 = vmatprep.subr.mxu0 %v4537
    %4576 = vmatpush1.msra.mxu0 %v4536
    %4577 = vmatprep.subr.mxu0 %v4540
    %4578 = vmatpush1.msra.mxu0 %v4539
    %4579 = vmatprep.subr.mxu0 %v4543
    %4580 = vmatpush1.msra.mxu0 %v4542
    %4581 = vmatprep.subr.mxu0 %v4546
    %4582 = vmatpush1.msra.mxu0 %v4545
    %4583 = vmatprep.subr.mxu0 %v4549
    %4584 = vmatpush1.msra.mxu0 %v4548
    %4585 = vmatprep.subr.mxu0 %v4552
    %4586 = vmatpush1.msra.mxu0 %v4551
    %4587 = vmatprep.subr.mxu0 %v4555
    %4588 = vmatpush1.msra.mxu0 %v4554
    %4589 = vmatprep.subr.mxu0 0.0
    %4590 = vmatpush1.msra.mxu0 0.0
    %4591 = vmatprep.subr.mxu0 0.0
    %4592 = vmatpush1.msra.mxu0 0.0
    %4593 = vmatprep.subr.mxu0 0.0
    %4594 = vmatpush1.msra.mxu0 0.0
    %4595 = vmatprep.subr.mxu0 0.0
    %4596 = vmatpush1.msra.mxu0 0.0
    %4597 = vmatprep.subr.mxu0 0.0
    %4598 = vmatpush1.msra.mxu0 0.0
    %4599 = vmatprep.subr.mxu0 0.0
    %4600 = vmatpush1.msra.mxu0 0.0
    %4601 = vmatprep.subr.mxu0 0.0
    %4602 = vmatpush1.msra.mxu0 0.0
    %4603 = vmatprep.subr.mxu0 0.0
    %4604 = vmatpush1.msra.mxu0 0.0
    %4605 = vmatprep.subr.mxu0 0.0
    %4606 = vmatpush1.msra.mxu0 0.0
    %4607 = vmatprep.subr.mxu0 0.0
    %4608 = vmatpush1.msra.mxu0 0.0
    %4609 = vmatprep.subr.mxu0 0.0
    %4610 = vmatpush1.msra.mxu0 0.0
    %4611 = vmatprep.subr.mxu0 0.0
    %4612 = vmatpush1.msra.mxu0 0.0
    %4613 = vmatprep.subr.mxu0 0.0
    %4614 = vmatpush1.msra.mxu0 0.0
    %4615 = vmatprep.subr.mxu0 0.0
    %4616 = vmatpush1.msra.mxu0 0.0
    %4617 = vmatprep.subr.mxu0 0.0
    %4618 = vmatpush1.msra.mxu0 0.0
    %4619 = vmatprep.subr.mxu0 0.0
    %4620 = vmatpush1.msra.mxu0 0.0
    %4621 = vmatprep.mubr.f32.mxu0 0.0
    %4622 = vmatmul.mubr.f32.gmra.mrb[0].mxu0 %v4508
    %v4623 = vpop.f32.mrb[0].mxu0
    %v4624 = vadd.f32 %v579, %v4623
    %v4625 = vpop.f32.mrb[0].mxu0
    %v4626 = vadd.f32 %v583, %v4625
    %4627 = vdwg.mxu0
    %4628 = vmatprep.subr.mxu0 0.0
    %4629 = vmatpush1.msra.mxu0 %v4511
    %4630 = vmatprep.subr.mxu0 0.0
    %4631 = vmatpush1.msra.mxu0 %v4514
    %4632 = vmatprep.subr.mxu0 0.0
    %4633 = vmatpush1.msra.mxu0 %v4517
    %4634 = vmatprep.subr.mxu0 0.0
    %4635 = vmatpush1.msra.mxu0 %v4520
    %4636 = vmatprep.subr.mxu0 0.0
    %4637 = vmatpush1.msra.mxu0 %v4523
    %4638 = vmatprep.subr.mxu0 0.0
    %4639 = vmatpush1.msra.mxu0 %v4526
    %4640 = vmatprep.subr.mxu0 0.0
    %4641 = vmatpush1.msra.mxu0 %v4529
    %4642 = vmatprep.subr.mxu0 0.0
    %4643 = vmatpush1.msra.mxu0 %v4532
    %4644 = vmatprep.subr.mxu0 0.0
    %4645 = vmatpush1.msra.mxu0 %v4535
    %4646 = vmatprep.subr.mxu0 0.0
    %4647 = vmatpush1.msra.mxu0 %v4538
    %4648 = vmatprep.subr.mxu0 0.0
    %4649 = vmatpush1.msra.mxu0 %v4541
    %4650 = vmatprep.subr.mxu0 0.0
    %4651 = vmatpush1.msra.mxu0 %v4544
    %4652 = vmatprep.subr.mxu0 0.0
    %4653 = vmatpush1.msra.mxu0 %v4547
    %4654 = vmatprep.subr.mxu0 0.0
    %4655 = vmatpush1.msra.mxu0 %v4550
    %4656 = vmatprep.subr.mxu0 0.0
    %4657 = vmatpush1.msra.mxu0 %v4553
    %4658 = vmatprep.subr.mxu0 0.0
    %4659 = vmatpush1.msra.mxu0 %v4556
    %4660 = vmatprep.subr.mxu0 0.0
    %4661 = vmatpush1.msra.mxu0 0.0
    %4662 = vmatprep.subr.mxu0 0.0
    %4663 = vmatpush1.msra.mxu0 0.0
    %4664 = vmatprep.subr.mxu0 0.0
    %4665 = vmatpush1.msra.mxu0 0.0
    %4666 = vmatprep.subr.mxu0 0.0
    %4667 = vmatpush1.msra.mxu0 0.0
    %4668 = vmatprep.subr.mxu0 0.0
    %4669 = vmatpush1.msra.mxu0 0.0
    %4670 = vmatprep.subr.mxu0 0.0
    %4671 = vmatpush1.msra.mxu0 0.0
    %4672 = vmatprep.subr.mxu0 0.0
    %4673 = vmatpush1.msra.mxu0 0.0
    %4674 = vmatprep.subr.mxu0 0.0
    %4675 = vmatpush1.msra.mxu0 0.0
    %4676 = vmatprep.subr.mxu0 0.0
    %4677 = vmatpush1.msra.mxu0 0.0
    %4678 = vmatprep.subr.mxu0 0.0
    %4679 = vmatpush1.msra.mxu0 0.0
    %4680 = vmatprep.subr.mxu0 0.0
    %4681 = vmatpush1.msra.mxu0 0.0
    %4682 = vmatprep.subr.mxu0 0.0
    %4683 = vmatpush1.msra.mxu0 0.0
    %4684 = vmatprep.subr.mxu0 0.0
    %4685 = vmatpush1.msra.mxu0 0.0
    %4686 = vmatprep.subr.mxu0 0.0
    %4687 = vmatpush1.msra.mxu0 0.0
    %4688 = vmatprep.subr.mxu0 0.0
    %4689 = vmatpush1.msra.mxu0 0.0
    %4690 = vmatprep.subr.mxu0 0.0
    %4691 = vmatpush1.msra.mxu0 0.0
    %4692 = vmatprep.mubr.f32.mxu0 0.0
    %4693 = vmatmul.mubr.f32.gmra.mrb[0].mxu0 %v4508
    %v4694 = vpop.f32.mrb[0].mxu0
    %v4695 = vadd.f32 %v587, %v4694
    %v4696 = vpop.f32.mrb[0].mxu0
    %4697 = vdwg.mxu0
    %v4698 = vadd.f32 %v4624, %v4407
    %v4699 = vxor.u32 %v4698, 2147483648
    %v4700 = vmul.f32 %v4699, 1.442695
    %v4701 = vpow.pop %v4700
    %v4702 = vadd.f32 %v4701, 1.0
    %v4703 = vrcp.pop %v4702
    %v4704 = vmul.f32 1.0, %v4703
    %v4705 = vadd.f32 %v4626, %v4409
    %v4706 = vxor.u32 %v4705, 2147483648
    %v4707 = vmul.f32 %v4706, 1.442695
    %v4708 = vpow.pop %v4707
    %v4709 = vadd.f32 %v4708, 1.0
    %v4710 = vrcp.pop %v4709
    %v4711 = vmul.f32 1.0, %v4710
    %v4712 = vmul.f32 %v4704, %v4478
    %v4713 = vadd.f32 %v4695, %v4712
    %v4714 = vtanh.pop %v4713
    %v4715 = vsub.f32 1.0, %v4711
    %v4716 = vmul.f32 %v4715, %v4714
    %v4717 = vmul.f32 %v4711, %v3927
    %v4718 = vadd.f32 %v4716, %v4717
    %v4719 = vld [vmem:[#allocation10] sm:$0xff]
    %v4720 = vld [vmem:[#allocation10 + $0x10] sm:$0xff]
    %v4721 = vld [vmem:[#allocation10 + $0x20] sm:$0xff]
    %v4722 = vld [vmem:[#allocation10 + $0x30] sm:$0xff]
    %v4723 = vld [vmem:[#allocation10 + $0x40] sm:$0xff]
    %v4724 = vld [vmem:[#allocation10 + $0x50] sm:$0xff]
    %v4725 = vld [vmem:[#allocation10 + $0x60] sm:$0xff]
    %v4726 = vld [vmem:[#allocation10 + $0x70] sm:$0xff]
    %v4727 = vld [vmem:[#allocation10 + $0x80] sm:$0xff]
    %v4728 = vld [vmem:[#allocation10 + $0x90] sm:$0xff]
    %v4729 = vld [vmem:[#allocation10 + $0xa0] sm:$0xff]
    %v4730 = vld [vmem:[#allocation10 + $0xb0] sm:$0xff]
    %v4731 = vld [vmem:[#allocation10 + $0xc0] sm:$0xff]
    %v4732 = vld [vmem:[#allocation10 + $0xd0] sm:$0xff]
    %v4733 = vld [vmem:[#allocation10 + $0xe0] sm:$0xff]
    %v4734 = vld [vmem:[#allocation10 + $0xf0] sm:$0xff]
    %4735 = vmatprep.subr.mxu0 0.0
    %4736 = vmatpush1.msra.mxu0 %v4719
    %4737 = vmatprep.subr.mxu0 0.0
    %4738 = vmatpush1.msra.mxu0 %v4720
    %4739 = vmatprep.subr.mxu0 0.0
    %4740 = vmatpush1.msra.mxu0 %v4721
    %4741 = vmatprep.subr.mxu0 0.0
    %4742 = vmatpush1.msra.mxu0 %v4722
    %4743 = vmatprep.subr.mxu0 0.0
    %4744 = vmatpush1.msra.mxu0 %v4723
    %4745 = vmatprep.subr.mxu0 0.0
    %4746 = vmatpush1.msra.mxu0 %v4724
    %4747 = vmatprep.subr.mxu0 0.0
    %4748 = vmatpush1.msra.mxu0 %v4725
    %4749 = vmatprep.subr.mxu0 0.0
    %4750 = vmatpush1.msra.mxu0 %v4726
    %4751 = vmatprep.subr.mxu0 0.0
    %4752 = vmatpush1.msra.mxu0 %v4727
    %4753 = vmatprep.subr.mxu0 0.0
    %4754 = vmatpush1.msra.mxu0 %v4728
    %4755 = vmatprep.subr.mxu0 0.0
    %4756 = vmatpush1.msra.mxu0 %v4729
    %4757 = vmatprep.subr.mxu0 0.0
    %4758 = vmatpush1.msra.mxu0 %v4730
    %4759 = vmatprep.subr.mxu0 0.0
    %4760 = vmatpush1.msra.mxu0 %v4731
    %4761 = vmatprep.subr.mxu0 0.0
    %4762 = vmatpush1.msra.mxu0 %v4732
    %4763 = vmatprep.subr.mxu0 0.0
    %4764 = vmatpush1.msra.mxu0 %v4733
    %4765 = vmatprep.subr.mxu0 0.0
    %4766 = vmatpush1.msra.mxu0 %v4734
    %4767 = vmatprep.subr.mxu0 0.0
    %4768 = vmatpush1.msra.mxu0 0.0
    %4769 = vmatprep.subr.mxu0 0.0
    %4770 = vmatpush1.msra.mxu0 0.0
    %4771 = vmatprep.subr.mxu0 0.0
    %4772 = vmatpush1.msra.mxu0 0.0
    %4773 = vmatprep.subr.mxu0 0.0
    %4774 = vmatpush1.msra.mxu0 0.0
    %4775 = vmatprep.subr.mxu0 0.0
    %4776 = vmatpush1.msra.mxu0 0.0
    %4777 = vmatprep.subr.mxu0 0.0
    %4778 = vmatpush1.msra.mxu0 0.0
    %4779 = vmatprep.subr.mxu0 0.0
    %4780 = vmatpush1.msra.mxu0 0.0
    %4781 = vmatprep.subr.mxu0 0.0
    %4782 = vmatpush1.msra.mxu0 0.0
    %4783 = vmatprep.subr.mxu0 0.0
    %4784 = vmatpush1.msra.mxu0 0.0
    %4785 = vmatprep.subr.mxu0 0.0
    %4786 = vmatpush1.msra.mxu0 0.0
    %4787 = vmatprep.subr.mxu0 0.0
    %4788 = vmatpush1.msra.mxu0 0.0
    %4789 = vmatprep.subr.mxu0 0.0
    %4790 = vmatpush1.msra.mxu0 0.0
    %4791 = vmatprep.subr.mxu0 0.0
    %4792 = vmatpush1.msra.mxu0 0.0
    %4793 = vmatprep.subr.mxu0 0.0
    %4794 = vmatpush1.msra.mxu0 0.0
    %4795 = vmatprep.subr.mxu0 0.0
    %4796 = vmatpush1.msra.mxu0 0.0
    %4797 = vmatprep.subr.mxu0 0.0
    %4798 = vmatpush1.msra.mxu0 0.0
    %4799 = vmatprep.mubr.f32.mxu0 0.0
    %4800 = vmatmul.mubr.f32.gmra.mrb[0].mxu0 %v4718
    %v4801 = vpop.f32.mrb[0].mxu0
    %v4802 = vadd.f32 %v773, %v4801
    %v4803 = vpop.f32.mrb[0].mxu0
    %4804 = vdwg.mxu0
    %v4805 = vmax.f32 %v4802, 0.0
    %v4806 = vld [vmem:[#allocation10 + $0x8] sm:$0xff]
    %v4807 = vld [vmem:[#allocation10 + $0x18] sm:$0xff]
    %v4808 = vld [vmem:[#allocation10 + $0x28] sm:$0xff]
    %v4809 = vld [vmem:[#allocation10 + $0x38] sm:$0xff]
    %v4810 = vld [vmem:[#allocation10 + $0x48] sm:$0xff]
    %v4811 = vld [vmem:[#allocation10 + $0x58] sm:$0xff]
    %v4812 = vld [vmem:[#allocation10 + $0x68] sm:$0xff]
    %v4813 = vld [vmem:[#allocation10 + $0x78] sm:$0xff]
    %v4814 = vld [vmem:[#allocation10 + $0x88] sm:$0xff]
    %v4815 = vld [vmem:[#allocation10 + $0x98] sm:$0xff]
    %v4816 = vld [vmem:[#allocation10 + $0xa8] sm:$0xff]
    %v4817 = vld [vmem:[#allocation10 + $0xb8] sm:$0xff]
    %v4818 = vld [vmem:[#allocation10 + $0xc8] sm:$0xff]
    %v4819 = vld [vmem:[#allocation10 + $0xd8] sm:$0xff]
    %v4820 = vld [vmem:[#allocation10 + $0xe8] sm:$0xff]
    %v4821 = vld [vmem:[#allocation10 + $0xf8] sm:$0xff]
    %4822 = vmatprep.subr.mxu0 0.0
    %4823 = vmatpush1.msra.mxu0 %v4806
    %4824 = vmatprep.subr.mxu0 0.0
    %4825 = vmatpush1.msra.mxu0 %v4807
    %4826 = vmatprep.subr.mxu0 0.0
    %4827 = vmatpush1.msra.mxu0 %v4808
    %4828 = vmatprep.subr.mxu0 0.0
    %4829 = vmatpush1.msra.mxu0 %v4809
    %4830 = vmatprep.subr.mxu0 0.0
    %4831 = vmatpush1.msra.mxu0 %v4810
    %4832 = vmatprep.subr.mxu0 0.0
    %4833 = vmatpush1.msra.mxu0 %v4811
    %4834 = vmatprep.subr.mxu0 0.0
    %4835 = vmatpush1.msra.mxu0 %v4812
    %4836 = vmatprep.subr.mxu0 0.0
    %4837 = vmatpush1.msra.mxu0 %v4813
    %4838 = vmatprep.subr.mxu0 0.0
    %4839 = vmatpush1.msra.mxu0 %v4814
    %4840 = vmatprep.subr.mxu0 0.0
    %4841 = vmatpush1.msra.mxu0 %v4815
    %4842 = vmatprep.subr.mxu0 0.0
    %4843 = vmatpush1.msra.mxu0 %v4816
    %4844 = vmatprep.subr.mxu0 0.0
    %4845 = vmatpush1.msra.mxu0 %v4817
    %4846 = vmatprep.subr.mxu0 0.0
    %4847 = vmatpush1.msra.mxu0 %v4818
    %4848 = vmatprep.subr.mxu0 0.0
    %4849 = vmatpush1.msra.mxu0 %v4819
    %4850 = vmatprep.subr.mxu0 0.0
    %4851 = vmatpush1.msra.mxu0 %v4820
    %4852 = vmatprep.subr.mxu0 0.0
    %4853 = vmatpush1.msra.mxu0 %v4821
    %4854 = vmatprep.subr.mxu0 0.0
    %4855 = vmatpush1.msra.mxu0 0.0
    %4856 = vmatprep.subr.mxu0 0.0
    %4857 = vmatpush1.msra.mxu0 0.0
    %4858 = vmatprep.subr.mxu0 0.0
    %4859 = vmatpush1.msra.mxu0 0.0
    %4860 = vmatprep.subr.mxu0 0.0
    %4861 = vmatpush1.msra.mxu0 0.0
    %4862 = vmatprep.subr.mxu0 0.0
    %4863 = vmatpush1.msra.mxu0 0.0
    %4864 = vmatprep.subr.mxu0 0.0
    %4865 = vmatpush1.msra.mxu0 0.0
    %4866 = vmatprep.subr.mxu0 0.0
    %4867 = vmatpush1.msra.mxu0 0.0
    %4868 = vmatprep.subr.mxu0 0.0
    %4869 = vmatpush1.msra.mxu0 0.0
    %4870 = vmatprep.subr.mxu0 0.0
    %4871 = vmatpush1.msra.mxu0 0.0
    %4872 = vmatprep.subr.mxu0 0.0
    %4873 = vmatpush1.msra.mxu0 0.0
    %4874 = vmatprep.subr.mxu0 0.0
    %4875 = vmatpush1.msra.mxu0 0.0
    %4876 = vmatprep.subr.mxu0 0.0
    %4877 = vmatpush1.msra.mxu0 0.0
    %4878 = vmatprep.subr.mxu0 0.0
    %4879 = vmatpush1.msra.mxu0 0.0
    %4880 = vmatprep.subr.mxu0 0.0
    %4881 = vmatpush1.msra.mxu0 0.0
    %4882 = vmatprep.subr.mxu0 0.0
    %4883 = vmatpush1.msra.mxu0 0.0
    %4884 = vmatprep.subr.mxu0 0.0
    %4885 = vmatpush1.msra.mxu0 0.0
    %4886 = vmatprep.mubr.f32.mxu0 0.0
    %4887 = vmatmul.mubr.f32.gmra.mrb[0].mxu0 %v4805
    %v4888 = vpop.f32.mrb[0].mxu0
    %v4889 = vadd.f32 %v866, %v4888
    %v4890 = vpop.f32.mrb[0].mxu0
    %4891 = vdwg.mxu0
    %s4892 = scalar_lea.vmem [#allocation12], 10
    %4893 = vst [vmem:[%s4892] sm:$0x3] %v4889
    %v4894 = vld [vmem:[#allocation7] sm:$0xff]
    %v4895 = vld [vmem:[#allocation7 + $0x8] sm:$0xff]
    %v4896 = vld [vmem:[#allocation7 + $0x10] sm:$0xff]
    %v4897 = vld [vmem:[#allocation7 + $0x48] sm:$0xff]
    %v4898 = vld [vmem:[#allocation7 + $0x50] sm:$0xff]
    %v4899 = vld [vmem:[#allocation7 + $0x58] sm:$0xff]
    %v4900 = vld [vmem:[#allocation7 + $0x90] sm:$0xff]
    %v4901 = vld [vmem:[#allocation7 + $0x98] sm:$0xff]
    %v4902 = vld [vmem:[#allocation7 + $0xa0] sm:$0xff]
    %v4903 = vld [vmem:[#allocation7 + $0xd8] sm:$0xff]
    %v4904 = vld [vmem:[#allocation7 + $0xe0] sm:$0xff]
    %v4905 = vld [vmem:[#allocation7 + $0xe8] sm:$0xff]
    %v4906 = vld [vmem:[#allocation7 + $0x120] sm:$0xff]
    %v4907 = vld [vmem:[#allocation7 + $0x128] sm:$0xff]
    %v4908 = vld [vmem:[#allocation7 + $0x130] sm:$0xff]
    %v4909 = vld [vmem:[#allocation7 + $0x168] sm:$0xff]
    %v4910 = vld [vmem:[#allocation7 + $0x170] sm:$0xff]
    %v4911 = vld [vmem:[#allocation7 + $0x178] sm:$0xff]
    %v4912 = vld [vmem:[#allocation7 + $0x1b0] sm:$0xff]
    %v4913 = vld [vmem:[#allocation7 + $0x1b8] sm:$0xff]
    %v4914 = vld [vmem:[#allocation7 + $0x1c0] sm:$0xff]
    %v4915 = vld [vmem:[#allocation7 + $0x1f8] sm:$0xff]
    %v4916 = vld [vmem:[#allocation7 + $0x200] sm:$0xff]
    %v4917 = vld [vmem:[#allocation7 + $0x208] sm:$0xff]
    %v4918 = vld [vmem:[#allocation7 + $0x240] sm:$0xff]
    %v4919 = vld [vmem:[#allocation7 + $0x248] sm:$0xff]
    %v4920 = vld [vmem:[#allocation7 + $0x250] sm:$0xff]
    %v4921 = vld [vmem:[#allocation7 + $0x288] sm:$0xff]
    %v4922 = vld [vmem:[#allocation7 + $0x290] sm:$0xff]
    %v4923 = vld [vmem:[#allocation7 + $0x298] sm:$0xff]
    %v4924 = vld [vmem:[#allocation7 + $0x2d0] sm:$0xff]
    %v4925 = vld [vmem:[#allocation7 + $0x2d8] sm:$0xff]
    %v4926 = vld [vmem:[#allocation7 + $0x2e0] sm:$0xff]
    %v4927 = vld [vmem:[#allocation7 + $0x318] sm:$0xff]
    %v4928 = vld [vmem:[#allocation7 + $0x320] sm:$0xff]
    %v4929 = vld [vmem:[#allocation7 + $0x328] sm:$0xff]
    %v4930 = vld [vmem:[#allocation7 + $0x360] sm:$0xff]
    %v4931 = vld [vmem:[#allocation7 + $0x368] sm:$0xff]
    %v4932 = vld [vmem:[#allocation7 + $0x370] sm:$0xff]
    %v4933 = vld [vmem:[#allocation7 + $0x3a8] sm:$0xff]
    %v4934 = vld [vmem:[#allocation7 + $0x3b0] sm:$0xff]
    %v4935 = vld [vmem:[#allocation7 + $0x3b8] sm:$0xff]
    %v4936 = vld [vmem:[#allocation7 + $0x3f0] sm:$0xff]
    %v4937 = vld [vmem:[#allocation7 + $0x3f8] sm:$0xff]
    %v4938 = vld [vmem:[#allocation7 + $0x400] sm:$0xff]
    %v4939 = vld [vmem:[#allocation7 + $0x438] sm:$0xff]
    %v4940 = vld [vmem:[#allocation7 + $0x440] sm:$0xff]
    %v4941 = vld [vmem:[#allocation7 + $0x448] sm:$0xff]
    %4942 = vmatprep.subr.mxu0 %v4895
    %4943 = vmatpush1.msra.mxu0 %v4894
    %4944 = vmatprep.subr.mxu0 %v4898
    %4945 = vmatpush1.msra.mxu0 %v4897
    %4946 = vmatprep.subr.mxu0 %v4901
    %4947 = vmatpush1.msra.mxu0 %v4900
    %4948 = vmatprep.subr.mxu0 %v4904
    %4949 = vmatpush1.msra.mxu0 %v4903
    %4950 = vmatprep.subr.mxu0 %v4907
    %4951 = vmatpush1.msra.mxu0 %v4906
    %4952 = vmatprep.subr.mxu0 %v4910
    %4953 = vmatpush1.msra.mxu0 %v4909
    %4954 = vmatprep.subr.mxu0 %v4913
    %4955 = vmatpush1.msra.mxu0 %v4912
    %4956 = vmatprep.subr.mxu0 %v4916
    %4957 = vmatpush1.msra.mxu0 %v4915
    %4958 = vmatprep.subr.mxu0 %v4919
    %4959 = vmatpush1.msra.mxu0 %v4918
    %4960 = vmatprep.subr.mxu0 %v4922
    %4961 = vmatpush1.msra.mxu0 %v4921
    %4962 = vmatprep.subr.mxu0 %v4925
    %4963 = vmatpush1.msra.mxu0 %v4924
    %4964 = vmatprep.subr.mxu0 %v4928
    %4965 = vmatpush1.msra.mxu0 %v4927
    %4966 = vmatprep.subr.mxu0 %v4931
    %4967 = vmatpush1.msra.mxu0 %v4930
    %4968 = vmatprep.subr.mxu0 %v4934
    %4969 = vmatpush1.msra.mxu0 %v4933
    %4970 = vmatprep.subr.mxu0 %v4937
    %4971 = vmatpush1.msra.mxu0 %v4936
    %4972 = vmatprep.subr.mxu0 %v4940
    %4973 = vmatpush1.msra.mxu0 %v4939
    %4974 = vmatprep.subr.mxu0 0.0
    %4975 = vmatpush1.msra.mxu0 0.0
    %4976 = vmatprep.subr.mxu0 0.0
    %4977 = vmatpush1.msra.mxu0 0.0
    %4978 = vmatprep.subr.mxu0 0.0
    %4979 = vmatpush1.msra.mxu0 0.0
    %4980 = vmatprep.subr.mxu0 0.0
    %4981 = vmatpush1.msra.mxu0 0.0
    %4982 = vmatprep.subr.mxu0 0.0
    %4983 = vmatpush1.msra.mxu0 0.0
    %4984 = vmatprep.subr.mxu0 0.0
    %4985 = vmatpush1.msra.mxu0 0.0
    %4986 = vmatprep.subr.mxu0 0.0
    %4987 = vmatpush1.msra.mxu0 0.0
    %4988 = vmatprep.subr.mxu0 0.0
    %4989 = vmatpush1.msra.mxu0 0.0
    %4990 = vmatprep.subr.mxu0 0.0
    %4991 = vmatpush1.msra.mxu0 0.0
    %4992 = vmatprep.subr.mxu0 0.0
    %4993 = vmatpush1.msra.mxu0 0.0
    %4994 = vmatprep.subr.mxu0 0.0
    %4995 = vmatpush1.msra.mxu0 0.0
    %4996 = vmatprep.subr.mxu0 0.0
    %4997 = vmatpush1.msra.mxu0 0.0
    %4998 = vmatprep.subr.mxu0 0.0
    %4999 = vmatpush1.msra.mxu0 0.0
    %5000 = vmatprep.subr.mxu0 0.0
    %5001 = vmatpush1.msra.mxu0 0.0
    %5002 = vmatprep.subr.mxu0 0.0
    %5003 = vmatpush1.msra.mxu0 0.0
    %5004 = vmatprep.subr.mxu0 0.0
    %5005 = vmatpush1.msra.mxu0 0.0
    %5006 = vmatprep.mubr.f32.mxu0 0.0
    %5007 = vmatmul.mubr.f32.gmra.mrb[0].mxu0 %v4508
    %v5008 = vpop.f32.mrb[0].mxu0
    %v5009 = vadd.f32 %v142, %v5008
    %v5010 = vpop.f32.mrb[0].mxu0
    %v5011 = vadd.f32 %v146, %v5010
    %5012 = vdwg.mxu0
    %5013 = vmatprep.subr.mxu0 0.0
    %5014 = vmatpush1.msra.mxu0 %v4896
    %5015 = vmatprep.subr.mxu0 0.0
    %5016 = vmatpush1.msra.mxu0 %v4899
    %5017 = vmatprep.subr.mxu0 0.0
    %5018 = vmatpush1.msra.mxu0 %v4902
    %5019 = vmatprep.subr.mxu0 0.0
    %5020 = vmatpush1.msra.mxu0 %v4905
    %5021 = vmatprep.subr.mxu0 0.0
    %5022 = vmatpush1.msra.mxu0 %v4908
    %5023 = vmatprep.subr.mxu0 0.0
    %5024 = vmatpush1.msra.mxu0 %v4911
    %5025 = vmatprep.subr.mxu0 0.0
    %5026 = vmatpush1.msra.mxu0 %v4914
    %5027 = vmatprep.subr.mxu0 0.0
    %5028 = vmatpush1.msra.mxu0 %v4917
    %5029 = vmatprep.subr.mxu0 0.0
    %5030 = vmatpush1.msra.mxu0 %v4920
    %5031 = vmatprep.subr.mxu0 0.0
    %5032 = vmatpush1.msra.mxu0 %v4923
    %5033 = vmatprep.subr.mxu0 0.0
    %5034 = vmatpush1.msra.mxu0 %v4926
    %5035 = vmatprep.subr.mxu0 0.0
    %5036 = vmatpush1.msra.mxu0 %v4929
    %5037 = vmatprep.subr.mxu0 0.0
    %5038 = vmatpush1.msra.mxu0 %v4932
    %5039 = vmatprep.subr.mxu0 0.0
    %5040 = vmatpush1.msra.mxu0 %v4935
    %5041 = vmatprep.subr.mxu0 0.0
    %5042 = vmatpush1.msra.mxu0 %v4938
    %5043 = vmatprep.subr.mxu0 0.0
    %5044 = vmatpush1.msra.mxu0 %v4941
    %5045 = vmatprep.subr.mxu0 0.0
    %5046 = vmatpush1.msra.mxu0 0.0
    %5047 = vmatprep.subr.mxu0 0.0
    %5048 = vmatpush1.msra.mxu0 0.0
    %5049 = vmatprep.subr.mxu0 0.0
    %5050 = vmatpush1.msra.mxu0 0.0
    %5051 = vmatprep.subr.mxu0 0.0
    %5052 = vmatpush1.msra.mxu0 0.0
    %5053 = vmatprep.subr.mxu0 0.0
    %5054 = vmatpush1.msra.mxu0 0.0
    %5055 = vmatprep.subr.mxu0 0.0
    %5056 = vmatpush1.msra.mxu0 0.0
    %5057 = vmatprep.subr.mxu0 0.0
    %5058 = vmatpush1.msra.mxu0 0.0
    %5059 = vmatprep.subr.mxu0 0.0
    %5060 = vmatpush1.msra.mxu0 0.0
    %5061 = vmatprep.subr.mxu0 0.0
    %5062 = vmatpush1.msra.mxu0 0.0
    %5063 = vmatprep.subr.mxu0 0.0
    %5064 = vmatpush1.msra.mxu0 0.0
    %5065 = vmatprep.subr.mxu0 0.0
    %5066 = vmatpush1.msra.mxu0 0.0
    %5067 = vmatprep.subr.mxu0 0.0
    %5068 = vmatpush1.msra.mxu0 0.0
    %5069 = vmatprep.subr.mxu0 0.0
    %5070 = vmatpush1.msra.mxu0 0.0
    %5071 = vmatprep.subr.mxu0 0.0
    %5072 = vmatpush1.msra.mxu0 0.0
    %5073 = vmatprep.subr.mxu0 0.0
    %5074 = vmatpush1.msra.mxu0 0.0
    %5075 = vmatprep.subr.mxu0 0.0
    %5076 = vmatpush1.msra.mxu0 0.0
    %5077 = vmatprep.mubr.f32.mxu0 0.0
    %5078 = vmatmul.mubr.f32.gmra.mrb[0].mxu0 %v4508
    %v5079 = vpop.f32.mrb[0].mxu0
    %v5080 = vadd.f32 %v150, %v5079
    %v5081 = vpop.f32.mrb[0].mxu0
    %5082 = vdwg.mxu0
    %v5083 = vld [vmem:[#allocation7 + $0x30] sm:$0xff]
    %v5084 = vld [vmem:[#allocation7 + $0x38] sm:$0xff]
    %v5085 = vld [vmem:[#allocation7 + $0x40] sm:$0xff]
    %v5086 = vld [vmem:[#allocation7 + $0x78] sm:$0xff]
    %v5087 = vld [vmem:[#allocation7 + $0x80] sm:$0xff]
    %v5088 = vld [vmem:[#allocation7 + $0x88] sm:$0xff]
    %v5089 = vld [vmem:[#allocation7 + $0xc0] sm:$0xff]
    %v5090 = vld [vmem:[#allocation7 + $0xc8] sm:$0xff]
    %v5091 = vld [vmem:[#allocation7 + $0xd0] sm:$0xff]
    %v5092 = vld [vmem:[#allocation7 + $0x108] sm:$0xff]
    %v5093 = vld [vmem:[#allocation7 + $0x110] sm:$0xff]
    %v5094 = vld [vmem:[#allocation7 + $0x118] sm:$0xff]
    %v5095 = vld [vmem:[#allocation7 + $0x150] sm:$0xff]
    %v5096 = vld [vmem:[#allocation7 + $0x158] sm:$0xff]
    %v5097 = vld [vmem:[#allocation7 + $0x160] sm:$0xff]
    %v5098 = vld [vmem:[#allocation7 + $0x198] sm:$0xff]
    %v5099 = vld [vmem:[#allocation7 + $0x1a0] sm:$0xff]
    %v5100 = vld [vmem:[#allocation7 + $0x1a8] sm:$0xff]
    %v5101 = vld [vmem:[#allocation7 + $0x1e0] sm:$0xff]
    %v5102 = vld [vmem:[#allocation7 + $0x1e8] sm:$0xff]
    %v5103 = vld [vmem:[#allocation7 + $0x1f0] sm:$0xff]
    %v5104 = vld [vmem:[#allocation7 + $0x228] sm:$0xff]
    %v5105 = vld [vmem:[#allocation7 + $0x230] sm:$0xff]
    %v5106 = vld [vmem:[#allocation7 + $0x238] sm:$0xff]
    %v5107 = vld [vmem:[#allocation7 + $0x270] sm:$0xff]
    %v5108 = vld [vmem:[#allocation7 + $0x278] sm:$0xff]
    %v5109 = vld [vmem:[#allocation7 + $0x280] sm:$0xff]
    %v5110 = vld [vmem:[#allocation7 + $0x2b8] sm:$0xff]
    %v5111 = vld [vmem:[#allocation7 + $0x2c0] sm:$0xff]
    %v5112 = vld [vmem:[#allocation7 + $0x2c8] sm:$0xff]
    %v5113 = vld [vmem:[#allocation7 + $0x300] sm:$0xff]
    %v5114 = vld [vmem:[#allocation7 + $0x308] sm:$0xff]
    %v5115 = vld [vmem:[#allocation7 + $0x310] sm:$0xff]
    %v5116 = vld [vmem:[#allocation7 + $0x348] sm:$0xff]
    %v5117 = vld [vmem:[#allocation7 + $0x350] sm:$0xff]
    %v5118 = vld [vmem:[#allocation7 + $0x358] sm:$0xff]
    %v5119 = vld [vmem:[#allocation7 + $0x390] sm:$0xff]
    %v5120 = vld [vmem:[#allocation7 + $0x398] sm:$0xff]
    %v5121 = vld [vmem:[#allocation7 + $0x3a0] sm:$0xff]
    %v5122 = vld [vmem:[#allocation7 + $0x3d8] sm:$0xff]
    %v5123 = vld [vmem:[#allocation7 + $0x3e0] sm:$0xff]
    %v5124 = vld [vmem:[#allocation7 + $0x3e8] sm:$0xff]
    %v5125 = vld [vmem:[#allocation7 + $0x420] sm:$0xff]
    %v5126 = vld [vmem:[#allocation7 + $0x428] sm:$0xff]
    %v5127 = vld [vmem:[#allocation7 + $0x430] sm:$0xff]
    %v5128 = vld [vmem:[#allocation7 + $0x468] sm:$0xff]
    %v5129 = vld [vmem:[#allocation7 + $0x470] sm:$0xff]
    %v5130 = vld [vmem:[#allocation7 + $0x478] sm:$0xff]
    %5131 = vmatprep.subr.mxu0 %v5084
    %5132 = vmatpush1.msra.mxu0 %v5083
    %5133 = vmatprep.subr.mxu0 %v5087
    %5134 = vmatpush1.msra.mxu0 %v5086
    %5135 = vmatprep.subr.mxu0 %v5090
    %5136 = vmatpush1.msra.mxu0 %v5089
    %5137 = vmatprep.subr.mxu0 %v5093
    %5138 = vmatpush1.msra.mxu0 %v5092
    %5139 = vmatprep.subr.mxu0 %v5096
    %5140 = vmatpush1.msra.mxu0 %v5095
    %5141 = vmatprep.subr.mxu0 %v5099
    %5142 = vmatpush1.msra.mxu0 %v5098
    %5143 = vmatprep.subr.mxu0 %v5102
    %5144 = vmatpush1.msra.mxu0 %v5101
    %5145 = vmatprep.subr.mxu0 %v5105
    %5146 = vmatpush1.msra.mxu0 %v5104
    %5147 = vmatprep.subr.mxu0 %v5108
    %5148 = vmatpush1.msra.mxu0 %v5107
    %5149 = vmatprep.subr.mxu0 %v5111
    %5150 = vmatpush1.msra.mxu0 %v5110
    %5151 = vmatprep.subr.mxu0 %v5114
    %5152 = vmatpush1.msra.mxu0 %v5113
    %5153 = vmatprep.subr.mxu0 %v5117
    %5154 = vmatpush1.msra.mxu0 %v5116
    %5155 = vmatprep.subr.mxu0 %v5120
    %5156 = vmatpush1.msra.mxu0 %v5119
    %5157 = vmatprep.subr.mxu0 %v5123
    %5158 = vmatpush1.msra.mxu0 %v5122
    %5159 = vmatprep.subr.mxu0 %v5126
    %5160 = vmatpush1.msra.mxu0 %v5125
    %5161 = vmatprep.subr.mxu0 %v5129
    %5162 = vmatpush1.msra.mxu0 %v5128
    %5163 = vmatprep.subr.mxu0 0.0
    %5164 = vmatpush1.msra.mxu0 0.0
    %5165 = vmatprep.subr.mxu0 0.0
    %5166 = vmatpush1.msra.mxu0 0.0
    %5167 = vmatprep.subr.mxu0 0.0
    %5168 = vmatpush1.msra.mxu0 0.0
    %5169 = vmatprep.subr.mxu0 0.0
    %5170 = vmatpush1.msra.mxu0 0.0
    %5171 = vmatprep.subr.mxu0 0.0
    %5172 = vmatpush1.msra.mxu0 0.0
    %5173 = vmatprep.subr.mxu0 0.0
    %5174 = vmatpush1.msra.mxu0 0.0
    %5175 = vmatprep.subr.mxu0 0.0
    %5176 = vmatpush1.msra.mxu0 0.0
    %5177 = vmatprep.subr.mxu0 0.0
    %5178 = vmatpush1.msra.mxu0 0.0
    %5179 = vmatprep.subr.mxu0 0.0
    %5180 = vmatpush1.msra.mxu0 0.0
    %5181 = vmatprep.subr.mxu0 0.0
    %5182 = vmatpush1.msra.mxu0 0.0
    %5183 = vmatprep.subr.mxu0 0.0
    %5184 = vmatpush1.msra.mxu0 0.0
    %5185 = vmatprep.subr.mxu0 0.0
    %5186 = vmatpush1.msra.mxu0 0.0
    %5187 = vmatprep.subr.mxu0 0.0
    %5188 = vmatpush1.msra.mxu0 0.0
    %5189 = vmatprep.subr.mxu0 0.0
    %5190 = vmatpush1.msra.mxu0 0.0
    %5191 = vmatprep.subr.mxu0 0.0
    %5192 = vmatpush1.msra.mxu0 0.0
    %5193 = vmatprep.subr.mxu0 0.0
    %5194 = vmatpush1.msra.mxu0 0.0
    %5195 = vmatprep.mubr.f32.mxu0 0.0
    %5196 = vmatmul.mubr.f32.gmra.mrb[0].mxu0 %v4718
    %v5197 = vpop.f32.mrb[0].mxu0
    %v5198 = vadd.f32 %v347, %v5197
    %v5199 = vpop.f32.mrb[0].mxu0
    %v5200 = vadd.f32 %v351, %v5199
    %5201 = vdwg.mxu0
    %5202 = vmatprep.subr.mxu0 0.0
    %5203 = vmatpush1.msra.mxu0 %v5085
    %5204 = vmatprep.subr.mxu0 0.0
    %5205 = vmatpush1.msra.mxu0 %v5088
    %5206 = vmatprep.subr.mxu0 0.0
    %5207 = vmatpush1.msra.mxu0 %v5091
    %5208 = vmatprep.subr.mxu0 0.0
    %5209 = vmatpush1.msra.mxu0 %v5094
    %5210 = vmatprep.subr.mxu0 0.0
    %5211 = vmatpush1.msra.mxu0 %v5097
    %5212 = vmatprep.subr.mxu0 0.0
    %5213 = vmatpush1.msra.mxu0 %v5100
    %5214 = vmatprep.subr.mxu0 0.0
    %5215 = vmatpush1.msra.mxu0 %v5103
    %5216 = vmatprep.subr.mxu0 0.0
    %5217 = vmatpush1.msra.mxu0 %v5106
    %5218 = vmatprep.subr.mxu0 0.0
    %5219 = vmatpush1.msra.mxu0 %v5109
    %5220 = vmatprep.subr.mxu0 0.0
    %5221 = vmatpush1.msra.mxu0 %v5112
    %5222 = vmatprep.subr.mxu0 0.0
    %5223 = vmatpush1.msra.mxu0 %v5115
    %5224 = vmatprep.subr.mxu0 0.0
    %5225 = vmatpush1.msra.mxu0 %v5118
    %5226 = vmatprep.subr.mxu0 0.0
    %5227 = vmatpush1.msra.mxu0 %v5121
    %5228 = vmatprep.subr.mxu0 0.0
    %5229 = vmatpush1.msra.mxu0 %v5124
    %5230 = vmatprep.subr.mxu0 0.0
    %5231 = vmatpush1.msra.mxu0 %v5127
    %5232 = vmatprep.subr.mxu0 0.0
    %5233 = vmatpush1.msra.mxu0 %v5130
    %5234 = vmatprep.subr.mxu0 0.0
    %5235 = vmatpush1.msra.mxu0 0.0
    %5236 = vmatprep.subr.mxu0 0.0
    %5237 = vmatpush1.msra.mxu0 0.0
    %5238 = vmatprep.subr.mxu0 0.0
    %5239 = vmatpush1.msra.mxu0 0.0
    %5240 = vmatprep.subr.mxu0 0.0
    %5241 = vmatpush1.msra.mxu0 0.0
    %5242 = vmatprep.subr.mxu0 0.0
    %5243 = vmatpush1.msra.mxu0 0.0
    %5244 = vmatprep.subr.mxu0 0.0
    %5245 = vmatpush1.msra.mxu0 0.0
    %5246 = vmatprep.subr.mxu0 0.0
    %5247 = vmatpush1.msra.mxu0 0.0
    %5248 = vmatprep.subr.mxu0 0.0
    %5249 = vmatpush1.msra.mxu0 0.0
    %5250 = vmatprep.subr.mxu0 0.0
    %5251 = vmatpush1.msra.mxu0 0.0
    %5252 = vmatprep.subr.mxu0 0.0
    %5253 = vmatpush1.msra.mxu0 0.0
    %5254 = vmatprep.subr.mxu0 0.0
    %5255 = vmatpush1.msra.mxu0 0.0
    %5256 = vmatprep.subr.mxu0 0.0
    %5257 = vmatpush1.msra.mxu0 0.0
    %5258 = vmatprep.subr.mxu0 0.0
    %5259 = vmatpush1.msra.mxu0 0.0
    %5260 = vmatprep.subr.mxu0 0.0
    %5261 = vmatpush1.msra.mxu0 0.0
    %5262 = vmatprep.subr.mxu0 0.0
    %5263 = vmatpush1.msra.mxu0 0.0
    %5264 = vmatprep.subr.mxu0 0.0
    %5265 = vmatpush1.msra.mxu0 0.0
    %5266 = vmatprep.mubr.f32.mxu0 0.0
    %5267 = vmatmul.mubr.f32.gmra.mrb[0].mxu0 %v4718
    %v5268 = vpop.f32.mrb[0].mxu0
    %v5269 = vadd.f32 %v355, %v5268
    %v5270 = vpop.f32.mrb[0].mxu0
    %5271 = vdwg.mxu0
    %s5272 = scalar_lea.vmem [#allocation4], 36
    %v5273 = vld [vmem:[%s5272] sm:$0x3f]
    %v5274 = vadd.f32 %v5273, %v5009
    %v5275 = vxor.u32 %v5274, 2147483648
    %v5276 = vmul.f32 %v5275, 1.442695
    %v5277 = vpow.pop %v5276
    %v5278 = vadd.f32 %v5277, 1.0
    %v5279 = vrcp.pop %v5278
    %v5280 = vmul.f32 1.0, %v5279
    %v5282 = vrot.slane %v5273, 2
    %v5284 = vadd.f32 %v5282, %v5011
    %v5285 = vxor.u32 %v5284, 2147483648
    %v5286 = vmul.f32 %v5285, 1.442695
    %v5287 = vpow.pop %v5286
    %v5288 = vadd.f32 %v5287, 1.0
    %v5289 = vrcp.pop %v5288
    %v5290 = vmul.f32 1.0, %v5289
    %v5291 = vmul.f32 %v5280, %v5080
    %v5292 = vrot.slane %v5273, 4
    %v5294 = vadd.f32 %v5292, %v5291
    %v5295 = vtanh.pop %v5294
    %v5296 = vsub.f32 1.0, %v5290
    %v5297 = vmul.f32 %v5296, %v5295
    %v5298 = vmul.f32 %v5290, %v4508
    %v5299 = vadd.f32 %v5297, %v5298
    %v5300 = vld [vmem:[#allocation7 + $0x18] sm:$0xff]
    %v5301 = vld [vmem:[#allocation7 + $0x20] sm:$0xff]
    %v5302 = vld [vmem:[#allocation7 + $0x28] sm:$0xff]
    %v5303 = vld [vmem:[#allocation7 + $0x60] sm:$0xff]
    %v5304 = vld [vmem:[#allocation7 + $0x68] sm:$0xff]
    %v5305 = vld [vmem:[#allocation7 + $0x70] sm:$0xff]
    %v5306 = vld [vmem:[#allocation7 + $0xa8] sm:$0xff]
    %v5307 = vld [vmem:[#allocation7 + $0xb0] sm:$0xff]
    %v5308 = vld [vmem:[#allocation7 + $0xb8] sm:$0xff]
    %v5309 = vld [vmem:[#allocation7 + $0xf0] sm:$0xff]
    %v5310 = vld [vmem:[#allocation7 + $0xf8] sm:$0xff]
    %v5311 = vld [vmem:[#allocation7 + $0x100] sm:$0xff]
    %v5312 = vld [vmem:[#allocation7 + $0x138] sm:$0xff]
    %v5313 = vld [vmem:[#allocation7 + $0x140] sm:$0xff]
    %v5314 = vld [vmem:[#allocation7 + $0x148] sm:$0xff]
    %v5315 = vld [vmem:[#allocation7 + $0x180] sm:$0xff]
    %v5316 = vld [vmem:[#allocation7 + $0x188] sm:$0xff]
    %v5317 = vld [vmem:[#allocation7 + $0x190] sm:$0xff]
    %v5318 = vld [vmem:[#allocation7 + $0x1c8] sm:$0xff]
    %v5319 = vld [vmem:[#allocation7 + $0x1d0] sm:$0xff]
    %v5320 = vld [vmem:[#allocation7 + $0x1d8] sm:$0xff]
    %v5321 = vld [vmem:[#allocation7 + $0x210] sm:$0xff]
    %v5322 = vld [vmem:[#allocation7 + $0x218] sm:$0xff]
    %v5323 = vld [vmem:[#allocation7 + $0x220] sm:$0xff]
    %v5324 = vld [vmem:[#allocation7 + $0x258] sm:$0xff]
    %v5325 = vld [vmem:[#allocation7 + $0x260] sm:$0xff]
    %v5326 = vld [vmem:[#allocation7 + $0x268] sm:$0xff]
    %v5327 = vld [vmem:[#allocation7 + $0x2a0] sm:$0xff]
    %v5328 = vld [vmem:[#allocation7 + $0x2a8] sm:$0xff]
    %v5329 = vld [vmem:[#allocation7 + $0x2b0] sm:$0xff]
    %v5330 = vld [vmem:[#allocation7 + $0x2e8] sm:$0xff]
    %v5331 = vld [vmem:[#allocation7 + $0x2f0] sm:$0xff]
    %v5332 = vld [vmem:[#allocation7 + $0x2f8] sm:$0xff]
    %v5333 = vld [vmem:[#allocation7 + $0x330] sm:$0xff]
    %v5334 = vld [vmem:[#allocation7 + $0x338] sm:$0xff]
    %v5335 = vld [vmem:[#allocation7 + $0x340] sm:$0xff]
    %v5336 = vld [vmem:[#allocation7 + $0x378] sm:$0xff]
    %v5337 = vld [vmem:[#allocation7 + $0x380] sm:$0xff]
    %v5338 = vld [vmem:[#allocation7 + $0x388] sm:$0xff]
    %v5339 = vld [vmem:[#allocation7 + $0x3c0] sm:$0xff]
    %v5340 = vld [vmem:[#allocation7 + $0x3c8] sm:$0xff]
    %v5341 = vld [vmem:[#allocation7 + $0x3d0] sm:$0xff]
    %v5342 = vld [vmem:[#allocation7 + $0x408] sm:$0xff]
    %v5343 = vld [vmem:[#allocation7 + $0x410] sm:$0xff]
    %v5344 = vld [vmem:[#allocation7 + $0x418] sm:$0xff]
    %v5345 = vld [vmem:[#allocation7 + $0x450] sm:$0xff]
    %v5346 = vld [vmem:[#allocation7 + $0x458] sm:$0xff]
    %v5347 = vld [vmem:[#allocation7 + $0x460] sm:$0xff]
    %5348 = vmatprep.subr.mxu0 %v5301
    %5349 = vmatpush1.msra.mxu0 %v5300
    %5350 = vmatprep.subr.mxu0 %v5304
    %5351 = vmatpush1.msra.mxu0 %v5303
    %5352 = vmatprep.subr.mxu0 %v5307
    %5353 = vmatpush1.msra.mxu0 %v5306
    %5354 = vmatprep.subr.mxu0 %v5310
    %5355 = vmatpush1.msra.mxu0 %v5309
    %5356 = vmatprep.subr.mxu0 %v5313
    %5357 = vmatpush1.msra.mxu0 %v5312
    %5358 = vmatprep.subr.mxu0 %v5316
    %5359 = vmatpush1.msra.mxu0 %v5315
    %5360 = vmatprep.subr.mxu0 %v5319
    %5361 = vmatpush1.msra.mxu0 %v5318
    %5362 = vmatprep.subr.mxu0 %v5322
    %5363 = vmatpush1.msra.mxu0 %v5321
    %5364 = vmatprep.subr.mxu0 %v5325
    %5365 = vmatpush1.msra.mxu0 %v5324
    %5366 = vmatprep.subr.mxu0 %v5328
    %5367 = vmatpush1.msra.mxu0 %v5327
    %5368 = vmatprep.subr.mxu0 %v5331
    %5369 = vmatpush1.msra.mxu0 %v5330
    %5370 = vmatprep.subr.mxu0 %v5334
    %5371 = vmatpush1.msra.mxu0 %v5333
    %5372 = vmatprep.subr.mxu0 %v5337
    %5373 = vmatpush1.msra.mxu0 %v5336
    %5374 = vmatprep.subr.mxu0 %v5340
    %5375 = vmatpush1.msra.mxu0 %v5339
    %5376 = vmatprep.subr.mxu0 %v5343
    %5377 = vmatpush1.msra.mxu0 %v5342
    %5378 = vmatprep.subr.mxu0 %v5346
    %5379 = vmatpush1.msra.mxu0 %v5345
    %5380 = vmatprep.subr.mxu0 0.0
    %5381 = vmatpush1.msra.mxu0 0.0
    %5382 = vmatprep.subr.mxu0 0.0
    %5383 = vmatpush1.msra.mxu0 0.0
    %5384 = vmatprep.subr.mxu0 0.0
    %5385 = vmatpush1.msra.mxu0 0.0
    %5386 = vmatprep.subr.mxu0 0.0
    %5387 = vmatpush1.msra.mxu0 0.0
    %5388 = vmatprep.subr.mxu0 0.0
    %5389 = vmatpush1.msra.mxu0 0.0
    %5390 = vmatprep.subr.mxu0 0.0
    %5391 = vmatpush1.msra.mxu0 0.0
    %5392 = vmatprep.subr.mxu0 0.0
    %5393 = vmatpush1.msra.mxu0 0.0
    %5394 = vmatprep.subr.mxu0 0.0
    %5395 = vmatpush1.msra.mxu0 0.0
    %5396 = vmatprep.subr.mxu0 0.0
    %5397 = vmatpush1.msra.mxu0 0.0
    %5398 = vmatprep.subr.mxu0 0.0
    %5399 = vmatpush1.msra.mxu0 0.0
    %5400 = vmatprep.subr.mxu0 0.0
    %5401 = vmatpush1.msra.mxu0 0.0
    %5402 = vmatprep.subr.mxu0 0.0
    %5403 = vmatpush1.msra.mxu0 0.0
    %5404 = vmatprep.subr.mxu0 0.0
    %5405 = vmatpush1.msra.mxu0 0.0
    %5406 = vmatprep.subr.mxu0 0.0
    %5407 = vmatpush1.msra.mxu0 0.0
    %5408 = vmatprep.subr.mxu0 0.0
    %5409 = vmatpush1.msra.mxu0 0.0
    %5410 = vmatprep.subr.mxu0 0.0
    %5411 = vmatpush1.msra.mxu0 0.0
    %5412 = vmatprep.mubr.f32.mxu0 0.0
    %5413 = vmatmul.mubr.f32.gmra.mrb[0].mxu0 %v5299
    %v5414 = vpop.f32.mrb[0].mxu0
    %v5415 = vadd.f32 %v579, %v5414
    %v5416 = vpop.f32.mrb[0].mxu0
    %v5417 = vadd.f32 %v583, %v5416
    %5418 = vdwg.mxu0
    %5419 = vmatprep.subr.mxu0 0.0
    %5420 = vmatpush1.msra.mxu0 %v5302
    %5421 = vmatprep.subr.mxu0 0.0
    %5422 = vmatpush1.msra.mxu0 %v5305
    %5423 = vmatprep.subr.mxu0 0.0
    %5424 = vmatpush1.msra.mxu0 %v5308
    %5425 = vmatprep.subr.mxu0 0.0
    %5426 = vmatpush1.msra.mxu0 %v5311
    %5427 = vmatprep.subr.mxu0 0.0
    %5428 = vmatpush1.msra.mxu0 %v5314
    %5429 = vmatprep.subr.mxu0 0.0
    %5430 = vmatpush1.msra.mxu0 %v5317
    %5431 = vmatprep.subr.mxu0 0.0
    %5432 = vmatpush1.msra.mxu0 %v5320
    %5433 = vmatprep.subr.mxu0 0.0
    %5434 = vmatpush1.msra.mxu0 %v5323
    %5435 = vmatprep.subr.mxu0 0.0
    %5436 = vmatpush1.msra.mxu0 %v5326
    %5437 = vmatprep.subr.mxu0 0.0
    %5438 = vmatpush1.msra.mxu0 %v5329
    %5439 = vmatprep.subr.mxu0 0.0
    %5440 = vmatpush1.msra.mxu0 %v5332
    %5441 = vmatprep.subr.mxu0 0.0
    %5442 = vmatpush1.msra.mxu0 %v5335
    %5443 = vmatprep.subr.mxu0 0.0
    %5444 = vmatpush1.msra.mxu0 %v5338
    %5445 = vmatprep.subr.mxu0 0.0
    %5446 = vmatpush1.msra.mxu0 %v5341
    %5447 = vmatprep.subr.mxu0 0.0
    %5448 = vmatpush1.msra.mxu0 %v5344
    %5449 = vmatprep.subr.mxu0 0.0
    %5450 = vmatpush1.msra.mxu0 %v5347
    %5451 = vmatprep.subr.mxu0 0.0
    %5452 = vmatpush1.msra.mxu0 0.0
    %5453 = vmatprep.subr.mxu0 0.0
    %5454 = vmatpush1.msra.mxu0 0.0
    %5455 = vmatprep.subr.mxu0 0.0
    %5456 = vmatpush1.msra.mxu0 0.0
    %5457 = vmatprep.subr.mxu0 0.0
    %5458 = vmatpush1.msra.mxu0 0.0
    %5459 = vmatprep.subr.mxu0 0.0
    %5460 = vmatpush1.msra.mxu0 0.0
    %5461 = vmatprep.subr.mxu0 0.0
    %5462 = vmatpush1.msra.mxu0 0.0
    %5463 = vmatprep.subr.mxu0 0.0
    %5464 = vmatpush1.msra.mxu0 0.0
    %5465 = vmatprep.subr.mxu0 0.0
    %5466 = vmatpush1.msra.mxu0 0.0
    %5467 = vmatprep.subr.mxu0 0.0
    %5468 = vmatpush1.msra.mxu0 0.0
    %5469 = vmatprep.subr.mxu0 0.0
    %5470 = vmatpush1.msra.mxu0 0.0
    %5471 = vmatprep.subr.mxu0 0.0
    %5472 = vmatpush1.msra.mxu0 0.0
    %5473 = vmatprep.subr.mxu0 0.0
    %5474 = vmatpush1.msra.mxu0 0.0
    %5475 = vmatprep.subr.mxu0 0.0
    %5476 = vmatpush1.msra.mxu0 0.0
    %5477 = vmatprep.subr.mxu0 0.0
    %5478 = vmatpush1.msra.mxu0 0.0
    %5479 = vmatprep.subr.mxu0 0.0
    %5480 = vmatpush1.msra.mxu0 0.0
    %5481 = vmatprep.subr.mxu0 0.0
    %5482 = vmatpush1.msra.mxu0 0.0
    %5483 = vmatprep.mubr.f32.mxu0 0.0
    %5484 = vmatmul.mubr.f32.gmra.mrb[0].mxu0 %v5299
    %v5485 = vpop.f32.mrb[0].mxu0
    %v5486 = vadd.f32 %v587, %v5485
    %v5487 = vpop.f32.mrb[0].mxu0
    %5488 = vdwg.mxu0
    %v5489 = vadd.f32 %v5415, %v5198
    %v5490 = vxor.u32 %v5489, 2147483648
    %v5491 = vmul.f32 %v5490, 1.442695
    %v5492 = vpow.pop %v5491
    %v5493 = vadd.f32 %v5492, 1.0
    %v5494 = vrcp.pop %v5493
    %v5495 = vmul.f32 1.0, %v5494
    %v5496 = vadd.f32 %v5417, %v5200
    %v5497 = vxor.u32 %v5496, 2147483648
    %v5498 = vmul.f32 %v5497, 1.442695
    %v5499 = vpow.pop %v5498
    %v5500 = vadd.f32 %v5499, 1.0
    %v5501 = vrcp.pop %v5500
    %v5502 = vmul.f32 1.0, %v5501
    %v5503 = vmul.f32 %v5495, %v5269
    %v5504 = vadd.f32 %v5486, %v5503
    %v5505 = vtanh.pop %v5504
    %v5506 = vsub.f32 1.0, %v5502
    %v5507 = vmul.f32 %v5506, %v5505
    %v5508 = vmul.f32 %v5502, %v4718
    %v5509 = vadd.f32 %v5507, %v5508
    %v5510 = vld [vmem:[#allocation10] sm:$0xff]
    %v5511 = vld [vmem:[#allocation10 + $0x10] sm:$0xff]
    %v5512 = vld [vmem:[#allocation10 + $0x20] sm:$0xff]
    %v5513 = vld [vmem:[#allocation10 + $0x30] sm:$0xff]
    %v5514 = vld [vmem:[#allocation10 + $0x40] sm:$0xff]
    %v5515 = vld [vmem:[#allocation10 + $0x50] sm:$0xff]
    %v5516 = vld [vmem:[#allocation10 + $0x60] sm:$0xff]
    %v5517 = vld [vmem:[#allocation10 + $0x70] sm:$0xff]
    %v5518 = vld [vmem:[#allocation10 + $0x80] sm:$0xff]
    %v5519 = vld [vmem:[#allocation10 + $0x90] sm:$0xff]
    %v5520 = vld [vmem:[#allocation10 + $0xa0] sm:$0xff]
    %v5521 = vld [vmem:[#allocation10 + $0xb0] sm:$0xff]
    %v5522 = vld [vmem:[#allocation10 + $0xc0] sm:$0xff]
    %v5523 = vld [vmem:[#allocation10 + $0xd0] sm:$0xff]
    %v5524 = vld [vmem:[#allocation10 + $0xe0] sm:$0xff]
    %v5525 = vld [vmem:[#allocation10 + $0xf0] sm:$0xff]
    %5526 = vmatprep.subr.mxu0 0.0
    %5527 = vmatpush1.msra.mxu0 %v5510
    %5528 = vmatprep.subr.mxu0 0.0
    %5529 = vmatpush1.msra.mxu0 %v5511
    %5530 = vmatprep.subr.mxu0 0.0
    %5531 = vmatpush1.msra.mxu0 %v5512
    %5532 = vmatprep.subr.mxu0 0.0
    %5533 = vmatpush1.msra.mxu0 %v5513
    %5534 = vmatprep.subr.mxu0 0.0
    %5535 = vmatpush1.msra.mxu0 %v5514
    %5536 = vmatprep.subr.mxu0 0.0
    %5537 = vmatpush1.msra.mxu0 %v5515
    %5538 = vmatprep.subr.mxu0 0.0
    %5539 = vmatpush1.msra.mxu0 %v5516
    %5540 = vmatprep.subr.mxu0 0.0
    %5541 = vmatpush1.msra.mxu0 %v5517
    %5542 = vmatprep.subr.mxu0 0.0
    %5543 = vmatpush1.msra.mxu0 %v5518
    %5544 = vmatprep.subr.mxu0 0.0
    %5545 = vmatpush1.msra.mxu0 %v5519
    %5546 = vmatprep.subr.mxu0 0.0
    %5547 = vmatpush1.msra.mxu0 %v5520
    %5548 = vmatprep.subr.mxu0 0.0
    %5549 = vmatpush1.msra.mxu0 %v5521
    %5550 = vmatprep.subr.mxu0 0.0
    %5551 = vmatpush1.msra.mxu0 %v5522
    %5552 = vmatprep.subr.mxu0 0.0
    %5553 = vmatpush1.msra.mxu0 %v5523
    %5554 = vmatprep.subr.mxu0 0.0
    %5555 = vmatpush1.msra.mxu0 %v5524
    %5556 = vmatprep.subr.mxu0 0.0
    %5557 = vmatpush1.msra.mxu0 %v5525
    %5558 = vmatprep.subr.mxu0 0.0
    %5559 = vmatpush1.msra.mxu0 0.0
    %5560 = vmatprep.subr.mxu0 0.0
    %5561 = vmatpush1.msra.mxu0 0.0
    %5562 = vmatprep.subr.mxu0 0.0
    %5563 = vmatpush1.msra.mxu0 0.0
    %5564 = vmatprep.subr.mxu0 0.0
    %5565 = vmatpush1.msra.mxu0 0.0
    %5566 = vmatprep.subr.mxu0 0.0
    %5567 = vmatpush1.msra.mxu0 0.0
    %5568 = vmatprep.subr.mxu0 0.0
    %5569 = vmatpush1.msra.mxu0 0.0
    %5570 = vmatprep.subr.mxu0 0.0
    %5571 = vmatpush1.msra.mxu0 0.0
    %5572 = vmatprep.subr.mxu0 0.0
    %5573 = vmatpush1.msra.mxu0 0.0
    %5574 = vmatprep.subr.mxu0 0.0
    %5575 = vmatpush1.msra.mxu0 0.0
    %5576 = vmatprep.subr.mxu0 0.0
    %5577 = vmatpush1.msra.mxu0 0.0
    %5578 = vmatprep.subr.mxu0 0.0
    %5579 = vmatpush1.msra.mxu0 0.0
    %5580 = vmatprep.subr.mxu0 0.0
    %5581 = vmatpush1.msra.mxu0 0.0
    %5582 = vmatprep.subr.mxu0 0.0
    %5583 = vmatpush1.msra.mxu0 0.0
    %5584 = vmatprep.subr.mxu0 0.0
    %5585 = vmatpush1.msra.mxu0 0.0
    %5586 = vmatprep.subr.mxu0 0.0
    %5587 = vmatpush1.msra.mxu0 0.0
    %5588 = vmatprep.subr.mxu0 0.0
    %5589 = vmatpush1.msra.mxu0 0.0
    %5590 = vmatprep.mubr.f32.mxu0 0.0
    %5591 = vmatmul.mubr.f32.gmra.mrb[0].mxu0 %v5509
    %v5592 = vpop.f32.mrb[0].mxu0
    %v5593 = vadd.f32 %v773, %v5592
    %v5594 = vpop.f32.mrb[0].mxu0
    %5595 = vdwg.mxu0
    %v5596 = vmax.f32 %v5593, 0.0
    %v5597 = vld [vmem:[#allocation10 + $0x8] sm:$0xff]
    %v5598 = vld [vmem:[#allocation10 + $0x18] sm:$0xff]
    %v5599 = vld [vmem:[#allocation10 + $0x28] sm:$0xff]
    %v5600 = vld [vmem:[#allocation10 + $0x38] sm:$0xff]
    %v5601 = vld [vmem:[#allocation10 + $0x48] sm:$0xff]
    %v5602 = vld [vmem:[#allocation10 + $0x58] sm:$0xff]
    %v5603 = vld [vmem:[#allocation10 + $0x68] sm:$0xff]
    %v5604 = vld [vmem:[#allocation10 + $0x78] sm:$0xff]
    %v5605 = vld [vmem:[#allocation10 + $0x88] sm:$0xff]
    %v5606 = vld [vmem:[#allocation10 + $0x98] sm:$0xff]
    %v5607 = vld [vmem:[#allocation10 + $0xa8] sm:$0xff]
    %v5608 = vld [vmem:[#allocation10 + $0xb8] sm:$0xff]
    %v5609 = vld [vmem:[#allocation10 + $0xc8] sm:$0xff]
    %v5610 = vld [vmem:[#allocation10 + $0xd8] sm:$0xff]
    %v5611 = vld [vmem:[#allocation10 + $0xe8] sm:$0xff]
    %v5612 = vld [vmem:[#allocation10 + $0xf8] sm:$0xff]
    %5613 = vmatprep.subr.mxu0 0.0
    %5614 = vmatpush1.msra.mxu0 %v5597
    %5615 = vmatprep.subr.mxu0 0.0
    %5616 = vmatpush1.msra.mxu0 %v5598
    %5617 = vmatprep.subr.mxu0 0.0
    %5618 = vmatpush1.msra.mxu0 %v5599
    %5619 = vmatprep.subr.mxu0 0.0
    %5620 = vmatpush1.msra.mxu0 %v5600
    %5621 = vmatprep.subr.mxu0 0.0
    %5622 = vmatpush1.msra.mxu0 %v5601
    %5623 = vmatprep.subr.mxu0 0.0
    %5624 = vmatpush1.msra.mxu0 %v5602
    %5625 = vmatprep.subr.mxu0 0.0
    %5626 = vmatpush1.msra.mxu0 %v5603
    %5627 = vmatprep.subr.mxu0 0.0
    %5628 = vmatpush1.msra.mxu0 %v5604
    %5629 = vmatprep.subr.mxu0 0.0
    %5630 = vmatpush1.msra.mxu0 %v5605
    %5631 = vmatprep.subr.mxu0 0.0
    %5632 = vmatpush1.msra.mxu0 %v5606
    %5633 = vmatprep.subr.mxu0 0.0
    %5634 = vmatpush1.msra.mxu0 %v5607
    %5635 = vmatprep.subr.mxu0 0.0
    %5636 = vmatpush1.msra.mxu0 %v5608
    %5637 = vmatprep.subr.mxu0 0.0
    %5638 = vmatpush1.msra.mxu0 %v5609
    %5639 = vmatprep.subr.mxu0 0.0
    %5640 = vmatpush1.msra.mxu0 %v5610
    %5641 = vmatprep.subr.mxu0 0.0
    %5642 = vmatpush1.msra.mxu0 %v5611
    %5643 = vmatprep.subr.mxu0 0.0
    %5644 = vmatpush1.msra.mxu0 %v5612
    %5645 = vmatprep.subr.mxu0 0.0
    %5646 = vmatpush1.msra.mxu0 0.0
    %5647 = vmatprep.subr.mxu0 0.0
    %5648 = vmatpush1.msra.mxu0 0.0
    %5649 = vmatprep.subr.mxu0 0.0
    %5650 = vmatpush1.msra.mxu0 0.0
    %5651 = vmatprep.subr.mxu0 0.0
    %5652 = vmatpush1.msra.mxu0 0.0
    %5653 = vmatprep.subr.mxu0 0.0
    %5654 = vmatpush1.msra.mxu0 0.0
    %5655 = vmatprep.subr.mxu0 0.0
    %5656 = vmatpush1.msra.mxu0 0.0
    %5657 = vmatprep.subr.mxu0 0.0
    %5658 = vmatpush1.msra.mxu0 0.0
    %5659 = vmatprep.subr.mxu0 0.0
    %5660 = vmatpush1.msra.mxu0 0.0
    %5661 = vmatprep.subr.mxu0 0.0
    %5662 = vmatpush1.msra.mxu0 0.0
    %5663 = vmatprep.subr.mxu0 0.0
    %5664 = vmatpush1.msra.mxu0 0.0
    %5665 = vmatprep.subr.mxu0 0.0
    %5666 = vmatpush1.msra.mxu0 0.0
    %5667 = vmatprep.subr.mxu0 0.0
    %5668 = vmatpush1.msra.mxu0 0.0
    %5669 = vmatprep.subr.mxu0 0.0
    %5670 = vmatpush1.msra.mxu0 0.0
    %5671 = vmatprep.subr.mxu0 0.0
    %5672 = vmatpush1.msra.mxu0 0.0
    %5673 = vmatprep.subr.mxu0 0.0
    %5674 = vmatpush1.msra.mxu0 0.0
    %5675 = vmatprep.subr.mxu0 0.0
    %5676 = vmatpush1.msra.mxu0 0.0
    %5677 = vmatprep.mubr.f32.mxu0 0.0
    %5678 = vmatmul.mubr.f32.gmra.mrb[0].mxu0 %v5596
    %v5679 = vpop.f32.mrb[0].mxu0
    %v5680 = vadd.f32 %v866, %v5679
    %v5681 = vpop.f32.mrb[0].mxu0
    %5682 = vdwg.mxu0
    %s5683 = scalar_lea.vmem [#allocation12], 12
    %5684 = vst [vmem:[%s5683] sm:$0x3] %v5680
    %v5685 = vld [vmem:[#allocation7] sm:$0xff]
    %v5686 = vld [vmem:[#allocation7 + $0x8] sm:$0xff]
    %v5687 = vld [vmem:[#allocation7 + $0x10] sm:$0xff]
    %v5688 = vld [vmem:[#allocation7 + $0x48] sm:$0xff]
    %v5689 = vld [vmem:[#allocation7 + $0x50] sm:$0xff]
    %v5690 = vld [vmem:[#allocation7 + $0x58] sm:$0xff]
    %v5691 = vld [vmem:[#allocation7 + $0x90] sm:$0xff]
    %v5692 = vld [vmem:[#allocation7 + $0x98] sm:$0xff]
    %v5693 = vld [vmem:[#allocation7 + $0xa0] sm:$0xff]
    %v5694 = vld [vmem:[#allocation7 + $0xd8] sm:$0xff]
    %v5695 = vld [vmem:[#allocation7 + $0xe0] sm:$0xff]
    %v5696 = vld [vmem:[#allocation7 + $0xe8] sm:$0xff]
    %v5697 = vld [vmem:[#allocation7 + $0x120] sm:$0xff]
    %v5698 = vld [vmem:[#allocation7 + $0x128] sm:$0xff]
    %v5699 = vld [vmem:[#allocation7 + $0x130] sm:$0xff]
    %v5700 = vld [vmem:[#allocation7 + $0x168] sm:$0xff]
    %v5701 = vld [vmem:[#allocation7 + $0x170] sm:$0xff]
    %v5702 = vld [vmem:[#allocation7 + $0x178] sm:$0xff]
    %v5703 = vld [vmem:[#allocation7 + $0x1b0] sm:$0xff]
    %v5704 = vld [vmem:[#allocation7 + $0x1b8] sm:$0xff]
    %v5705 = vld [vmem:[#allocation7 + $0x1c0] sm:$0xff]
    %v5706 = vld [vmem:[#allocation7 + $0x1f8] sm:$0xff]
    %v5707 = vld [vmem:[#allocation7 + $0x200] sm:$0xff]
    %v5708 = vld [vmem:[#allocation7 + $0x208] sm:$0xff]
    %v5709 = vld [vmem:[#allocation7 + $0x240] sm:$0xff]
    %v5710 = vld [vmem:[#allocation7 + $0x248] sm:$0xff]
    %v5711 = vld [vmem:[#allocation7 + $0x250] sm:$0xff]
    %v5712 = vld [vmem:[#allocation7 + $0x288] sm:$0xff]
    %v5713 = vld [vmem:[#allocation7 + $0x290] sm:$0xff]
    %v5714 = vld [vmem:[#allocation7 + $0x298] sm:$0xff]
    %v5715 = vld [vmem:[#allocation7 + $0x2d0] sm:$0xff]
    %v5716 = vld [vmem:[#allocation7 + $0x2d8] sm:$0xff]
    %v5717 = vld [vmem:[#allocation7 + $0x2e0] sm:$0xff]
    %v5718 = vld [vmem:[#allocation7 + $0x318] sm:$0xff]
    %v5719 = vld [vmem:[#allocation7 + $0x320] sm:$0xff]
    %v5720 = vld [vmem:[#allocation7 + $0x328] sm:$0xff]
    %v5721 = vld [vmem:[#allocation7 + $0x360] sm:$0xff]
    %v5722 = vld [vmem:[#allocation7 + $0x368] sm:$0xff]
    %v5723 = vld [vmem:[#allocation7 + $0x370] sm:$0xff]
    %v5724 = vld [vmem:[#allocation7 + $0x3a8] sm:$0xff]
    %v5725 = vld [vmem:[#allocation7 + $0x3b0] sm:$0xff]
    %v5726 = vld [vmem:[#allocation7 + $0x3b8] sm:$0xff]
    %v5727 = vld [vmem:[#allocation7 + $0x3f0] sm:$0xff]
    %v5728 = vld [vmem:[#allocation7 + $0x3f8] sm:$0xff]
    %v5729 = vld [vmem:[#allocation7 + $0x400] sm:$0xff]
    %v5730 = vld [vmem:[#allocation7 + $0x438] sm:$0xff]
    %v5731 = vld [vmem:[#allocation7 + $0x440] sm:$0xff]
    %v5732 = vld [vmem:[#allocation7 + $0x448] sm:$0xff]
    %5733 = vmatprep.subr.mxu0 %v5686
    %5734 = vmatpush1.msra.mxu0 %v5685
    %5735 = vmatprep.subr.mxu0 %v5689
    %5736 = vmatpush1.msra.mxu0 %v5688
    %5737 = vmatprep.subr.mxu0 %v5692
    %5738 = vmatpush1.msra.mxu0 %v5691
    %5739 = vmatprep.subr.mxu0 %v5695
    %5740 = vmatpush1.msra.mxu0 %v5694
    %5741 = vmatprep.subr.mxu0 %v5698
    %5742 = vmatpush1.msra.mxu0 %v5697
    %5743 = vmatprep.subr.mxu0 %v5701
    %5744 = vmatpush1.msra.mxu0 %v5700
    %5745 = vmatprep.subr.mxu0 %v5704
    %5746 = vmatpush1.msra.mxu0 %v5703
    %5747 = vmatprep.subr.mxu0 %v5707
    %5748 = vmatpush1.msra.mxu0 %v5706
    %5749 = vmatprep.subr.mxu0 %v5710
    %5750 = vmatpush1.msra.mxu0 %v5709
    %5751 = vmatprep.subr.mxu0 %v5713
    %5752 = vmatpush1.msra.mxu0 %v5712
    %5753 = vmatprep.subr.mxu0 %v5716
    %5754 = vmatpush1.msra.mxu0 %v5715
    %5755 = vmatprep.subr.mxu0 %v5719
    %5756 = vmatpush1.msra.mxu0 %v5718
    %5757 = vmatprep.subr.mxu0 %v5722
    %5758 = vmatpush1.msra.mxu0 %v5721
    %5759 = vmatprep.subr.mxu0 %v5725
    %5760 = vmatpush1.msra.mxu0 %v5724
    %5761 = vmatprep.subr.mxu0 %v5728
    %5762 = vmatpush1.msra.mxu0 %v5727
    %5763 = vmatprep.subr.mxu0 %v5731
    %5764 = vmatpush1.msra.mxu0 %v5730
    %5765 = vmatprep.subr.mxu0 0.0
    %5766 = vmatpush1.msra.mxu0 0.0
    %5767 = vmatprep.subr.mxu0 0.0
    %5768 = vmatpush1.msra.mxu0 0.0
    %5769 = vmatprep.subr.mxu0 0.0
    %5770 = vmatpush1.msra.mxu0 0.0
    %5771 = vmatprep.subr.mxu0 0.0
    %5772 = vmatpush1.msra.mxu0 0.0
    %5773 = vmatprep.subr.mxu0 0.0
    %5774 = vmatpush1.msra.mxu0 0.0
    %5775 = vmatprep.subr.mxu0 0.0
    %5776 = vmatpush1.msra.mxu0 0.0
    %5777 = vmatprep.subr.mxu0 0.0
    %5778 = vmatpush1.msra.mxu0 0.0
    %5779 = vmatprep.subr.mxu0 0.0
    %5780 = vmatpush1.msra.mxu0 0.0
    %5781 = vmatprep.subr.mxu0 0.0
    %5782 = vmatpush1.msra.mxu0 0.0
    %5783 = vmatprep.subr.mxu0 0.0
    %5784 = vmatpush1.msra.mxu0 0.0
    %5785 = vmatprep.subr.mxu0 0.0
    %5786 = vmatpush1.msra.mxu0 0.0
    %5787 = vmatprep.subr.mxu0 0.0
    %5788 = vmatpush1.msra.mxu0 0.0
    %5789 = vmatprep.subr.mxu0 0.0
    %5790 = vmatpush1.msra.mxu0 0.0
    %5791 = vmatprep.subr.mxu0 0.0
    %5792 = vmatpush1.msra.mxu0 0.0
    %5793 = vmatprep.subr.mxu0 0.0
    %5794 = vmatpush1.msra.mxu0 0.0
    %5795 = vmatprep.subr.mxu0 0.0
    %5796 = vmatpush1.msra.mxu0 0.0
    %5797 = vmatprep.mubr.f32.mxu0 0.0
    %5798 = vmatmul.mubr.f32.gmra.mrb[0].mxu0 %v5299
    %v5799 = vpop.f32.mrb[0].mxu0
    %v5800 = vadd.f32 %v142, %v5799
    %v5801 = vpop.f32.mrb[0].mxu0
    %v5802 = vadd.f32 %v146, %v5801
    %5803 = vdwg.mxu0
    %5804 = vmatprep.subr.mxu0 0.0
    %5805 = vmatpush1.msra.mxu0 %v5687
    %5806 = vmatprep.subr.mxu0 0.0
    %5807 = vmatpush1.msra.mxu0 %v5690
    %5808 = vmatprep.subr.mxu0 0.0
    %5809 = vmatpush1.msra.mxu0 %v5693
    %5810 = vmatprep.subr.mxu0 0.0
    %5811 = vmatpush1.msra.mxu0 %v5696
    %5812 = vmatprep.subr.mxu0 0.0
    %5813 = vmatpush1.msra.mxu0 %v5699
    %5814 = vmatprep.subr.mxu0 0.0
    %5815 = vmatpush1.msra.mxu0 %v5702
    %5816 = vmatprep.subr.mxu0 0.0
    %5817 = vmatpush1.msra.mxu0 %v5705
    %5818 = vmatprep.subr.mxu0 0.0
    %5819 = vmatpush1.msra.mxu0 %v5708
    %5820 = vmatprep.subr.mxu0 0.0
    %5821 = vmatpush1.msra.mxu0 %v5711
    %5822 = vmatprep.subr.mxu0 0.0
    %5823 = vmatpush1.msra.mxu0 %v5714
    %5824 = vmatprep.subr.mxu0 0.0
    %5825 = vmatpush1.msra.mxu0 %v5717
    %5826 = vmatprep.subr.mxu0 0.0
    %5827 = vmatpush1.msra.mxu0 %v5720
    %5828 = vmatprep.subr.mxu0 0.0
    %5829 = vmatpush1.msra.mxu0 %v5723
    %5830 = vmatprep.subr.mxu0 0.0
    %5831 = vmatpush1.msra.mxu0 %v5726
    %5832 = vmatprep.subr.mxu0 0.0
    %5833 = vmatpush1.msra.mxu0 %v5729
    %5834 = vmatprep.subr.mxu0 0.0
    %5835 = vmatpush1.msra.mxu0 %v5732
    %5836 = vmatprep.subr.mxu0 0.0
    %5837 = vmatpush1.msra.mxu0 0.0
    %5838 = vmatprep.subr.mxu0 0.0
    %5839 = vmatpush1.msra.mxu0 0.0
    %5840 = vmatprep.subr.mxu0 0.0
    %5841 = vmatpush1.msra.mxu0 0.0
    %5842 = vmatprep.subr.mxu0 0.0
    %5843 = vmatpush1.msra.mxu0 0.0
    %5844 = vmatprep.subr.mxu0 0.0
    %5845 = vmatpush1.msra.mxu0 0.0
    %5846 = vmatprep.subr.mxu0 0.0
    %5847 = vmatpush1.msra.mxu0 0.0
    %5848 = vmatprep.subr.mxu0 0.0
    %5849 = vmatpush1.msra.mxu0 0.0
    %5850 = vmatprep.subr.mxu0 0.0
    %5851 = vmatpush1.msra.mxu0 0.0
    %5852 = vmatprep.subr.mxu0 0.0
    %5853 = vmatpush1.msra.mxu0 0.0
    %5854 = vmatprep.subr.mxu0 0.0
    %5855 = vmatpush1.msra.mxu0 0.0
    %5856 = vmatprep.subr.mxu0 0.0
    %5857 = vmatpush1.msra.mxu0 0.0
    %5858 = vmatprep.subr.mxu0 0.0
    %5859 = vmatpush1.msra.mxu0 0.0
    %5860 = vmatprep.subr.mxu0 0.0
    %5861 = vmatpush1.msra.mxu0 0.0
    %5862 = vmatprep.subr.mxu0 0.0
    %5863 = vmatpush1.msra.mxu0 0.0
    %5864 = vmatprep.subr.mxu0 0.0
    %5865 = vmatpush1.msra.mxu0 0.0
    %5866 = vmatprep.subr.mxu0 0.0
    %5867 = vmatpush1.msra.mxu0 0.0
    %5868 = vmatprep.mubr.f32.mxu0 0.0
    %5869 = vmatmul.mubr.f32.gmra.mrb[0].mxu0 %v5299
    %v5870 = vpop.f32.mrb[0].mxu0
    %v5871 = vadd.f32 %v150, %v5870
    %v5872 = vpop.f32.mrb[0].mxu0
    %5873 = vdwg.mxu0
    %v5874 = vld [vmem:[#allocation7 + $0x30] sm:$0xff]
    %v5875 = vld [vmem:[#allocation7 + $0x38] sm:$0xff]
    %v5876 = vld [vmem:[#allocation7 + $0x40] sm:$0xff]
    %v5877 = vld [vmem:[#allocation7 + $0x78] sm:$0xff]
    %v5878 = vld [vmem:[#allocation7 + $0x80] sm:$0xff]
    %v5879 = vld [vmem:[#allocation7 + $0x88] sm:$0xff]
    %v5880 = vld [vmem:[#allocation7 + $0xc0] sm:$0xff]
    %v5881 = vld [vmem:[#allocation7 + $0xc8] sm:$0xff]
    %v5882 = vld [vmem:[#allocation7 + $0xd0] sm:$0xff]
    %v5883 = vld [vmem:[#allocation7 + $0x108] sm:$0xff]
    %v5884 = vld [vmem:[#allocation7 + $0x110] sm:$0xff]
    %v5885 = vld [vmem:[#allocation7 + $0x118] sm:$0xff]
    %v5886 = vld [vmem:[#allocation7 + $0x150] sm:$0xff]
    %v5887 = vld [vmem:[#allocation7 + $0x158] sm:$0xff]
    %v5888 = vld [vmem:[#allocation7 + $0x160] sm:$0xff]
    %v5889 = vld [vmem:[#allocation7 + $0x198] sm:$0xff]
    %v5890 = vld [vmem:[#allocation7 + $0x1a0] sm:$0xff]
    %v5891 = vld [vmem:[#allocation7 + $0x1a8] sm:$0xff]
    %v5892 = vld [vmem:[#allocation7 + $0x1e0] sm:$0xff]
    %v5893 = vld [vmem:[#allocation7 + $0x1e8] sm:$0xff]
    %v5894 = vld [vmem:[#allocation7 + $0x1f0] sm:$0xff]
    %v5895 = vld [vmem:[#allocation7 + $0x228] sm:$0xff]
    %v5896 = vld [vmem:[#allocation7 + $0x230] sm:$0xff]
    %v5897 = vld [vmem:[#allocation7 + $0x238] sm:$0xff]
    %v5898 = vld [vmem:[#allocation7 + $0x270] sm:$0xff]
    %v5899 = vld [vmem:[#allocation7 + $0x278] sm:$0xff]
    %v5900 = vld [vmem:[#allocation7 + $0x280] sm:$0xff]
    %v5901 = vld [vmem:[#allocation7 + $0x2b8] sm:$0xff]
    %v5902 = vld [vmem:[#allocation7 + $0x2c0] sm:$0xff]
    %v5903 = vld [vmem:[#allocation7 + $0x2c8] sm:$0xff]
    %v5904 = vld [vmem:[#allocation7 + $0x300] sm:$0xff]
    %v5905 = vld [vmem:[#allocation7 + $0x308] sm:$0xff]
    %v5906 = vld [vmem:[#allocation7 + $0x310] sm:$0xff]
    %v5907 = vld [vmem:[#allocation7 + $0x348] sm:$0xff]
    %v5908 = vld [vmem:[#allocation7 + $0x350] sm:$0xff]
    %v5909 = vld [vmem:[#allocation7 + $0x358] sm:$0xff]
    %v5910 = vld [vmem:[#allocation7 + $0x390] sm:$0xff]
    %v5911 = vld [vmem:[#allocation7 + $0x398] sm:$0xff]
    %v5912 = vld [vmem:[#allocation7 + $0x3a0] sm:$0xff]
    %v5913 = vld [vmem:[#allocation7 + $0x3d8] sm:$0xff]
    %v5914 = vld [vmem:[#allocation7 + $0x3e0] sm:$0xff]
    %v5915 = vld [vmem:[#allocation7 + $0x3e8] sm:$0xff]
    %v5916 = vld [vmem:[#allocation7 + $0x420] sm:$0xff]
    %v5917 = vld [vmem:[#allocation7 + $0x428] sm:$0xff]
    %v5918 = vld [vmem:[#allocation7 + $0x430] sm:$0xff]
    %v5919 = vld [vmem:[#allocation7 + $0x468] sm:$0xff]
    %v5920 = vld [vmem:[#allocation7 + $0x470] sm:$0xff]
    %v5921 = vld [vmem:[#allocation7 + $0x478] sm:$0xff]
    %5922 = vmatprep.subr.mxu0 %v5875
    %5923 = vmatpush1.msra.mxu0 %v5874
    %5924 = vmatprep.subr.mxu0 %v5878
    %5925 = vmatpush1.msra.mxu0 %v5877
    %5926 = vmatprep.subr.mxu0 %v5881
    %5927 = vmatpush1.msra.mxu0 %v5880
    %5928 = vmatprep.subr.mxu0 %v5884
    %5929 = vmatpush1.msra.mxu0 %v5883
    %5930 = vmatprep.subr.mxu0 %v5887
    %5931 = vmatpush1.msra.mxu0 %v5886
    %5932 = vmatprep.subr.mxu0 %v5890
    %5933 = vmatpush1.msra.mxu0 %v5889
    %5934 = vmatprep.subr.mxu0 %v5893
    %5935 = vmatpush1.msra.mxu0 %v5892
    %5936 = vmatprep.subr.mxu0 %v5896
    %5937 = vmatpush1.msra.mxu0 %v5895
    %5938 = vmatprep.subr.mxu0 %v5899
    %5939 = vmatpush1.msra.mxu0 %v5898
    %5940 = vmatprep.subr.mxu0 %v5902
    %5941 = vmatpush1.msra.mxu0 %v5901
    %5942 = vmatprep.subr.mxu0 %v5905
    %5943 = vmatpush1.msra.mxu0 %v5904
    %5944 = vmatprep.subr.mxu0 %v5908
    %5945 = vmatpush1.msra.mxu0 %v5907
    %5946 = vmatprep.subr.mxu0 %v5911
    %5947 = vmatpush1.msra.mxu0 %v5910
    %5948 = vmatprep.subr.mxu0 %v5914
    %5949 = vmatpush1.msra.mxu0 %v5913
    %5950 = vmatprep.subr.mxu0 %v5917
    %5951 = vmatpush1.msra.mxu0 %v5916
    %5952 = vmatprep.subr.mxu0 %v5920
    %5953 = vmatpush1.msra.mxu0 %v5919
    %5954 = vmatprep.subr.mxu0 0.0
    %5955 = vmatpush1.msra.mxu0 0.0
    %5956 = vmatprep.subr.mxu0 0.0
    %5957 = vmatpush1.msra.mxu0 0.0
    %5958 = vmatprep.subr.mxu0 0.0
    %5959 = vmatpush1.msra.mxu0 0.0
    %5960 = vmatprep.subr.mxu0 0.0
    %5961 = vmatpush1.msra.mxu0 0.0
    %5962 = vmatprep.subr.mxu0 0.0
    %5963 = vmatpush1.msra.mxu0 0.0
    %5964 = vmatprep.subr.mxu0 0.0
    %5965 = vmatpush1.msra.mxu0 0.0
    %5966 = vmatprep.subr.mxu0 0.0
    %5967 = vmatpush1.msra.mxu0 0.0
    %5968 = vmatprep.subr.mxu0 0.0
    %5969 = vmatpush1.msra.mxu0 0.0
    %5970 = vmatprep.subr.mxu0 0.0
    %5971 = vmatpush1.msra.mxu0 0.0
    %5972 = vmatprep.subr.mxu0 0.0
    %5973 = vmatpush1.msra.mxu0 0.0
    %5974 = vmatprep.subr.mxu0 0.0
    %5975 = vmatpush1.msra.mxu0 0.0
    %5976 = vmatprep.subr.mxu0 0.0
    %5977 = vmatpush1.msra.mxu0 0.0
    %5978 = vmatprep.subr.mxu0 0.0
    %5979 = vmatpush1.msra.mxu0 0.0
    %5980 = vmatprep.subr.mxu0 0.0
    %5981 = vmatpush1.msra.mxu0 0.0
    %5982 = vmatprep.subr.mxu0 0.0
    %5983 = vmatpush1.msra.mxu0 0.0
    %5984 = vmatprep.subr.mxu0 0.0
    %5985 = vmatpush1.msra.mxu0 0.0
    %5986 = vmatprep.mubr.f32.mxu0 0.0
    %5987 = vmatmul.mubr.f32.gmra.mrb[0].mxu0 %v5509
    %v5988 = vpop.f32.mrb[0].mxu0
    %v5989 = vadd.f32 %v347, %v5988
    %v5990 = vpop.f32.mrb[0].mxu0
    %v5991 = vadd.f32 %v351, %v5990
    %5992 = vdwg.mxu0
    %5993 = vmatprep.subr.mxu0 0.0
    %5994 = vmatpush1.msra.mxu0 %v5876
    %5995 = vmatprep.subr.mxu0 0.0
    %5996 = vmatpush1.msra.mxu0 %v5879
    %5997 = vmatprep.subr.mxu0 0.0
    %5998 = vmatpush1.msra.mxu0 %v5882
    %5999 = vmatprep.subr.mxu0 0.0
    %6000 = vmatpush1.msra.mxu0 %v5885
    %6001 = vmatprep.subr.mxu0 0.0
    %6002 = vmatpush1.msra.mxu0 %v5888
    %6003 = vmatprep.subr.mxu0 0.0
    %6004 = vmatpush1.msra.mxu0 %v5891
    %6005 = vmatprep.subr.mxu0 0.0
    %6006 = vmatpush1.msra.mxu0 %v5894
    %6007 = vmatprep.subr.mxu0 0.0
    %6008 = vmatpush1.msra.mxu0 %v5897
    %6009 = vmatprep.subr.mxu0 0.0
    %6010 = vmatpush1.msra.mxu0 %v5900
    %6011 = vmatprep.subr.mxu0 0.0
    %6012 = vmatpush1.msra.mxu0 %v5903
    %6013 = vmatprep.subr.mxu0 0.0
    %6014 = vmatpush1.msra.mxu0 %v5906
    %6015 = vmatprep.subr.mxu0 0.0
    %6016 = vmatpush1.msra.mxu0 %v5909
    %6017 = vmatprep.subr.mxu0 0.0
    %6018 = vmatpush1.msra.mxu0 %v5912
    %6019 = vmatprep.subr.mxu0 0.0
    %6020 = vmatpush1.msra.mxu0 %v5915
    %6021 = vmatprep.subr.mxu0 0.0
    %6022 = vmatpush1.msra.mxu0 %v5918
    %6023 = vmatprep.subr.mxu0 0.0
    %6024 = vmatpush1.msra.mxu0 %v5921
    %6025 = vmatprep.subr.mxu0 0.0
    %6026 = vmatpush1.msra.mxu0 0.0
    %6027 = vmatprep.subr.mxu0 0.0
    %6028 = vmatpush1.msra.mxu0 0.0
    %6029 = vmatprep.subr.mxu0 0.0
    %6030 = vmatpush1.msra.mxu0 0.0
    %6031 = vmatprep.subr.mxu0 0.0
    %6032 = vmatpush1.msra.mxu0 0.0
    %6033 = vmatprep.subr.mxu0 0.0
    %6034 = vmatpush1.msra.mxu0 0.0
    %6035 = vmatprep.subr.mxu0 0.0
    %6036 = vmatpush1.msra.mxu0 0.0
    %6037 = vmatprep.subr.mxu0 0.0
    %6038 = vmatpush1.msra.mxu0 0.0
    %6039 = vmatprep.subr.mxu0 0.0
    %6040 = vmatpush1.msra.mxu0 0.0
    %6041 = vmatprep.subr.mxu0 0.0
    %6042 = vmatpush1.msra.mxu0 0.0
    %6043 = vmatprep.subr.mxu0 0.0
    %6044 = vmatpush1.msra.mxu0 0.0
    %6045 = vmatprep.subr.mxu0 0.0
    %6046 = vmatpush1.msra.mxu0 0.0
    %6047 = vmatprep.subr.mxu0 0.0
    %6048 = vmatpush1.msra.mxu0 0.0
    %6049 = vmatprep.subr.mxu0 0.0
    %6050 = vmatpush1.msra.mxu0 0.0
    %6051 = vmatprep.subr.mxu0 0.0
    %6052 = vmatpush1.msra.mxu0 0.0
    %6053 = vmatprep.subr.mxu0 0.0
    %6054 = vmatpush1.msra.mxu0 0.0
    %6055 = vmatprep.subr.mxu0 0.0
    %6056 = vmatpush1.msra.mxu0 0.0
    %6057 = vmatprep.mubr.f32.mxu0 0.0
    %6058 = vmatmul.mubr.f32.gmra.mrb[0].mxu0 %v5509
    %v6059 = vpop.f32.mrb[0].mxu0
    %v6060 = vadd.f32 %v355, %v6059
    %v6061 = vpop.f32.mrb[0].mxu0
    %6062 = vdwg.mxu0
    %s6063 = scalar_lea.vmem [#allocation4], 42
    %v6064 = vld [vmem:[%s6063] sm:$0x3f]
    %v6065 = vadd.f32 %v6064, %v5800
    %v6066 = vxor.u32 %v6065, 2147483648
    %v6067 = vmul.f32 %v6066, 1.442695
    %v6068 = vpow.pop %v6067
    %v6069 = vadd.f32 %v6068, 1.0
    %v6070 = vrcp.pop %v6069
    %v6071 = vmul.f32 1.0, %v6070
    %v6073 = vrot.slane %v6064, 2
    %v6075 = vadd.f32 %v6073, %v5802
    %v6076 = vxor.u32 %v6075, 2147483648
    %v6077 = vmul.f32 %v6076, 1.442695
    %v6078 = vpow.pop %v6077
    %v6079 = vadd.f32 %v6078, 1.0
    %v6080 = vrcp.pop %v6079
    %v6081 = vmul.f32 1.0, %v6080
    %v6082 = vmul.f32 %v6071, %v5871
    %v6083 = vrot.slane %v6064, 4
    %v6085 = vadd.f32 %v6083, %v6082
    %v6086 = vtanh.pop %v6085
    %v6087 = vsub.f32 1.0, %v6081
    %v6088 = vmul.f32 %v6087, %v6086
    %v6089 = vmul.f32 %v6081, %v5299
    %v6090 = vadd.f32 %v6088, %v6089
    %v6091 = vld [vmem:[#allocation7 + $0x18] sm:$0xff]
    %v6092 = vld [vmem:[#allocation7 + $0x20] sm:$0xff]
    %v6093 = vld [vmem:[#allocation7 + $0x28] sm:$0xff]
    %v6094 = vld [vmem:[#allocation7 + $0x60] sm:$0xff]
    %v6095 = vld [vmem:[#allocation7 + $0x68] sm:$0xff]
    %v6096 = vld [vmem:[#allocation7 + $0x70] sm:$0xff]
    %v6097 = vld [vmem:[#allocation7 + $0xa8] sm:$0xff]
    %v6098 = vld [vmem:[#allocation7 + $0xb0] sm:$0xff]
    %v6099 = vld [vmem:[#allocation7 + $0xb8] sm:$0xff]
    %v6100 = vld [vmem:[#allocation7 + $0xf0] sm:$0xff]
    %v6101 = vld [vmem:[#allocation7 + $0xf8] sm:$0xff]
    %v6102 = vld [vmem:[#allocation7 + $0x100] sm:$0xff]
    %v6103 = vld [vmem:[#allocation7 + $0x138] sm:$0xff]
    %v6104 = vld [vmem:[#allocation7 + $0x140] sm:$0xff]
    %v6105 = vld [vmem:[#allocation7 + $0x148] sm:$0xff]
    %v6106 = vld [vmem:[#allocation7 + $0x180] sm:$0xff]
    %v6107 = vld [vmem:[#allocation7 + $0x188] sm:$0xff]
    %v6108 = vld [vmem:[#allocation7 + $0x190] sm:$0xff]
    %v6109 = vld [vmem:[#allocation7 + $0x1c8] sm:$0xff]
    %v6110 = vld [vmem:[#allocation7 + $0x1d0] sm:$0xff]
    %v6111 = vld [vmem:[#allocation7 + $0x1d8] sm:$0xff]
    %v6112 = vld [vmem:[#allocation7 + $0x210] sm:$0xff]
    %v6113 = vld [vmem:[#allocation7 + $0x218] sm:$0xff]
    %v6114 = vld [vmem:[#allocation7 + $0x220] sm:$0xff]
    %v6115 = vld [vmem:[#allocation7 + $0x258] sm:$0xff]
    %v6116 = vld [vmem:[#allocation7 + $0x260] sm:$0xff]
    %v6117 = vld [vmem:[#allocation7 + $0x268] sm:$0xff]
    %v6118 = vld [vmem:[#allocation7 + $0x2a0] sm:$0xff]
    %v6119 = vld [vmem:[#allocation7 + $0x2a8] sm:$0xff]
    %v6120 = vld [vmem:[#allocation7 + $0x2b0] sm:$0xff]
    %v6121 = vld [vmem:[#allocation7 + $0x2e8] sm:$0xff]
    %v6122 = vld [vmem:[#allocation7 + $0x2f0] sm:$0xff]
    %v6123 = vld [vmem:[#allocation7 + $0x2f8] sm:$0xff]
    %v6124 = vld [vmem:[#allocation7 + $0x330] sm:$0xff]
    %v6125 = vld [vmem:[#allocation7 + $0x338] sm:$0xff]
    %v6126 = vld [vmem:[#allocation7 + $0x340] sm:$0xff]
    %v6127 = vld [vmem:[#allocation7 + $0x378] sm:$0xff]
    %v6128 = vld [vmem:[#allocation7 + $0x380] sm:$0xff]
    %v6129 = vld [vmem:[#allocation7 + $0x388] sm:$0xff]
    %v6130 = vld [vmem:[#allocation7 + $0x3c0] sm:$0xff]
    %v6131 = vld [vmem:[#allocation7 + $0x3c8] sm:$0xff]
    %v6132 = vld [vmem:[#allocation7 + $0x3d0] sm:$0xff]
    %v6133 = vld [vmem:[#allocation7 + $0x408] sm:$0xff]
    %v6134 = vld [vmem:[#allocation7 + $0x410] sm:$0xff]
    %v6135 = vld [vmem:[#allocation7 + $0x418] sm:$0xff]
    %v6136 = vld [vmem:[#allocation7 + $0x450] sm:$0xff]
    %v6137 = vld [vmem:[#allocation7 + $0x458] sm:$0xff]
    %v6138 = vld [vmem:[#allocation7 + $0x460] sm:$0xff]
    %6139 = vmatprep.subr.mxu0 %v6092
    %6140 = vmatpush1.msra.mxu0 %v6091
    %6141 = vmatprep.subr.mxu0 %v6095
    %6142 = vmatpush1.msra.mxu0 %v6094
    %6143 = vmatprep.subr.mxu0 %v6098
    %6144 = vmatpush1.msra.mxu0 %v6097
    %6145 = vmatprep.subr.mxu0 %v6101
    %6146 = vmatpush1.msra.mxu0 %v6100
    %6147 = vmatprep.subr.mxu0 %v6104
    %6148 = vmatpush1.msra.mxu0 %v6103
    %6149 = vmatprep.subr.mxu0 %v6107
    %6150 = vmatpush1.msra.mxu0 %v6106
    %6151 = vmatprep.subr.mxu0 %v6110
    %6152 = vmatpush1.msra.mxu0 %v6109
    %6153 = vmatprep.subr.mxu0 %v6113
    %6154 = vmatpush1.msra.mxu0 %v6112
    %6155 = vmatprep.subr.mxu0 %v6116
    %6156 = vmatpush1.msra.mxu0 %v6115
    %6157 = vmatprep.subr.mxu0 %v6119
    %6158 = vmatpush1.msra.mxu0 %v6118
    %6159 = vmatprep.subr.mxu0 %v6122
    %6160 = vmatpush1.msra.mxu0 %v6121
    %6161 = vmatprep.subr.mxu0 %v6125
    %6162 = vmatpush1.msra.mxu0 %v6124
    %6163 = vmatprep.subr.mxu0 %v6128
    %6164 = vmatpush1.msra.mxu0 %v6127
    %6165 = vmatprep.subr.mxu0 %v6131
    %6166 = vmatpush1.msra.mxu0 %v6130
    %6167 = vmatprep.subr.mxu0 %v6134
    %6168 = vmatpush1.msra.mxu0 %v6133
    %6169 = vmatprep.subr.mxu0 %v6137
    %6170 = vmatpush1.msra.mxu0 %v6136
    %6171 = vmatprep.subr.mxu0 0.0
    %6172 = vmatpush1.msra.mxu0 0.0
    %6173 = vmatprep.subr.mxu0 0.0
    %6174 = vmatpush1.msra.mxu0 0.0
    %6175 = vmatprep.subr.mxu0 0.0
    %6176 = vmatpush1.msra.mxu0 0.0
    %6177 = vmatprep.subr.mxu0 0.0
    %6178 = vmatpush1.msra.mxu0 0.0
    %6179 = vmatprep.subr.mxu0 0.0
    %6180 = vmatpush1.msra.mxu0 0.0
    %6181 = vmatprep.subr.mxu0 0.0
    %6182 = vmatpush1.msra.mxu0 0.0
    %6183 = vmatprep.subr.mxu0 0.0
    %6184 = vmatpush1.msra.mxu0 0.0
    %6185 = vmatprep.subr.mxu0 0.0
    %6186 = vmatpush1.msra.mxu0 0.0
    %6187 = vmatprep.subr.mxu0 0.0
    %6188 = vmatpush1.msra.mxu0 0.0
    %6189 = vmatprep.subr.mxu0 0.0
    %6190 = vmatpush1.msra.mxu0 0.0
    %6191 = vmatprep.subr.mxu0 0.0
    %6192 = vmatpush1.msra.mxu0 0.0
    %6193 = vmatprep.subr.mxu0 0.0
    %6194 = vmatpush1.msra.mxu0 0.0
    %6195 = vmatprep.subr.mxu0 0.0
    %6196 = vmatpush1.msra.mxu0 0.0
    %6197 = vmatprep.subr.mxu0 0.0
    %6198 = vmatpush1.msra.mxu0 0.0
    %6199 = vmatprep.subr.mxu0 0.0
    %6200 = vmatpush1.msra.mxu0 0.0
    %6201 = vmatprep.subr.mxu0 0.0
    %6202 = vmatpush1.msra.mxu0 0.0
    %6203 = vmatprep.mubr.f32.mxu0 0.0
    %6204 = vmatmul.mubr.f32.gmra.mrb[0].mxu0 %v6090
    %v6205 = vpop.f32.mrb[0].mxu0
    %v6206 = vadd.f32 %v579, %v6205
    %v6207 = vpop.f32.mrb[0].mxu0
    %v6208 = vadd.f32 %v583, %v6207
    %6209 = vdwg.mxu0
    %6210 = vmatprep.subr.mxu0 0.0
    %6211 = vmatpush1.msra.mxu0 %v6093
    %6212 = vmatprep.subr.mxu0 0.0
    %6213 = vmatpush1.msra.mxu0 %v6096
    %6214 = vmatprep.subr.mxu0 0.0
    %6215 = vmatpush1.msra.mxu0 %v6099
    %6216 = vmatprep.subr.mxu0 0.0
    %6217 = vmatpush1.msra.mxu0 %v6102
    %6218 = vmatprep.subr.mxu0 0.0
    %6219 = vmatpush1.msra.mxu0 %v6105
    %6220 = vmatprep.subr.mxu0 0.0
    %6221 = vmatpush1.msra.mxu0 %v6108
    %6222 = vmatprep.subr.mxu0 0.0
    %6223 = vmatpush1.msra.mxu0 %v6111
    %6224 = vmatprep.subr.mxu0 0.0
    %6225 = vmatpush1.msra.mxu0 %v6114
    %6226 = vmatprep.subr.mxu0 0.0
    %6227 = vmatpush1.msra.mxu0 %v6117
    %6228 = vmatprep.subr.mxu0 0.0
    %6229 = vmatpush1.msra.mxu0 %v6120
    %6230 = vmatprep.subr.mxu0 0.0
    %6231 = vmatpush1.msra.mxu0 %v6123
    %6232 = vmatprep.subr.mxu0 0.0
    %6233 = vmatpush1.msra.mxu0 %v6126
    %6234 = vmatprep.subr.mxu0 0.0
    %6235 = vmatpush1.msra.mxu0 %v6129
    %6236 = vmatprep.subr.mxu0 0.0
    %6237 = vmatpush1.msra.mxu0 %v6132
    %6238 = vmatprep.subr.mxu0 0.0
    %6239 = vmatpush1.msra.mxu0 %v6135
    %6240 = vmatprep.subr.mxu0 0.0
    %6241 = vmatpush1.msra.mxu0 %v6138
    %6242 = vmatprep.subr.mxu0 0.0
    %6243 = vmatpush1.msra.mxu0 0.0
    %6244 = vmatprep.subr.mxu0 0.0
    %6245 = vmatpush1.msra.mxu0 0.0
    %6246 = vmatprep.subr.mxu0 0.0
    %6247 = vmatpush1.msra.mxu0 0.0
    %6248 = vmatprep.subr.mxu0 0.0
    %6249 = vmatpush1.msra.mxu0 0.0
    %6250 = vmatprep.subr.mxu0 0.0
    %6251 = vmatpush1.msra.mxu0 0.0
    %6252 = vmatprep.subr.mxu0 0.0
    %6253 = vmatpush1.msra.mxu0 0.0
    %6254 = vmatprep.subr.mxu0 0.0
    %6255 = vmatpush1.msra.mxu0 0.0
    %6256 = vmatprep.subr.mxu0 0.0
    %6257 = vmatpush1.msra.mxu0 0.0
    %6258 = vmatprep.subr.mxu0 0.0
    %6259 = vmatpush1.msra.mxu0 0.0
    %6260 = vmatprep.subr.mxu0 0.0
    %6261 = vmatpush1.msra.mxu0 0.0
    %6262 = vmatprep.subr.mxu0 0.0
    %6263 = vmatpush1.msra.mxu0 0.0
    %6264 = vmatprep.subr.mxu0 0.0
    %6265 = vmatpush1.msra.mxu0 0.0
    %6266 = vmatprep.subr.mxu0 0.0
    %6267 = vmatpush1.msra.mxu0 0.0
    %6268 = vmatprep.subr.mxu0 0.0
    %6269 = vmatpush1.msra.mxu0 0.0
    %6270 = vmatprep.subr.mxu0 0.0
    %6271 = vmatpush1.msra.mxu0 0.0
    %6272 = vmatprep.subr.mxu0 0.0
    %6273 = vmatpush1.msra.mxu0 0.0
    %6274 = vmatprep.mubr.f32.mxu0 0.0
    %6275 = vmatmul.mubr.f32.gmra.mrb[0].mxu0 %v6090
    %v6276 = vpop.f32.mrb[0].mxu0
    %v6277 = vadd.f32 %v587, %v6276
    %v6278 = vpop.f32.mrb[0].mxu0
    %6279 = vdwg.mxu0
    %v6280 = vadd.f32 %v6206, %v5989
    %v6281 = vxor.u32 %v6280, 2147483648
    %v6282 = vmul.f32 %v6281, 1.442695
    %v6283 = vpow.pop %v6282
    %v6284 = vadd.f32 %v6283, 1.0
    %v6285 = vrcp.pop %v6284
    %v6286 = vmul.f32 1.0, %v6285
    %v6287 = vadd.f32 %v6208, %v5991
    %v6288 = vxor.u32 %v6287, 2147483648
    %v6289 = vmul.f32 %v6288, 1.442695
    %v6290 = vpow.pop %v6289
    %v6291 = vadd.f32 %v6290, 1.0
    %v6292 = vrcp.pop %v6291
    %v6293 = vmul.f32 1.0, %v6292
    %v6294 = vmul.f32 %v6286, %v6060
    %v6295 = vadd.f32 %v6277, %v6294
    %v6296 = vtanh.pop %v6295
    %v6297 = vsub.f32 1.0, %v6293
    %v6298 = vmul.f32 %v6297, %v6296
    %v6299 = vmul.f32 %v6293, %v5509
    %v6300 = vadd.f32 %v6298, %v6299
    %v6301 = vld [vmem:[#allocation10] sm:$0xff]
    %v6302 = vld [vmem:[#allocation10 + $0x10] sm:$0xff]
    %v6303 = vld [vmem:[#allocation10 + $0x20] sm:$0xff]
    %v6304 = vld [vmem:[#allocation10 + $0x30] sm:$0xff]
    %v6305 = vld [vmem:[#allocation10 + $0x40] sm:$0xff]
    %v6306 = vld [vmem:[#allocation10 + $0x50] sm:$0xff]
    %v6307 = vld [vmem:[#allocation10 + $0x60] sm:$0xff]
    %v6308 = vld [vmem:[#allocation10 + $0x70] sm:$0xff]
    %v6309 = vld [vmem:[#allocation10 + $0x80] sm:$0xff]
    %v6310 = vld [vmem:[#allocation10 + $0x90] sm:$0xff]
    %v6311 = vld [vmem:[#allocation10 + $0xa0] sm:$0xff]
    %v6312 = vld [vmem:[#allocation10 + $0xb0] sm:$0xff]
    %v6313 = vld [vmem:[#allocation10 + $0xc0] sm:$0xff]
    %v6314 = vld [vmem:[#allocation10 + $0xd0] sm:$0xff]
    %v6315 = vld [vmem:[#allocation10 + $0xe0] sm:$0xff]
    %v6316 = vld [vmem:[#allocation10 + $0xf0] sm:$0xff]
    %6317 = vmatprep.subr.mxu0 0.0
    %6318 = vmatpush1.msra.mxu0 %v6301
    %6319 = vmatprep.subr.mxu0 0.0
    %6320 = vmatpush1.msra.mxu0 %v6302
    %6321 = vmatprep.subr.mxu0 0.0
    %6322 = vmatpush1.msra.mxu0 %v6303
    %6323 = vmatprep.subr.mxu0 0.0
    %6324 = vmatpush1.msra.mxu0 %v6304
    %6325 = vmatprep.subr.mxu0 0.0
    %6326 = vmatpush1.msra.mxu0 %v6305
    %6327 = vmatprep.subr.mxu0 0.0
    %6328 = vmatpush1.msra.mxu0 %v6306
    %6329 = vmatprep.subr.mxu0 0.0
    %6330 = vmatpush1.msra.mxu0 %v6307
    %6331 = vmatprep.subr.mxu0 0.0
    %6332 = vmatpush1.msra.mxu0 %v6308
    %6333 = vmatprep.subr.mxu0 0.0
    %6334 = vmatpush1.msra.mxu0 %v6309
    %6335 = vmatprep.subr.mxu0 0.0
    %6336 = vmatpush1.msra.mxu0 %v6310
    %6337 = vmatprep.subr.mxu0 0.0
    %6338 = vmatpush1.msra.mxu0 %v6311
    %6339 = vmatprep.subr.mxu0 0.0
    %6340 = vmatpush1.msra.mxu0 %v6312
    %6341 = vmatprep.subr.mxu0 0.0
    %6342 = vmatpush1.msra.mxu0 %v6313
    %6343 = vmatprep.subr.mxu0 0.0
    %6344 = vmatpush1.msra.mxu0 %v6314
    %6345 = vmatprep.subr.mxu0 0.0
    %6346 = vmatpush1.msra.mxu0 %v6315
    %6347 = vmatprep.subr.mxu0 0.0
    %6348 = vmatpush1.msra.mxu0 %v6316
    %6349 = vmatprep.subr.mxu0 0.0
    %6350 = vmatpush1.msra.mxu0 0.0
    %6351 = vmatprep.subr.mxu0 0.0
    %6352 = vmatpush1.msra.mxu0 0.0
    %6353 = vmatprep.subr.mxu0 0.0
    %6354 = vmatpush1.msra.mxu0 0.0
    %6355 = vmatprep.subr.mxu0 0.0
    %6356 = vmatpush1.msra.mxu0 0.0
    %6357 = vmatprep.subr.mxu0 0.0
    %6358 = vmatpush1.msra.mxu0 0.0
    %6359 = vmatprep.subr.mxu0 0.0
    %6360 = vmatpush1.msra.mxu0 0.0
    %6361 = vmatprep.subr.mxu0 0.0
    %6362 = vmatpush1.msra.mxu0 0.0
    %6363 = vmatprep.subr.mxu0 0.0
    %6364 = vmatpush1.msra.mxu0 0.0
    %6365 = vmatprep.subr.mxu0 0.0
    %6366 = vmatpush1.msra.mxu0 0.0
    %6367 = vmatprep.subr.mxu0 0.0
    %6368 = vmatpush1.msra.mxu0 0.0
    %6369 = vmatprep.subr.mxu0 0.0
    %6370 = vmatpush1.msra.mxu0 0.0
    %6371 = vmatprep.subr.mxu0 0.0
    %6372 = vmatpush1.msra.mxu0 0.0
    %6373 = vmatprep.subr.mxu0 0.0
    %6374 = vmatpush1.msra.mxu0 0.0
    %6375 = vmatprep.subr.mxu0 0.0
    %6376 = vmatpush1.msra.mxu0 0.0
    %6377 = vmatprep.subr.mxu0 0.0
    %6378 = vmatpush1.msra.mxu0 0.0
    %6379 = vmatprep.subr.mxu0 0.0
    %6380 = vmatpush1.msra.mxu0 0.0
    %6381 = vmatprep.mubr.f32.mxu0 0.0
    %6382 = vmatmul.mubr.f32.gmra.mrb[0].mxu0 %v6300
    %v6383 = vpop.f32.mrb[0].mxu0
    %v6384 = vadd.f32 %v773, %v6383
    %v6385 = vpop.f32.mrb[0].mxu0
    %6386 = vdwg.mxu0
    %v6387 = vmax.f32 %v6384, 0.0
    %v6388 = vld [vmem:[#allocation10 + $0x8] sm:$0xff]
    %v6389 = vld [vmem:[#allocation10 + $0x18] sm:$0xff]
    %v6390 = vld [vmem:[#allocation10 + $0x28] sm:$0xff]
    %v6391 = vld [vmem:[#allocation10 + $0x38] sm:$0xff]
    %v6392 = vld [vmem:[#allocation10 + $0x48] sm:$0xff]
    %v6393 = vld [vmem:[#allocation10 + $0x58] sm:$0xff]
    %v6394 = vld [vmem:[#allocation10 + $0x68] sm:$0xff]
    %v6395 = vld [vmem:[#allocation10 + $0x78] sm:$0xff]
    %v6396 = vld [vmem:[#allocation10 + $0x88] sm:$0xff]
    %v6397 = vld [vmem:[#allocation10 + $0x98] sm:$0xff]
    %v6398 = vld [vmem:[#allocation10 + $0xa8] sm:$0xff]
    %v6399 = vld [vmem:[#allocation10 + $0xb8] sm:$0xff]
    %v6400 = vld [vmem:[#allocation10 + $0xc8] sm:$0xff]
    %v6401 = vld [vmem:[#allocation10 + $0xd8] sm:$0xff]
    %v6402 = vld [vmem:[#allocation10 + $0xe8] sm:$0xff]
    %v6403 = vld [vmem:[#allocation10 + $0xf8] sm:$0xff]
    %6404 = vmatprep.subr.mxu0 0.0
    %6405 = vmatpush1.msra.mxu0 %v6388
    %6406 = vmatprep.subr.mxu0 0.0
    %6407 = vmatpush1.msra.mxu0 %v6389
    %6408 = vmatprep.subr.mxu0 0.0
    %6409 = vmatpush1.msra.mxu0 %v6390
    %6410 = vmatprep.subr.mxu0 0.0
    %6411 = vmatpush1.msra.mxu0 %v6391
    %6412 = vmatprep.subr.mxu0 0.0
    %6413 = vmatpush1.msra.mxu0 %v6392
    %6414 = vmatprep.subr.mxu0 0.0
    %6415 = vmatpush1.msra.mxu0 %v6393
    %6416 = vmatprep.subr.mxu0 0.0
    %6417 = vmatpush1.msra.mxu0 %v6394
    %6418 = vmatprep.subr.mxu0 0.0
    %6419 = vmatpush1.msra.mxu0 %v6395
    %6420 = vmatprep.subr.mxu0 0.0
    %6421 = vmatpush1.msra.mxu0 %v6396
    %6422 = vmatprep.subr.mxu0 0.0
    %6423 = vmatpush1.msra.mxu0 %v6397
    %6424 = vmatprep.subr.mxu0 0.0
    %6425 = vmatpush1.msra.mxu0 %v6398
    %6426 = vmatprep.subr.mxu0 0.0
    %6427 = vmatpush1.msra.mxu0 %v6399
    %6428 = vmatprep.subr.mxu0 0.0
    %6429 = vmatpush1.msra.mxu0 %v6400
    %6430 = vmatprep.subr.mxu0 0.0
    %6431 = vmatpush1.msra.mxu0 %v6401
    %6432 = vmatprep.subr.mxu0 0.0
    %6433 = vmatpush1.msra.mxu0 %v6402
    %6434 = vmatprep.subr.mxu0 0.0
    %6435 = vmatpush1.msra.mxu0 %v6403
    %6436 = vmatprep.subr.mxu0 0.0
    %6437 = vmatpush1.msra.mxu0 0.0
    %6438 = vmatprep.subr.mxu0 0.0
    %6439 = vmatpush1.msra.mxu0 0.0
    %6440 = vmatprep.subr.mxu0 0.0
    %6441 = vmatpush1.msra.mxu0 0.0
    %6442 = vmatprep.subr.mxu0 0.0
    %6443 = vmatpush1.msra.mxu0 0.0
    %6444 = vmatprep.subr.mxu0 0.0
    %6445 = vmatpush1.msra.mxu0 0.0
    %6446 = vmatprep.subr.mxu0 0.0
    %6447 = vmatpush1.msra.mxu0 0.0
    %6448 = vmatprep.subr.mxu0 0.0
    %6449 = vmatpush1.msra.mxu0 0.0
    %6450 = vmatprep.subr.mxu0 0.0
    %6451 = vmatpush1.msra.mxu0 0.0
    %6452 = vmatprep.subr.mxu0 0.0
    %6453 = vmatpush1.msra.mxu0 0.0
    %6454 = vmatprep.subr.mxu0 0.0
    %6455 = vmatpush1.msra.mxu0 0.0
    %6456 = vmatprep.subr.mxu0 0.0
    %6457 = vmatpush1.msra.mxu0 0.0
    %6458 = vmatprep.subr.mxu0 0.0
    %6459 = vmatpush1.msra.mxu0 0.0
    %6460 = vmatprep.subr.mxu0 0.0
    %6461 = vmatpush1.msra.mxu0 0.0
    %6462 = vmatprep.subr.mxu0 0.0
    %6463 = vmatpush1.msra.mxu0 0.0
    %6464 = vmatprep.subr.mxu0 0.0
    %6465 = vmatpush1.msra.mxu0 0.0
    %6466 = vmatprep.subr.mxu0 0.0
    %6467 = vmatpush1.msra.mxu0 0.0
    %6468 = vmatprep.mubr.f32.mxu0 0.0
    %6469 = vmatmul.mubr.f32.gmra.mrb[0].mxu0 %v6387
    %v6470 = vpop.f32.mrb[0].mxu0
    %v6471 = vadd.f32 %v866, %v6470
    %v6472 = vpop.f32.mrb[0].mxu0
    %6473 = vdwg.mxu0
    %s6474 = scalar_lea.vmem [#allocation12], 14
    %6475 = vst [vmem:[%s6474] sm:$0x3] %v6471
    %6476 = vst [vmem:[#allocation2] sm:$0x3] %v6090
    %6477 = vst [vmem:[#allocation3] sm:$0x3] %v6300
    // Predicated region
    $region42: #{tpu_custom_call.1} parent=1 // pred_check
      %p6478 = pneg %p77
    $region43: #{tpu_custom_call.1} parent=1 // pred_check_branch
      %6480 = sbr.rel (%p6478) target = $region45
    $region44: #{tpu_custom_call.1} parent=1 // pred_region
      %6481 = vst [vmem:[#allocation13] sm:$0x3] %v6090
      %s6482 = scalar_lea.vmem [#allocation13], 2
      %6483 = vst [vmem:[%s6482] sm:$0x3] %v6300
    $region45: #{tpu_custom_call.1} parent=1 // pred_fallthru
      _
    // Predicated region
    $region46: #{tpu_custom_call.1} parent=1 // pred_check
      _
    $region47: #{tpu_custom_call.1} parent=1 // pred_check_branch
      %6485 = sbr.rel (0) target = $region49
    $region48: #{tpu_custom_call.1} parent=1 // pred_region
      %s6487 = ssub.s32 256, 256
      %6488 = vsyncadd [#allocation6], %s6487
      %s6489 = sshll.u32 [#allocation12], 4
      %s6490 = int_to_ptr.vmem [resolvable:$true] %s6489
      %6495 = dma.vmem_to_hbm [thread:$0]  %s6490, 256, %s5, [#allocation6], 32, 32, 2
    $region49: #{tpu_custom_call.1} parent=1 // pred_fallthru
      _
    // Predicated region
    $region50: #{tpu_custom_call.1} parent=1 // pred_check
      _
    $region51: #{tpu_custom_call.1} parent=1 // pred_check_branch
      %6497 = sbr.rel (0) target = $region53
    $region52: #{tpu_custom_call.1} parent=1 // pred_region
      %s6499 = ssub.s32 64, 64
      %6500 = vsyncadd [#allocation14], %s6499
      %s6501 = sshll.u32 [#allocation13], 4
      %s6502 = int_to_ptr.vmem [resolvable:$true] %s6501
      %6507 = dma.vmem_to_hbm [thread:$0]  %s6502, 64, %s6, [#allocation14], 32, 32, 2
    $region53: #{tpu_custom_call.1} parent=1 // pred_fallthru
      _
    // Predicated region
    $region54: #{tpu_custom_call.1} parent=1 // pred_check
      _
    $region55: #{tpu_custom_call.1} parent=1 // pred_check_branch
      %6509 = sbr.rel (0) target = $region57
    $region56: #{tpu_custom_call.1} parent=1 // pred_region
      %6510 = dma.done [#allocation6], 256
    $region57: #{tpu_custom_call.1} parent=1 // pred_fallthru
      _
    // Predicated region
    $region58: #{tpu_custom_call.1} parent=1 // pred_check
      _
    $region59: #{tpu_custom_call.1} parent=1 // pred_check_branch
      %6512 = sbr.rel (0) target = $region61
    $region60: #{tpu_custom_call.1} parent=1 // pred_region
      %6513 = dma.done [#allocation14], 64
    $region61: #{tpu_custom_call.1} parent=1 // pred_fallthru
      _
    %6514 = vsyncpa [#allocation5], 1
    %6515 = vsyncpa [#allocation8], 1
    %6516 = vsyncpa [#allocation11], 1
    %6517 = vsyncpa [#allocation6], 1
    %6518 = vsyncpa [#allocation14], 1

</llo_original>
